<compile_context>
chip_gen: v6e
topology: v6e:2x2x1
jax: 0.10.0
libtpu: 0.0.40
codegen_flags: <defaults>
</compile_context>

<pallas_src>
import functools

import jax
import jax.numpy as jnp
from jax import lax
from jax.experimental import pallas as pl
from jax.experimental.pallas import tpu as pltpu


# ------------------------------ Pallas kernels ------------------------------

def _prep_kernel(*refs, off_cols, has_pos, has_mask):
    """Fused: q = X (+ pos); value = X @ Wv + bv (optionally masked);
    [off | attn_logits] = q @ Wqa + bqa;  per-head softmax of the logits via
    full-width exp + block-diagonal group-sum matmul + approx reciprocal."""
    it = iter(refs)
    x_ref = next(it)
    pos_ref = next(it) if has_pos else None
    mask_ref = next(it) if has_mask else None
    wv_ref, bv_ref, wqa_ref, bqa_ref, blk_ref = (next(it) for _ in range(5))
    val_ref, off_ref, attn_ref = (next(it) for _ in range(3))

    x = x_ref[...]                                   # bf16
    if has_pos:
        q = x + pos_ref[...]                         # bf16 add (pos_embed fused in-tile)
    else:
        q = x

    # value_proj (bf16 MXU matmul, f32 accumulate)
    val = jnp.dot(x, wv_ref[...], preferred_element_type=jnp.float32) + bv_ref[...]
    if has_mask:
        val = val * mask_ref[...]                    # (tm, 1) multiplier: 0 on padded rows
    val_ref[...] = val.astype(val_ref.dtype)

    # fused sampling_offsets | attention_weights projection (offset normalizer pre-folded)
    qa = jnp.dot(q, wqa_ref[...], preferred_element_type=jnp.float32) + bqa_ref[...]
    off_ref[...] = qa[:, :off_cols].astype(off_ref.dtype)

    # full-width per-head softmax (groups handled by the block-diagonal ones matmul)
    logits = qa[:, off_cols:]                        # (tm, n_heads * n_levels * n_points)
    m = jnp.max(logits, axis=-1, keepdims=True)      # row-global max: still an exact softmax
    e = jnp.exp(logits - m)
    denom = jnp.dot(e, blk_ref[...], preferred_element_type=jnp.float32)
    attn_ref[...] = (e * pl.reciprocal(denom, approx=True)).astype(attn_ref.dtype)


def _tail_kernel(a_ref, res_ref, wo_ref, bo_ref, g1_ref, be1_ref,
                 w1_ref, b1_ref, w2_ref, b2_ref, g2_ref, be2_ref, o_ref, *, eps):
    """Fused: out_proj + residual + LN1 + FFN(relu) + residual + LN2.
    The post-LN1 activation and the (tm, d_ffn) intermediate never leave VMEM."""
    y = jnp.dot(a_ref[...], wo_ref[...], preferred_element_type=jnp.float32) + bo_ref[...]
    z = res_ref[...].astype(jnp.float32) + y
    mean = jnp.mean(z, axis=-1, keepdims=True)
    zc = z - mean
    var = jnp.mean(zc * zc, axis=-1, keepdims=True)
    h1 = zc * lax.rsqrt(var + eps) * g1_ref[...] + be1_ref[...]       # LN1 output (f32)

    h = jnp.dot(h1.astype(jnp.bfloat16), w1_ref[...],
                preferred_element_type=jnp.float32) + b1_ref[...]
    h = jnp.maximum(h, 0.0)
    y2 = jnp.dot(h.astype(jnp.bfloat16), w2_ref[...],
                 preferred_element_type=jnp.float32) + b2_ref[...]
    z2 = h1 + y2
    mean2 = jnp.mean(z2, axis=-1, keepdims=True)
    zc2 = z2 - mean2
    var2 = jnp.mean(zc2 * zc2, axis=-1, keepdims=True)
    o_ref[...] = (zc2 * lax.rsqrt(var2 + eps) * g2_ref[...] + be2_ref[...]).astype(o_ref.dtype)


# ------------------------------ call wrappers ------------------------------

def _pick_tile(m, cap=512):
    """Multiple-of-8 row tile (<= cap) giving an even, balanced grid (v7x megacore).
    Ragged last blocks are allowed (Pallas masks partial-block writes)."""
    steps = max(2, -(-m // cap))
    if steps % 2:
        steps += 1
    tm = ((-(-m // steps)) + 7) // 8 * 8
    return max(8, min(tm, ((m + 7) // 8) * 8))


def _prep_call(x, pos, mask, value_w, value_b, qa_w, qa_b, blkdiag, *, n_heads, lp, tm):
    M, D = x.shape
    off_cols = 2 * n_heads * lp
    attn_cols = n_heads * lp
    qa_cols = off_cols + attn_cols
    has_pos = pos is not None
    has_mask = mask is not None
    grid = (pl.cdiv(M, tm),)

    in_specs = [pl.BlockSpec((tm, D), lambda i: (i, 0))]
    operands = [x]
    if has_pos:
        in_specs.append(pl.BlockSpec((tm, D), lambda i: (i, 0)))
        operands.append(pos)
    if has_mask:
        in_specs.append(pl.BlockSpec((tm, 1), lambda i: (i, 0)))
        operands.append(mask)
    in_specs += [
        pl.BlockSpec((D, D), lambda i: (0, 0)),
        pl.BlockSpec((1, D), lambda i: (0, 0)),
        pl.BlockSpec((D, qa_cols), lambda i: (0, 0)),
        pl.BlockSpec((1, qa_cols), lambda i: (0, 0)),
        pl.BlockSpec((attn_cols, attn_cols), lambda i: (0, 0)),
    ]
    operands += [value_w, value_b.reshape(1, D), qa_w, qa_b.reshape(1, qa_cols), blkdiag]

    return pl.pallas_call(
        functools.partial(_prep_kernel, off_cols=off_cols,
                          has_pos=has_pos, has_mask=has_mask),
        out_shape=(jax.ShapeDtypeStruct((M, D), jnp.bfloat16),
                   jax.ShapeDtypeStruct((M, off_cols), jnp.float32),
                   jax.ShapeDtypeStruct((M, attn_cols), jnp.float32)),
        grid=grid,
        in_specs=in_specs,
        out_specs=(
            pl.BlockSpec((tm, D), lambda i: (i, 0)),
            pl.BlockSpec((tm, off_cols), lambda i: (i, 0)),
            pl.BlockSpec((tm, attn_cols), lambda i: (i, 0)),
        ),
        compiler_params=pltpu.CompilerParams(dimension_semantics=("parallel",)),
    )(*operands)


def _tail_call(attn_out, residual, params, *, tm, eps=1e-5):
    M, D = residual.shape
    F = params["lin1_w"].shape[1]
    grid = (pl.cdiv(M, tm),)
    # TODO(synk): for production d_ffn on v7x (64 MiB VMEM, 32 MiB scoped default) tile the
    # d_ffn axis across a grid dimension and set vmem_limit_bytes instead of keeping both
    # FFN weight matrices fully resident.
    return pl.pallas_call(
        functools.partial(_tail_kernel, eps=eps),
        out_shape=jax.ShapeDtypeStruct((M, D), jnp.float32),
        grid=grid,
        in_specs=[
            pl.BlockSpec((tm, D), lambda i: (i, 0)),    # attn_out (bf16)
            pl.BlockSpec((tm, D), lambda i: (i, 0)),    # residual (bf16)
            pl.BlockSpec((D, D), lambda i: (0, 0)),     # out_w
            pl.BlockSpec((1, D), lambda i: (0, 0)),     # out_b
            pl.BlockSpec((1, D), lambda i: (0, 0)),     # ln1_g
            pl.BlockSpec((1, D), lambda i: (0, 0)),     # ln1_b
            pl.BlockSpec((D, F), lambda i: (0, 0)),     # lin1_w
            pl.BlockSpec((1, F), lambda i: (0, 0)),     # lin1_b
            pl.BlockSpec((F, D), lambda i: (0, 0)),     # lin2_w
            pl.BlockSpec((1, D), lambda i: (0, 0)),     # lin2_b
            pl.BlockSpec((1, D), lambda i: (0, 0)),     # ln2_g
            pl.BlockSpec((1, D), lambda i: (0, 0)),     # ln2_b
        ],
        out_specs=pl.BlockSpec((tm, D), lambda i: (i, 0)),
        compiler_params=pltpu.CompilerParams(dimension_semantics=("parallel",)),
    )(attn_out, residual,
      params["out_w"], params["out_b"].reshape(1, D),
      params["ln1_g"].reshape(1, D), params["ln1_b"].reshape(1, D),
      params["lin1_w"], params["lin1_b"].reshape(1, F),
      params["lin2_w"], params["lin2_b"].reshape(1, D),
      params["ln2_g"].reshape(1, D), params["ln2_b"].reshape(1, D))


# --------------------------- plain-JAX glue pieces ---------------------------

def _ms_deform_attn_core(value, spatial_shapes, level_start_index, sampling_locations, attn):
    """Bilinear multi-scale sampling + attention-weighted sum, expressed gather-free.

    Per level, the 4 bilinear corner weights and the attention weights are folded into a
    dense (B, Lq, H, S_l) combined-weight slab (one-hot scatter fused by XLA as a reduce);
    levels are concatenated and applied with a single MXU einsum against value.  Exactly
    matches grid_sample(align_corners=False, padding_mode='zeros') + weighted sum.

    value: (B, S, H, Dh)   sampling_locations: (B, Lq, H, Lv, P, 2) in [0, 1]
    attn:  (B, Lq, H, Lv, P)        returns (B*Lq, H*Dh) bf16
    """
    # TODO(synk): for production spatial sizes the dense (B, Lq, H, S) weight slab is
    # infeasible; write a Pallas kernel that stages each level's value slab into VMEM via
    # make_async_copy (memory_space=pl.ANY) and does the 4-corner gather per query tile.
    B, S, H, Dh = value.shape
    _, Lq, _, Lv, P, _ = sampling_locations.shape
    del level_start_index  # levels are concatenated in order below
    w_levels = []
    for lid, (Hl, Wl) in enumerate(spatial_shapes):
        loc = sampling_locations[:, :, :, lid]                         # (B, Lq, H, P, 2)
        a_l = attn[:, :, :, lid]                                       # (B, Lq, H, P)
        gx = loc[..., 0] * Wl - 0.5                                    # align_corners=False
        gy = loc[..., 1] * Hl - 0.5
        x0 = jnp.floor(gx)
        y0 = jnp.floor(gy)
        wx1 = gx - x0
        wy1 = gy - y0
        ixs = jnp.stack([x0, x0 + 1.0, x0, x0 + 1.0], axis=-1)         # (B, Lq, H, P, 4)
        iys = jnp.stack([y0, y0, y0 + 1.0, y0 + 1.0], axis=-1)
        wgt = jnp.stack([(1.0 - wx1) * (1.0 - wy1), wx1 * (1.0 - wy1),
                         (1.0 - wx1) * wy1, wx1 * wy1], axis=-1)
        inb = ((ixs >= 0) & (ixs < Wl) & (iys >= 0) & (iys < Hl)).astype(jnp.float32)
        wgt = wgt * inb * a_l[..., None]                               # fold attention in
        idx = (jnp.clip(iys, 0, Hl - 1) * Wl
               + jnp.clip(ixs, 0, Wl - 1)).astype(jnp.int32)           # (B, Lq, H, P, 4)
        idx = idx.reshape(B, Lq, H, P * 4)
        wgt = wgt.reshape(B, Lq, H, P * 4)
        onehot = (idx[..., None] == jnp.arange(Hl * Wl, dtype=jnp.int32)).astype(jnp.float32)
        w_levels.append(jnp.sum(wgt[..., None] * onehot, axis=-2))     # (B, Lq, H, S_l)
    W = jnp.concatenate(w_levels, axis=-1)                             # (B, Lq, H, S)
    out = jnp.einsum("bqhs,bshd->bqhd", W, value.astype(jnp.float32),
                     preferred_element_type=jnp.float32)
    return out.reshape(B * Lq, H * Dh).astype(jnp.bfloat16)


def encoder_layer_forward(params, X, pos, ref_points, spatial_shapes, level_start_index,
                          *, n_heads, n_levels, n_points, padding_mask=None):
    """Forward of DeformableTransformerEncoderLayer (inference: dropout = identity)."""
    B, L, D = X.shape
    Dh = D // n_heads
    LP = n_levels * n_points
    M = B * L
    tm = _pick_tile(M)

    x2 = X.reshape(M, D).astype(jnp.bfloat16)                          # bf16 kernel I/O
    pos2 = pos.reshape(M, D).astype(jnp.bfloat16) if pos is not None else None
    mask2 = (1.0 - padding_mask.reshape(M, 1).astype(jnp.float32)) \
        if padding_mask is not None else None

    # Fold the per-level offset normalizer (1/W, 1/H) into the offset columns of the
    # fused qa projection -> offsets leave kernel A already normalized (no HBM divide pass).
    shapes_arr = jnp.asarray(spatial_shapes, dtype=jnp.float32)        # (Lv, 2) = (H, W)
    norm_wh = jnp.stack([shapes_arr[:, 1], shapes_arr[:, 0]], axis=-1) # (Lv, 2) = (W, H)
    inv_norm = jnp.broadcast_to((1.0 / norm_wh)[None, :, None, :],
                                (n_heads, n_levels, n_points, 2)).reshape(-1)
    col_scale = jnp.concatenate([inv_norm, jnp.ones((n_heads * LP,), jnp.float32)])
    qa_w = (params["qa_w"] * col_scale[None, :]).astype(jnp.bfloat16)
    qa_b = params["qa_b"] * col_scale

    # Static block-diagonal ones matrix for per-head group sums in the softmax.
    grp = jnp.arange(n_heads * LP, dtype=jnp.int32) // LP
    blkdiag = (grp[:, None] == grp[None, :]).astype(jnp.float32)

    # -------- fused pos-add + value/offset/attention projections + softmax --------
    value2, offsets2, attn2 = _prep_call(
        x2, pos2, mask2, params["value_w"], params["value_b"], qa_w, qa_b, blkdiag,
        n_heads=n_heads, lp=LP, tm=tm)

    value = value2.reshape(B, L, n_heads, Dh)
    offsets = offsets2.reshape(B, L, n_heads, n_levels, n_points, 2)   # pre-normalized
    attn = attn2.reshape(B, L, n_heads, n_levels, n_points)

    sampling_locations = ref_points[:, :, None, :, None, :] + offsets

    attn_out = _ms_deform_attn_core(value, spatial_shapes, level_start_index,
                                    sampling_locations, attn)          # (M, D) bf16

    # -------- fused out_proj + residual + LN1 + FFN + residual + LN2 --------
    out = _tail_call(attn_out, x2, params, tm=tm)
    return out.reshape(B, L, D)


def init_params(key, d_model, d_ffn, n_heads, n_levels, n_points):
    ks = jax.random.split(key, 8)

    def w(k, shape, scale=0.02):
        return scale * jax.random.normal(k, shape, dtype=jnp.float32)

    hlp = n_heads * n_levels * n_points
    off_cols = 2 * hlp
    off_w = w(ks[1], (d_model, off_cols), 0.05)
    attn_w = w(ks[3], (d_model, hlp), 0.05)
    off_b = w(ks[2], (off_cols,), 0.5)
    attn_b = jnp.zeros((hlp,), jnp.float32)
    return dict(
        # matmul weights stored bf16 (f32 accumulation in-kernel); biases / LN params f32.
        # qa_w kept f32 so the per-level offset normalizer can be folded in before casting.
        value_w=w(ks[0], (d_model, d_model)).astype(jnp.bfloat16),
        value_b=jnp.zeros((d_model,), jnp.float32),
        qa_w=jnp.concatenate([off_w, attn_w], axis=1),
        qa_b=jnp.concatenate([off_b, attn_b], axis=0),
        out_w=w(ks[4], (d_model, d_model)).astype(jnp.bfloat16),
        out_b=jnp.zeros((d_model,), jnp.float32),
        ln1_g=jnp.ones((d_model,), jnp.float32),
        ln1_b=jnp.zeros((d_model,), jnp.float32),
        lin1_w=w(ks[5], (d_model, d_ffn)).astype(jnp.bfloat16),
        lin1_b=jnp.zeros((d_ffn,), jnp.float32),
        lin2_w=w(ks[6], (d_ffn, d_model)).astype(jnp.bfloat16),
        lin2_b=jnp.zeros((d_model,), jnp.float32),
        ln2_g=jnp.ones((d_model,), jnp.float32),
        ln2_b=jnp.zeros((d_model,), jnp.float32),
    )


if __name__ == "__main__":
    # Scaled-down MODEL_SIZE / LINEAR_SIZE; d_model kept a multiple of 128 for lane-dense stores.
    d_model, d_ffn, n_heads, n_levels, n_points = 128, 256, 8, 4, 4
    B = 2
    spatial_shapes = ((16, 16), (8, 8), (4, 4), (2, 2))
    lsi = [0]
    for (h_, w_) in spatial_shapes[:-1]:
        lsi.append(lsi[-1] + h_ * w_)
    level_start_index = tuple(lsi)
    Len = sum(h_ * w_ for h_, w_ in spatial_shapes)   # 340

    key = jax.random.PRNGKey(0)
    kx, kp, kr, kparam = jax.random.split(key, 4)
    X = jax.random.normal(kx, (B, Len, d_model), dtype=jnp.float32)
    pos = 0.1 * jax.random.normal(kp, (B, Len, d_model), dtype=jnp.float32)
    ref_points = jax.random.uniform(kr, (B, Len, n_levels, 2), dtype=jnp.float32)
    params = init_params(kparam, d_model, d_ffn, n_heads, n_levels, n_points)

    fwd = jax.jit(encoder_layer_forward,
                  static_argnames=("spatial_shapes", "level_start_index",
                                   "n_heads", "n_levels", "n_points"))

    out = fwd(params, X, pos, ref_points,
              spatial_shapes=spatial_shapes, level_start_index=level_start_index,
              n_heads=n_heads, n_levels=n_levels, n_points=n_points)
    out = jax.block_until_ready(out)
    assert out.shape == (B, Len, d_model)
    assert bool(jnp.all(jnp.isfinite(out)))

    # Exercise the in-kernel padding-mask path as well.
    padding_mask = jnp.broadcast_to(jnp.arange(Len)[None, :] >= (Len - 20), (B, Len))
    out_m = fwd(params, X, pos, ref_points,
                spatial_shapes=spatial_shapes, level_start_index=level_start_index,
                n_heads=n_heads, n_levels=n_levels, n_points=n_points,
                padding_mask=padding_mask)
    out_m = jax.block_until_ready(out_m)
    assert out_m.shape == (B, Len, d_model)
    assert bool(jnp.all(jnp.isfinite(out_m)))
    print("KERNEL_OK")
</pallas_src>

<mosaic_0001>
module attributes {stable_mosaic.version = 11 : i64} {
  func.func @_prep_kernel(%arg0: i32, %arg1: memref<344x128xbf16, #tpu.memory_space<vmem>>, %arg2: memref<344x128xbf16, #tpu.memory_space<vmem>>, %arg3: memref<128x128xbf16, #tpu.memory_space<vmem>>, %arg4: memref<1x128xf32, #tpu.memory_space<vmem>>, %arg5: memref<128x384xbf16, #tpu.memory_space<vmem>>, %arg6: memref<1x384xf32, #tpu.memory_space<vmem>>, %arg7: memref<128x128xf32, #tpu.memory_space<vmem>>, %arg8: memref<344x128xbf16, #tpu.memory_space<vmem>>, %arg9: memref<344x256xf32, #tpu.memory_space<vmem>>, %arg10: memref<344x128xf32, #tpu.memory_space<vmem>>) attributes {dimension_semantics = [#tpu.dimension_semantics<parallel>], iteration_bounds = array<i64: 2>, scalar_prefetch = 0 : i64, scratch_operands = 0 : i64, tpu.core_type = #tpu.core_type<tc>, window_params = [{transform_indices = @transform_0, window_bounds = array<i64: 344, 128>}, {transform_indices = @transform_1, window_bounds = array<i64: 344, 128>}, {pipeline_mode = #tpu.pipeline_mode<synchronous>, transform_indices = @transform_2, window_bounds = array<i64: 128, 128>}, {pipeline_mode = #tpu.pipeline_mode<synchronous>, transform_indices = @transform_3, window_bounds = array<i64: 1, 128>}, {pipeline_mode = #tpu.pipeline_mode<synchronous>, transform_indices = @transform_4, window_bounds = array<i64: 128, 384>}, {pipeline_mode = #tpu.pipeline_mode<synchronous>, transform_indices = @transform_5, window_bounds = array<i64: 1, 384>}, {pipeline_mode = #tpu.pipeline_mode<synchronous>, transform_indices = @transform_6, window_bounds = array<i64: 128, 128>}, {transform_indices = @transform_7, window_bounds = array<i64: 344, 128>}, {transform_indices = @transform_8, window_bounds = array<i64: 344, 256>}, {transform_indices = @transform_9, window_bounds = array<i64: 344, 128>}]} {
    %c0 = arith.constant 0 : index
    %c0_0 = arith.constant 0 : index
    %0 = vector.load %arg1[%c0, %c0_0] : memref<344x128xbf16, #tpu.memory_space<vmem>>, vector<344x128xbf16>
    %c0_1 = arith.constant 0 : index
    %c0_2 = arith.constant 0 : index
    %1 = vector.load %arg2[%c0_1, %c0_2] : memref<344x128xbf16, #tpu.memory_space<vmem>>, vector<344x128xbf16>
    %2 = arith.addf %0, %1 : vector<344x128xbf16>
    %c0_3 = arith.constant 0 : index
    %c0_4 = arith.constant 0 : index
    %3 = vector.load %arg3[%c0_3, %c0_4] : memref<128x128xbf16, #tpu.memory_space<vmem>>, vector<128x128xbf16>
    %cst = arith.constant dense<0.000000e+00> : vector<344x128xf32>
    %4 = tpu.matmul %0, %3, %cst {dimension_numbers = #tpu.dot_dimension_numbers<[1], [0], [0], [1], [0, 0, 1, 1], [], []>} : vector<344x128xbf16>, vector<128x128xbf16>, vector<344x128xf32> -> vector<344x128xf32>
    %c0_5 = arith.constant 0 : index
    %c0_6 = arith.constant 0 : index
    %5 = vector.load %arg4[%c0_5, %c0_6] : memref<1x128xf32, #tpu.memory_space<vmem>>, vector<1x128xf32>
    %6 = vector.broadcast %5 : vector<1x128xf32> to vector<344x128xf32>
    %7 = arith.addf %4, %6 : vector<344x128xf32>
    %8 = arith.truncf %7 : vector<344x128xf32> to vector<344x128xbf16>
    %c0_7 = arith.constant 0 : index
    %c0_8 = arith.constant 0 : index
    %9 = vector.load %arg8[%c0_7, %c0_8] : memref<344x128xbf16, #tpu.memory_space<vmem>>, vector<344x128xbf16>
    tpu.vector_store %arg8[%c0_7, %c0_8], %8 {strides = array<i32>} : memref<344x128xbf16, #tpu.memory_space<vmem>>, vector<344x128xbf16>,
    %c0_9 = arith.constant 0 : index
    %c0_10 = arith.constant 0 : index
    %10 = vector.load %arg5[%c0_9, %c0_10] : memref<128x384xbf16, #tpu.memory_space<vmem>>, vector<128x384xbf16>
    %cst_11 = arith.constant dense<0.000000e+00> : vector<344x384xf32>
    %11 = tpu.matmul %2, %10, %cst_11 {dimension_numbers = #tpu.dot_dimension_numbers<[1], [0], [0], [1], [0, 0, 1, 1], [], []>} : vector<344x128xbf16>, vector<128x384xbf16>, vector<344x384xf32> -> vector<344x384xf32>
    %c0_12 = arith.constant 0 : index
    %c0_13 = arith.constant 0 : index
    %12 = vector.load %arg6[%c0_12, %c0_13] : memref<1x384xf32, #tpu.memory_space<vmem>>, vector<1x384xf32>
    %13 = vector.broadcast %12 : vector<1x384xf32> to vector<344x384xf32>
    %14 = arith.addf %11, %13 : vector<344x384xf32>
    %15 = vector.extract_strided_slice %14 {offsets = [0, 0], sizes = [344, 256], strides = [1, 1]} : vector<344x384xf32> to vector<344x256xf32>
    %c0_14 = arith.constant 0 : index
    %c0_15 = arith.constant 0 : index
    %16 = vector.load %arg9[%c0_14, %c0_15] : memref<344x256xf32, #tpu.memory_space<vmem>>, vector<344x256xf32>
    tpu.vector_store %arg9[%c0_14, %c0_15], %15 {strides = array<i32>} : memref<344x256xf32, #tpu.memory_space<vmem>>, vector<344x256xf32>,
    %17 = vector.extract_strided_slice %14 {offsets = [0, 256], sizes = [344, 128], strides = [1, 1]} : vector<344x384xf32> to vector<344x128xf32>
    %cst_16 = arith.constant dense<0xFF800000> : vector<344xf32>
    %18 = vector.multi_reduction <maximumf>, %17, %cst_16 [1] : vector<344x128xf32> to vector<344xf32>
    %19 = vector.shape_cast %18 : vector<344xf32> to vector<344x1xf32>
    %20 = vector.broadcast %19 : vector<344x1xf32> to vector<344x128xf32>
    %21 = arith.subf %17, %20 : vector<344x128xf32>
    %22 = math.exp %21 : vector<344x128xf32>
    %c0_17 = arith.constant 0 : index
    %c0_18 = arith.constant 0 : index
    %23 = vector.load %arg7[%c0_17, %c0_18] : memref<128x128xf32, #tpu.memory_space<vmem>>, vector<128x128xf32>
    %cst_19 = arith.constant dense<0.000000e+00> : vector<344x128xf32>
    %24 = tpu.matmul %22, %23, %cst_19 {dimension_numbers = #tpu.dot_dimension_numbers<[1], [0], [0], [1], [0, 0, 1, 1], [], []>} : vector<344x128xf32>, vector<128x128xf32>, vector<344x128xf32> -> vector<344x128xf32>
    %25 = tpu.reciprocal %24 {approx = true} : vector<344x128xf32> -> vector<344x128xf32>
    %26 = arith.mulf %22, %25 : vector<344x128xf32>
    %c0_20 = arith.constant 0 : index
    %c0_21 = arith.constant 0 : index
    %27 = vector.load %arg10[%c0_20, %c0_21] : memref<344x128xf32, #tpu.memory_space<vmem>>, vector<344x128xf32>
    tpu.vector_store %arg10[%c0_20, %c0_21], %26 {strides = array<i32>} : memref<344x128xf32, #tpu.memory_space<vmem>>, vector<344x128xf32>,
    return
  }
  func.func @transform_0(%arg0: i32) -> (i32, i32) {
    %c0_i32 = arith.constant 0 : i32
    %c0_i32_0 = arith.constant 0 : i32
    return %arg0, %c0_i32 : i32, i32
  }
  func.func @transform_1(%arg0: i32) -> (i32, i32) {
    %c0_i32 = arith.constant 0 : i32
    %c0_i32_0 = arith.constant 0 : i32
    return %arg0, %c0_i32 : i32, i32
  }
  func.func @transform_2(%arg0: i32) -> (i32, i32) {
    %c0_i32 = arith.constant 0 : i32
    %c0_i32_0 = arith.constant 0 : i32
    %c0_i32_1 = arith.constant 0 : i32
    return %c0_i32, %c0_i32_0 : i32, i32
  }
  func.func @transform_3(%arg0: i32) -> (i32, i32) {
    %c0_i32 = arith.constant 0 : i32
    %c0_i32_0 = arith.constant 0 : i32
    %c0_i32_1 = arith.constant 0 : i32
    return %c0_i32, %c0_i32_0 : i32, i32
  }
  func.func @transform_4(%arg0: i32) -> (i32, i32) {
    %c0_i32 = arith.constant 0 : i32
    %c0_i32_0 = arith.constant 0 : i32
    %c0_i32_1 = arith.constant 0 : i32
    return %c0_i32, %c0_i32_0 : i32, i32
  }
  func.func @transform_5(%arg0: i32) -> (i32, i32) {
    %c0_i32 = arith.constant 0 : i32
    %c0_i32_0 = arith.constant 0 : i32
    %c0_i32_1 = arith.constant 0 : i32
    return %c0_i32, %c0_i32_0 : i32, i32
  }
  func.func @transform_6(%arg0: i32) -> (i32, i32) {
    %c0_i32 = arith.constant 0 : i32
    %c0_i32_0 = arith.constant 0 : i32
    %c0_i32_1 = arith.constant 0 : i32
    return %c0_i32, %c0_i32_0 : i32, i32
  }
  func.func @transform_7(%arg0: i32) -> (i32, i32) {
    %c0_i32 = arith.constant 0 : i32
    %c0_i32_0 = arith.constant 0 : i32
    return %arg0, %c0_i32 : i32, i32
  }
  func.func @transform_8(%arg0: i32) -> (i32, i32) {
    %c0_i32 = arith.constant 0 : i32
    %c0_i32_0 = arith.constant 0 : i32
    return %arg0, %c0_i32 : i32, i32
  }
  func.func @transform_9(%arg0: i32) -> (i32, i32) {
    %c0_i32 = arith.constant 0 : i32
    %c0_i32_0 = arith.constant 0 : i32
    return %arg0, %c0_i32 : i32, i32
  }
}

module attributes {stable_mosaic.version = 11 : i64} {
  func.func @_tail_kernel(%arg0: i32, %arg1: memref<344x128xbf16, #tpu.memory_space<vmem>>, %arg2: memref<344x128xbf16, #tpu.memory_space<vmem>>, %arg3: memref<128x128xbf16, #tpu.memory_space<vmem>>, %arg4: memref<1x128xf32, #tpu.memory_space<vmem>>, %arg5: memref<1x128xf32, #tpu.memory_space<vmem>>, %arg6: memref<1x128xf32, #tpu.memory_space<vmem>>, %arg7: memref<128x256xbf16, #tpu.memory_space<vmem>>, %arg8: memref<1x256xf32, #tpu.memory_space<vmem>>, %arg9: memref<256x128xbf16, #tpu.memory_space<vmem>>, %arg10: memref<1x128xf32, #tpu.memory_space<vmem>>, %arg11: memref<1x128xf32, #tpu.memory_space<vmem>>, %arg12: memref<1x128xf32, #tpu.memory_space<vmem>>, %arg13: memref<344x128xf32, #tpu.memory_space<vmem>>) attributes {dimension_semantics = [#tpu.dimension_semantics<parallel>], iteration_bounds = array<i64: 2>, scalar_prefetch = 0 : i64, scratch_operands = 0 : i64, tpu.core_type = #tpu.core_type<tc>, window_params = [{transform_indices = @transform_0, window_bounds = array<i64: 344, 128>}, {transform_indices = @transform_1, window_bounds = array<i64: 344, 128>}, {pipeline_mode = #tpu.pipeline_mode<synchronous>, transform_indices = @transform_2, window_bounds = array<i64: 128, 128>}, {pipeline_mode = #tpu.pipeline_mode<synchronous>, transform_indices = @transform_3, window_bounds = array<i64: 1, 128>}, {pipeline_mode = #tpu.pipeline_mode<synchronous>, transform_indices = @transform_4, window_bounds = array<i64: 1, 128>}, {pipeline_mode = #tpu.pipeline_mode<synchronous>, transform_indices = @transform_5, window_bounds = array<i64: 1, 128>}, {pipeline_mode = #tpu.pipeline_mode<synchronous>, transform_indices = @transform_6, window_bounds = array<i64: 128, 256>}, {pipeline_mode = #tpu.pipeline_mode<synchronous>, transform_indices = @transform_7, window_bounds = array<i64: 1, 256>}, {pipeline_mode = #tpu.pipeline_mode<synchronous>, transform_indices = @transform_8, window_bounds = array<i64: 256, 128>}, {pipeline_mode = #tpu.pipeline_mode<synchronous>, transform_indices = @transform_9, window_bounds = array<i64: 1, 128>}, {pipeline_mode = #tpu.pipeline_mode<synchronous>, transform_indices = @transform_10, window_bounds = array<i64: 1, 128>}, {pipeline_mode = #tpu.pipeline_mode<synchronous>, transform_indices = @transform_11, window_bounds = array<i64: 1, 128>}, {transform_indices = @transform_12, window_bounds = array<i64: 344, 128>}]} {
    %c0 = arith.constant 0 : index
    %c0_0 = arith.constant 0 : index
    %0 = vector.load %arg1[%c0, %c0_0] : memref<344x128xbf16, #tpu.memory_space<vmem>>, vector<344x128xbf16>
    %c0_1 = arith.constant 0 : index
    %c0_2 = arith.constant 0 : index
    %1 = vector.load %arg3[%c0_1, %c0_2] : memref<128x128xbf16, #tpu.memory_space<vmem>>, vector<128x128xbf16>
    %cst = arith.constant dense<0.000000e+00> : vector<344x128xf32>
    %2 = tpu.matmul %0, %1, %cst {dimension_numbers = #tpu.dot_dimension_numbers<[1], [0], [0], [1], [0, 0, 1, 1], [], []>} : vector<344x128xbf16>, vector<128x128xbf16>, vector<344x128xf32> -> vector<344x128xf32>
    %c0_3 = arith.constant 0 : index
    %c0_4 = arith.constant 0 : index
    %3 = vector.load %arg4[%c0_3, %c0_4] : memref<1x128xf32, #tpu.memory_space<vmem>>, vector<1x128xf32>
    %4 = vector.broadcast %3 : vector<1x128xf32> to vector<344x128xf32>
    %5 = arith.addf %2, %4 : vector<344x128xf32>
    %c0_5 = arith.constant 0 : index
    %c0_6 = arith.constant 0 : index
    %6 = vector.load %arg2[%c0_5, %c0_6] : memref<344x128xbf16, #tpu.memory_space<vmem>>, vector<344x128xbf16>
    %7 = arith.extf %6 : vector<344x128xbf16> to vector<344x128xf32>
    %8 = arith.addf %7, %5 : vector<344x128xf32>
    %cst_7 = arith.constant dense<0.000000e+00> : vector<344xf32>
    %9 = vector.multi_reduction <add>, %8, %cst_7 [1] : vector<344x128xf32> to vector<344xf32>
    %10 = vector.shape_cast %9 : vector<344xf32> to vector<344x1xf32>
    %cst_8 = arith.constant 1.280000e+02 : f32
    %11 = vector.broadcast %cst_8 : f32 to vector<344x1xf32>
    %12 = arith.divf %10, %11 : vector<344x1xf32>
    %13 = vector.broadcast %12 : vector<344x1xf32> to vector<344x128xf32>
    %14 = arith.subf %8, %13 : vector<344x128xf32>
    %15 = arith.mulf %14, %14 : vector<344x128xf32>
    %cst_9 = arith.constant dense<0.000000e+00> : vector<344xf32>
    %16 = vector.multi_reduction <add>, %15, %cst_9 [1] : vector<344x128xf32> to vector<344xf32>
    %17 = vector.shape_cast %16 : vector<344xf32> to vector<344x1xf32>
    %cst_10 = arith.constant 1.280000e+02 : f32
    %18 = vector.broadcast %cst_10 : f32 to vector<344x1xf32>
    %19 = arith.divf %17, %18 : vector<344x1xf32>
    %cst_11 = arith.constant 9.99999974E-6 : f32
    %20 = vector.broadcast %cst_11 : f32 to vector<344x1xf32>
    %21 = arith.addf %19, %20 : vector<344x1xf32>
    %22 = math.rsqrt %21 : vector<344x1xf32>
    %23 = vector.broadcast %22 : vector<344x1xf32> to vector<344x128xf32>
    %24 = arith.mulf %14, %23 : vector<344x128xf32>
    %c0_12 = arith.constant 0 : index
    %c0_13 = arith.constant 0 : index
    %25 = vector.load %arg5[%c0_12, %c0_13] : memref<1x128xf32, #tpu.memory_space<vmem>>, vector<1x128xf32>
    %26 = vector.broadcast %25 : vector<1x128xf32> to vector<344x128xf32>
    %27 = arith.mulf %24, %26 : vector<344x128xf32>
    %c0_14 = arith.constant 0 : index
    %c0_15 = arith.constant 0 : index
    %28 = vector.load %arg6[%c0_14, %c0_15] : memref<1x128xf32, #tpu.memory_space<vmem>>, vector<1x128xf32>
    %29 = vector.broadcast %28 : vector<1x128xf32> to vector<344x128xf32>
    %30 = arith.addf %27, %29 : vector<344x128xf32>
    %31 = arith.truncf %30 : vector<344x128xf32> to vector<344x128xbf16>
    %c0_16 = arith.constant 0 : index
    %c0_17 = arith.constant 0 : index
    %32 = vector.load %arg7[%c0_16, %c0_17] : memref<128x256xbf16, #tpu.memory_space<vmem>>, vector<128x256xbf16>
    %cst_18 = arith.constant dense<0.000000e+00> : vector<344x256xf32>
    %33 = tpu.matmul %31, %32, %cst_18 {dimension_numbers = #tpu.dot_dimension_numbers<[1], [0], [0], [1], [0, 0, 1, 1], [], []>} : vector<344x128xbf16>, vector<128x256xbf16>, vector<344x256xf32> -> vector<344x256xf32>
    %c0_19 = arith.constant 0 : index
    %c0_20 = arith.constant 0 : index
    %34 = vector.load %arg8[%c0_19, %c0_20] : memref<1x256xf32, #tpu.memory_space<vmem>>, vector<1x256xf32>
    %35 = vector.broadcast %34 : vector<1x256xf32> to vector<344x256xf32>
    %36 = arith.addf %33, %35 : vector<344x256xf32>
    %cst_21 = arith.constant 0.000000e+00 : f32
    %37 = vector.broadcast %cst_21 : f32 to vector<344x256xf32>
    %38 = arith.maximumf %36, %37 : vector<344x256xf32>
    %39 = arith.truncf %38 : vector<344x256xf32> to vector<344x256xbf16>
    %c0_22 = arith.constant 0 : index
    %c0_23 = arith.constant 0 : index
    %40 = vector.load %arg9[%c0_22, %c0_23] : memref<256x128xbf16, #tpu.memory_space<vmem>>, vector<256x128xbf16>
    %cst_24 = arith.constant dense<0.000000e+00> : vector<344x128xf32>
    %41 = tpu.matmul %39, %40, %cst_24 {dimension_numbers = #tpu.dot_dimension_numbers<[1], [0], [0], [1], [0, 0, 1, 1], [], []>} : vector<344x256xbf16>, vector<256x128xbf16>, vector<344x128xf32> -> vector<344x128xf32>
    %c0_25 = arith.constant 0 : index
    %c0_26 = arith.constant 0 : index
    %42 = vector.load %arg10[%c0_25, %c0_26] : memref<1x128xf32, #tpu.memory_space<vmem>>, vector<1x128xf32>
    %43 = vector.broadcast %42 : vector<1x128xf32> to vector<344x128xf32>
    %44 = arith.addf %41, %43 : vector<344x128xf32>
    %45 = arith.addf %30, %44 : vector<344x128xf32>
    %cst_27 = arith.constant dense<0.000000e+00> : vector<344xf32>
    %46 = vector.multi_reduction <add>, %45, %cst_27 [1] : vector<344x128xf32> to vector<344xf32>
    %47 = vector.shape_cast %46 : vector<344xf32> to vector<344x1xf32>
    %cst_28 = arith.constant 1.280000e+02 : f32
    %48 = vector.broadcast %cst_28 : f32 to vector<344x1xf32>
    %49 = arith.divf %47, %48 : vector<344x1xf32>
    %50 = vector.broadcast %49 : vector<344x1xf32> to vector<344x128xf32>
    %51 = arith.subf %45, %50 : vector<344x128xf32>
    %52 = arith.mulf %51, %51 : vector<344x128xf32>
    %cst_29 = arith.constant dense<0.000000e+00> : vector<344xf32>
    %53 = vector.multi_reduction <add>, %52, %cst_29 [1] : vector<344x128xf32> to vector<344xf32>
    %54 = vector.shape_cast %53 : vector<344xf32> to vector<344x1xf32>
    %cst_30 = arith.constant 1.280000e+02 : f32
    %55 = vector.broadcast %cst_30 : f32 to vector<344x1xf32>
    %56 = arith.divf %54, %55 : vector<344x1xf32>
    %cst_31 = arith.constant 9.99999974E-6 : f32
    %57 = vector.broadcast %cst_31 : f32 to vector<344x1xf32>
    %58 = arith.addf %56, %57 : vector<344x1xf32>
    %59 = math.rsqrt %58 : vector<344x1xf32>
    %60 = vector.broadcast %59 : vector<344x1xf32> to vector<344x128xf32>
    %61 = arith.mulf %51, %60 : vector<344x128xf32>
    %c0_32 = arith.constant 0 : index
    %c0_33 = arith.constant 0 : index
    %62 = vector.load %arg11[%c0_32, %c0_33] : memref<1x128xf32, #tpu.memory_space<vmem>>, vector<1x128xf32>
    %63 = vector.broadcast %62 : vector<1x128xf32> to vector<344x128xf32>
    %64 = arith.mulf %61, %63 : vector<344x128xf32>
    %c0_34 = arith.constant 0 : index
    %c0_35 = arith.constant 0 : index
    %65 = vector.load %arg12[%c0_34, %c0_35] : memref<1x128xf32, #tpu.memory_space<vmem>>, vector<1x128xf32>
    %66 = vector.broadcast %65 : vector<1x128xf32> to vector<344x128xf32>
    %67 = arith.addf %64, %66 : vector<344x128xf32>
    %c0_36 = arith.constant 0 : index
    %c0_37 = arith.constant 0 : index
    %68 = vector.load %arg13[%c0_36, %c0_37] : memref<344x128xf32, #tpu.memory_space<vmem>>, vector<344x128xf32>
    tpu.vector_store %arg13[%c0_36, %c0_37], %67 {strides = array<i32>} : memref<344x128xf32, #tpu.memory_space<vmem>>, vector<344x128xf32>,
    return
  }
  func.func @transform_0(%arg0: i32) -> (i32, i32) {
    %c0_i32 = arith.constant 0 : i32
    %c0_i32_0 = arith.constant 0 : i32
    return %arg0, %c0_i32 : i32, i32
  }
  func.func @transform_1(%arg0: i32) -> (i32, i32) {
    %c0_i32 = arith.constant 0 : i32
    %c0_i32_0 = arith.constant 0 : i32
    return %arg0, %c0_i32 : i32, i32
  }
  func.func @transform_2(%arg0: i32) -> (i32, i32) {
    %c0_i32 = arith.constant 0 : i32
    %c0_i32_0 = arith.constant 0 : i32
    %c0_i32_1 = arith.constant 0 : i32
    return %c0_i32, %c0_i32_0 : i32, i32
  }
  func.func @transform_3(%arg0: i32) -> (i32, i32) {
    %c0_i32 = arith.constant 0 : i32
    %c0_i32_0 = arith.constant 0 : i32
    %c0_i32_1 = arith.constant 0 : i32
    return %c0_i32, %c0_i32_0 : i32, i32
  }
  func.func @transform_4(%arg0: i32) -> (i32, i32) {
    %c0_i32 = arith.constant 0 : i32
    %c0_i32_0 = arith.constant 0 : i32
    %c0_i32_1 = arith.constant 0 : i32
    return %c0_i32, %c0_i32_0 : i32, i32
  }
  func.func @transform_5(%arg0: i32) -> (i32, i32) {
    %c0_i32 = arith.constant 0 : i32
    %c0_i32_0 = arith.constant 0 : i32
    %c0_i32_1 = arith.constant 0 : i32
    return %c0_i32, %c0_i32_0 : i32, i32
  }
  func.func @transform_6(%arg0: i32) -> (i32, i32) {
    %c0_i32 = arith.constant 0 : i32
    %c0_i32_0 = arith.constant 0 : i32
    %c0_i32_1 = arith.constant 0 : i32
    return %c0_i32, %c0_i32_0 : i32, i32
  }
  func.func @transform_7(%arg0: i32) -> (i32, i32) {
    %c0_i32 = arith.constant 0 : i32
    %c0_i32_0 = arith.constant 0 : i32
    %c0_i32_1 = arith.constant 0 : i32
    return %c0_i32, %c0_i32_0 : i32, i32
  }
  func.func @transform_8(%arg0: i32) -> (i32, i32) {
    %c0_i32 = arith.constant 0 : i32
    %c0_i32_0 = arith.constant 0 : i32
    %c0_i32_1 = arith.constant 0 : i32
    return %c0_i32, %c0_i32_0 : i32, i32
  }
  func.func @transform_9(%arg0: i32) -> (i32, i32) {
    %c0_i32 = arith.constant 0 : i32
    %c0_i32_0 = arith.constant 0 : i32
    %c0_i32_1 = arith.constant 0 : i32
    return %c0_i32, %c0_i32_0 : i32, i32
  }
  func.func @transform_10(%arg0: i32) -> (i32, i32) {
    %c0_i32 = arith.constant 0 : i32
    %c0_i32_0 = arith.constant 0 : i32
    %c0_i32_1 = arith.constant 0 : i32
    return %c0_i32, %c0_i32_0 : i32, i32
  }
  func.func @transform_11(%arg0: i32) -> (i32, i32) {
    %c0_i32 = arith.constant 0 : i32
    %c0_i32_0 = arith.constant 0 : i32
    %c0_i32_1 = arith.constant 0 : i32
    return %c0_i32, %c0_i32_0 : i32, i32
  }
  func.func @transform_12(%arg0: i32) -> (i32, i32) {
    %c0_i32 = arith.constant 0 : i32
    %c0_i32_0 = arith.constant 0 : i32
    return %arg0, %c0_i32 : i32, i32
  }
}

</mosaic_0001>

<llo_original>
// kernel: encoder_layer_forward.2
$region0: #{encoder_layer_forward.2}
  #allocation0 [shape = 'u32[]', space=smem, size = 0x4, offset = 0x4, fixed_abs, tag = 'smem constant byte address 0x4 - core index']
  #allocation1 [shape = 'u32[144,128]{1,0:T(1,128)}', space=vmem, size = 0x12000, scoped, tag = 'internal scratch']
  %s0 = inlined_call_operand.vmem [shape: bf16[680,128], index: 0, kind: input, shape index: {}]
  %s1 = inlined_call_operand.vmem [shape: bf16[680,128], index: 1, kind: input, shape index: {}]
  %s2 = inlined_call_operand.vmem [shape: bf16[128,128], index: 2, kind: input, shape index: {}]
  %s3 = inlined_call_operand.vmem [shape: f32[1,128], index: 3, kind: input, shape index: {}]
  %s4 = inlined_call_operand.vmem [shape: bf16[128,384], index: 4, kind: input, shape index: {}]
  %s5 = inlined_call_operand.vmem [shape: f32[1,384], index: 5, kind: input, shape index: {}]
  %s6 = inlined_call_operand.vmem [shape: f32[128,128], index: 6, kind: input, shape index: {}]
  %s7 = inlined_call_operand.vmem [shape: bf16[680,128], index: 7, kind: output, shape index: {0}]
  %s8 = inlined_call_operand.vmem [shape: f32[680,256], index: 8, kind: output, shape index: {1}]
  %s9 = inlined_call_operand.vmem [shape: f32[680,128], index: 9, kind: output, shape index: {2}]
  %10 = xla_tuple %s7, %s8, %s9
  %s11 = sld [smem:[#allocation0]]
  $region195: #{encoder_layer_forward.2} parent=0
    _
  %s13 = ssub.s32 1, %s11
  %s14 = scalar_select 0, %s13, %s11
  $region1: #{encoder_layer_forward.2} parent=0
    #allocation2 [shape = 'u8[176128]{0}', space=vmem, size = 0x2b000, scoped, tag = 'output window, operand 0']
    #allocation3 [shape = 'u8[704512]{0}', space=vmem, size = 0xac000, scoped, tag = 'output window, operand 1']
    #allocation4 [shape = 'u8[352256]{0}', space=vmem, size = 0x56000, scoped, tag = 'output window, operand 2']
    loop: start=0, step=1, limit=4
    $region2: #{encoder_layer_forward.2} parent=1 // loop_pre_header
      _
    $region3: #{encoder_layer_forward.2} parent=1 // loop_header
      %s16 = sphi 0, %s20
      %p17 = scmp.ge.s32.totalorder %s16, 4
      %s26 = sphi 0, %s28
      %s29 = sphi 0, %s26
      %s30 = sphi 0, %s29
      %s46 = sphi 0, %s30
      %s52 = sphi 0, %s54
      %s55 = sphi 0, %s52
      %s56 = sphi 0, %s55
      %s72 = sphi 0, %s56
      %s76 = sphi 0, %s76
      %s78 = sphi 0, %s76
      %s79 = sphi 0, %s78
      %s93 = sphi 0, %s79
      %s97 = sphi 0, %s97
      %s99 = sphi 0, %s97
      %s100 = sphi 0, %s99
      %s114 = sphi 0, %s100
      %s118 = sphi 0, %s118
      %s120 = sphi 0, %s118
      %s121 = sphi 0, %s120
      %s135 = sphi 0, %s121
      %s139 = sphi 0, %s139
      %s141 = sphi 0, %s139
      %s142 = sphi 0, %s141
      %s156 = sphi 0, %s142
      %s160 = sphi 0, %s160
      %s162 = sphi 0, %s160
      %s163 = sphi 0, %s162
      %s177 = sphi 0, %s163
      %s183 = sphi 0, %s185
      %s186 = sphi 0, %s183
      %s187 = sphi 0, %s186
      %s203 = sphi 0, %s187
      %s209 = sphi 0, %s211
      %s212 = sphi 0, %s209
      %s213 = sphi 0, %s212
      %s229 = sphi 0, %s213
      %s235 = sphi 0, %s237
      %s238 = sphi 0, %s235
      %s239 = sphi 0, %s238
      %s255 = sphi 0, %s239
    $region4: #{encoder_layer_forward.2} parent=1 // loop_header_branch
      %19 = sbr.rel (%p17) target = $region8
    $region5: #{encoder_layer_forward.2} parent=1 // loop_body
      %s21 = ssub.s32 %s16, 1
      %s22 = ssub.s32 %s16, 2
      %s23 = sadd.s32 %s16, 1
      %s24 = ssub.s32 %s16, %s23
      %p25 = scmp.eq.s32.totalorder %s24, 0
      %s27 = sadd.s32 %s26, 1
      %s28 = scalar_select %p25, %s26, %s27
      %p31 = pneg %p25
      %p32 = scmp.eq.s32.totalorder %s16, 1
      %p33 = por %p31, %p32
      %p34 = scmp.ne.s32.totalorder %s26, %s29
      %p35 = scmp.eq.s32.totalorder %s16, 0
      %p36 = por %p34, %p35
      %p37 = scmp.ne.s32.totalorder %s26, %s29
      %p38 = scmp.eq.s32.totalorder %s21, 1
      %p39 = por %p37, %p38
      %p40 = scmp.ne.s32.totalorder %s29, %s30
      %p41 = scmp.eq.s32.totalorder %s21, 0
      %p42 = por %p40, %p41
      %p43 = scmp.ne.s32.totalorder %s29, %s30
      %p44 = scmp.eq.s32.totalorder %s22, 1
      %p45 = por %p43, %p44
      %p47 = scmp.ne.s32.totalorder %s30, %s46
      %p48 = scmp.eq.s32.totalorder %s22, 0
      %p49 = por %p47, %p48
      %s50 = ssub.s32 %s16, %s23
      %p51 = scmp.eq.s32.totalorder %s50, 0
      %s53 = sadd.s32 %s52, 1
      %s54 = scalar_select %p51, %s52, %s53
      %p57 = pneg %p51
      %p58 = scmp.eq.s32.totalorder %s16, 1
      %p59 = por %p57, %p58
      %p60 = scmp.ne.s32.totalorder %s52, %s55
      %p61 = scmp.eq.s32.totalorder %s16, 0
      %p62 = por %p60, %p61
      %p63 = scmp.ne.s32.totalorder %s52, %s55
      %p64 = scmp.eq.s32.totalorder %s21, 1
      %p65 = por %p63, %p64
      %p66 = scmp.ne.s32.totalorder %s55, %s56
      %p67 = scmp.eq.s32.totalorder %s21, 0
      %p68 = por %p66, %p67
      %p69 = scmp.ne.s32.totalorder %s55, %s56
      %p70 = scmp.eq.s32.totalorder %s22, 1
      %p71 = por %p69, %p70
      %p73 = scmp.ne.s32.totalorder %s56, %s72
      %p74 = scmp.eq.s32.totalorder %s22, 0
      %p75 = por %p73, %p74
      %s77 = sadd.s32 %s76, 1
      %p80 = scmp.eq.s32.totalorder %s16, 1
      %p81 = scmp.ne.s32.totalorder %s76, %s78
      %p82 = scmp.eq.s32.totalorder %s16, 0
      %p83 = por %p81, %p82
      %p84 = scmp.ne.s32.totalorder %s76, %s78
      %p85 = scmp.eq.s32.totalorder %s21, 1
      %p86 = por %p84, %p85
      %p87 = scmp.ne.s32.totalorder %s78, %s79
      %p88 = scmp.eq.s32.totalorder %s21, 0
      %p89 = por %p87, %p88
      %p90 = scmp.ne.s32.totalorder %s78, %s79
      %p91 = scmp.eq.s32.totalorder %s22, 1
      %p92 = por %p90, %p91
      %p94 = scmp.ne.s32.totalorder %s79, %s93
      %p95 = scmp.eq.s32.totalorder %s22, 0
      %p96 = por %p94, %p95
      %s98 = sadd.s32 %s97, 1
      %p101 = scmp.eq.s32.totalorder %s16, 1
      %p102 = scmp.ne.s32.totalorder %s97, %s99
      %p103 = scmp.eq.s32.totalorder %s16, 0
      %p104 = por %p102, %p103
      %p105 = scmp.ne.s32.totalorder %s97, %s99
      %p106 = scmp.eq.s32.totalorder %s21, 1
      %p107 = por %p105, %p106
      %p108 = scmp.ne.s32.totalorder %s99, %s100
      %p109 = scmp.eq.s32.totalorder %s21, 0
      %p110 = por %p108, %p109
      %p111 = scmp.ne.s32.totalorder %s99, %s100
      %p112 = scmp.eq.s32.totalorder %s22, 1
      %p113 = por %p111, %p112
      %p115 = scmp.ne.s32.totalorder %s100, %s114
      %p116 = scmp.eq.s32.totalorder %s22, 0
      %p117 = por %p115, %p116
      %s119 = sadd.s32 %s118, 1
      %p122 = scmp.eq.s32.totalorder %s16, 1
      %p123 = scmp.ne.s32.totalorder %s118, %s120
      %p124 = scmp.eq.s32.totalorder %s16, 0
      %p125 = por %p123, %p124
      %p126 = scmp.ne.s32.totalorder %s118, %s120
      %p127 = scmp.eq.s32.totalorder %s21, 1
      %p128 = por %p126, %p127
      %p129 = scmp.ne.s32.totalorder %s120, %s121
      %p130 = scmp.eq.s32.totalorder %s21, 0
      %p131 = por %p129, %p130
      %p132 = scmp.ne.s32.totalorder %s120, %s121
      %p133 = scmp.eq.s32.totalorder %s22, 1
      %p134 = por %p132, %p133
      %p136 = scmp.ne.s32.totalorder %s121, %s135
      %p137 = scmp.eq.s32.totalorder %s22, 0
      %p138 = por %p136, %p137
      %s140 = sadd.s32 %s139, 1
      %p143 = scmp.eq.s32.totalorder %s16, 1
      %p144 = scmp.ne.s32.totalorder %s139, %s141
      %p145 = scmp.eq.s32.totalorder %s16, 0
      %p146 = por %p144, %p145
      %p147 = scmp.ne.s32.totalorder %s139, %s141
      %p148 = scmp.eq.s32.totalorder %s21, 1
      %p149 = por %p147, %p148
      %p150 = scmp.ne.s32.totalorder %s141, %s142
      %p151 = scmp.eq.s32.totalorder %s21, 0
      %p152 = por %p150, %p151
      %p153 = scmp.ne.s32.totalorder %s141, %s142
      %p154 = scmp.eq.s32.totalorder %s22, 1
      %p155 = por %p153, %p154
      %p157 = scmp.ne.s32.totalorder %s142, %s156
      %p158 = scmp.eq.s32.totalorder %s22, 0
      %p159 = por %p157, %p158
      %s161 = sadd.s32 %s160, 1
      %p164 = scmp.eq.s32.totalorder %s16, 1
      %p165 = scmp.ne.s32.totalorder %s160, %s162
      %p166 = scmp.eq.s32.totalorder %s16, 0
      %p167 = por %p165, %p166
      %p168 = scmp.ne.s32.totalorder %s160, %s162
      %p169 = scmp.eq.s32.totalorder %s21, 1
      %p170 = por %p168, %p169
      %p171 = scmp.ne.s32.totalorder %s162, %s163
      %p172 = scmp.eq.s32.totalorder %s21, 0
      %p173 = por %p171, %p172
      %p174 = scmp.ne.s32.totalorder %s162, %s163
      %p175 = scmp.eq.s32.totalorder %s22, 1
      %p176 = por %p174, %p175
      %p178 = scmp.ne.s32.totalorder %s163, %s177
      %p179 = scmp.eq.s32.totalorder %s22, 0
      %p180 = por %p178, %p179
      %s181 = ssub.s32 %s16, %s23
      %p182 = scmp.eq.s32.totalorder %s181, 0
      %s184 = sadd.s32 %s183, 1
      %s185 = scalar_select %p182, %s183, %s184
      %p188 = pneg %p182
      %p189 = scmp.eq.s32.totalorder %s16, 1
      %p190 = por %p188, %p189
      %p191 = scmp.ne.s32.totalorder %s183, %s186
      %p192 = scmp.eq.s32.totalorder %s16, 0
      %p193 = por %p191, %p192
      %p194 = scmp.ne.s32.totalorder %s183, %s186
      %p195 = scmp.eq.s32.totalorder %s21, 1
      %p196 = por %p194, %p195
      %p197 = scmp.ne.s32.totalorder %s186, %s187
      %p198 = scmp.eq.s32.totalorder %s21, 0
      %p199 = por %p197, %p198
      %p200 = scmp.ne.s32.totalorder %s186, %s187
      %p201 = scmp.eq.s32.totalorder %s22, 1
      %p202 = por %p200, %p201
      %p204 = scmp.ne.s32.totalorder %s187, %s203
      %p205 = scmp.eq.s32.totalorder %s22, 0
      %p206 = por %p204, %p205
      %s207 = ssub.s32 %s16, %s23
      %p208 = scmp.eq.s32.totalorder %s207, 0
      %s210 = sadd.s32 %s209, 1
      %s211 = scalar_select %p208, %s209, %s210
      %p214 = pneg %p208
      %p215 = scmp.eq.s32.totalorder %s16, 1
      %p216 = por %p214, %p215
      %p217 = scmp.ne.s32.totalorder %s209, %s212
      %p218 = scmp.eq.s32.totalorder %s16, 0
      %p219 = por %p217, %p218
      %p220 = scmp.ne.s32.totalorder %s209, %s212
      %p221 = scmp.eq.s32.totalorder %s21, 1
      %p222 = por %p220, %p221
      %p223 = scmp.ne.s32.totalorder %s212, %s213
      %p224 = scmp.eq.s32.totalorder %s21, 0
      %p225 = por %p223, %p224
      %p226 = scmp.ne.s32.totalorder %s212, %s213
      %p227 = scmp.eq.s32.totalorder %s22, 1
      %p228 = por %p226, %p227
      %p230 = scmp.ne.s32.totalorder %s213, %s229
      %p231 = scmp.eq.s32.totalorder %s22, 0
      %p232 = por %p230, %p231
      %s233 = ssub.s32 %s16, %s23
      %p234 = scmp.eq.s32.totalorder %s233, 0
      %s236 = sadd.s32 %s235, 1
      %s237 = scalar_select %p234, %s235, %s236
      %p240 = pneg %p234
      %p241 = scmp.eq.s32.totalorder %s16, 1
      %p242 = por %p240, %p241
      %p243 = scmp.ne.s32.totalorder %s235, %s238
      %p244 = scmp.eq.s32.totalorder %s16, 0
      %p245 = por %p243, %p244
      %p246 = scmp.ne.s32.totalorder %s235, %s238
      %p247 = scmp.eq.s32.totalorder %s21, 1
      %p248 = por %p246, %p247
      %p249 = scmp.ne.s32.totalorder %s238, %s239
      %p250 = scmp.eq.s32.totalorder %s21, 0
      %p251 = por %p249, %p250
      %p252 = scmp.ne.s32.totalorder %s238, %s239
      %p253 = scmp.eq.s32.totalorder %s22, 1
      %p254 = por %p252, %p253
      %p256 = scmp.ne.s32.totalorder %s239, %s255
      %p257 = scmp.eq.s32.totalorder %s22, 0
      %p258 = por %p256, %p257
      %p259 = scmp.le.s32.totalorder 1, %s16
      %p260 = scmp.lt.s32.totalorder %s16, 3
      %p261 = pnand %p259, %p260
      %p262 = pneg %p261
      // Predicated region
      $region9: #{encoder_layer_forward.2} parent=5 // pred_check
        _
      $region10: #{encoder_layer_forward.2} parent=5 // pred_check_branch
        %264 = sbr.rel (%p261) target = $region12
      $region11: #{encoder_layer_forward.2} parent=5 // pred_region
        %s265 = ssub.s32 %s16, 1
        // Predicated region
        $region13: #{encoder_layer_forward.2} parent=11 // pred_check
          %p266 = pneg %p89
        $region14: #{encoder_layer_forward.2} parent=11 // pred_check_branch
          %268 = sbr.rel (%p266) target = $region16
        $region15: #{encoder_layer_forward.2} parent=11 // pred_region
          _
        $region16: #{encoder_layer_forward.2} parent=11 // pred_fallthru
          _
        // Predicated region
        $region17: #{encoder_layer_forward.2} parent=11 // pred_check
          %p269 = pneg %p110
        $region18: #{encoder_layer_forward.2} parent=11 // pred_check_branch
          %271 = sbr.rel (%p269) target = $region20
        $region19: #{encoder_layer_forward.2} parent=11 // pred_region
          _
        $region20: #{encoder_layer_forward.2} parent=11 // pred_fallthru
          _
        // Predicated region
        $region21: #{encoder_layer_forward.2} parent=11 // pred_check
          %p272 = pneg %p131
        $region22: #{encoder_layer_forward.2} parent=11 // pred_check_branch
          %274 = sbr.rel (%p272) target = $region24
        $region23: #{encoder_layer_forward.2} parent=11 // pred_region
          _
        $region24: #{encoder_layer_forward.2} parent=11 // pred_fallthru
          _
        // Predicated region
        $region25: #{encoder_layer_forward.2} parent=11 // pred_check
          %p275 = pneg %p152
        $region26: #{encoder_layer_forward.2} parent=11 // pred_check_branch
          %277 = sbr.rel (%p275) target = $region28
        $region27: #{encoder_layer_forward.2} parent=11 // pred_region
          _
        $region28: #{encoder_layer_forward.2} parent=11 // pred_fallthru
          _
        // Predicated region
        $region29: #{encoder_layer_forward.2} parent=11 // pred_check
          %p278 = pneg %p173
        $region30: #{encoder_layer_forward.2} parent=11 // pred_check_branch
          %280 = sbr.rel (%p278) target = $region32
        $region31: #{encoder_layer_forward.2} parent=11 // pred_region
          _
        $region32: #{encoder_layer_forward.2} parent=11 // pred_fallthru
          _
      $region12: #{encoder_layer_forward.2} parent=5 // pred_fallthru
        _
      %p281 = scmp.lt.s32.totalorder %s16, 2
      // Predicated region
      $region33: #{encoder_layer_forward.2} parent=5 // pred_check
        %p282 = pneg %p281
      $region34: #{encoder_layer_forward.2} parent=5 // pred_check_branch
        %284 = sbr.rel (%p282) target = $region36
      $region35: #{encoder_layer_forward.2} parent=5 // pred_region
        // Predicated region
        $region37: #{encoder_layer_forward.2} parent=35 // pred_check
          %p285 = pneg %p36
        $region38: #{encoder_layer_forward.2} parent=35 // pred_check_branch
          %287 = sbr.rel (%p285) target = $region40
        $region39: #{encoder_layer_forward.2} parent=35 // pred_region
          %s288 = smul.u32 43, %s16
          %s289 = ssub.s32 85, %s288
          %p290 = scmp.lt.s32.totalorder %s289, 43
          %s291 = scalar_select %p290, %s289, 43
          %s292 = smul.u32 64, %s291
          %p293 = scmp.lt.s32.totalorder %s288, 84
          %s294 = scalar_select %p293, %s288, 84
          %s295 = smul.addr %s294, 4
          %s296 = scalar_lea.vmem %s0, %s295
          %s297 = smul.u32 43, %s16
          %s298 = ssub.s32 85, %s297
          %p299 = scmp.lt.s32.totalorder %s298, 43
          %s300 = scalar_select %p299, %s298, 43
          %s301 = smul.u32 64, %s300
        $region40: #{encoder_layer_forward.2} parent=35 // pred_fallthru
          _
        // Predicated region
        $region41: #{encoder_layer_forward.2} parent=35 // pred_check
          %p302 = pneg %p62
        $region42: #{encoder_layer_forward.2} parent=35 // pred_check_branch
          %304 = sbr.rel (%p302) target = $region44
        $region43: #{encoder_layer_forward.2} parent=35 // pred_region
          %s305 = smul.u32 43, %s16
          %s306 = ssub.s32 85, %s305
          %p307 = scmp.lt.s32.totalorder %s306, 43
          %s308 = scalar_select %p307, %s306, 43
          %s309 = smul.u32 64, %s308
          %p310 = scmp.lt.s32.totalorder %s305, 84
          %s311 = scalar_select %p310, %s305, 84
          %s312 = smul.addr %s311, 4
          %s313 = scalar_lea.vmem %s1, %s312
          %s314 = smul.u32 43, %s16
          %s315 = ssub.s32 85, %s314
          %p316 = scmp.lt.s32.totalorder %s315, 43
          %s317 = scalar_select %p316, %s315, 43
          %s318 = smul.u32 64, %s317
        $region44: #{encoder_layer_forward.2} parent=35 // pred_fallthru
          _
      $region36: #{encoder_layer_forward.2} parent=5 // pred_fallthru
        _
      %p319 = scmp.le.s32.totalorder 1, %s16
      %p320 = scmp.lt.s32.totalorder %s16, 3
      %p321 = pnand %p319, %p320
      %p322 = pneg %p321
      // Predicated region
      $region45: #{encoder_layer_forward.2} parent=5 // pred_check
        _
      $region46: #{encoder_layer_forward.2} parent=5 // pred_check_branch
        %324 = sbr.rel (%p321) target = $region48
      $region47: #{encoder_layer_forward.2} parent=5 // pred_region
        %s325 = ssub.s32 %s16, 1
        %s326 = smul.u32 43, %s21
        %s327 = ssub.s32 85, %s326
        %p328 = scmp.lt.s32.totalorder %s327, 43
        %s329 = scalar_select %p328, %s327, 43
        %s330 = smul.u32 64, %s329
        %p331 = scmp.lt.s32.totalorder %s326, 84
        %s332 = scalar_select %p331, %s326, 84
        %s333 = smul.addr %s332, 4
        %s334 = scalar_lea.vmem %s0, %s333
        %p335 = pneg %p42
        %p336 = pneg %p39
        %s337 = smul.u32 43, %s21
        %s338 = ssub.s32 85, %s337
        %p339 = scmp.lt.s32.totalorder %s338, 43
        %s340 = scalar_select %p339, %s338, 43
        %s341 = smul.u32 64, %s340
        %p342 = scmp.lt.s32.totalorder %s337, 84
        %s343 = scalar_select %p342, %s337, 84
        %s344 = smul.addr %s343, 4
        %s345 = scalar_lea.vmem %s1, %s344
        %p346 = pneg %p68
        %p347 = pneg %p65
        %p348 = pneg %p89
        %p349 = pneg %p86
        %p350 = pneg %p110
        %p351 = pneg %p107
        %p352 = pneg %p131
        %p353 = pneg %p128
        %p354 = pneg %p152
        %p355 = pneg %p149
        %p356 = pneg %p173
        %p357 = pneg %p170
        %p358 = pneg %p199
        %p359 = pneg %p196
        %s360 = sand.u32 %s186, 1
        %s361 = sand.u32 %s186, 1
        %s362 = smul.addr %s361, 172
        %s363 = scalar_lea.vmem [#allocation2], %s362
        %p364 = pneg %p225
        %p365 = pneg %p222
        %s366 = sand.u32 %s212, 1
        %s367 = sand.u32 %s212, 1
        %s368 = smul.addr %s367, 688
        %s369 = scalar_lea.vmem [#allocation3], %s368
        %p370 = pneg %p251
        %p371 = pneg %p248
        %s372 = sand.u32 %s238, 1
        %s373 = sand.u32 %s238, 1
        %s374 = smul.addr %s373, 344
        %s375 = scalar_lea.vmem [#allocation4], %s374
        %s376 = smul.u32 43, %s21
        %s377 = ssub.s32 85, %s376
        %p378 = scmp.lt.s32.totalorder %s377, 43
        %s379 = scalar_select %p378, %s377, 43
        %s380 = smul.u32 64, %s379
        %p381 = scmp.lt.s32.totalorder %s376, 84
        %s382 = scalar_select %p381, %s376, 84
        %s383 = smul.addr %s382, 4
        %s384 = scalar_lea.vmem %s0, %s383
        %s385 = smul.u32 43, %s21
        %s386 = ssub.s32 85, %s385
        %p387 = scmp.lt.s32.totalorder %s386, 43
        %s388 = scalar_select %p387, %s386, 43
        %s389 = smul.u32 64, %s388
        %s390 = smul.u32 43, %s21
        %s391 = ssub.s32 85, %s390
        %p392 = scmp.lt.s32.totalorder %s391, 43
        %s393 = scalar_select %p392, %s391, 43
        %s394 = smul.u32 64, %s393
        %p395 = scmp.lt.s32.totalorder %s390, 84
        %s396 = scalar_select %p395, %s390, 84
        %s397 = smul.addr %s396, 4
        %s398 = scalar_lea.vmem %s1, %s397
        %s399 = smul.u32 43, %s21
        %s400 = ssub.s32 85, %s399
        %p401 = scmp.lt.s32.totalorder %s400, 43
        %s402 = scalar_select %p401, %s400, 43
        %s403 = smul.u32 64, %s402
        %s404 = smul.u32 43, %s21
        %s405 = ssub.s32 85, %s404
        %p406 = scmp.lt.s32.totalorder %s405, 43
        %s407 = scalar_select %p406, %s405, 43
        %s408 = smul.u32 64, %s407
        %s409 = smul.u32 43, %s21
        %s410 = ssub.s32 85, %s409
        %p411 = scmp.lt.s32.totalorder %s410, 43
        %s412 = scalar_select %p411, %s410, 43
        %s413 = smul.u32 128, %s412
        %s414 = smul.u32 %s413, 2
        %s415 = smul.u32 43, %s21
        %s416 = ssub.s32 85, %s415
        %p417 = scmp.lt.s32.totalorder %s416, 43
        %s418 = scalar_select %p417, %s416, 43
        %s419 = smul.u32 128, %s418
        %v421 = vld [vmem:[%s384] sm:$0xf]
        %v422 = vld [vmem:[%s384 + $0x4] sm:$0xf]
        %v423 = vld [vmem:[%s384 + $0x8] sm:$0xf]
        %v424 = vld [vmem:[%s384 + $0xc] sm:$0xf]
        %v425 = vld [vmem:[%s384 + $0x10] sm:$0xf]
        %v426 = vld [vmem:[%s384 + $0x14] sm:$0xf]
        %v427 = vld [vmem:[%s384 + $0x18] sm:$0xf]
        %v428 = vld [vmem:[%s384 + $0x1c] sm:$0xf]
        %v429 = vld [vmem:[%s384 + $0x20] sm:$0xf]
        %v430 = vld [vmem:[%s384 + $0x24] sm:$0xf]
        %v431 = vld [vmem:[%s384 + $0x28] sm:$0xf]
        %v432 = vld [vmem:[%s384 + $0x2c] sm:$0xf]
        %v433 = vld [vmem:[%s384 + $0x30] sm:$0xf]
        %v434 = vld [vmem:[%s384 + $0x34] sm:$0xf]
        %v435 = vld [vmem:[%s384 + $0x38] sm:$0xf]
        %v436 = vld [vmem:[%s384 + $0x3c] sm:$0xf]
        %v437 = vld [vmem:[%s384 + $0x40] sm:$0xf]
        %v438 = vld [vmem:[%s384 + $0x44] sm:$0xf]
        %v439 = vld [vmem:[%s384 + $0x48] sm:$0xf]
        %v440 = vld [vmem:[%s384 + $0x4c] sm:$0xf]
        %v441 = vld [vmem:[%s384 + $0x50] sm:$0xf]
        %v442 = vld [vmem:[%s384 + $0x54] sm:$0xf]
        %v443 = vld [vmem:[%s384 + $0x58] sm:$0xf]
        %v444 = vld [vmem:[%s384 + $0x5c] sm:$0xf]
        %v445 = vld [vmem:[%s384 + $0x60] sm:$0xf]
        %v446 = vld [vmem:[%s384 + $0x64] sm:$0xf]
        %v447 = vld [vmem:[%s384 + $0x68] sm:$0xf]
        %v448 = vld [vmem:[%s384 + $0x6c] sm:$0xf]
        %v449 = vld [vmem:[%s384 + $0x70] sm:$0xf]
        %v450 = vld [vmem:[%s384 + $0x74] sm:$0xf]
        %v451 = vld [vmem:[%s384 + $0x78] sm:$0xf]
        %v452 = vld [vmem:[%s384 + $0x7c] sm:$0xf]
        %v453 = vld [vmem:[%s384 + $0x80] sm:$0xf]
        %v454 = vld [vmem:[%s384 + $0x84] sm:$0xf]
        %v455 = vld [vmem:[%s384 + $0x88] sm:$0xf]
        %v456 = vld [vmem:[%s384 + $0x8c] sm:$0xf]
        %v457 = vld [vmem:[%s384 + $0x90] sm:$0xf]
        %v458 = vld [vmem:[%s384 + $0x94] sm:$0xf]
        %v459 = vld [vmem:[%s384 + $0x98] sm:$0xf]
        %v460 = vld [vmem:[%s384 + $0x9c] sm:$0xf]
        %v461 = vld [vmem:[%s384 + $0xa0] sm:$0xf]
        %v462 = vld [vmem:[%s384 + $0xa4] sm:$0xf]
        %v463 = vld [vmem:[%s384 + $0xa8] sm:$0xf]
        %v464 = vld [vmem:[%s398] sm:$0xf]
        %v465 = vld [vmem:[%s398 + $0x4] sm:$0xf]
        %v466 = vld [vmem:[%s398 + $0x8] sm:$0xf]
        %v467 = vld [vmem:[%s398 + $0xc] sm:$0xf]
        %v468 = vld [vmem:[%s398 + $0x10] sm:$0xf]
        %v469 = vld [vmem:[%s398 + $0x14] sm:$0xf]
        %v470 = vld [vmem:[%s398 + $0x18] sm:$0xf]
        %v471 = vld [vmem:[%s398 + $0x1c] sm:$0xf]
        %v472 = vld [vmem:[%s398 + $0x20] sm:$0xf]
        %v473 = vld [vmem:[%s398 + $0x24] sm:$0xf]
        %v474 = vld [vmem:[%s398 + $0x28] sm:$0xf]
        %v475 = vld [vmem:[%s398 + $0x2c] sm:$0xf]
        %v476 = vld [vmem:[%s398 + $0x30] sm:$0xf]
        %v477 = vld [vmem:[%s398 + $0x34] sm:$0xf]
        %v478 = vld [vmem:[%s398 + $0x38] sm:$0xf]
        %v479 = vld [vmem:[%s398 + $0x3c] sm:$0xf]
        %v480 = vld [vmem:[%s398 + $0x40] sm:$0xf]
        %v481 = vld [vmem:[%s398 + $0x44] sm:$0xf]
        %v482 = vld [vmem:[%s398 + $0x48] sm:$0xf]
        %v483 = vld [vmem:[%s398 + $0x4c] sm:$0xf]
        %v484 = vld [vmem:[%s398 + $0x50] sm:$0xf]
        %v485 = vld [vmem:[%s398 + $0x54] sm:$0xf]
        %v486 = vld [vmem:[%s398 + $0x58] sm:$0xf]
        %v487 = vld [vmem:[%s398 + $0x5c] sm:$0xf]
        %v488 = vld [vmem:[%s398 + $0x60] sm:$0xf]
        %v489 = vld [vmem:[%s398 + $0x64] sm:$0xf]
        %v490 = vld [vmem:[%s398 + $0x68] sm:$0xf]
        %v491 = vld [vmem:[%s398 + $0x6c] sm:$0xf]
        %v492 = vld [vmem:[%s398 + $0x70] sm:$0xf]
        %v493 = vld [vmem:[%s398 + $0x74] sm:$0xf]
        %v494 = vld [vmem:[%s398 + $0x78] sm:$0xf]
        %v495 = vld [vmem:[%s398 + $0x7c] sm:$0xf]
        %v496 = vld [vmem:[%s398 + $0x80] sm:$0xf]
        %v497 = vld [vmem:[%s398 + $0x84] sm:$0xf]
        %v498 = vld [vmem:[%s398 + $0x88] sm:$0xf]
        %v499 = vld [vmem:[%s398 + $0x8c] sm:$0xf]
        %v500 = vld [vmem:[%s398 + $0x90] sm:$0xf]
        %v501 = vld [vmem:[%s398 + $0x94] sm:$0xf]
        %v502 = vld [vmem:[%s398 + $0x98] sm:$0xf]
        %v503 = vld [vmem:[%s398 + $0x9c] sm:$0xf]
        %v504 = vld [vmem:[%s398 + $0xa0] sm:$0xf]
        %v505 = vld [vmem:[%s398 + $0xa4] sm:$0xf]
        %v506 = vld [vmem:[%s398 + $0xa8] sm:$0xf]
        %v507 = vadd.bf16 %v421, %v464
        %v508 = vadd.bf16 %v422, %v465
        %v509 = vadd.bf16 %v423, %v466
        %v510 = vadd.bf16 %v424, %v467
        %v511 = vadd.bf16 %v425, %v468
        %v512 = vadd.bf16 %v426, %v469
        %v513 = vadd.bf16 %v427, %v470
        %v514 = vadd.bf16 %v428, %v471
        %v515 = vadd.bf16 %v429, %v472
        %v516 = vadd.bf16 %v430, %v473
        %v517 = vadd.bf16 %v431, %v474
        %v518 = vadd.bf16 %v432, %v475
        %v519 = vadd.bf16 %v433, %v476
        %v520 = vadd.bf16 %v434, %v477
        %v521 = vadd.bf16 %v435, %v478
        %v522 = vadd.bf16 %v436, %v479
        %v523 = vadd.bf16 %v437, %v480
        %v524 = vadd.bf16 %v438, %v481
        %v525 = vadd.bf16 %v439, %v482
        %v526 = vadd.bf16 %v440, %v483
        %v527 = vadd.bf16 %v441, %v484
        %v528 = vadd.bf16 %v442, %v485
        %v529 = vadd.bf16 %v443, %v486
        %v530 = vadd.bf16 %v444, %v487
        %v531 = vadd.bf16 %v445, %v488
        %v532 = vadd.bf16 %v446, %v489
        %v533 = vadd.bf16 %v447, %v490
        %v534 = vadd.bf16 %v448, %v491
        %v535 = vadd.bf16 %v449, %v492
        %v536 = vadd.bf16 %v450, %v493
        %v537 = vadd.bf16 %v451, %v494
        %v538 = vadd.bf16 %v452, %v495
        %v539 = vadd.bf16 %v453, %v496
        %v540 = vadd.bf16 %v454, %v497
        %v541 = vadd.bf16 %v455, %v498
        %v542 = vadd.bf16 %v456, %v499
        %v543 = vadd.bf16 %v457, %v500
        %v544 = vadd.bf16 %v458, %v501
        %v545 = vadd.bf16 %v459, %v502
        %v546 = vadd.bf16 %v460, %v503
        %v547 = vadd.bf16 %v461, %v504
        %v548 = vadd.bf16 %v462, %v505
        %v549 = vadd.bf16 %v463, %v506
        %v550 = vld [vmem:[%s2] sm:$0xf]
        %v551 = vld [vmem:[%s2 + $0x4] sm:$0xf]
        %v552 = vld [vmem:[%s2 + $0x8] sm:$0xf]
        %v553 = vld [vmem:[%s2 + $0xc] sm:$0xf]
        %v554 = vld [vmem:[%s2 + $0x10] sm:$0xf]
        %v555 = vld [vmem:[%s2 + $0x14] sm:$0xf]
        %v556 = vld [vmem:[%s2 + $0x18] sm:$0xf]
        %v557 = vld [vmem:[%s2 + $0x1c] sm:$0xf]
        %v558 = vld [vmem:[%s2 + $0x20] sm:$0xf]
        %v559 = vld [vmem:[%s2 + $0x24] sm:$0xf]
        %v560 = vld [vmem:[%s2 + $0x28] sm:$0xf]
        %v561 = vld [vmem:[%s2 + $0x2c] sm:$0xf]
        %v562 = vld [vmem:[%s2 + $0x30] sm:$0xf]
        %v563 = vld [vmem:[%s2 + $0x34] sm:$0xf]
        %v564 = vld [vmem:[%s2 + $0x38] sm:$0xf]
        %v565 = vld [vmem:[%s2 + $0x3c] sm:$0xf]
        %v566 = vld [vmem:[%s3] sm:$0x1]
        %v568 = vlaneseq
        %v569 = vshrl.u32 %v568, 7
        %v570 = vsub.s32 0, %v569
        %v571 = vrot.slane %v566, %v570
        %v616 = vunpack.c.l.b16 %v421
        %v617 = vunpack.c.l.b16 %v422
        %v618 = vunpack.c.l.b16 %v423
        %v619 = vunpack.c.l.b16 %v424
        %v620 = vunpack.c.l.b16 %v425
        %v621 = vunpack.c.l.b16 %v426
        %v622 = vunpack.c.l.b16 %v427
        %v623 = vunpack.c.l.b16 %v428
        %v624 = vunpack.c.l.b16 %v429
        %v625 = vunpack.c.l.b16 %v430
        %v626 = vunpack.c.l.b16 %v431
        %v627 = vunpack.c.l.b16 %v432
        %v628 = vunpack.c.l.b16 %v433
        %v629 = vunpack.c.l.b16 %v434
        %v630 = vunpack.c.l.b16 %v435
        %v631 = vunpack.c.l.b16 %v436
        %v632 = vunpack.c.l.b16 %v437
        %v633 = vunpack.c.l.b16 %v438
        %v634 = vunpack.c.l.b16 %v439
        %v635 = vunpack.c.l.b16 %v440
        %v636 = vunpack.c.l.b16 %v441
        %v637 = vunpack.c.l.b16 %v442
        %v638 = vunpack.c.l.b16 %v443
        %v639 = vunpack.c.l.b16 %v444
        %v640 = vunpack.c.l.b16 %v445
        %v641 = vunpack.c.l.b16 %v446
        %v642 = vunpack.c.l.b16 %v447
        %v643 = vunpack.c.l.b16 %v448
        %v644 = vunpack.c.l.b16 %v449
        %v645 = vunpack.c.l.b16 %v450
        %v646 = vunpack.c.l.b16 %v451
        %v647 = vunpack.c.l.b16 %v452
        %v648 = vunpack.c.l.b16 %v453
        %v649 = vunpack.c.l.b16 %v454
        %v650 = vunpack.c.l.b16 %v455
        %v651 = vunpack.c.l.b16 %v456
        %v652 = vunpack.c.l.b16 %v457
        %v653 = vunpack.c.l.b16 %v458
        %v654 = vunpack.c.l.b16 %v459
        %v655 = vunpack.c.l.b16 %v460
        %v656 = vunpack.c.l.b16 %v461
        %v657 = vunpack.c.l.b16 %v462
        %v658 = vunpack.c.l.b16 %v463
        %v659 = vpack.c.b16 %v617, %v616
        %v660 = vpack.c.b16 %v619, %v618
        %v661 = vpack.c.b16 %v621, %v620
        %v662 = vpack.c.b16 %v623, %v622
        %v663 = vpack.c.b16 %v625, %v624
        %v664 = vpack.c.b16 %v627, %v626
        %v665 = vpack.c.b16 %v629, %v628
        %v666 = vpack.c.b16 %v631, %v630
        %v667 = vpack.c.b16 %v633, %v632
        %v668 = vpack.c.b16 %v635, %v634
        %v669 = vpack.c.b16 %v637, %v636
        %v670 = vpack.c.b16 %v639, %v638
        %v671 = vpack.c.b16 %v641, %v640
        %v672 = vpack.c.b16 %v643, %v642
        %v673 = vpack.c.b16 %v645, %v644
        %v674 = vpack.c.b16 %v647, %v646
        %v675 = vpack.c.b16 %v649, %v648
        %v676 = vpack.c.b16 %v651, %v650
        %v677 = vpack.c.b16 %v653, %v652
        %v678 = vpack.c.b16 %v655, %v654
        %v679 = vpack.c.b16 %v657, %v656
        %v680 = vpack.c.b16 %v658, %v658
        %v719 = vunpack.c.l.b16 %v550
        %v720 = vunpack.c.l.b16 %v551
        %v721 = vunpack.c.l.b16 %v552
        %v722 = vunpack.c.l.b16 %v553
        %v723 = vunpack.c.l.b16 %v554
        %v724 = vunpack.c.l.b16 %v555
        %v725 = vunpack.c.l.b16 %v556
        %v726 = vunpack.c.l.b16 %v557
        %v727 = vunpack.c.l.b16 %v558
        %v728 = vunpack.c.l.b16 %v559
        %v729 = vunpack.c.l.b16 %v560
        %v730 = vunpack.c.l.b16 %v561
        %v731 = vunpack.c.l.b16 %v562
        %v732 = vunpack.c.l.b16 %v563
        %v733 = vunpack.c.l.b16 %v564
        %v734 = vunpack.c.l.b16 %v565
        %v735 = vpack.c.b16 %v720, %v719
        %v736 = vpack.c.b16 %v722, %v721
        %v737 = vpack.c.b16 %v724, %v723
        %v738 = vpack.c.b16 %v726, %v725
        %v739 = vpack.c.b16 %v728, %v727
        %v740 = vpack.c.b16 %v730, %v729
        %v741 = vpack.c.b16 %v732, %v731
        %v742 = vpack.c.b16 %v734, %v733
        %751 = vmatprep.subr.bf16.mxu0 0
        %752 = vmatpush1.bf16.msra.mxu0 %v742
        %753 = vmatprep.subr.bf16.mxu0 0
        %754 = vmatpush1.bf16.msra.mxu0 %v741
        %755 = vmatprep.subr.bf16.mxu0 0
        %756 = vmatpush1.bf16.msra.mxu0 %v740
        %757 = vmatprep.subr.bf16.mxu0 0
        %758 = vmatpush1.bf16.msra.mxu0 %v739
        %759 = vmatprep.subr.bf16.mxu0 0
        %760 = vmatpush1.bf16.msra.mxu0 %v738
        %761 = vmatprep.subr.bf16.mxu0 0
        %762 = vmatpush1.bf16.msra.mxu0 %v737
        %763 = vmatprep.subr.bf16.mxu0 0
        %764 = vmatpush1.bf16.msra.mxu0 %v736
        %765 = vmatprep.subr.bf16.mxu0 0
        %766 = vmatpush1.bf16.msra.mxu0 %v735
        %767 = vmatprep.subr.bf16.mxu0 0
        %768 = vmatpush2.bf16.msra.mxu0 0
        %769 = vmatprep.subr.bf16.mxu0 0
        %770 = vmatpush2.bf16.msra.mxu0 0
        %771 = vmatprep.subr.bf16.mxu0 0
        %772 = vmatpush2.bf16.msra.mxu0 0
        %773 = vmatprep.subr.bf16.mxu0 0
        %774 = vmatpush2.bf16.msra.mxu0 0
        %775 = vmatprep.subr.bf16.mxu0 0
        %776 = vmatpush2.bf16.msra.mxu0 0
        %777 = vmatprep.subr.bf16.mxu0 0
        %778 = vmatpush2.bf16.msra.mxu0 0
        %779 = vmatprep.subr.bf16.mxu0 0
        %780 = vmatpush2.bf16.msra.mxu0 0
        %781 = vmatprep.subr.bf16.mxu0 0
        %782 = vmatpush2.bf16.msra.mxu0 0
        %783 = vmatprep.mubr.bf16.mxu0 0
        %784 = vmatmul.mubr.bf16.gmra.mxu0 %v659
        %v785 = vpop.f32.mrf.mxu0
        %v786 = vadd.f32 %v571, %v785
        %v787 = vpop.f32.mrf.mxu0
        %v788 = vpop.f32.mrf.mxu0
        %v789 = vadd.f32 %v571, %v788
        %v790 = vpop.f32.mrf.mxu0
        %791 = vmatprep.mubr.bf16.mxu0 0
        %792 = vmatmul.mubr.bf16.gmra.mxu0 %v660
        %v793 = vpop.f32.mrf.mxu0
        %v794 = vadd.f32 %v571, %v793
        %v795 = vpop.f32.mrf.mxu0
        %v796 = vpop.f32.mrf.mxu0
        %v797 = vadd.f32 %v571, %v796
        %v798 = vpop.f32.mrf.mxu0
        %799 = vmatprep.mubr.bf16.mxu0 0
        %800 = vmatmul.mubr.bf16.gmra.mxu0 %v661
        %v801 = vpop.f32.mrf.mxu0
        %v802 = vadd.f32 %v571, %v801
        %v803 = vpop.f32.mrf.mxu0
        %v804 = vpop.f32.mrf.mxu0
        %v805 = vadd.f32 %v571, %v804
        %v806 = vpop.f32.mrf.mxu0
        %807 = vmatprep.mubr.bf16.mxu0 0
        %808 = vmatmul.mubr.bf16.gmra.mxu0 %v662
        %v809 = vpop.f32.mrf.mxu0
        %v810 = vadd.f32 %v571, %v809
        %v811 = vpop.f32.mrf.mxu0
        %v812 = vpop.f32.mrf.mxu0
        %v813 = vadd.f32 %v571, %v812
        %v814 = vpop.f32.mrf.mxu0
        %815 = vmatprep.mubr.bf16.mxu0 0
        %816 = vmatmul.mubr.bf16.gmra.mxu0 %v663
        %v817 = vpop.f32.mrf.mxu0
        %v818 = vadd.f32 %v571, %v817
        %v819 = vpop.f32.mrf.mxu0
        %v820 = vpop.f32.mrf.mxu0
        %v821 = vadd.f32 %v571, %v820
        %v822 = vpop.f32.mrf.mxu0
        %823 = vmatprep.mubr.bf16.mxu0 0
        %824 = vmatmul.mubr.bf16.gmra.mxu0 %v664
        %v825 = vpop.f32.mrf.mxu0
        %v826 = vadd.f32 %v571, %v825
        %v827 = vpop.f32.mrf.mxu0
        %v828 = vpop.f32.mrf.mxu0
        %v829 = vadd.f32 %v571, %v828
        %v830 = vpop.f32.mrf.mxu0
        %831 = vmatprep.mubr.bf16.mxu0 0
        %832 = vmatmul.mubr.bf16.gmra.mxu0 %v665
        %v833 = vpop.f32.mrf.mxu0
        %v834 = vadd.f32 %v571, %v833
        %v835 = vpop.f32.mrf.mxu0
        %v836 = vpop.f32.mrf.mxu0
        %v837 = vadd.f32 %v571, %v836
        %v838 = vpop.f32.mrf.mxu0
        %839 = vmatprep.mubr.bf16.mxu0 0
        %840 = vmatmul.mubr.bf16.gmra.mxu0 %v666
        %v841 = vpop.f32.mrf.mxu0
        %v842 = vadd.f32 %v571, %v841
        %v843 = vpop.f32.mrf.mxu0
        %v844 = vpop.f32.mrf.mxu0
        %v845 = vadd.f32 %v571, %v844
        %v846 = vpop.f32.mrf.mxu0
        %847 = vmatprep.mubr.bf16.mxu0 0
        %848 = vmatmul.mubr.bf16.gmra.mxu0 %v667
        %v849 = vpop.f32.mrf.mxu0
        %v850 = vadd.f32 %v571, %v849
        %v851 = vpop.f32.mrf.mxu0
        %v852 = vpop.f32.mrf.mxu0
        %v853 = vadd.f32 %v571, %v852
        %v854 = vpop.f32.mrf.mxu0
        %855 = vmatprep.mubr.bf16.mxu0 0
        %856 = vmatmul.mubr.bf16.gmra.mxu0 %v668
        %v857 = vpop.f32.mrf.mxu0
        %v858 = vadd.f32 %v571, %v857
        %v859 = vpop.f32.mrf.mxu0
        %v860 = vpop.f32.mrf.mxu0
        %v861 = vadd.f32 %v571, %v860
        %v862 = vpop.f32.mrf.mxu0
        %863 = vmatprep.mubr.bf16.mxu0 0
        %864 = vmatmul.mubr.bf16.gmra.mxu0 %v669
        %v865 = vpop.f32.mrf.mxu0
        %v866 = vadd.f32 %v571, %v865
        %v867 = vpop.f32.mrf.mxu0
        %v868 = vpop.f32.mrf.mxu0
        %v869 = vadd.f32 %v571, %v868
        %v870 = vpop.f32.mrf.mxu0
        %871 = vmatprep.mubr.bf16.mxu0 0
        %872 = vmatmul.mubr.bf16.gmra.mxu0 %v670
        %v873 = vpop.f32.mrf.mxu0
        %v874 = vadd.f32 %v571, %v873
        %v875 = vpop.f32.mrf.mxu0
        %v876 = vpop.f32.mrf.mxu0
        %v877 = vadd.f32 %v571, %v876
        %v878 = vpop.f32.mrf.mxu0
        %879 = vmatprep.mubr.bf16.mxu0 0
        %880 = vmatmul.mubr.bf16.gmra.mxu0 %v671
        %v881 = vpop.f32.mrf.mxu0
        %v882 = vadd.f32 %v571, %v881
        %v883 = vpop.f32.mrf.mxu0
        %v884 = vpop.f32.mrf.mxu0
        %v885 = vadd.f32 %v571, %v884
        %v886 = vpop.f32.mrf.mxu0
        %887 = vmatprep.mubr.bf16.mxu0 0
        %888 = vmatmul.mubr.bf16.gmra.mxu0 %v672
        %v889 = vpop.f32.mrf.mxu0
        %v890 = vadd.f32 %v571, %v889
        %v891 = vpop.f32.mrf.mxu0
        %v892 = vpop.f32.mrf.mxu0
        %v893 = vadd.f32 %v571, %v892
        %v894 = vpop.f32.mrf.mxu0
        %895 = vmatprep.mubr.bf16.mxu0 0
        %896 = vmatmul.mubr.bf16.gmra.mxu0 %v673
        %v897 = vpop.f32.mrf.mxu0
        %v898 = vadd.f32 %v571, %v897
        %v899 = vpop.f32.mrf.mxu0
        %v900 = vpop.f32.mrf.mxu0
        %v901 = vadd.f32 %v571, %v900
        %v902 = vpop.f32.mrf.mxu0
        %903 = vmatprep.mubr.bf16.mxu0 0
        %904 = vmatmul.mubr.bf16.gmra.mxu0 %v674
        %v905 = vpop.f32.mrf.mxu0
        %v906 = vadd.f32 %v571, %v905
        %v907 = vpop.f32.mrf.mxu0
        %v908 = vpop.f32.mrf.mxu0
        %v909 = vadd.f32 %v571, %v908
        %v910 = vpop.f32.mrf.mxu0
        %911 = vmatprep.mubr.bf16.mxu0 0
        %912 = vmatmul.mubr.bf16.gmra.mxu0 %v675
        %v913 = vpop.f32.mrf.mxu0
        %v914 = vadd.f32 %v571, %v913
        %v915 = vpop.f32.mrf.mxu0
        %v916 = vpop.f32.mrf.mxu0
        %v917 = vadd.f32 %v571, %v916
        %v918 = vpop.f32.mrf.mxu0
        %919 = vmatprep.mubr.bf16.mxu0 0
        %920 = vmatmul.mubr.bf16.gmra.mxu0 %v676
        %v921 = vpop.f32.mrf.mxu0
        %v922 = vadd.f32 %v571, %v921
        %v923 = vpop.f32.mrf.mxu0
        %v924 = vpop.f32.mrf.mxu0
        %v925 = vadd.f32 %v571, %v924
        %v926 = vpop.f32.mrf.mxu0
        %927 = vmatprep.mubr.bf16.mxu0 0
        %928 = vmatmul.mubr.bf16.gmra.mxu0 %v677
        %v929 = vpop.f32.mrf.mxu0
        %v930 = vadd.f32 %v571, %v929
        %v931 = vpop.f32.mrf.mxu0
        %v932 = vpop.f32.mrf.mxu0
        %v933 = vadd.f32 %v571, %v932
        %v934 = vpop.f32.mrf.mxu0
        %935 = vmatprep.mubr.bf16.mxu0 0
        %936 = vmatmul.mubr.bf16.gmra.mxu0 %v678
        %v937 = vpop.f32.mrf.mxu0
        %v938 = vadd.f32 %v571, %v937
        %v939 = vpop.f32.mrf.mxu0
        %v940 = vpop.f32.mrf.mxu0
        %v941 = vadd.f32 %v571, %v940
        %v942 = vpop.f32.mrf.mxu0
        %943 = vmatprep.mubr.bf16.mxu0 0
        %944 = vmatmul.mubr.bf16.gmra.mxu0 %v679
        %v945 = vpop.f32.mrf.mxu0
        %v946 = vadd.f32 %v571, %v945
        %v947 = vpop.f32.mrf.mxu0
        %v948 = vpop.f32.mrf.mxu0
        %v949 = vadd.f32 %v571, %v948
        %v950 = vpop.f32.mrf.mxu0
        %951 = vmatprep.mubr.bf16.mxu0 0
        %952 = vmatmul.mubr.bf16.gmra.mxu0 %v680
        %v953 = vpop.f32.mrf.mxu0
        %v954 = vadd.f32 %v571, %v953
        %v955 = vpop.f32.mrf.mxu0
        %v956 = vpop.f32.mrf.mxu0
        %v957 = vpop.f32.mrf.mxu0
        %958 = vdwg.mxu0
        %v959 = vpack.c.bf16 %v789, %v786
        %v960 = vpack.c.bf16 %v797, %v794
        %v961 = vpack.c.bf16 %v805, %v802
        %v962 = vpack.c.bf16 %v813, %v810
        %v963 = vpack.c.bf16 %v821, %v818
        %v964 = vpack.c.bf16 %v829, %v826
        %v965 = vpack.c.bf16 %v837, %v834
        %v966 = vpack.c.bf16 %v845, %v842
        %v967 = vpack.c.bf16 %v853, %v850
        %v968 = vpack.c.bf16 %v861, %v858
        %v969 = vpack.c.bf16 %v869, %v866
        %v970 = vpack.c.bf16 %v877, %v874
        %v971 = vpack.c.bf16 %v885, %v882
        %v972 = vpack.c.bf16 %v893, %v890
        %v973 = vpack.c.bf16 %v901, %v898
        %v974 = vpack.c.bf16 %v909, %v906
        %v975 = vpack.c.bf16 %v917, %v914
        %v976 = vpack.c.bf16 %v925, %v922
        %v977 = vpack.c.bf16 %v933, %v930
        %v978 = vpack.c.bf16 %v941, %v938
        %v979 = vpack.c.bf16 %v949, %v946
        %v980 = vpack.c.bf16 %v954, %v954
        %v1003 = vunpack.c.l.b16 %v959
        %v1004 = vunpack.c.h.b16 %v959
        %v1005 = vunpack.c.l.b16 %v960
        %v1006 = vunpack.c.h.b16 %v960
        %v1007 = vunpack.c.l.b16 %v961
        %v1008 = vunpack.c.h.b16 %v961
        %v1009 = vunpack.c.l.b16 %v962
        %v1010 = vunpack.c.h.b16 %v962
        %v1011 = vunpack.c.l.b16 %v963
        %v1012 = vunpack.c.h.b16 %v963
        %v1013 = vunpack.c.l.b16 %v964
        %v1014 = vunpack.c.h.b16 %v964
        %v1015 = vunpack.c.l.b16 %v965
        %v1016 = vunpack.c.h.b16 %v965
        %v1017 = vunpack.c.l.b16 %v966
        %v1018 = vunpack.c.h.b16 %v966
        %v1019 = vunpack.c.l.b16 %v967
        %v1020 = vunpack.c.h.b16 %v967
        %v1021 = vunpack.c.l.b16 %v968
        %v1022 = vunpack.c.h.b16 %v968
        %v1023 = vunpack.c.l.b16 %v969
        %v1024 = vunpack.c.h.b16 %v969
        %v1025 = vunpack.c.l.b16 %v970
        %v1026 = vunpack.c.h.b16 %v970
        %v1027 = vunpack.c.l.b16 %v971
        %v1028 = vunpack.c.h.b16 %v971
        %v1029 = vunpack.c.l.b16 %v972
        %v1030 = vunpack.c.h.b16 %v972
        %v1031 = vunpack.c.l.b16 %v973
        %v1032 = vunpack.c.h.b16 %v973
        %v1033 = vunpack.c.l.b16 %v974
        %v1034 = vunpack.c.h.b16 %v974
        %v1035 = vunpack.c.l.b16 %v975
        %v1036 = vunpack.c.h.b16 %v975
        %v1037 = vunpack.c.l.b16 %v976
        %v1038 = vunpack.c.h.b16 %v976
        %v1039 = vunpack.c.l.b16 %v977
        %v1040 = vunpack.c.h.b16 %v977
        %v1041 = vunpack.c.l.b16 %v978
        %v1042 = vunpack.c.h.b16 %v978
        %v1043 = vunpack.c.l.b16 %v979
        %v1044 = vunpack.c.h.b16 %v979
        %v1045 = vunpack.c.l.b16 %v980
        %v1046 = vpack.c.b16 %v1003, %v1003
        %v1047 = vpack.c.b16 %v1004, %v1004
        %v1048 = vpack.c.b16 %v1005, %v1005
        %v1049 = vpack.c.b16 %v1006, %v1006
        %v1050 = vpack.c.b16 %v1007, %v1007
        %v1051 = vpack.c.b16 %v1008, %v1008
        %v1052 = vpack.c.b16 %v1009, %v1009
        %v1053 = vpack.c.b16 %v1010, %v1010
        %v1054 = vpack.c.b16 %v1011, %v1011
        %v1055 = vpack.c.b16 %v1012, %v1012
        %v1056 = vpack.c.b16 %v1013, %v1013
        %v1057 = vpack.c.b16 %v1014, %v1014
        %v1058 = vpack.c.b16 %v1015, %v1015
        %v1059 = vpack.c.b16 %v1016, %v1016
        %v1060 = vpack.c.b16 %v1017, %v1017
        %v1061 = vpack.c.b16 %v1018, %v1018
        %v1062 = vpack.c.b16 %v1019, %v1019
        %v1063 = vpack.c.b16 %v1020, %v1020
        %v1064 = vpack.c.b16 %v1021, %v1021
        %v1065 = vpack.c.b16 %v1022, %v1022
        %v1066 = vpack.c.b16 %v1023, %v1023
        %v1067 = vpack.c.b16 %v1024, %v1024
        %v1068 = vpack.c.b16 %v1025, %v1025
        %v1069 = vpack.c.b16 %v1026, %v1026
        %v1070 = vpack.c.b16 %v1027, %v1027
        %v1071 = vpack.c.b16 %v1028, %v1028
        %v1072 = vpack.c.b16 %v1029, %v1029
        %v1073 = vpack.c.b16 %v1030, %v1030
        %v1074 = vpack.c.b16 %v1031, %v1031
        %v1075 = vpack.c.b16 %v1032, %v1032
        %v1076 = vpack.c.b16 %v1033, %v1033
        %v1077 = vpack.c.b16 %v1034, %v1034
        %v1078 = vpack.c.b16 %v1035, %v1035
        %v1079 = vpack.c.b16 %v1036, %v1036
        %v1080 = vpack.c.b16 %v1037, %v1037
        %v1081 = vpack.c.b16 %v1038, %v1038
        %v1082 = vpack.c.b16 %v1039, %v1039
        %v1083 = vpack.c.b16 %v1040, %v1040
        %v1084 = vpack.c.b16 %v1041, %v1041
        %v1085 = vpack.c.b16 %v1042, %v1042
        %v1086 = vpack.c.b16 %v1043, %v1043
        %v1087 = vpack.c.b16 %v1044, %v1044
        %v1088 = vpack.c.b16 %v1045, %v1045
        %1132 = vst [vmem:[%s363] sm:$0xf] %v1046
        %1133 = vst [vmem:[%s363 + $0x4] sm:$0xf] %v1047
        %1134 = vst [vmem:[%s363 + $0x8] sm:$0xf] %v1048
        %1135 = vst [vmem:[%s363 + $0xc] sm:$0xf] %v1049
        %1136 = vst [vmem:[%s363 + $0x10] sm:$0xf] %v1050
        %1137 = vst [vmem:[%s363 + $0x14] sm:$0xf] %v1051
        %1138 = vst [vmem:[%s363 + $0x18] sm:$0xf] %v1052
        %1139 = vst [vmem:[%s363 + $0x1c] sm:$0xf] %v1053
        %1140 = vst [vmem:[%s363 + $0x20] sm:$0xf] %v1054
        %1141 = vst [vmem:[%s363 + $0x24] sm:$0xf] %v1055
        %1142 = vst [vmem:[%s363 + $0x28] sm:$0xf] %v1056
        %1143 = vst [vmem:[%s363 + $0x2c] sm:$0xf] %v1057
        %1144 = vst [vmem:[%s363 + $0x30] sm:$0xf] %v1058
        %1145 = vst [vmem:[%s363 + $0x34] sm:$0xf] %v1059
        %1146 = vst [vmem:[%s363 + $0x38] sm:$0xf] %v1060
        %1147 = vst [vmem:[%s363 + $0x3c] sm:$0xf] %v1061
        %1148 = vst [vmem:[%s363 + $0x40] sm:$0xf] %v1062
        %1149 = vst [vmem:[%s363 + $0x44] sm:$0xf] %v1063
        %1150 = vst [vmem:[%s363 + $0x48] sm:$0xf] %v1064
        %1151 = vst [vmem:[%s363 + $0x4c] sm:$0xf] %v1065
        %1152 = vst [vmem:[%s363 + $0x50] sm:$0xf] %v1066
        %1153 = vst [vmem:[%s363 + $0x54] sm:$0xf] %v1067
        %1154 = vst [vmem:[%s363 + $0x58] sm:$0xf] %v1068
        %1155 = vst [vmem:[%s363 + $0x5c] sm:$0xf] %v1069
        %1156 = vst [vmem:[%s363 + $0x60] sm:$0xf] %v1070
        %1157 = vst [vmem:[%s363 + $0x64] sm:$0xf] %v1071
        %1158 = vst [vmem:[%s363 + $0x68] sm:$0xf] %v1072
        %1159 = vst [vmem:[%s363 + $0x6c] sm:$0xf] %v1073
        %1160 = vst [vmem:[%s363 + $0x70] sm:$0xf] %v1074
        %1161 = vst [vmem:[%s363 + $0x74] sm:$0xf] %v1075
        %1162 = vst [vmem:[%s363 + $0x78] sm:$0xf] %v1076
        %1163 = vst [vmem:[%s363 + $0x7c] sm:$0xf] %v1077
        %1164 = vst [vmem:[%s363 + $0x80] sm:$0xf] %v1078
        %1165 = vst [vmem:[%s363 + $0x84] sm:$0xf] %v1079
        %1166 = vst [vmem:[%s363 + $0x88] sm:$0xf] %v1080
        %1167 = vst [vmem:[%s363 + $0x8c] sm:$0xf] %v1081
        %1168 = vst [vmem:[%s363 + $0x90] sm:$0xf] %v1082
        %1169 = vst [vmem:[%s363 + $0x94] sm:$0xf] %v1083
        %1170 = vst [vmem:[%s363 + $0x98] sm:$0xf] %v1084
        %1171 = vst [vmem:[%s363 + $0x9c] sm:$0xf] %v1085
        %1172 = vst [vmem:[%s363 + $0xa0] sm:$0xf] %v1086
        %1173 = vst [vmem:[%s363 + $0xa4] sm:$0xf] %v1087
        %1174 = vst [vmem:[%s363 + $0xa8] sm:$0xf] %v1088
        %v1175 = vld [vmem:[%s4] sm:$0xff]
        %v1176 = vld [vmem:[%s4 + $0x8] sm:$0xf]
        %v1177 = vld [vmem:[%s4 + $0xc] sm:$0xff]
        %v1178 = vld [vmem:[%s4 + $0x14] sm:$0xf]
        %v1179 = vld [vmem:[%s4 + $0x18] sm:$0xff]
        %v1180 = vld [vmem:[%s4 + $0x20] sm:$0xf]
        %v1181 = vld [vmem:[%s4 + $0x24] sm:$0xff]
        %v1182 = vld [vmem:[%s4 + $0x2c] sm:$0xf]
        %v1183 = vld [vmem:[%s4 + $0x30] sm:$0xff]
        %v1184 = vld [vmem:[%s4 + $0x38] sm:$0xf]
        %v1185 = vld [vmem:[%s4 + $0x3c] sm:$0xff]
        %v1186 = vld [vmem:[%s4 + $0x44] sm:$0xf]
        %v1187 = vld [vmem:[%s4 + $0x48] sm:$0xff]
        %v1188 = vld [vmem:[%s4 + $0x50] sm:$0xf]
        %v1189 = vld [vmem:[%s4 + $0x54] sm:$0xff]
        %v1190 = vld [vmem:[%s4 + $0x5c] sm:$0xf]
        %v1191 = vld [vmem:[%s4 + $0x60] sm:$0xff]
        %v1192 = vld [vmem:[%s4 + $0x68] sm:$0xf]
        %v1193 = vld [vmem:[%s4 + $0x6c] sm:$0xff]
        %v1194 = vld [vmem:[%s4 + $0x74] sm:$0xf]
        %v1195 = vld [vmem:[%s4 + $0x78] sm:$0xff]
        %v1196 = vld [vmem:[%s4 + $0x80] sm:$0xf]
        %v1197 = vld [vmem:[%s4 + $0x84] sm:$0xff]
        %v1198 = vld [vmem:[%s4 + $0x8c] sm:$0xf]
        %v1199 = vld [vmem:[%s4 + $0x90] sm:$0xff]
        %v1200 = vld [vmem:[%s4 + $0x98] sm:$0xf]
        %v1201 = vld [vmem:[%s4 + $0x9c] sm:$0xff]
        %v1202 = vld [vmem:[%s4 + $0xa4] sm:$0xf]
        %v1203 = vld [vmem:[%s4 + $0xa8] sm:$0xff]
        %v1204 = vld [vmem:[%s4 + $0xb0] sm:$0xf]
        %v1205 = vld [vmem:[%s4 + $0xb4] sm:$0xff]
        %v1206 = vld [vmem:[%s4 + $0xbc] sm:$0xf]
        %v1207 = vld [vmem:[%s5] sm:$0x7]
        %v1209 = vlaneseq
        %v1210 = vshrl.u32 %v1209, 7
        %v1211 = vsub.s32 0, %v1210
        %v1212 = vrot.slane %v1207, %v1211
        %v1213 = vlaneseq
        %v1214 = vshrl.u32 %v1213, 7
        %v1215 = vsub.s32 1, %v1214
        %v1216 = vrot.slane %v1207, %v1215
        %v1217 = vlaneseq
        %v1218 = vshrl.u32 %v1217, 7
        %v1219 = vsub.s32 2, %v1218
        %v1220 = vrot.slane %v1207, %v1219
        %v1267 = vunpack.c.l.b16 %v507
        %v1268 = vunpack.c.l.b16 %v508
        %v1269 = vunpack.c.l.b16 %v509
        %v1270 = vunpack.c.l.b16 %v510
        %v1271 = vunpack.c.l.b16 %v511
        %v1272 = vunpack.c.l.b16 %v512
        %v1273 = vunpack.c.l.b16 %v513
        %v1274 = vunpack.c.l.b16 %v514
        %v1275 = vunpack.c.l.b16 %v515
        %v1276 = vunpack.c.l.b16 %v516
        %v1277 = vunpack.c.l.b16 %v517
        %v1278 = vunpack.c.l.b16 %v518
        %v1279 = vunpack.c.l.b16 %v519
        %v1280 = vunpack.c.l.b16 %v520
        %v1281 = vunpack.c.l.b16 %v521
        %v1282 = vunpack.c.l.b16 %v522
        %v1283 = vunpack.c.l.b16 %v523
        %v1284 = vunpack.c.l.b16 %v524
        %v1285 = vunpack.c.l.b16 %v525
        %v1286 = vunpack.c.l.b16 %v526
        %v1287 = vunpack.c.l.b16 %v527
        %v1288 = vunpack.c.l.b16 %v528
        %v1289 = vunpack.c.l.b16 %v529
        %v1290 = vunpack.c.l.b16 %v530
        %v1291 = vunpack.c.l.b16 %v531
        %v1292 = vunpack.c.l.b16 %v532
        %v1293 = vunpack.c.l.b16 %v533
        %v1294 = vunpack.c.l.b16 %v534
        %v1295 = vunpack.c.l.b16 %v535
        %v1296 = vunpack.c.l.b16 %v536
        %v1297 = vunpack.c.l.b16 %v537
        %v1298 = vunpack.c.l.b16 %v538
        %v1299 = vunpack.c.l.b16 %v539
        %v1300 = vunpack.c.l.b16 %v540
        %v1301 = vunpack.c.l.b16 %v541
        %v1302 = vunpack.c.l.b16 %v542
        %v1303 = vunpack.c.l.b16 %v543
        %v1304 = vunpack.c.l.b16 %v544
        %v1305 = vunpack.c.l.b16 %v545
        %v1306 = vunpack.c.l.b16 %v546
        %v1307 = vunpack.c.l.b16 %v547
        %v1308 = vunpack.c.l.b16 %v548
        %v1309 = vunpack.c.l.b16 %v549
        %v1310 = vpack.c.b16 %v1268, %v1267
        %v1311 = vpack.c.b16 %v1270, %v1269
        %v1312 = vpack.c.b16 %v1272, %v1271
        %v1313 = vpack.c.b16 %v1274, %v1273
        %v1314 = vpack.c.b16 %v1276, %v1275
        %v1315 = vpack.c.b16 %v1278, %v1277
        %v1316 = vpack.c.b16 %v1280, %v1279
        %v1317 = vpack.c.b16 %v1282, %v1281
        %v1318 = vpack.c.b16 %v1284, %v1283
        %v1319 = vpack.c.b16 %v1286, %v1285
        %v1320 = vpack.c.b16 %v1288, %v1287
        %v1321 = vpack.c.b16 %v1290, %v1289
        %v1322 = vpack.c.b16 %v1292, %v1291
        %v1323 = vpack.c.b16 %v1294, %v1293
        %v1324 = vpack.c.b16 %v1296, %v1295
        %v1325 = vpack.c.b16 %v1298, %v1297
        %v1326 = vpack.c.b16 %v1300, %v1299
        %v1327 = vpack.c.b16 %v1302, %v1301
        %v1328 = vpack.c.b16 %v1304, %v1303
        %v1329 = vpack.c.b16 %v1306, %v1305
        %v1330 = vpack.c.b16 %v1308, %v1307
        %v1331 = vpack.c.b16 %v1309, %v1309
        %v1386 = vunpack.c.l.b16 %v1175
        %v1387 = vunpack.c.h.b16 %v1175
        %v1388 = vunpack.c.l.b16 %v1176
        %v1389 = vunpack.c.l.b16 %v1177
        %v1390 = vunpack.c.h.b16 %v1177
        %v1391 = vunpack.c.l.b16 %v1178
        %v1392 = vunpack.c.l.b16 %v1179
        %v1393 = vunpack.c.h.b16 %v1179
        %v1394 = vunpack.c.l.b16 %v1180
        %v1395 = vunpack.c.l.b16 %v1181
        %v1396 = vunpack.c.h.b16 %v1181
        %v1397 = vunpack.c.l.b16 %v1182
        %v1398 = vunpack.c.l.b16 %v1183
        %v1399 = vunpack.c.h.b16 %v1183
        %v1400 = vunpack.c.l.b16 %v1184
        %v1401 = vunpack.c.l.b16 %v1185
        %v1402 = vunpack.c.h.b16 %v1185
        %v1403 = vunpack.c.l.b16 %v1186
        %v1404 = vunpack.c.l.b16 %v1187
        %v1405 = vunpack.c.h.b16 %v1187
        %v1406 = vunpack.c.l.b16 %v1188
        %v1407 = vunpack.c.l.b16 %v1189
        %v1408 = vunpack.c.h.b16 %v1189
        %v1409 = vunpack.c.l.b16 %v1190
        %v1410 = vunpack.c.l.b16 %v1191
        %v1411 = vunpack.c.h.b16 %v1191
        %v1412 = vunpack.c.l.b16 %v1192
        %v1413 = vunpack.c.l.b16 %v1193
        %v1414 = vunpack.c.h.b16 %v1193
        %v1415 = vunpack.c.l.b16 %v1194
        %v1416 = vunpack.c.l.b16 %v1195
        %v1417 = vunpack.c.h.b16 %v1195
        %v1418 = vunpack.c.l.b16 %v1196
        %v1419 = vunpack.c.l.b16 %v1197
        %v1420 = vunpack.c.h.b16 %v1197
        %v1421 = vunpack.c.l.b16 %v1198
        %v1422 = vunpack.c.l.b16 %v1199
        %v1423 = vunpack.c.h.b16 %v1199
        %v1424 = vunpack.c.l.b16 %v1200
        %v1425 = vunpack.c.l.b16 %v1201
        %v1426 = vunpack.c.h.b16 %v1201
        %v1427 = vunpack.c.l.b16 %v1202
        %v1428 = vunpack.c.l.b16 %v1203
        %v1429 = vunpack.c.h.b16 %v1203
        %v1430 = vunpack.c.l.b16 %v1204
        %v1431 = vunpack.c.l.b16 %v1205
        %v1432 = vunpack.c.h.b16 %v1205
        %v1433 = vunpack.c.l.b16 %v1206
        %v1434 = vpack.c.b16 %v1389, %v1386
        %v1435 = vpack.c.b16 %v1390, %v1387
        %v1436 = vpack.c.b16 %v1391, %v1388
        %v1437 = vpack.c.b16 %v1395, %v1392
        %v1438 = vpack.c.b16 %v1396, %v1393
        %v1439 = vpack.c.b16 %v1397, %v1394
        %v1440 = vpack.c.b16 %v1401, %v1398
        %v1441 = vpack.c.b16 %v1402, %v1399
        %v1442 = vpack.c.b16 %v1403, %v1400
        %v1443 = vpack.c.b16 %v1407, %v1404
        %v1444 = vpack.c.b16 %v1408, %v1405
        %v1445 = vpack.c.b16 %v1409, %v1406
        %v1446 = vpack.c.b16 %v1413, %v1410
        %v1447 = vpack.c.b16 %v1414, %v1411
        %v1448 = vpack.c.b16 %v1415, %v1412
        %v1449 = vpack.c.b16 %v1419, %v1416
        %v1450 = vpack.c.b16 %v1420, %v1417
        %v1451 = vpack.c.b16 %v1421, %v1418
        %v1452 = vpack.c.b16 %v1425, %v1422
        %v1453 = vpack.c.b16 %v1426, %v1423
        %v1454 = vpack.c.b16 %v1427, %v1424
        %v1455 = vpack.c.b16 %v1431, %v1428
        %v1456 = vpack.c.b16 %v1432, %v1429
        %v1457 = vpack.c.b16 %v1433, %v1430
        %1482 = vmatprep.subr.bf16.mxu0 %v1456
        %1483 = vmatpush1.bf16.msra.mxu0 %v1455
        %1484 = vmatprep.subr.bf16.mxu0 %v1453
        %1485 = vmatpush1.bf16.msra.mxu0 %v1452
        %1486 = vmatprep.subr.bf16.mxu0 %v1450
        %1487 = vmatpush1.bf16.msra.mxu0 %v1449
        %1488 = vmatprep.subr.bf16.mxu0 %v1447
        %1489 = vmatpush1.bf16.msra.mxu0 %v1446
        %1490 = vmatprep.subr.bf16.mxu0 %v1444
        %1491 = vmatpush1.bf16.msra.mxu0 %v1443
        %1492 = vmatprep.subr.bf16.mxu0 %v1441
        %1493 = vmatpush1.bf16.msra.mxu0 %v1440
        %1494 = vmatprep.subr.bf16.mxu0 %v1438
        %1495 = vmatpush1.bf16.msra.mxu0 %v1437
        %1496 = vmatprep.subr.bf16.mxu0 %v1435
        %1497 = vmatpush1.bf16.msra.mxu0 %v1434
        %1498 = vmatprep.subr.bf16.mxu0 0
        %1499 = vmatpush2.bf16.msra.mxu0 0
        %1500 = vmatprep.subr.bf16.mxu0 0
        %1501 = vmatpush2.bf16.msra.mxu0 0
        %1502 = vmatprep.subr.bf16.mxu0 0
        %1503 = vmatpush2.bf16.msra.mxu0 0
        %1504 = vmatprep.subr.bf16.mxu0 0
        %1505 = vmatpush2.bf16.msra.mxu0 0
        %1506 = vmatprep.subr.bf16.mxu0 0
        %1507 = vmatpush2.bf16.msra.mxu0 0
        %1508 = vmatprep.subr.bf16.mxu0 0
        %1509 = vmatpush2.bf16.msra.mxu0 0
        %1510 = vmatprep.subr.bf16.mxu0 0
        %1511 = vmatpush2.bf16.msra.mxu0 0
        %1512 = vmatprep.subr.bf16.mxu0 0
        %1513 = vmatpush2.bf16.msra.mxu0 0
        %1514 = vmatprep.mubr.bf16.mxu0 0
        %1515 = vmatmul.mubr.bf16.gmra.mxu0 %v1310
        %v1516 = vpop.f32.mrf.mxu0
        %v1517 = vadd.f32 %v1212, %v1516
        %v1518 = vpop.f32.mrf.mxu0
        %v1519 = vadd.f32 %v1216, %v1518
        %v1520 = vpop.f32.mrf.mxu0
        %v1521 = vadd.f32 %v1212, %v1520
        %v1522 = vpop.f32.mrf.mxu0
        %v1523 = vadd.f32 %v1216, %v1522
        %1524 = vmatprep.mubr.bf16.mxu0 0
        %1525 = vmatmul.mubr.bf16.gmra.mxu0 %v1311
        %v1526 = vpop.f32.mrf.mxu0
        %v1527 = vadd.f32 %v1212, %v1526
        %v1528 = vpop.f32.mrf.mxu0
        %v1529 = vadd.f32 %v1216, %v1528
        %v1530 = vpop.f32.mrf.mxu0
        %v1531 = vadd.f32 %v1212, %v1530
        %v1532 = vpop.f32.mrf.mxu0
        %v1533 = vadd.f32 %v1216, %v1532
        %1534 = vmatprep.mubr.bf16.mxu0 0
        %1535 = vmatmul.mubr.bf16.gmra.mxu0 %v1312
        %v1536 = vpop.f32.mrf.mxu0
        %v1537 = vadd.f32 %v1212, %v1536
        %v1538 = vpop.f32.mrf.mxu0
        %v1539 = vadd.f32 %v1216, %v1538
        %v1540 = vpop.f32.mrf.mxu0
        %v1541 = vadd.f32 %v1212, %v1540
        %v1542 = vpop.f32.mrf.mxu0
        %v1543 = vadd.f32 %v1216, %v1542
        %1544 = vmatprep.mubr.bf16.mxu0 0
        %1545 = vmatmul.mubr.bf16.gmra.mxu0 %v1313
        %v1546 = vpop.f32.mrf.mxu0
        %v1547 = vadd.f32 %v1212, %v1546
        %v1548 = vpop.f32.mrf.mxu0
        %v1549 = vadd.f32 %v1216, %v1548
        %v1550 = vpop.f32.mrf.mxu0
        %v1551 = vadd.f32 %v1212, %v1550
        %v1552 = vpop.f32.mrf.mxu0
        %v1553 = vadd.f32 %v1216, %v1552
        %1554 = vmatprep.mubr.bf16.mxu0 0
        %1555 = vmatmul.mubr.bf16.gmra.mxu0 %v1314
        %v1556 = vpop.f32.mrf.mxu0
        %v1557 = vadd.f32 %v1212, %v1556
        %v1558 = vpop.f32.mrf.mxu0
        %v1559 = vadd.f32 %v1216, %v1558
        %v1560 = vpop.f32.mrf.mxu0
        %v1561 = vadd.f32 %v1212, %v1560
        %v1562 = vpop.f32.mrf.mxu0
        %v1563 = vadd.f32 %v1216, %v1562
        %1564 = vmatprep.mubr.bf16.mxu0 0
        %1565 = vmatmul.mubr.bf16.gmra.mxu0 %v1315
        %v1566 = vpop.f32.mrf.mxu0
        %v1567 = vadd.f32 %v1212, %v1566
        %v1568 = vpop.f32.mrf.mxu0
        %v1569 = vadd.f32 %v1216, %v1568
        %v1570 = vpop.f32.mrf.mxu0
        %v1571 = vadd.f32 %v1212, %v1570
        %v1572 = vpop.f32.mrf.mxu0
        %v1573 = vadd.f32 %v1216, %v1572
        %1574 = vmatprep.mubr.bf16.mxu0 0
        %1575 = vmatmul.mubr.bf16.gmra.mxu0 %v1316
        %v1576 = vpop.f32.mrf.mxu0
        %v1577 = vadd.f32 %v1212, %v1576
        %v1578 = vpop.f32.mrf.mxu0
        %v1579 = vadd.f32 %v1216, %v1578
        %v1580 = vpop.f32.mrf.mxu0
        %v1581 = vadd.f32 %v1212, %v1580
        %v1582 = vpop.f32.mrf.mxu0
        %v1583 = vadd.f32 %v1216, %v1582
        %1584 = vmatprep.mubr.bf16.mxu0 0
        %1585 = vmatmul.mubr.bf16.gmra.mxu0 %v1317
        %v1586 = vpop.f32.mrf.mxu0
        %v1587 = vadd.f32 %v1212, %v1586
        %v1588 = vpop.f32.mrf.mxu0
        %v1589 = vadd.f32 %v1216, %v1588
        %v1590 = vpop.f32.mrf.mxu0
        %v1591 = vadd.f32 %v1212, %v1590
        %v1592 = vpop.f32.mrf.mxu0
        %v1593 = vadd.f32 %v1216, %v1592
        %1594 = vmatprep.mubr.bf16.mxu0 0
        %1595 = vmatmul.mubr.bf16.gmra.mxu0 %v1318
        %v1596 = vpop.f32.mrf.mxu0
        %v1597 = vadd.f32 %v1212, %v1596
        %v1598 = vpop.f32.mrf.mxu0
        %v1599 = vadd.f32 %v1216, %v1598
        %v1600 = vpop.f32.mrf.mxu0
        %v1601 = vadd.f32 %v1212, %v1600
        %v1602 = vpop.f32.mrf.mxu0
        %v1603 = vadd.f32 %v1216, %v1602
        %1604 = vmatprep.mubr.bf16.mxu0 0
        %1605 = vmatmul.mubr.bf16.gmra.mxu0 %v1319
        %v1606 = vpop.f32.mrf.mxu0
        %v1607 = vadd.f32 %v1212, %v1606
        %v1608 = vpop.f32.mrf.mxu0
        %v1609 = vadd.f32 %v1216, %v1608
        %v1610 = vpop.f32.mrf.mxu0
        %v1611 = vadd.f32 %v1212, %v1610
        %v1612 = vpop.f32.mrf.mxu0
        %v1613 = vadd.f32 %v1216, %v1612
        %1614 = vmatprep.mubr.bf16.mxu0 0
        %1615 = vmatmul.mubr.bf16.gmra.mxu0 %v1320
        %v1616 = vpop.f32.mrf.mxu0
        %v1617 = vadd.f32 %v1212, %v1616
        %v1618 = vpop.f32.mrf.mxu0
        %v1619 = vadd.f32 %v1216, %v1618
        %v1620 = vpop.f32.mrf.mxu0
        %v1621 = vadd.f32 %v1212, %v1620
        %v1622 = vpop.f32.mrf.mxu0
        %v1623 = vadd.f32 %v1216, %v1622
        %1624 = vmatprep.mubr.bf16.mxu0 0
        %1625 = vmatmul.mubr.bf16.gmra.mxu0 %v1321
        %v1626 = vpop.f32.mrf.mxu0
        %v1627 = vadd.f32 %v1212, %v1626
        %v1628 = vpop.f32.mrf.mxu0
        %v1629 = vadd.f32 %v1216, %v1628
        %v1630 = vpop.f32.mrf.mxu0
        %v1631 = vadd.f32 %v1212, %v1630
        %v1632 = vpop.f32.mrf.mxu0
        %v1633 = vadd.f32 %v1216, %v1632
        %1634 = vmatprep.mubr.bf16.mxu0 0
        %1635 = vmatmul.mubr.bf16.gmra.mxu0 %v1322
        %v1636 = vpop.f32.mrf.mxu0
        %v1637 = vadd.f32 %v1212, %v1636
        %v1638 = vpop.f32.mrf.mxu0
        %v1639 = vadd.f32 %v1216, %v1638
        %v1640 = vpop.f32.mrf.mxu0
        %v1641 = vadd.f32 %v1212, %v1640
        %v1642 = vpop.f32.mrf.mxu0
        %v1643 = vadd.f32 %v1216, %v1642
        %1644 = vmatprep.mubr.bf16.mxu0 0
        %1645 = vmatmul.mubr.bf16.gmra.mxu0 %v1323
        %v1646 = vpop.f32.mrf.mxu0
        %v1647 = vadd.f32 %v1212, %v1646
        %v1648 = vpop.f32.mrf.mxu0
        %v1649 = vadd.f32 %v1216, %v1648
        %v1650 = vpop.f32.mrf.mxu0
        %v1651 = vadd.f32 %v1212, %v1650
        %v1652 = vpop.f32.mrf.mxu0
        %v1653 = vadd.f32 %v1216, %v1652
        %1654 = vmatprep.mubr.bf16.mxu0 0
        %1655 = vmatmul.mubr.bf16.gmra.mxu0 %v1324
        %v1656 = vpop.f32.mrf.mxu0
        %v1657 = vadd.f32 %v1212, %v1656
        %v1658 = vpop.f32.mrf.mxu0
        %v1659 = vadd.f32 %v1216, %v1658
        %v1660 = vpop.f32.mrf.mxu0
        %v1661 = vadd.f32 %v1212, %v1660
        %v1662 = vpop.f32.mrf.mxu0
        %v1663 = vadd.f32 %v1216, %v1662
        %1664 = vmatprep.mubr.bf16.mxu0 0
        %1665 = vmatmul.mubr.bf16.gmra.mxu0 %v1325
        %v1666 = vpop.f32.mrf.mxu0
        %v1667 = vadd.f32 %v1212, %v1666
        %v1668 = vpop.f32.mrf.mxu0
        %v1669 = vadd.f32 %v1216, %v1668
        %v1670 = vpop.f32.mrf.mxu0
        %v1671 = vadd.f32 %v1212, %v1670
        %v1672 = vpop.f32.mrf.mxu0
        %v1673 = vadd.f32 %v1216, %v1672
        %1674 = vmatprep.mubr.bf16.mxu0 0
        %1675 = vmatmul.mubr.bf16.gmra.mxu0 %v1326
        %v1676 = vpop.f32.mrf.mxu0
        %v1677 = vadd.f32 %v1212, %v1676
        %v1678 = vpop.f32.mrf.mxu0
        %v1679 = vadd.f32 %v1216, %v1678
        %v1680 = vpop.f32.mrf.mxu0
        %v1681 = vadd.f32 %v1212, %v1680
        %v1682 = vpop.f32.mrf.mxu0
        %v1683 = vadd.f32 %v1216, %v1682
        %1684 = vmatprep.mubr.bf16.mxu0 0
        %1685 = vmatmul.mubr.bf16.gmra.mxu0 %v1327
        %v1686 = vpop.f32.mrf.mxu0
        %v1687 = vadd.f32 %v1212, %v1686
        %v1688 = vpop.f32.mrf.mxu0
        %v1689 = vadd.f32 %v1216, %v1688
        %v1690 = vpop.f32.mrf.mxu0
        %v1691 = vadd.f32 %v1212, %v1690
        %v1692 = vpop.f32.mrf.mxu0
        %v1693 = vadd.f32 %v1216, %v1692
        %1694 = vmatprep.mubr.bf16.mxu0 0
        %1695 = vmatmul.mubr.bf16.gmra.mxu0 %v1328
        %v1696 = vpop.f32.mrf.mxu0
        %v1697 = vadd.f32 %v1212, %v1696
        %v1698 = vpop.f32.mrf.mxu0
        %v1699 = vadd.f32 %v1216, %v1698
        %v1700 = vpop.f32.mrf.mxu0
        %v1701 = vadd.f32 %v1212, %v1700
        %v1702 = vpop.f32.mrf.mxu0
        %v1703 = vadd.f32 %v1216, %v1702
        %1704 = vmatprep.mubr.bf16.mxu0 0
        %1705 = vmatmul.mubr.bf16.gmra.mxu0 %v1329
        %v1706 = vpop.f32.mrf.mxu0
        %v1707 = vadd.f32 %v1212, %v1706
        %v1708 = vpop.f32.mrf.mxu0
        %v1709 = vadd.f32 %v1216, %v1708
        %v1710 = vpop.f32.mrf.mxu0
        %v1711 = vadd.f32 %v1212, %v1710
        %v1712 = vpop.f32.mrf.mxu0
        %v1713 = vadd.f32 %v1216, %v1712
        %1714 = vmatprep.mubr.bf16.mxu0 0
        %1715 = vmatmul.mubr.bf16.gmra.mxu0 %v1330
        %v1716 = vpop.f32.mrf.mxu0
        %v1717 = vadd.f32 %v1212, %v1716
        %v1718 = vpop.f32.mrf.mxu0
        %v1719 = vadd.f32 %v1216, %v1718
        %v1720 = vpop.f32.mrf.mxu0
        %v1721 = vadd.f32 %v1212, %v1720
        %v1722 = vpop.f32.mrf.mxu0
        %v1723 = vadd.f32 %v1216, %v1722
        %1724 = vmatprep.mubr.bf16.mxu0 0
        %1725 = vmatmul.mubr.bf16.gmra.mxu0 %v1331
        %v1726 = vpop.f32.mrf.mxu0
        %v1727 = vadd.f32 %v1212, %v1726
        %v1728 = vpop.f32.mrf.mxu0
        %v1729 = vadd.f32 %v1216, %v1728
        %v1730 = vpop.f32.mrf.mxu0
        %v1731 = vpop.f32.mrf.mxu0
        %1732 = vdwg.mxu0
        %1733 = vmatprep.subr.bf16.mxu0 0
        %1734 = vmatpush1.bf16.msra.mxu0 %v1457
        %1735 = vmatprep.subr.bf16.mxu0 0
        %1736 = vmatpush1.bf16.msra.mxu0 %v1454
        %1737 = vmatprep.subr.bf16.mxu0 0
        %1738 = vmatpush1.bf16.msra.mxu0 %v1451
        %1739 = vmatprep.subr.bf16.mxu0 0
        %1740 = vmatpush1.bf16.msra.mxu0 %v1448
        %1741 = vmatprep.subr.bf16.mxu0 0
        %1742 = vmatpush1.bf16.msra.mxu0 %v1445
        %1743 = vmatprep.subr.bf16.mxu0 0
        %1744 = vmatpush1.bf16.msra.mxu0 %v1442
        %1745 = vmatprep.subr.bf16.mxu0 0
        %1746 = vmatpush1.bf16.msra.mxu0 %v1439
        %1747 = vmatprep.subr.bf16.mxu0 0
        %1748 = vmatpush1.bf16.msra.mxu0 %v1436
        %1749 = vmatprep.subr.bf16.mxu0 0
        %1750 = vmatpush2.bf16.msra.mxu0 0
        %1751 = vmatprep.subr.bf16.mxu0 0
        %1752 = vmatpush2.bf16.msra.mxu0 0
        %1753 = vmatprep.subr.bf16.mxu0 0
        %1754 = vmatpush2.bf16.msra.mxu0 0
        %1755 = vmatprep.subr.bf16.mxu0 0
        %1756 = vmatpush2.bf16.msra.mxu0 0
        %1757 = vmatprep.subr.bf16.mxu0 0
        %1758 = vmatpush2.bf16.msra.mxu0 0
        %1759 = vmatprep.subr.bf16.mxu0 0
        %1760 = vmatpush2.bf16.msra.mxu0 0
        %1761 = vmatprep.subr.bf16.mxu0 0
        %1762 = vmatpush2.bf16.msra.mxu0 0
        %1763 = vmatprep.subr.bf16.mxu0 0
        %1764 = vmatpush2.bf16.msra.mxu0 0
        %1765 = vmatprep.mubr.bf16.mxu0 0
        %1766 = vmatmul.mubr.bf16.gmra.mxu0 %v1310
        %v1767 = vpop.f32.mrf.mxu0
        %v1768 = vadd.f32 %v1220, %v1767
        %v1769 = vpop.f32.mrf.mxu0
        %v1770 = vpop.f32.mrf.mxu0
        %v1771 = vadd.f32 %v1220, %v1770
        %v1772 = vpop.f32.mrf.mxu0
        %1773 = vmatprep.mubr.bf16.mxu0 0
        %1774 = vmatmul.mubr.bf16.gmra.mxu0 %v1311
        %v1775 = vpop.f32.mrf.mxu0
        %v1776 = vadd.f32 %v1220, %v1775
        %v1777 = vpop.f32.mrf.mxu0
        %v1778 = vpop.f32.mrf.mxu0
        %v1779 = vadd.f32 %v1220, %v1778
        %v1780 = vpop.f32.mrf.mxu0
        %1781 = vmatprep.mubr.bf16.mxu0 0
        %1782 = vmatmul.mubr.bf16.gmra.mxu0 %v1312
        %v1783 = vpop.f32.mrf.mxu0
        %v1784 = vadd.f32 %v1220, %v1783
        %v1785 = vpop.f32.mrf.mxu0
        %v1786 = vpop.f32.mrf.mxu0
        %v1787 = vadd.f32 %v1220, %v1786
        %v1788 = vpop.f32.mrf.mxu0
        %1789 = vmatprep.mubr.bf16.mxu0 0
        %1790 = vmatmul.mubr.bf16.gmra.mxu0 %v1313
        %v1791 = vpop.f32.mrf.mxu0
        %v1792 = vadd.f32 %v1220, %v1791
        %v1793 = vpop.f32.mrf.mxu0
        %v1794 = vpop.f32.mrf.mxu0
        %v1795 = vadd.f32 %v1220, %v1794
        %v1796 = vpop.f32.mrf.mxu0
        %1797 = vmatprep.mubr.bf16.mxu0 0
        %1798 = vmatmul.mubr.bf16.gmra.mxu0 %v1314
        %v1799 = vpop.f32.mrf.mxu0
        %v1800 = vadd.f32 %v1220, %v1799
        %v1801 = vpop.f32.mrf.mxu0
        %v1802 = vpop.f32.mrf.mxu0
        %v1803 = vadd.f32 %v1220, %v1802
        %v1804 = vpop.f32.mrf.mxu0
        %1805 = vmatprep.mubr.bf16.mxu0 0
        %1806 = vmatmul.mubr.bf16.gmra.mxu0 %v1315
        %v1807 = vpop.f32.mrf.mxu0
        %v1808 = vadd.f32 %v1220, %v1807
        %v1809 = vpop.f32.mrf.mxu0
        %v1810 = vpop.f32.mrf.mxu0
        %v1811 = vadd.f32 %v1220, %v1810
        %v1812 = vpop.f32.mrf.mxu0
        %1813 = vmatprep.mubr.bf16.mxu0 0
        %1814 = vmatmul.mubr.bf16.gmra.mxu0 %v1316
        %v1815 = vpop.f32.mrf.mxu0
        %v1816 = vadd.f32 %v1220, %v1815
        %v1817 = vpop.f32.mrf.mxu0
        %v1818 = vpop.f32.mrf.mxu0
        %v1819 = vadd.f32 %v1220, %v1818
        %v1820 = vpop.f32.mrf.mxu0
        %1821 = vmatprep.mubr.bf16.mxu0 0
        %1822 = vmatmul.mubr.bf16.gmra.mxu0 %v1317
        %v1823 = vpop.f32.mrf.mxu0
        %v1824 = vadd.f32 %v1220, %v1823
        %v1825 = vpop.f32.mrf.mxu0
        %v1826 = vpop.f32.mrf.mxu0
        %v1827 = vadd.f32 %v1220, %v1826
        %v1828 = vpop.f32.mrf.mxu0
        %1829 = vmatprep.mubr.bf16.mxu0 0
        %1830 = vmatmul.mubr.bf16.gmra.mxu0 %v1318
        %v1831 = vpop.f32.mrf.mxu0
        %v1832 = vadd.f32 %v1220, %v1831
        %v1833 = vpop.f32.mrf.mxu0
        %v1834 = vpop.f32.mrf.mxu0
        %v1835 = vadd.f32 %v1220, %v1834
        %v1836 = vpop.f32.mrf.mxu0
        %1837 = vmatprep.mubr.bf16.mxu0 0
        %1838 = vmatmul.mubr.bf16.gmra.mxu0 %v1319
        %v1839 = vpop.f32.mrf.mxu0
        %v1840 = vadd.f32 %v1220, %v1839
        %v1841 = vpop.f32.mrf.mxu0
        %v1842 = vpop.f32.mrf.mxu0
        %v1843 = vadd.f32 %v1220, %v1842
        %v1844 = vpop.f32.mrf.mxu0
        %1845 = vmatprep.mubr.bf16.mxu0 0
        %1846 = vmatmul.mubr.bf16.gmra.mxu0 %v1320
        %v1847 = vpop.f32.mrf.mxu0
        %v1848 = vadd.f32 %v1220, %v1847
        %v1849 = vpop.f32.mrf.mxu0
        %v1850 = vpop.f32.mrf.mxu0
        %v1851 = vadd.f32 %v1220, %v1850
        %v1852 = vpop.f32.mrf.mxu0
        %1853 = vmatprep.mubr.bf16.mxu0 0
        %1854 = vmatmul.mubr.bf16.gmra.mxu0 %v1321
        %v1855 = vpop.f32.mrf.mxu0
        %v1856 = vadd.f32 %v1220, %v1855
        %v1857 = vpop.f32.mrf.mxu0
        %v1858 = vpop.f32.mrf.mxu0
        %v1859 = vadd.f32 %v1220, %v1858
        %v1860 = vpop.f32.mrf.mxu0
        %1861 = vmatprep.mubr.bf16.mxu0 0
        %1862 = vmatmul.mubr.bf16.gmra.mxu0 %v1322
        %v1863 = vpop.f32.mrf.mxu0
        %v1864 = vadd.f32 %v1220, %v1863
        %v1865 = vpop.f32.mrf.mxu0
        %v1866 = vpop.f32.mrf.mxu0
        %v1867 = vadd.f32 %v1220, %v1866
        %v1868 = vpop.f32.mrf.mxu0
        %1869 = vmatprep.mubr.bf16.mxu0 0
        %1870 = vmatmul.mubr.bf16.gmra.mxu0 %v1323
        %v1871 = vpop.f32.mrf.mxu0
        %v1872 = vadd.f32 %v1220, %v1871
        %v1873 = vpop.f32.mrf.mxu0
        %v1874 = vpop.f32.mrf.mxu0
        %v1875 = vadd.f32 %v1220, %v1874
        %v1876 = vpop.f32.mrf.mxu0
        %1877 = vmatprep.mubr.bf16.mxu0 0
        %1878 = vmatmul.mubr.bf16.gmra.mxu0 %v1324
        %v1879 = vpop.f32.mrf.mxu0
        %v1880 = vadd.f32 %v1220, %v1879
        %v1881 = vpop.f32.mrf.mxu0
        %v1882 = vpop.f32.mrf.mxu0
        %v1883 = vadd.f32 %v1220, %v1882
        %v1884 = vpop.f32.mrf.mxu0
        %1885 = vmatprep.mubr.bf16.mxu0 0
        %1886 = vmatmul.mubr.bf16.gmra.mxu0 %v1325
        %v1887 = vpop.f32.mrf.mxu0
        %v1888 = vadd.f32 %v1220, %v1887
        %v1889 = vpop.f32.mrf.mxu0
        %v1890 = vpop.f32.mrf.mxu0
        %v1891 = vadd.f32 %v1220, %v1890
        %v1892 = vpop.f32.mrf.mxu0
        %1893 = vmatprep.mubr.bf16.mxu0 0
        %1894 = vmatmul.mubr.bf16.gmra.mxu0 %v1326
        %v1895 = vpop.f32.mrf.mxu0
        %v1896 = vadd.f32 %v1220, %v1895
        %v1897 = vpop.f32.mrf.mxu0
        %v1898 = vpop.f32.mrf.mxu0
        %v1899 = vadd.f32 %v1220, %v1898
        %v1900 = vpop.f32.mrf.mxu0
        %1901 = vmatprep.mubr.bf16.mxu0 0
        %1902 = vmatmul.mubr.bf16.gmra.mxu0 %v1327
        %v1903 = vpop.f32.mrf.mxu0
        %v1904 = vadd.f32 %v1220, %v1903
        %v1905 = vpop.f32.mrf.mxu0
        %v1906 = vpop.f32.mrf.mxu0
        %v1907 = vadd.f32 %v1220, %v1906
        %v1908 = vpop.f32.mrf.mxu0
        %1909 = vmatprep.mubr.bf16.mxu0 0
        %1910 = vmatmul.mubr.bf16.gmra.mxu0 %v1328
        %v1911 = vpop.f32.mrf.mxu0
        %v1912 = vadd.f32 %v1220, %v1911
        %v1913 = vpop.f32.mrf.mxu0
        %v1914 = vpop.f32.mrf.mxu0
        %v1915 = vadd.f32 %v1220, %v1914
        %v1916 = vpop.f32.mrf.mxu0
        %1917 = vmatprep.mubr.bf16.mxu0 0
        %1918 = vmatmul.mubr.bf16.gmra.mxu0 %v1329
        %v1919 = vpop.f32.mrf.mxu0
        %v1920 = vadd.f32 %v1220, %v1919
        %v1921 = vpop.f32.mrf.mxu0
        %v1922 = vpop.f32.mrf.mxu0
        %v1923 = vadd.f32 %v1220, %v1922
        %v1924 = vpop.f32.mrf.mxu0
        %1925 = vmatprep.mubr.bf16.mxu0 0
        %1926 = vmatmul.mubr.bf16.gmra.mxu0 %v1330
        %v1927 = vpop.f32.mrf.mxu0
        %v1928 = vadd.f32 %v1220, %v1927
        %v1929 = vpop.f32.mrf.mxu0
        %v1930 = vpop.f32.mrf.mxu0
        %v1931 = vadd.f32 %v1220, %v1930
        %v1932 = vpop.f32.mrf.mxu0
        %1933 = vmatprep.mubr.bf16.mxu0 0
        %1934 = vmatmul.mubr.bf16.gmra.mxu0 %v1331
        %v1935 = vpop.f32.mrf.mxu0
        %v1936 = vadd.f32 %v1220, %v1935
        %v1937 = vpop.f32.mrf.mxu0
        %v1938 = vpop.f32.mrf.mxu0
        %v1939 = vpop.f32.mrf.mxu0
        %1940 = vdwg.mxu0
        %1941 = vst [vmem:[%s369] sm:$0xff] %v1517
        %1942 = vst [vmem:[%s369 + $0x8] sm:$0xff] %v1519
        %1943 = vst [vmem:[%s369 + $0x10] sm:$0xff] %v1521
        %1944 = vst [vmem:[%s369 + $0x18] sm:$0xff] %v1523
        %1945 = vst [vmem:[%s369 + $0x20] sm:$0xff] %v1527
        %1946 = vst [vmem:[%s369 + $0x28] sm:$0xff] %v1529
        %1947 = vst [vmem:[%s369 + $0x30] sm:$0xff] %v1531
        %1948 = vst [vmem:[%s369 + $0x38] sm:$0xff] %v1533
        %1949 = vst [vmem:[%s369 + $0x40] sm:$0xff] %v1537
        %1950 = vst [vmem:[%s369 + $0x48] sm:$0xff] %v1539
        %1951 = vst [vmem:[%s369 + $0x50] sm:$0xff] %v1541
        %1952 = vst [vmem:[%s369 + $0x58] sm:$0xff] %v1543
        %1953 = vst [vmem:[%s369 + $0x60] sm:$0xff] %v1547
        %1954 = vst [vmem:[%s369 + $0x68] sm:$0xff] %v1549
        %1955 = vst [vmem:[%s369 + $0x70] sm:$0xff] %v1551
        %1956 = vst [vmem:[%s369 + $0x78] sm:$0xff] %v1553
        %1957 = vst [vmem:[%s369 + $0x80] sm:$0xff] %v1557
        %1958 = vst [vmem:[%s369 + $0x88] sm:$0xff] %v1559
        %1959 = vst [vmem:[%s369 + $0x90] sm:$0xff] %v1561
        %1960 = vst [vmem:[%s369 + $0x98] sm:$0xff] %v1563
        %1961 = vst [vmem:[%s369 + $0xa0] sm:$0xff] %v1567
        %1962 = vst [vmem:[%s369 + $0xa8] sm:$0xff] %v1569
        %1963 = vst [vmem:[%s369 + $0xb0] sm:$0xff] %v1571
        %1964 = vst [vmem:[%s369 + $0xb8] sm:$0xff] %v1573
        %1965 = vst [vmem:[%s369 + $0xc0] sm:$0xff] %v1577
        %1966 = vst [vmem:[%s369 + $0xc8] sm:$0xff] %v1579
        %1967 = vst [vmem:[%s369 + $0xd0] sm:$0xff] %v1581
        %1968 = vst [vmem:[%s369 + $0xd8] sm:$0xff] %v1583
        %1969 = vst [vmem:[%s369 + $0xe0] sm:$0xff] %v1587
        %1970 = vst [vmem:[%s369 + $0xe8] sm:$0xff] %v1589
        %1971 = vst [vmem:[%s369 + $0xf0] sm:$0xff] %v1591
        %1972 = vst [vmem:[%s369 + $0xf8] sm:$0xff] %v1593
        %1973 = vst [vmem:[%s369 + $0x100] sm:$0xff] %v1597
        %1974 = vst [vmem:[%s369 + $0x108] sm:$0xff] %v1599
        %1975 = vst [vmem:[%s369 + $0x110] sm:$0xff] %v1601
        %1976 = vst [vmem:[%s369 + $0x118] sm:$0xff] %v1603
        %1977 = vst [vmem:[%s369 + $0x120] sm:$0xff] %v1607
        %1978 = vst [vmem:[%s369 + $0x128] sm:$0xff] %v1609
        %1979 = vst [vmem:[%s369 + $0x130] sm:$0xff] %v1611
        %1980 = vst [vmem:[%s369 + $0x138] sm:$0xff] %v1613
        %1981 = vst [vmem:[%s369 + $0x140] sm:$0xff] %v1617
        %1982 = vst [vmem:[%s369 + $0x148] sm:$0xff] %v1619
        %1983 = vst [vmem:[%s369 + $0x150] sm:$0xff] %v1621
        %1984 = vst [vmem:[%s369 + $0x158] sm:$0xff] %v1623
        %1985 = vst [vmem:[%s369 + $0x160] sm:$0xff] %v1627
        %1986 = vst [vmem:[%s369 + $0x168] sm:$0xff] %v1629
        %1987 = vst [vmem:[%s369 + $0x170] sm:$0xff] %v1631
        %1988 = vst [vmem:[%s369 + $0x178] sm:$0xff] %v1633
        %1989 = vst [vmem:[%s369 + $0x180] sm:$0xff] %v1637
        %1990 = vst [vmem:[%s369 + $0x188] sm:$0xff] %v1639
        %1991 = vst [vmem:[%s369 + $0x190] sm:$0xff] %v1641
        %1992 = vst [vmem:[%s369 + $0x198] sm:$0xff] %v1643
        %1993 = vst [vmem:[%s369 + $0x1a0] sm:$0xff] %v1647
        %1994 = vst [vmem:[%s369 + $0x1a8] sm:$0xff] %v1649
        %1995 = vst [vmem:[%s369 + $0x1b0] sm:$0xff] %v1651
        %1996 = vst [vmem:[%s369 + $0x1b8] sm:$0xff] %v1653
        %1997 = vst [vmem:[%s369 + $0x1c0] sm:$0xff] %v1657
        %1998 = vst [vmem:[%s369 + $0x1c8] sm:$0xff] %v1659
        %1999 = vst [vmem:[%s369 + $0x1d0] sm:$0xff] %v1661
        %2000 = vst [vmem:[%s369 + $0x1d8] sm:$0xff] %v1663
        %2001 = vst [vmem:[%s369 + $0x1e0] sm:$0xff] %v1667
        %2002 = vst [vmem:[%s369 + $0x1e8] sm:$0xff] %v1669
        %2003 = vst [vmem:[%s369 + $0x1f0] sm:$0xff] %v1671
        %2004 = vst [vmem:[%s369 + $0x1f8] sm:$0xff] %v1673
        %2005 = vst [vmem:[%s369 + $0x200] sm:$0xff] %v1677
        %2006 = vst [vmem:[%s369 + $0x208] sm:$0xff] %v1679
        %2007 = vst [vmem:[%s369 + $0x210] sm:$0xff] %v1681
        %2008 = vst [vmem:[%s369 + $0x218] sm:$0xff] %v1683
        %2009 = vst [vmem:[%s369 + $0x220] sm:$0xff] %v1687
        %2010 = vst [vmem:[%s369 + $0x228] sm:$0xff] %v1689
        %2011 = vst [vmem:[%s369 + $0x230] sm:$0xff] %v1691
        %2012 = vst [vmem:[%s369 + $0x238] sm:$0xff] %v1693
        %2013 = vst [vmem:[%s369 + $0x240] sm:$0xff] %v1697
        %2014 = vst [vmem:[%s369 + $0x248] sm:$0xff] %v1699
        %2015 = vst [vmem:[%s369 + $0x250] sm:$0xff] %v1701
        %2016 = vst [vmem:[%s369 + $0x258] sm:$0xff] %v1703
        %2017 = vst [vmem:[%s369 + $0x260] sm:$0xff] %v1707
        %2018 = vst [vmem:[%s369 + $0x268] sm:$0xff] %v1709
        %2019 = vst [vmem:[%s369 + $0x270] sm:$0xff] %v1711
        %2020 = vst [vmem:[%s369 + $0x278] sm:$0xff] %v1713
        %2021 = vst [vmem:[%s369 + $0x280] sm:$0xff] %v1717
        %2022 = vst [vmem:[%s369 + $0x288] sm:$0xff] %v1719
        %2023 = vst [vmem:[%s369 + $0x290] sm:$0xff] %v1721
        %2024 = vst [vmem:[%s369 + $0x298] sm:$0xff] %v1723
        %2025 = vst [vmem:[%s369 + $0x2a0] sm:$0xff] %v1727
        %2026 = vst [vmem:[%s369 + $0x2a8] sm:$0xff] %v1729
        %2027 = vmax.xlane.f32.xlu0 %v1768
        %v2028 = vpop.xlane.xlu0 %2027
        %2029 = vmax.xlane.f32.xlu0 %v1771
        %v2030 = vpop.xlane.xlu0 %2029
        %2031 = vmax.xlane.f32.xlu0 %v1776
        %v2032 = vpop.xlane.xlu0 %2031
        %2033 = vmax.xlane.f32.xlu0 %v1779
        %v2034 = vpop.xlane.xlu0 %2033
        %2035 = vmax.xlane.f32.xlu0 %v1784
        %v2036 = vpop.xlane.xlu0 %2035
        %2037 = vmax.xlane.f32.xlu0 %v1787
        %v2038 = vpop.xlane.xlu0 %2037
        %2039 = vmax.xlane.f32.xlu0 %v1792
        %v2040 = vpop.xlane.xlu0 %2039
        %2041 = vmax.xlane.f32.xlu0 %v1795
        %v2042 = vpop.xlane.xlu0 %2041
        %2043 = vmax.xlane.f32.xlu0 %v1800
        %v2044 = vpop.xlane.xlu0 %2043
        %2045 = vmax.xlane.f32.xlu0 %v1803
        %v2046 = vpop.xlane.xlu0 %2045
        %2047 = vmax.xlane.f32.xlu0 %v1808
        %v2048 = vpop.xlane.xlu0 %2047
        %2049 = vmax.xlane.f32.xlu0 %v1811
        %v2050 = vpop.xlane.xlu0 %2049
        %2051 = vmax.xlane.f32.xlu0 %v1816
        %v2052 = vpop.xlane.xlu0 %2051
        %2053 = vmax.xlane.f32.xlu0 %v1819
        %v2054 = vpop.xlane.xlu0 %2053
        %2055 = vmax.xlane.f32.xlu0 %v1824
        %v2056 = vpop.xlane.xlu0 %2055
        %2057 = vmax.xlane.f32.xlu0 %v1827
        %v2058 = vpop.xlane.xlu0 %2057
        %2059 = vmax.xlane.f32.xlu0 %v1832
        %v2060 = vpop.xlane.xlu0 %2059
        %2061 = vmax.xlane.f32.xlu0 %v1835
        %v2062 = vpop.xlane.xlu0 %2061
        %2063 = vmax.xlane.f32.xlu0 %v1840
        %v2064 = vpop.xlane.xlu0 %2063
        %2065 = vmax.xlane.f32.xlu0 %v1843
        %v2066 = vpop.xlane.xlu0 %2065
        %2067 = vmax.xlane.f32.xlu0 %v1848
        %v2068 = vpop.xlane.xlu0 %2067
        %2069 = vmax.xlane.f32.xlu0 %v1851
        %v2070 = vpop.xlane.xlu0 %2069
        %2071 = vmax.xlane.f32.xlu0 %v1856
        %v2072 = vpop.xlane.xlu0 %2071
        %2073 = vmax.xlane.f32.xlu0 %v1859
        %v2074 = vpop.xlane.xlu0 %2073
        %2075 = vmax.xlane.f32.xlu0 %v1864
        %v2076 = vpop.xlane.xlu0 %2075
        %2077 = vmax.xlane.f32.xlu0 %v1867
        %v2078 = vpop.xlane.xlu0 %2077
        %2079 = vmax.xlane.f32.xlu0 %v1872
        %v2080 = vpop.xlane.xlu0 %2079
        %2081 = vmax.xlane.f32.xlu0 %v1875
        %v2082 = vpop.xlane.xlu0 %2081
        %2083 = vmax.xlane.f32.xlu0 %v1880
        %v2084 = vpop.xlane.xlu0 %2083
        %2085 = vmax.xlane.f32.xlu0 %v1883
        %v2086 = vpop.xlane.xlu0 %2085
        %2087 = vmax.xlane.f32.xlu0 %v1888
        %v2088 = vpop.xlane.xlu0 %2087
        %2089 = vmax.xlane.f32.xlu0 %v1891
        %v2090 = vpop.xlane.xlu0 %2089
        %2091 = vmax.xlane.f32.xlu0 %v1896
        %v2092 = vpop.xlane.xlu0 %2091
        %2093 = vmax.xlane.f32.xlu0 %v1899
        %v2094 = vpop.xlane.xlu0 %2093
        %2095 = vmax.xlane.f32.xlu0 %v1904
        %v2096 = vpop.xlane.xlu0 %2095
        %2097 = vmax.xlane.f32.xlu0 %v1907
        %v2098 = vpop.xlane.xlu0 %2097
        %2099 = vmax.xlane.f32.xlu0 %v1912
        %v2100 = vpop.xlane.xlu0 %2099
        %2101 = vmax.xlane.f32.xlu0 %v1915
        %v2102 = vpop.xlane.xlu0 %2101
        %2103 = vmax.xlane.f32.xlu0 %v1920
        %v2104 = vpop.xlane.xlu0 %2103
        %2105 = vmax.xlane.f32.xlu0 %v1923
        %v2106 = vpop.xlane.xlu0 %2105
        %2107 = vmax.xlane.f32.xlu0 %v1928
        %v2108 = vpop.xlane.xlu0 %2107
        %2109 = vmax.xlane.f32.xlu0 %v1931
        %v2110 = vpop.xlane.xlu0 %2109
        %2111 = vmax.xlane.f32.xlu0 %v1936
        %v2112 = vpop.xlane.xlu0 %2111
        %v2113 = vsub.f32 %v1768, %v2028
        %v2114 = vsub.f32 %v1771, %v2030
        %v2115 = vsub.f32 %v1776, %v2032
        %v2116 = vsub.f32 %v1779, %v2034
        %v2117 = vsub.f32 %v1784, %v2036
        %v2118 = vsub.f32 %v1787, %v2038
        %v2119 = vsub.f32 %v1792, %v2040
        %v2120 = vsub.f32 %v1795, %v2042
        %v2121 = vsub.f32 %v1800, %v2044
        %v2122 = vsub.f32 %v1803, %v2046
        %v2123 = vsub.f32 %v1808, %v2048
        %v2124 = vsub.f32 %v1811, %v2050
        %v2125 = vsub.f32 %v1816, %v2052
        %v2126 = vsub.f32 %v1819, %v2054
        %v2127 = vsub.f32 %v1824, %v2056
        %v2128 = vsub.f32 %v1827, %v2058
        %v2129 = vsub.f32 %v1832, %v2060
        %v2130 = vsub.f32 %v1835, %v2062
        %v2131 = vsub.f32 %v1840, %v2064
        %v2132 = vsub.f32 %v1843, %v2066
        %v2133 = vsub.f32 %v1848, %v2068
        %v2134 = vsub.f32 %v1851, %v2070
        %v2135 = vsub.f32 %v1856, %v2072
        %v2136 = vsub.f32 %v1859, %v2074
        %v2137 = vsub.f32 %v1864, %v2076
        %v2138 = vsub.f32 %v1867, %v2078
        %v2139 = vsub.f32 %v1872, %v2080
        %v2140 = vsub.f32 %v1875, %v2082
        %v2141 = vsub.f32 %v1880, %v2084
        %v2142 = vsub.f32 %v1883, %v2086
        %v2143 = vsub.f32 %v1888, %v2088
        %v2144 = vsub.f32 %v1891, %v2090
        %v2145 = vsub.f32 %v1896, %v2092
        %v2146 = vsub.f32 %v1899, %v2094
        %v2147 = vsub.f32 %v1904, %v2096
        %v2148 = vsub.f32 %v1907, %v2098
        %v2149 = vsub.f32 %v1912, %v2100
        %v2150 = vsub.f32 %v1915, %v2102
        %v2151 = vsub.f32 %v1920, %v2104
        %v2152 = vsub.f32 %v1923, %v2106
        %v2153 = vsub.f32 %v1928, %v2108
        %v2154 = vsub.f32 %v1931, %v2110
        %v2155 = vsub.f32 %v1936, %v2112
        %v2156 = vmul.f32 %v2113, 1.442695
        %v2157 = vpow.pop %v2156
        %v2158 = vmul.f32 %v2114, 1.442695
        %v2159 = vpow.pop %v2158
        %v2160 = vmul.f32 %v2115, 1.442695
        %v2161 = vpow.pop %v2160
        %v2162 = vmul.f32 %v2116, 1.442695
        %v2163 = vpow.pop %v2162
        %v2164 = vmul.f32 %v2117, 1.442695
        %v2165 = vpow.pop %v2164
        %v2166 = vmul.f32 %v2118, 1.442695
        %v2167 = vpow.pop %v2166
        %v2168 = vmul.f32 %v2119, 1.442695
        %v2169 = vpow.pop %v2168
        %v2170 = vmul.f32 %v2120, 1.442695
        %v2171 = vpow.pop %v2170
        %v2172 = vmul.f32 %v2121, 1.442695
        %v2173 = vpow.pop %v2172
        %v2174 = vmul.f32 %v2122, 1.442695
        %v2175 = vpow.pop %v2174
        %v2176 = vmul.f32 %v2123, 1.442695
        %v2177 = vpow.pop %v2176
        %v2178 = vmul.f32 %v2124, 1.442695
        %v2179 = vpow.pop %v2178
        %v2180 = vmul.f32 %v2125, 1.442695
        %v2181 = vpow.pop %v2180
        %v2182 = vmul.f32 %v2126, 1.442695
        %v2183 = vpow.pop %v2182
        %v2184 = vmul.f32 %v2127, 1.442695
        %v2185 = vpow.pop %v2184
        %v2186 = vmul.f32 %v2128, 1.442695
        %v2187 = vpow.pop %v2186
        %v2188 = vmul.f32 %v2129, 1.442695
        %v2189 = vpow.pop %v2188
        %v2190 = vmul.f32 %v2130, 1.442695
        %v2191 = vpow.pop %v2190
        %v2192 = vmul.f32 %v2131, 1.442695
        %v2193 = vpow.pop %v2192
        %v2194 = vmul.f32 %v2132, 1.442695
        %v2195 = vpow.pop %v2194
        %v2196 = vmul.f32 %v2133, 1.442695
        %v2197 = vpow.pop %v2196
        %v2198 = vmul.f32 %v2134, 1.442695
        %v2199 = vpow.pop %v2198
        %v2200 = vmul.f32 %v2135, 1.442695
        %v2201 = vpow.pop %v2200
        %v2202 = vmul.f32 %v2136, 1.442695
        %v2203 = vpow.pop %v2202
        %v2204 = vmul.f32 %v2137, 1.442695
        %v2205 = vpow.pop %v2204
        %v2206 = vmul.f32 %v2138, 1.442695
        %v2207 = vpow.pop %v2206
        %v2208 = vmul.f32 %v2139, 1.442695
        %v2209 = vpow.pop %v2208
        %v2210 = vmul.f32 %v2140, 1.442695
        %v2211 = vpow.pop %v2210
        %v2212 = vmul.f32 %v2141, 1.442695
        %v2213 = vpow.pop %v2212
        %v2214 = vmul.f32 %v2142, 1.442695
        %v2215 = vpow.pop %v2214
        %v2216 = vmul.f32 %v2143, 1.442695
        %v2217 = vpow.pop %v2216
        %v2218 = vmul.f32 %v2144, 1.442695
        %v2219 = vpow.pop %v2218
        %v2220 = vmul.f32 %v2145, 1.442695
        %v2221 = vpow.pop %v2220
        %v2222 = vmul.f32 %v2146, 1.442695
        %v2223 = vpow.pop %v2222
        %v2224 = vmul.f32 %v2147, 1.442695
        %v2225 = vpow.pop %v2224
        %v2226 = vmul.f32 %v2148, 1.442695
        %v2227 = vpow.pop %v2226
        %v2228 = vmul.f32 %v2149, 1.442695
        %v2229 = vpow.pop %v2228
        %v2230 = vmul.f32 %v2150, 1.442695
        %v2231 = vpow.pop %v2230
        %v2232 = vmul.f32 %v2151, 1.442695
        %v2233 = vpow.pop %v2232
        %v2234 = vmul.f32 %v2152, 1.442695
        %v2235 = vpow.pop %v2234
        %v2236 = vmul.f32 %v2153, 1.442695
        %v2237 = vpow.pop %v2236
        %v2238 = vmul.f32 %v2154, 1.442695
        %v2239 = vpow.pop %v2238
        %v2240 = vmul.f32 %v2155, 1.442695
        %v2241 = vpow.pop %v2240
        %v2242 = vld [vmem:[%s6] sm:$0xff]
        %v2243 = vld [vmem:[%s6 + $0x8] sm:$0xff]
        %v2244 = vld [vmem:[%s6 + $0x10] sm:$0xff]
        %v2245 = vld [vmem:[%s6 + $0x18] sm:$0xff]
        %v2246 = vld [vmem:[%s6 + $0x20] sm:$0xff]
        %v2247 = vld [vmem:[%s6 + $0x28] sm:$0xff]
        %v2248 = vld [vmem:[%s6 + $0x30] sm:$0xff]
        %v2249 = vld [vmem:[%s6 + $0x38] sm:$0xff]
        %v2250 = vld [vmem:[%s6 + $0x40] sm:$0xff]
        %v2251 = vld [vmem:[%s6 + $0x48] sm:$0xff]
        %v2252 = vld [vmem:[%s6 + $0x50] sm:$0xff]
        %v2253 = vld [vmem:[%s6 + $0x58] sm:$0xff]
        %v2254 = vld [vmem:[%s6 + $0x60] sm:$0xff]
        %v2255 = vld [vmem:[%s6 + $0x68] sm:$0xff]
        %v2256 = vld [vmem:[%s6 + $0x70] sm:$0xff]
        %v2257 = vld [vmem:[%s6 + $0x78] sm:$0xff]
        %2258 = vmatprep.subr.mxu0 0.0
        %2259 = vmatpush1.msra.mxu0 %v2257
        %2260 = vmatprep.subr.mxu0 0.0
        %2261 = vmatpush1.msra.mxu0 %v2256
        %2262 = vmatprep.subr.mxu0 0.0
        %2263 = vmatpush1.msra.mxu0 %v2255
        %2264 = vmatprep.subr.mxu0 0.0
        %2265 = vmatpush1.msra.mxu0 %v2254
        %2266 = vmatprep.subr.mxu0 0.0
        %2267 = vmatpush1.msra.mxu0 %v2253
        %2268 = vmatprep.subr.mxu0 0.0
        %2269 = vmatpush1.msra.mxu0 %v2252
        %2270 = vmatprep.subr.mxu0 0.0
        %2271 = vmatpush1.msra.mxu0 %v2251
        %2272 = vmatprep.subr.mxu0 0.0
        %2273 = vmatpush1.msra.mxu0 %v2250
        %2274 = vmatprep.subr.mxu0 0.0
        %2275 = vmatpush1.msra.mxu0 %v2249
        %2276 = vmatprep.subr.mxu0 0.0
        %2277 = vmatpush1.msra.mxu0 %v2248
        %2278 = vmatprep.subr.mxu0 0.0
        %2279 = vmatpush1.msra.mxu0 %v2247
        %2280 = vmatprep.subr.mxu0 0.0
        %2281 = vmatpush1.msra.mxu0 %v2246
        %2282 = vmatprep.subr.mxu0 0.0
        %2283 = vmatpush1.msra.mxu0 %v2245
        %2284 = vmatprep.subr.mxu0 0.0
        %2285 = vmatpush1.msra.mxu0 %v2244
        %2286 = vmatprep.subr.mxu0 0.0
        %2287 = vmatpush1.msra.mxu0 %v2243
        %2288 = vmatprep.subr.mxu0 0.0
        %2289 = vmatpush1.msra.mxu0 %v2242
        %2290 = vmatprep.subr.mxu0 0.0
        %2291 = vmatpush2.msra.mxu0 0.0
        %2292 = vmatprep.subr.mxu0 0.0
        %2293 = vmatpush2.msra.mxu0 0.0
        %2294 = vmatprep.subr.mxu0 0.0
        %2295 = vmatpush2.msra.mxu0 0.0
        %2296 = vmatprep.subr.mxu0 0.0
        %2297 = vmatpush2.msra.mxu0 0.0
        %2298 = vmatprep.subr.mxu0 0.0
        %2299 = vmatpush2.msra.mxu0 0.0
        %2300 = vmatprep.subr.mxu0 0.0
        %2301 = vmatpush2.msra.mxu0 0.0
        %2302 = vmatprep.subr.mxu0 0.0
        %2303 = vmatpush2.msra.mxu0 0.0
        %2304 = vmatprep.subr.mxu0 0.0
        %2305 = vmatpush2.msra.mxu0 0.0
        %2306 = vmatprep.subr.mxu0 0.0
        %2307 = vmatpush2.msra.mxu0 0.0
        %2308 = vmatprep.subr.mxu0 0.0
        %2309 = vmatpush2.msra.mxu0 0.0
        %2310 = vmatprep.subr.mxu0 0.0
        %2311 = vmatpush2.msra.mxu0 0.0
        %2312 = vmatprep.subr.mxu0 0.0
        %2313 = vmatpush2.msra.mxu0 0.0
        %2314 = vmatprep.subr.mxu0 0.0
        %2315 = vmatpush2.msra.mxu0 0.0
        %2316 = vmatprep.subr.mxu0 0.0
        %2317 = vmatpush2.msra.mxu0 0.0
        %2318 = vmatprep.subr.mxu0 0.0
        %2319 = vmatpush2.msra.mxu0 0.0
        %2320 = vmatprep.subr.mxu0 0.0
        %2321 = vmatpush2.msra.mxu0 0.0
        %2322 = vmatprep.mubr.f32.mxu0 0.0
        %2323 = vmatmul.mubr.f32.gmra.mxu0 %v2157
        %v2324 = vpop.f32.mrf.mxu0
        %v2325 = vadd.f32 0.0, %v2324
        %v2326 = vpop.f32.mrf.mxu0
        %2327 = vmatprep.mubr.f32.mxu0 0.0
        %2328 = vmatmul.mubr.f32.gmra.mxu0 %v2159
        %v2329 = vpop.f32.mrf.mxu0
        %v2330 = vadd.f32 0.0, %v2329
        %v2331 = vpop.f32.mrf.mxu0
        %2332 = vmatprep.mubr.f32.mxu0 0.0
        %2333 = vmatmul.mubr.f32.gmra.mxu0 %v2161
        %v2334 = vpop.f32.mrf.mxu0
        %v2335 = vadd.f32 0.0, %v2334
        %v2336 = vpop.f32.mrf.mxu0
        %2337 = vmatprep.mubr.f32.mxu0 0.0
        %2338 = vmatmul.mubr.f32.gmra.mxu0 %v2163
        %v2339 = vpop.f32.mrf.mxu0
        %v2340 = vadd.f32 0.0, %v2339
        %v2341 = vpop.f32.mrf.mxu0
        %2342 = vmatprep.mubr.f32.mxu0 0.0
        %2343 = vmatmul.mubr.f32.gmra.mxu0 %v2165
        %v2344 = vpop.f32.mrf.mxu0
        %v2345 = vadd.f32 0.0, %v2344
        %v2346 = vpop.f32.mrf.mxu0
        %2347 = vmatprep.mubr.f32.mxu0 0.0
        %2348 = vmatmul.mubr.f32.gmra.mxu0 %v2167
        %v2349 = vpop.f32.mrf.mxu0
        %v2350 = vadd.f32 0.0, %v2349
        %v2351 = vpop.f32.mrf.mxu0
        %2352 = vmatprep.mubr.f32.mxu0 0.0
        %2353 = vmatmul.mubr.f32.gmra.mxu0 %v2169
        %v2354 = vpop.f32.mrf.mxu0
        %v2355 = vadd.f32 0.0, %v2354
        %v2356 = vpop.f32.mrf.mxu0
        %2357 = vmatprep.mubr.f32.mxu0 0.0
        %2358 = vmatmul.mubr.f32.gmra.mxu0 %v2171
        %v2359 = vpop.f32.mrf.mxu0
        %v2360 = vadd.f32 0.0, %v2359
        %v2361 = vpop.f32.mrf.mxu0
        %2362 = vmatprep.mubr.f32.mxu0 0.0
        %2363 = vmatmul.mubr.f32.gmra.mxu0 %v2173
        %v2364 = vpop.f32.mrf.mxu0
        %v2365 = vadd.f32 0.0, %v2364
        %v2366 = vpop.f32.mrf.mxu0
        %2367 = vmatprep.mubr.f32.mxu0 0.0
        %2368 = vmatmul.mubr.f32.gmra.mxu0 %v2175
        %v2369 = vpop.f32.mrf.mxu0
        %v2370 = vadd.f32 0.0, %v2369
        %v2371 = vpop.f32.mrf.mxu0
        %2372 = vmatprep.mubr.f32.mxu0 0.0
        %2373 = vmatmul.mubr.f32.gmra.mxu0 %v2177
        %v2374 = vpop.f32.mrf.mxu0
        %v2375 = vadd.f32 0.0, %v2374
        %v2376 = vpop.f32.mrf.mxu0
        %2377 = vmatprep.mubr.f32.mxu0 0.0
        %2378 = vmatmul.mubr.f32.gmra.mxu0 %v2179
        %v2379 = vpop.f32.mrf.mxu0
        %v2380 = vadd.f32 0.0, %v2379
        %v2381 = vpop.f32.mrf.mxu0
        %2382 = vmatprep.mubr.f32.mxu0 0.0
        %2383 = vmatmul.mubr.f32.gmra.mxu0 %v2181
        %v2384 = vpop.f32.mrf.mxu0
        %v2385 = vadd.f32 0.0, %v2384
        %v2386 = vpop.f32.mrf.mxu0
        %2387 = vmatprep.mubr.f32.mxu0 0.0
        %2388 = vmatmul.mubr.f32.gmra.mxu0 %v2183
        %v2389 = vpop.f32.mrf.mxu0
        %v2390 = vadd.f32 0.0, %v2389
        %v2391 = vpop.f32.mrf.mxu0
        %2392 = vmatprep.mubr.f32.mxu0 0.0
        %2393 = vmatmul.mubr.f32.gmra.mxu0 %v2185
        %v2394 = vpop.f32.mrf.mxu0
        %v2395 = vadd.f32 0.0, %v2394
        %v2396 = vpop.f32.mrf.mxu0
        %2397 = vmatprep.mubr.f32.mxu0 0.0
        %2398 = vmatmul.mubr.f32.gmra.mxu0 %v2187
        %v2399 = vpop.f32.mrf.mxu0
        %v2400 = vadd.f32 0.0, %v2399
        %v2401 = vpop.f32.mrf.mxu0
        %2402 = vmatprep.mubr.f32.mxu0 0.0
        %2403 = vmatmul.mubr.f32.gmra.mxu0 %v2189
        %v2404 = vpop.f32.mrf.mxu0
        %v2405 = vadd.f32 0.0, %v2404
        %v2406 = vpop.f32.mrf.mxu0
        %2407 = vmatprep.mubr.f32.mxu0 0.0
        %2408 = vmatmul.mubr.f32.gmra.mxu0 %v2191
        %v2409 = vpop.f32.mrf.mxu0
        %v2410 = vadd.f32 0.0, %v2409
        %v2411 = vpop.f32.mrf.mxu0
        %2412 = vmatprep.mubr.f32.mxu0 0.0
        %2413 = vmatmul.mubr.f32.gmra.mxu0 %v2193
        %v2414 = vpop.f32.mrf.mxu0
        %v2415 = vadd.f32 0.0, %v2414
        %v2416 = vpop.f32.mrf.mxu0
        %2417 = vmatprep.mubr.f32.mxu0 0.0
        %2418 = vmatmul.mubr.f32.gmra.mxu0 %v2195
        %v2419 = vpop.f32.mrf.mxu0
        %v2420 = vadd.f32 0.0, %v2419
        %v2421 = vpop.f32.mrf.mxu0
        %2422 = vmatprep.mubr.f32.mxu0 0.0
        %2423 = vmatmul.mubr.f32.gmra.mxu0 %v2197
        %v2424 = vpop.f32.mrf.mxu0
        %v2425 = vadd.f32 0.0, %v2424
        %v2426 = vpop.f32.mrf.mxu0
        %2427 = vmatprep.mubr.f32.mxu0 0.0
        %2428 = vmatmul.mubr.f32.gmra.mxu0 %v2199
        %v2429 = vpop.f32.mrf.mxu0
        %v2430 = vadd.f32 0.0, %v2429
        %v2431 = vpop.f32.mrf.mxu0
        %2432 = vmatprep.mubr.f32.mxu0 0.0
        %2433 = vmatmul.mubr.f32.gmra.mxu0 %v2201
        %v2434 = vpop.f32.mrf.mxu0
        %v2435 = vadd.f32 0.0, %v2434
        %v2436 = vpop.f32.mrf.mxu0
        %2437 = vmatprep.mubr.f32.mxu0 0.0
        %2438 = vmatmul.mubr.f32.gmra.mxu0 %v2203
        %v2439 = vpop.f32.mrf.mxu0
        %v2440 = vadd.f32 0.0, %v2439
        %v2441 = vpop.f32.mrf.mxu0
        %2442 = vmatprep.mubr.f32.mxu0 0.0
        %2443 = vmatmul.mubr.f32.gmra.mxu0 %v2205
        %v2444 = vpop.f32.mrf.mxu0
        %v2445 = vadd.f32 0.0, %v2444
        %v2446 = vpop.f32.mrf.mxu0
        %2447 = vmatprep.mubr.f32.mxu0 0.0
        %2448 = vmatmul.mubr.f32.gmra.mxu0 %v2207
        %v2449 = vpop.f32.mrf.mxu0
        %v2450 = vadd.f32 0.0, %v2449
        %v2451 = vpop.f32.mrf.mxu0
        %2452 = vmatprep.mubr.f32.mxu0 0.0
        %2453 = vmatmul.mubr.f32.gmra.mxu0 %v2209
        %v2454 = vpop.f32.mrf.mxu0
        %v2455 = vadd.f32 0.0, %v2454
        %v2456 = vpop.f32.mrf.mxu0
        %2457 = vmatprep.mubr.f32.mxu0 0.0
        %2458 = vmatmul.mubr.f32.gmra.mxu0 %v2211
        %v2459 = vpop.f32.mrf.mxu0
        %v2460 = vadd.f32 0.0, %v2459
        %v2461 = vpop.f32.mrf.mxu0
        %2462 = vmatprep.mubr.f32.mxu0 0.0
        %2463 = vmatmul.mubr.f32.gmra.mxu0 %v2213
        %v2464 = vpop.f32.mrf.mxu0
        %v2465 = vadd.f32 0.0, %v2464
        %v2466 = vpop.f32.mrf.mxu0
        %2467 = vmatprep.mubr.f32.mxu0 0.0
        %2468 = vmatmul.mubr.f32.gmra.mxu0 %v2215
        %v2469 = vpop.f32.mrf.mxu0
        %v2470 = vadd.f32 0.0, %v2469
        %v2471 = vpop.f32.mrf.mxu0
        %2472 = vmatprep.mubr.f32.mxu0 0.0
        %2473 = vmatmul.mubr.f32.gmra.mxu0 %v2217
        %v2474 = vpop.f32.mrf.mxu0
        %v2475 = vadd.f32 0.0, %v2474
        %v2476 = vpop.f32.mrf.mxu0
        %2477 = vmatprep.mubr.f32.mxu0 0.0
        %2478 = vmatmul.mubr.f32.gmra.mxu0 %v2219
        %v2479 = vpop.f32.mrf.mxu0
        %v2480 = vadd.f32 0.0, %v2479
        %v2481 = vpop.f32.mrf.mxu0
        %2482 = vmatprep.mubr.f32.mxu0 0.0
        %2483 = vmatmul.mubr.f32.gmra.mxu0 %v2221
        %v2484 = vpop.f32.mrf.mxu0
        %v2485 = vadd.f32 0.0, %v2484
        %v2486 = vpop.f32.mrf.mxu0
        %2487 = vmatprep.mubr.f32.mxu0 0.0
        %2488 = vmatmul.mubr.f32.gmra.mxu0 %v2223
        %v2489 = vpop.f32.mrf.mxu0
        %v2490 = vadd.f32 0.0, %v2489
        %v2491 = vpop.f32.mrf.mxu0
        %2492 = vmatprep.mubr.f32.mxu0 0.0
        %2493 = vmatmul.mubr.f32.gmra.mxu0 %v2225
        %v2494 = vpop.f32.mrf.mxu0
        %v2495 = vadd.f32 0.0, %v2494
        %v2496 = vpop.f32.mrf.mxu0
        %2497 = vmatprep.mubr.f32.mxu0 0.0
        %2498 = vmatmul.mubr.f32.gmra.mxu0 %v2227
        %v2499 = vpop.f32.mrf.mxu0
        %v2500 = vadd.f32 0.0, %v2499
        %v2501 = vpop.f32.mrf.mxu0
        %2502 = vmatprep.mubr.f32.mxu0 0.0
        %2503 = vmatmul.mubr.f32.gmra.mxu0 %v2229
        %v2504 = vpop.f32.mrf.mxu0
        %v2505 = vadd.f32 0.0, %v2504
        %v2506 = vpop.f32.mrf.mxu0
        %2507 = vmatprep.mubr.f32.mxu0 0.0
        %2508 = vmatmul.mubr.f32.gmra.mxu0 %v2231
        %v2509 = vpop.f32.mrf.mxu0
        %v2510 = vadd.f32 0.0, %v2509
        %v2511 = vpop.f32.mrf.mxu0
        %2512 = vmatprep.mubr.f32.mxu0 0.0
        %2513 = vmatmul.mubr.f32.gmra.mxu0 %v2233
        %v2514 = vpop.f32.mrf.mxu0
        %v2515 = vadd.f32 0.0, %v2514
        %v2516 = vpop.f32.mrf.mxu0
        %2517 = vmatprep.mubr.f32.mxu0 0.0
        %2518 = vmatmul.mubr.f32.gmra.mxu0 %v2235
        %v2519 = vpop.f32.mrf.mxu0
        %v2520 = vadd.f32 0.0, %v2519
        %v2521 = vpop.f32.mrf.mxu0
        %2522 = vmatprep.mubr.f32.mxu0 0.0
        %2523 = vmatmul.mubr.f32.gmra.mxu0 %v2237
        %v2524 = vpop.f32.mrf.mxu0
        %v2525 = vadd.f32 0.0, %v2524
        %v2526 = vpop.f32.mrf.mxu0
        %2527 = vmatprep.mubr.f32.mxu0 0.0
        %2528 = vmatmul.mubr.f32.gmra.mxu0 %v2239
        %v2529 = vpop.f32.mrf.mxu0
        %v2530 = vadd.f32 0.0, %v2529
        %v2531 = vpop.f32.mrf.mxu0
        %2532 = vmatprep.mubr.f32.mxu0 0.0
        %2533 = vmatmul.mubr.f32.gmra.mxu0 %v2241
        %v2534 = vpop.f32.mrf.mxu0
        %v2535 = vadd.f32 0.0, %v2534
        %v2536 = vpop.f32.mrf.mxu0
        %2537 = vdwg.mxu0
        %v2538 = vrcp.pop %v2325
        %v2539 = vrcp.pop %v2330
        %v2540 = vrcp.pop %v2335
        %v2541 = vrcp.pop %v2340
        %v2542 = vrcp.pop %v2345
        %v2543 = vrcp.pop %v2350
        %v2544 = vrcp.pop %v2355
        %v2545 = vrcp.pop %v2360
        %v2546 = vrcp.pop %v2365
        %v2547 = vrcp.pop %v2370
        %v2548 = vrcp.pop %v2375
        %v2549 = vrcp.pop %v2380
        %v2550 = vrcp.pop %v2385
        %v2551 = vrcp.pop %v2390
        %v2552 = vrcp.pop %v2395
        %v2553 = vrcp.pop %v2400
        %v2554 = vrcp.pop %v2405
        %v2555 = vrcp.pop %v2410
        %v2556 = vrcp.pop %v2415
        %v2557 = vrcp.pop %v2420
        %v2558 = vrcp.pop %v2425
        %v2559 = vrcp.pop %v2430
        %v2560 = vrcp.pop %v2435
        %v2561 = vrcp.pop %v2440
        %v2562 = vrcp.pop %v2445
        %v2563 = vrcp.pop %v2450
        %v2564 = vrcp.pop %v2455
        %v2565 = vrcp.pop %v2460
        %v2566 = vrcp.pop %v2465
        %v2567 = vrcp.pop %v2470
        %v2568 = vrcp.pop %v2475
        %v2569 = vrcp.pop %v2480
        %v2570 = vrcp.pop %v2485
        %v2571 = vrcp.pop %v2490
        %v2572 = vrcp.pop %v2495
        %v2573 = vrcp.pop %v2500
        %v2574 = vrcp.pop %v2505
        %v2575 = vrcp.pop %v2510
        %v2576 = vrcp.pop %v2515
        %v2577 = vrcp.pop %v2520
        %v2578 = vrcp.pop %v2525
        %v2579 = vrcp.pop %v2530
        %v2580 = vrcp.pop %v2535
        %v2581 = vmul.f32 %v2157, %v2538
        %v2582 = vmul.f32 %v2159, %v2539
        %v2583 = vmul.f32 %v2161, %v2540
        %v2584 = vmul.f32 %v2163, %v2541
        %v2585 = vmul.f32 %v2165, %v2542
        %v2586 = vmul.f32 %v2167, %v2543
        %v2587 = vmul.f32 %v2169, %v2544
        %v2588 = vmul.f32 %v2171, %v2545
        %v2589 = vmul.f32 %v2173, %v2546
        %v2590 = vmul.f32 %v2175, %v2547
        %v2591 = vmul.f32 %v2177, %v2548
        %v2592 = vmul.f32 %v2179, %v2549
        %v2593 = vmul.f32 %v2181, %v2550
        %v2594 = vmul.f32 %v2183, %v2551
        %v2595 = vmul.f32 %v2185, %v2552
        %v2596 = vmul.f32 %v2187, %v2553
        %v2597 = vmul.f32 %v2189, %v2554
        %v2598 = vmul.f32 %v2191, %v2555
        %v2599 = vmul.f32 %v2193, %v2556
        %v2600 = vmul.f32 %v2195, %v2557
        %v2601 = vmul.f32 %v2197, %v2558
        %v2602 = vmul.f32 %v2199, %v2559
        %v2603 = vmul.f32 %v2201, %v2560
        %v2604 = vmul.f32 %v2203, %v2561
        %v2605 = vmul.f32 %v2205, %v2562
        %v2606 = vmul.f32 %v2207, %v2563
        %v2607 = vmul.f32 %v2209, %v2564
        %v2608 = vmul.f32 %v2211, %v2565
        %v2609 = vmul.f32 %v2213, %v2566
        %v2610 = vmul.f32 %v2215, %v2567
        %v2611 = vmul.f32 %v2217, %v2568
        %v2612 = vmul.f32 %v2219, %v2569
        %v2613 = vmul.f32 %v2221, %v2570
        %v2614 = vmul.f32 %v2223, %v2571
        %v2615 = vmul.f32 %v2225, %v2572
        %v2616 = vmul.f32 %v2227, %v2573
        %v2617 = vmul.f32 %v2229, %v2574
        %v2618 = vmul.f32 %v2231, %v2575
        %v2619 = vmul.f32 %v2233, %v2576
        %v2620 = vmul.f32 %v2235, %v2577
        %v2621 = vmul.f32 %v2237, %v2578
        %v2622 = vmul.f32 %v2239, %v2579
        %v2623 = vmul.f32 %v2241, %v2580
        %2624 = vst [vmem:[%s375] sm:$0xff] %v2581
        %2625 = vst [vmem:[%s375 + $0x8] sm:$0xff] %v2582
        %2626 = vst [vmem:[%s375 + $0x10] sm:$0xff] %v2583
        %2627 = vst [vmem:[%s375 + $0x18] sm:$0xff] %v2584
        %2628 = vst [vmem:[%s375 + $0x20] sm:$0xff] %v2585
        %2629 = vst [vmem:[%s375 + $0x28] sm:$0xff] %v2586
        %2630 = vst [vmem:[%s375 + $0x30] sm:$0xff] %v2587
        %2631 = vst [vmem:[%s375 + $0x38] sm:$0xff] %v2588
        %2632 = vst [vmem:[%s375 + $0x40] sm:$0xff] %v2589
        %2633 = vst [vmem:[%s375 + $0x48] sm:$0xff] %v2590
        %2634 = vst [vmem:[%s375 + $0x50] sm:$0xff] %v2591
        %2635 = vst [vmem:[%s375 + $0x58] sm:$0xff] %v2592
        %2636 = vst [vmem:[%s375 + $0x60] sm:$0xff] %v2593
        %2637 = vst [vmem:[%s375 + $0x68] sm:$0xff] %v2594
        %2638 = vst [vmem:[%s375 + $0x70] sm:$0xff] %v2595
        %2639 = vst [vmem:[%s375 + $0x78] sm:$0xff] %v2596
        %2640 = vst [vmem:[%s375 + $0x80] sm:$0xff] %v2597
        %2641 = vst [vmem:[%s375 + $0x88] sm:$0xff] %v2598
        %2642 = vst [vmem:[%s375 + $0x90] sm:$0xff] %v2599
        %2643 = vst [vmem:[%s375 + $0x98] sm:$0xff] %v2600
        %2644 = vst [vmem:[%s375 + $0xa0] sm:$0xff] %v2601
        %2645 = vst [vmem:[%s375 + $0xa8] sm:$0xff] %v2602
        %2646 = vst [vmem:[%s375 + $0xb0] sm:$0xff] %v2603
        %2647 = vst [vmem:[%s375 + $0xb8] sm:$0xff] %v2604
        %2648 = vst [vmem:[%s375 + $0xc0] sm:$0xff] %v2605
        %2649 = vst [vmem:[%s375 + $0xc8] sm:$0xff] %v2606
        %2650 = vst [vmem:[%s375 + $0xd0] sm:$0xff] %v2607
        %2651 = vst [vmem:[%s375 + $0xd8] sm:$0xff] %v2608
        %2652 = vst [vmem:[%s375 + $0xe0] sm:$0xff] %v2609
        %2653 = vst [vmem:[%s375 + $0xe8] sm:$0xff] %v2610
        %2654 = vst [vmem:[%s375 + $0xf0] sm:$0xff] %v2611
        %2655 = vst [vmem:[%s375 + $0xf8] sm:$0xff] %v2612
        %2656 = vst [vmem:[%s375 + $0x100] sm:$0xff] %v2613
        %2657 = vst [vmem:[%s375 + $0x108] sm:$0xff] %v2614
        %2658 = vst [vmem:[%s375 + $0x110] sm:$0xff] %v2615
        %2659 = vst [vmem:[%s375 + $0x118] sm:$0xff] %v2616
        %2660 = vst [vmem:[%s375 + $0x120] sm:$0xff] %v2617
        %2661 = vst [vmem:[%s375 + $0x128] sm:$0xff] %v2618
        %2662 = vst [vmem:[%s375 + $0x130] sm:$0xff] %v2619
        %2663 = vst [vmem:[%s375 + $0x138] sm:$0xff] %v2620
        %2664 = vst [vmem:[%s375 + $0x140] sm:$0xff] %v2621
        %2665 = vst [vmem:[%s375 + $0x148] sm:$0xff] %v2622
        %2666 = vst [vmem:[%s375 + $0x150] sm:$0xff] %v2623
        %s2667 = sand.u32 %s186, 1
        %s2668 = sand.u32 %s186, 1
        %s2669 = smul.addr %s2668, 172
        %s2670 = scalar_lea.vmem [#allocation2], %s2669
        %s2671 = sand.u32 %s212, 1
        %s2672 = sand.u32 %s212, 1
        %s2673 = smul.addr %s2672, 688
        %s2674 = scalar_lea.vmem [#allocation3], %s2673
        %s2675 = sand.u32 %s238, 1
        %s2676 = sand.u32 %s238, 1
        %s2677 = smul.addr %s2676, 344
        %s2678 = scalar_lea.vmem [#allocation4], %s2677
        // Predicated region
        $region49: #{encoder_layer_forward.2} parent=47 // pred_check
          %p2679 = pneg %p196
        $region50: #{encoder_layer_forward.2} parent=47 // pred_check_branch
          %2681 = sbr.rel (%p2679) target = $region52
        $region51: #{encoder_layer_forward.2} parent=47 // pred_region
          %s2682 = smul.u32 43, %s21
          %s2683 = ssub.s32 85, %s2682
          %p2684 = scmp.lt.s32.totalorder %s2683, 43
          %s2685 = scalar_select %p2684, %s2683, 43
          %s2686 = smul.u32 64, %s2685
          %p2687 = scmp.ne.s32.totalorder 0, %s2686
          %s2688 = smul.addr %s2682, 4
          %s2689 = scalar_lea.vmem %s7, %s2688
          // Predicated region
          $region53: #{encoder_layer_forward.2} parent=51 // pred_check
            %p2690 = pneg %p2687
          $region54: #{encoder_layer_forward.2} parent=51 // pred_check_branch
            %2692 = sbr.rel (%p2690) target = $region56
          $region55: #{encoder_layer_forward.2} parent=51 // pred_region
            // Predicated region
            $region57: #{encoder_layer_forward.2} parent=55 // pred_check
              _
            $region58: #{encoder_layer_forward.2} parent=55 // pred_check_branch
              %2694 = sbr.rel target = $region60
            $region59: #{encoder_layer_forward.2} parent=55 // pred_region
              // Predicated region
              $region79: #{encoder_layer_forward.2} parent=59 // pred_check
                _
              $region80: #{encoder_layer_forward.2} parent=59 // pred_check_branch
                %2829 = sbr.rel (0) target = $region82
              $region81: #{encoder_layer_forward.2} parent=59 // pred_region
                %s2831 = ssub.s32 16, 1
                %s2832 = sdiv.u32.pop %s2685, 43
                %s2833 = srem.u32.pop %s2685, 43
                // While loop
                $region83: #{encoder_layer_forward.2} parent=81 // loop_pre_header
                  _
                $region84: #{encoder_layer_forward.2} parent=81 // loop_header
                  %s2835 = sphi 0, %s2837
                  %p2836 = scmp.ge.s32.totalorder %s2835, %s2832
                  %s2840 = sphi 0, %s2931
                  %s2841 = sphi %s2670, %s2934
                  %s2842 = sphi %s2689, %s2935
                $region85: #{encoder_layer_forward.2} parent=81 // loop_header_branch
                  %2839 = sbr.rel (%p2836) target = $region89
                $region86: #{encoder_layer_forward.2} parent=81 // loop_body
                  %v2843 = vld [vmem:[%s2841] sm:%s2831]
                  %2844 = vst [vmem:[%s2842] sm:%s2831] %v2843
                  %v2845 = vld [vmem:[%s2841 + $0x4] sm:%s2831]
                  %2846 = vst [vmem:[%s2842 + $0x4] sm:%s2831] %v2845
                  %v2847 = vld [vmem:[%s2841 + $0x8] sm:%s2831]
                  %2848 = vst [vmem:[%s2842 + $0x8] sm:%s2831] %v2847
                  %v2849 = vld [vmem:[%s2841 + $0xc] sm:%s2831]
                  %2850 = vst [vmem:[%s2842 + $0xc] sm:%s2831] %v2849
                  %v2851 = vld [vmem:[%s2841 + $0x10] sm:%s2831]
                  %2852 = vst [vmem:[%s2842 + $0x10] sm:%s2831] %v2851
                  %v2853 = vld [vmem:[%s2841 + $0x14] sm:%s2831]
                  %2854 = vst [vmem:[%s2842 + $0x14] sm:%s2831] %v2853
                  %v2855 = vld [vmem:[%s2841 + $0x18] sm:%s2831]
                  %2856 = vst [vmem:[%s2842 + $0x18] sm:%s2831] %v2855
                  %v2857 = vld [vmem:[%s2841 + $0x1c] sm:%s2831]
                  %2858 = vst [vmem:[%s2842 + $0x1c] sm:%s2831] %v2857
                  %v2859 = vld [vmem:[%s2841 + $0x20] sm:%s2831]
                  %2860 = vst [vmem:[%s2842 + $0x20] sm:%s2831] %v2859
                  %v2861 = vld [vmem:[%s2841 + $0x24] sm:%s2831]
                  %2862 = vst [vmem:[%s2842 + $0x24] sm:%s2831] %v2861
                  %v2863 = vld [vmem:[%s2841 + $0x28] sm:%s2831]
                  %2864 = vst [vmem:[%s2842 + $0x28] sm:%s2831] %v2863
                  %v2865 = vld [vmem:[%s2841 + $0x2c] sm:%s2831]
                  %2866 = vst [vmem:[%s2842 + $0x2c] sm:%s2831] %v2865
                  %v2867 = vld [vmem:[%s2841 + $0x30] sm:%s2831]
                  %2868 = vst [vmem:[%s2842 + $0x30] sm:%s2831] %v2867
                  %v2869 = vld [vmem:[%s2841 + $0x34] sm:%s2831]
                  %2870 = vst [vmem:[%s2842 + $0x34] sm:%s2831] %v2869
                  %v2871 = vld [vmem:[%s2841 + $0x38] sm:%s2831]
                  %2872 = vst [vmem:[%s2842 + $0x38] sm:%s2831] %v2871
                  %v2873 = vld [vmem:[%s2841 + $0x3c] sm:%s2831]
                  %2874 = vst [vmem:[%s2842 + $0x3c] sm:%s2831] %v2873
                  %v2875 = vld [vmem:[%s2841 + $0x40] sm:%s2831]
                  %2876 = vst [vmem:[%s2842 + $0x40] sm:%s2831] %v2875
                  %v2877 = vld [vmem:[%s2841 + $0x44] sm:%s2831]
                  %2878 = vst [vmem:[%s2842 + $0x44] sm:%s2831] %v2877
                  %v2879 = vld [vmem:[%s2841 + $0x48] sm:%s2831]
                  %2880 = vst [vmem:[%s2842 + $0x48] sm:%s2831] %v2879
                  %v2881 = vld [vmem:[%s2841 + $0x4c] sm:%s2831]
                  %2882 = vst [vmem:[%s2842 + $0x4c] sm:%s2831] %v2881
                  %v2883 = vld [vmem:[%s2841 + $0x50] sm:%s2831]
                  %2884 = vst [vmem:[%s2842 + $0x50] sm:%s2831] %v2883
                  %v2885 = vld [vmem:[%s2841 + $0x54] sm:%s2831]
                  %2886 = vst [vmem:[%s2842 + $0x54] sm:%s2831] %v2885
                  %v2887 = vld [vmem:[%s2841 + $0x58] sm:%s2831]
                  %2888 = vst [vmem:[%s2842 + $0x58] sm:%s2831] %v2887
                  %v2889 = vld [vmem:[%s2841 + $0x5c] sm:%s2831]
                  %2890 = vst [vmem:[%s2842 + $0x5c] sm:%s2831] %v2889
                  %v2891 = vld [vmem:[%s2841 + $0x60] sm:%s2831]
                  %2892 = vst [vmem:[%s2842 + $0x60] sm:%s2831] %v2891
                  %v2893 = vld [vmem:[%s2841 + $0x64] sm:%s2831]
                  %2894 = vst [vmem:[%s2842 + $0x64] sm:%s2831] %v2893
                  %v2895 = vld [vmem:[%s2841 + $0x68] sm:%s2831]
                  %2896 = vst [vmem:[%s2842 + $0x68] sm:%s2831] %v2895
                  %v2897 = vld [vmem:[%s2841 + $0x6c] sm:%s2831]
                  %2898 = vst [vmem:[%s2842 + $0x6c] sm:%s2831] %v2897
                  %v2899 = vld [vmem:[%s2841 + $0x70] sm:%s2831]
                  %2900 = vst [vmem:[%s2842 + $0x70] sm:%s2831] %v2899
                  %v2901 = vld [vmem:[%s2841 + $0x74] sm:%s2831]
                  %2902 = vst [vmem:[%s2842 + $0x74] sm:%s2831] %v2901
                  %v2903 = vld [vmem:[%s2841 + $0x78] sm:%s2831]
                  %2904 = vst [vmem:[%s2842 + $0x78] sm:%s2831] %v2903
                  %v2905 = vld [vmem:[%s2841 + $0x7c] sm:%s2831]
                  %2906 = vst [vmem:[%s2842 + $0x7c] sm:%s2831] %v2905
                  %v2907 = vld [vmem:[%s2841 + $0x80] sm:%s2831]
                  %2908 = vst [vmem:[%s2842 + $0x80] sm:%s2831] %v2907
                  %v2909 = vld [vmem:[%s2841 + $0x84] sm:%s2831]
                  %2910 = vst [vmem:[%s2842 + $0x84] sm:%s2831] %v2909
                  %v2911 = vld [vmem:[%s2841 + $0x88] sm:%s2831]
                  %2912 = vst [vmem:[%s2842 + $0x88] sm:%s2831] %v2911
                  %v2913 = vld [vmem:[%s2841 + $0x8c] sm:%s2831]
                  %2914 = vst [vmem:[%s2842 + $0x8c] sm:%s2831] %v2913
                  %v2915 = vld [vmem:[%s2841 + $0x90] sm:%s2831]
                  %2916 = vst [vmem:[%s2842 + $0x90] sm:%s2831] %v2915
                  %v2917 = vld [vmem:[%s2841 + $0x94] sm:%s2831]
                  %2918 = vst [vmem:[%s2842 + $0x94] sm:%s2831] %v2917
                  %v2919 = vld [vmem:[%s2841 + $0x98] sm:%s2831]
                  %2920 = vst [vmem:[%s2842 + $0x98] sm:%s2831] %v2919
                  %v2921 = vld [vmem:[%s2841 + $0x9c] sm:%s2831]
                  %2922 = vst [vmem:[%s2842 + $0x9c] sm:%s2831] %v2921
                  %v2923 = vld [vmem:[%s2841 + $0xa0] sm:%s2831]
                  %2924 = vst [vmem:[%s2842 + $0xa0] sm:%s2831] %v2923
                  %v2925 = vld [vmem:[%s2841 + $0xa4] sm:%s2831]
                  %2926 = vst [vmem:[%s2842 + $0xa4] sm:%s2831] %v2925
                  %v2927 = vld [vmem:[%s2841 + $0xa8] sm:%s2831]
                  %2928 = vst [vmem:[%s2842 + $0xa8] sm:%s2831] %v2927
                  %s2929 = sadd.s32 1, %s2840
                  %p2930 = scmp.ge.s32.totalorder %s2929, %s2832
                  %s2931 = scalar_select %p2930, 0, %s2929
                  %s2932 = smul.u32 %s2931, 172
                  %s2933 = smul.u32 %s2931, 172
                  %s2934 = scalar_lea.vmem %s2670, %s2932 [#allocation2]
                  %s2935 = scalar_lea.vmem %s2689, %s2933
                $region87: #{encoder_layer_forward.2} parent=81 // loop_footer
                  %s2837 = sadd.s32 %s2835, 1
                $region88: #{encoder_layer_forward.2} parent=81 // loop_footer_branch
                  %2834 = sbr.rel target = $region84
                $region89: #{encoder_layer_forward.2} parent=81 // loop_exit
                  _
                %s2936 = sdiv.u32.pop %s2685, 43
                %s2937 = srem.u32.pop %s2685, 43
                %s2938 = smul.u32 %s2936, 43
                %s2939 = smul.u32 4, %s2938
                %s2940 = scalar_lea.vmem %s2670, %s2939 [#allocation2]
                %s2941 = smul.u32 4, %s2938
                %s2942 = scalar_lea.vmem %s2689, %s2941
                // While loop
                $region90: #{encoder_layer_forward.2} parent=81 // loop_pre_header
                  _
                $region91: #{encoder_layer_forward.2} parent=81 // loop_header
                  %s2944 = sphi 0, %s2946
                  %p2945 = scmp.ge.s32.totalorder %s2944, %s2937
                  %s2949 = sphi 0, %s2956
                  %s2950 = sphi %s2940, %s2959
                  %s2951 = sphi %s2942, %s2960
                $region92: #{encoder_layer_forward.2} parent=81 // loop_header_branch
                  %2948 = sbr.rel (%p2945) target = $region96
                $region93: #{encoder_layer_forward.2} parent=81 // loop_body
                  %v2952 = vld [vmem:[%s2950] sm:%s2831]
                  %2953 = vst [vmem:[%s2951] sm:%s2831] %v2952
                  %s2954 = sadd.s32 1, %s2949
                  %p2955 = scmp.ge.s32.totalorder %s2954, %s2937
                  %s2956 = scalar_select %p2955, 0, %s2954
                  %s2957 = smul.u32 %s2956, 4
                  %s2958 = smul.u32 %s2956, 4
                  %s2959 = scalar_lea.vmem %s2940, %s2957 [#allocation2]
                  %s2960 = scalar_lea.vmem %s2942, %s2958
                $region94: #{encoder_layer_forward.2} parent=81 // loop_footer
                  %s2946 = sadd.s32 %s2944, 1
                $region95: #{encoder_layer_forward.2} parent=81 // loop_footer_branch
                  %2943 = sbr.rel target = $region91
                $region96: #{encoder_layer_forward.2} parent=81 // loop_exit
                  _
              $region82: #{encoder_layer_forward.2} parent=59 // pred_fallthru
                _
            $region60: #{encoder_layer_forward.2} parent=55 // pred_fallthru
              _
            // Predicated region
            $region61: #{encoder_layer_forward.2} parent=55 // pred_check
              _
            $region62: #{encoder_layer_forward.2} parent=55 // pred_check_branch
              %2696 = sbr.rel (0) target = $region64
            $region63: #{encoder_layer_forward.2} parent=55 // pred_region
              %s2698 = ssub.s32 16, 1
              %s2699 = sdiv.u32.pop %s2685, 43
              %s2700 = srem.u32.pop %s2685, 43
              // While loop
              $region65: #{encoder_layer_forward.2} parent=63 // loop_pre_header
                _
              $region66: #{encoder_layer_forward.2} parent=63 // loop_header
                %s2702 = sphi 0, %s2704
                %p2703 = scmp.ge.s32.totalorder %s2702, %s2699
                %s2707 = sphi 0, %s2798
                %s2708 = sphi %s2670, %s2801
                %s2709 = sphi %s2689, %s2802
              $region67: #{encoder_layer_forward.2} parent=63 // loop_header_branch
                %2706 = sbr.rel (%p2703) target = $region71
              $region68: #{encoder_layer_forward.2} parent=63 // loop_body
                %v2710 = vld [vmem:[%s2708] sm:%s2698]
                %2711 = vst [vmem:[%s2709] sm:%s2698] %v2710
                %v2712 = vld [vmem:[%s2708 + $0x4] sm:%s2698]
                %2713 = vst [vmem:[%s2709 + $0x4] sm:%s2698] %v2712
                %v2714 = vld [vmem:[%s2708 + $0x8] sm:%s2698]
                %2715 = vst [vmem:[%s2709 + $0x8] sm:%s2698] %v2714
                %v2716 = vld [vmem:[%s2708 + $0xc] sm:%s2698]
                %2717 = vst [vmem:[%s2709 + $0xc] sm:%s2698] %v2716
                %v2718 = vld [vmem:[%s2708 + $0x10] sm:%s2698]
                %2719 = vst [vmem:[%s2709 + $0x10] sm:%s2698] %v2718
                %v2720 = vld [vmem:[%s2708 + $0x14] sm:%s2698]
                %2721 = vst [vmem:[%s2709 + $0x14] sm:%s2698] %v2720
                %v2722 = vld [vmem:[%s2708 + $0x18] sm:%s2698]
                %2723 = vst [vmem:[%s2709 + $0x18] sm:%s2698] %v2722
                %v2724 = vld [vmem:[%s2708 + $0x1c] sm:%s2698]
                %2725 = vst [vmem:[%s2709 + $0x1c] sm:%s2698] %v2724
                %v2726 = vld [vmem:[%s2708 + $0x20] sm:%s2698]
                %2727 = vst [vmem:[%s2709 + $0x20] sm:%s2698] %v2726
                %v2728 = vld [vmem:[%s2708 + $0x24] sm:%s2698]
                %2729 = vst [vmem:[%s2709 + $0x24] sm:%s2698] %v2728
                %v2730 = vld [vmem:[%s2708 + $0x28] sm:%s2698]
                %2731 = vst [vmem:[%s2709 + $0x28] sm:%s2698] %v2730
                %v2732 = vld [vmem:[%s2708 + $0x2c] sm:%s2698]
                %2733 = vst [vmem:[%s2709 + $0x2c] sm:%s2698] %v2732
                %v2734 = vld [vmem:[%s2708 + $0x30] sm:%s2698]
                %2735 = vst [vmem:[%s2709 + $0x30] sm:%s2698] %v2734
                %v2736 = vld [vmem:[%s2708 + $0x34] sm:%s2698]
                %2737 = vst [vmem:[%s2709 + $0x34] sm:%s2698] %v2736
                %v2738 = vld [vmem:[%s2708 + $0x38] sm:%s2698]
                %2739 = vst [vmem:[%s2709 + $0x38] sm:%s2698] %v2738
                %v2740 = vld [vmem:[%s2708 + $0x3c] sm:%s2698]
                %2741 = vst [vmem:[%s2709 + $0x3c] sm:%s2698] %v2740
                %v2742 = vld [vmem:[%s2708 + $0x40] sm:%s2698]
                %2743 = vst [vmem:[%s2709 + $0x40] sm:%s2698] %v2742
                %v2744 = vld [vmem:[%s2708 + $0x44] sm:%s2698]
                %2745 = vst [vmem:[%s2709 + $0x44] sm:%s2698] %v2744
                %v2746 = vld [vmem:[%s2708 + $0x48] sm:%s2698]
                %2747 = vst [vmem:[%s2709 + $0x48] sm:%s2698] %v2746
                %v2748 = vld [vmem:[%s2708 + $0x4c] sm:%s2698]
                %2749 = vst [vmem:[%s2709 + $0x4c] sm:%s2698] %v2748
                %v2750 = vld [vmem:[%s2708 + $0x50] sm:%s2698]
                %2751 = vst [vmem:[%s2709 + $0x50] sm:%s2698] %v2750
                %v2752 = vld [vmem:[%s2708 + $0x54] sm:%s2698]
                %2753 = vst [vmem:[%s2709 + $0x54] sm:%s2698] %v2752
                %v2754 = vld [vmem:[%s2708 + $0x58] sm:%s2698]
                %2755 = vst [vmem:[%s2709 + $0x58] sm:%s2698] %v2754
                %v2756 = vld [vmem:[%s2708 + $0x5c] sm:%s2698]
                %2757 = vst [vmem:[%s2709 + $0x5c] sm:%s2698] %v2756
                %v2758 = vld [vmem:[%s2708 + $0x60] sm:%s2698]
                %2759 = vst [vmem:[%s2709 + $0x60] sm:%s2698] %v2758
                %v2760 = vld [vmem:[%s2708 + $0x64] sm:%s2698]
                %2761 = vst [vmem:[%s2709 + $0x64] sm:%s2698] %v2760
                %v2762 = vld [vmem:[%s2708 + $0x68] sm:%s2698]
                %2763 = vst [vmem:[%s2709 + $0x68] sm:%s2698] %v2762
                %v2764 = vld [vmem:[%s2708 + $0x6c] sm:%s2698]
                %2765 = vst [vmem:[%s2709 + $0x6c] sm:%s2698] %v2764
                %v2766 = vld [vmem:[%s2708 + $0x70] sm:%s2698]
                %2767 = vst [vmem:[%s2709 + $0x70] sm:%s2698] %v2766
                %v2768 = vld [vmem:[%s2708 + $0x74] sm:%s2698]
                %2769 = vst [vmem:[%s2709 + $0x74] sm:%s2698] %v2768
                %v2770 = vld [vmem:[%s2708 + $0x78] sm:%s2698]
                %2771 = vst [vmem:[%s2709 + $0x78] sm:%s2698] %v2770
                %v2772 = vld [vmem:[%s2708 + $0x7c] sm:%s2698]
                %2773 = vst [vmem:[%s2709 + $0x7c] sm:%s2698] %v2772
                %v2774 = vld [vmem:[%s2708 + $0x80] sm:%s2698]
                %2775 = vst [vmem:[%s2709 + $0x80] sm:%s2698] %v2774
                %v2776 = vld [vmem:[%s2708 + $0x84] sm:%s2698]
                %2777 = vst [vmem:[%s2709 + $0x84] sm:%s2698] %v2776
                %v2778 = vld [vmem:[%s2708 + $0x88] sm:%s2698]
                %2779 = vst [vmem:[%s2709 + $0x88] sm:%s2698] %v2778
                %v2780 = vld [vmem:[%s2708 + $0x8c] sm:%s2698]
                %2781 = vst [vmem:[%s2709 + $0x8c] sm:%s2698] %v2780
                %v2782 = vld [vmem:[%s2708 + $0x90] sm:%s2698]
                %2783 = vst [vmem:[%s2709 + $0x90] sm:%s2698] %v2782
                %v2784 = vld [vmem:[%s2708 + $0x94] sm:%s2698]
                %2785 = vst [vmem:[%s2709 + $0x94] sm:%s2698] %v2784
                %v2786 = vld [vmem:[%s2708 + $0x98] sm:%s2698]
                %2787 = vst [vmem:[%s2709 + $0x98] sm:%s2698] %v2786
                %v2788 = vld [vmem:[%s2708 + $0x9c] sm:%s2698]
                %2789 = vst [vmem:[%s2709 + $0x9c] sm:%s2698] %v2788
                %v2790 = vld [vmem:[%s2708 + $0xa0] sm:%s2698]
                %2791 = vst [vmem:[%s2709 + $0xa0] sm:%s2698] %v2790
                %v2792 = vld [vmem:[%s2708 + $0xa4] sm:%s2698]
                %2793 = vst [vmem:[%s2709 + $0xa4] sm:%s2698] %v2792
                %v2794 = vld [vmem:[%s2708 + $0xa8] sm:%s2698]
                %2795 = vst [vmem:[%s2709 + $0xa8] sm:%s2698] %v2794
                %s2796 = sadd.s32 1, %s2707
                %p2797 = scmp.ge.s32.totalorder %s2796, %s2699
                %s2798 = scalar_select %p2797, 0, %s2796
                %s2799 = smul.u32 %s2798, 172
                %s2800 = smul.u32 %s2798, 172
                %s2801 = scalar_lea.vmem %s2670, %s2799 [#allocation2]
                %s2802 = scalar_lea.vmem %s2689, %s2800
              $region69: #{encoder_layer_forward.2} parent=63 // loop_footer
                %s2704 = sadd.s32 %s2702, 1
              $region70: #{encoder_layer_forward.2} parent=63 // loop_footer_branch
                %2701 = sbr.rel target = $region66
              $region71: #{encoder_layer_forward.2} parent=63 // loop_exit
                _
              %s2803 = sdiv.u32.pop %s2685, 43
              %s2804 = srem.u32.pop %s2685, 43
              %s2805 = smul.u32 %s2803, 43
              %s2806 = smul.u32 4, %s2805
              %s2807 = scalar_lea.vmem %s2670, %s2806 [#allocation2]
              %s2808 = smul.u32 4, %s2805
              %s2809 = scalar_lea.vmem %s2689, %s2808
              // While loop
              $region72: #{encoder_layer_forward.2} parent=63 // loop_pre_header
                _
              $region73: #{encoder_layer_forward.2} parent=63 // loop_header
                %s2811 = sphi 0, %s2813
                %p2812 = scmp.ge.s32.totalorder %s2811, %s2804
                %s2816 = sphi 0, %s2823
                %s2817 = sphi %s2807, %s2826
                %s2818 = sphi %s2809, %s2827
              $region74: #{encoder_layer_forward.2} parent=63 // loop_header_branch
                %2815 = sbr.rel (%p2812) target = $region78
              $region75: #{encoder_layer_forward.2} parent=63 // loop_body
                %v2819 = vld [vmem:[%s2817] sm:%s2698]
                %2820 = vst [vmem:[%s2818] sm:%s2698] %v2819
                %s2821 = sadd.s32 1, %s2816
                %p2822 = scmp.ge.s32.totalorder %s2821, %s2804
                %s2823 = scalar_select %p2822, 0, %s2821
                %s2824 = smul.u32 %s2823, 4
                %s2825 = smul.u32 %s2823, 4
                %s2826 = scalar_lea.vmem %s2807, %s2824 [#allocation2]
                %s2827 = scalar_lea.vmem %s2809, %s2825
              $region76: #{encoder_layer_forward.2} parent=63 // loop_footer
                %s2813 = sadd.s32 %s2811, 1
              $region77: #{encoder_layer_forward.2} parent=63 // loop_footer_branch
                %2810 = sbr.rel target = $region73
              $region78: #{encoder_layer_forward.2} parent=63 // loop_exit
                _
            $region64: #{encoder_layer_forward.2} parent=55 // pred_fallthru
              _
          $region56: #{encoder_layer_forward.2} parent=51 // pred_fallthru
            _
          %2961 = vnop
        $region52: #{encoder_layer_forward.2} parent=47 // pred_fallthru
          _
        // Predicated region
        $region97: #{encoder_layer_forward.2} parent=47 // pred_check
          %p2962 = pneg %p222
        $region98: #{encoder_layer_forward.2} parent=47 // pred_check_branch
          %2964 = sbr.rel (%p2962) target = $region100
        $region99: #{encoder_layer_forward.2} parent=47 // pred_region
          %s2965 = smul.u32 43, %s21
          %s2966 = ssub.s32 85, %s2965
          %p2967 = scmp.lt.s32.totalorder %s2966, 43
          %s2968 = scalar_select %p2967, %s2966, 43
          %s2969 = smul.u32 128, %s2968
          %s2970 = smul.u32 %s2969, 2
          %p2971 = scmp.ne.s32.totalorder 0, %s2970
          %s2972 = smul.addr %s2965, 2
          %s2973 = smul.addr %s2972, 8
          %s2974 = scalar_lea.vmem %s8, %s2973
          // Predicated region
          $region101: #{encoder_layer_forward.2} parent=99 // pred_check
            %p2975 = pneg %p2971
          $region102: #{encoder_layer_forward.2} parent=99 // pred_check_branch
            %2977 = sbr.rel (%p2975) target = $region104
          $region103: #{encoder_layer_forward.2} parent=99 // pred_region
            // Predicated region
            $region105: #{encoder_layer_forward.2} parent=103 // pred_check
              _
            $region106: #{encoder_layer_forward.2} parent=103 // pred_check_branch
              %2979 = sbr.rel (0) target = $region108
            $region107: #{encoder_layer_forward.2} parent=103 // pred_region
              %s2980 = sshrl.u32 %s2968, 5
              // While loop
              $region109: #{encoder_layer_forward.2} parent=107 // loop_pre_header
                _
              $region110: #{encoder_layer_forward.2} parent=107 // loop_header
                %s2982 = sphi 0, %s2984
                %p2983 = scmp.ge.s32.totalorder %s2982, %s2980
                %s2987 = sphi 0, %s3120
                %s2988 = sphi %s2674, %s3123
                %s2989 = sphi %s2974, %s3124
              $region111: #{encoder_layer_forward.2} parent=107 // loop_header_branch
                %2986 = sbr.rel (%p2983) target = $region115
              $region112: #{encoder_layer_forward.2} parent=107 // loop_body
                %v2990 = vld [vmem:[%s2988] sm:$0xff]
                %2991 = vst [vmem:[%s2989] sm:$0xff] %v2990
                %v2992 = vld [vmem:[%s2988 + $0x10] sm:$0xff]
                %2993 = vst [vmem:[%s2989 + $0x10] sm:$0xff] %v2992
                %v2994 = vld [vmem:[%s2988 + $0x20] sm:$0xff]
                %2995 = vst [vmem:[%s2989 + $0x20] sm:$0xff] %v2994
                %v2996 = vld [vmem:[%s2988 + $0x30] sm:$0xff]
                %2997 = vst [vmem:[%s2989 + $0x30] sm:$0xff] %v2996
                %v2998 = vld [vmem:[%s2988 + $0x40] sm:$0xff]
                %2999 = vst [vmem:[%s2989 + $0x40] sm:$0xff] %v2998
                %v3000 = vld [vmem:[%s2988 + $0x50] sm:$0xff]
                %3001 = vst [vmem:[%s2989 + $0x50] sm:$0xff] %v3000
                %v3002 = vld [vmem:[%s2988 + $0x60] sm:$0xff]
                %3003 = vst [vmem:[%s2989 + $0x60] sm:$0xff] %v3002
                %v3004 = vld [vmem:[%s2988 + $0x70] sm:$0xff]
                %3005 = vst [vmem:[%s2989 + $0x70] sm:$0xff] %v3004
                %v3006 = vld [vmem:[%s2988 + $0x80] sm:$0xff]
                %3007 = vst [vmem:[%s2989 + $0x80] sm:$0xff] %v3006
                %v3008 = vld [vmem:[%s2988 + $0x90] sm:$0xff]
                %3009 = vst [vmem:[%s2989 + $0x90] sm:$0xff] %v3008
                %v3010 = vld [vmem:[%s2988 + $0xa0] sm:$0xff]
                %3011 = vst [vmem:[%s2989 + $0xa0] sm:$0xff] %v3010
                %v3012 = vld [vmem:[%s2988 + $0xb0] sm:$0xff]
                %3013 = vst [vmem:[%s2989 + $0xb0] sm:$0xff] %v3012
                %v3014 = vld [vmem:[%s2988 + $0xc0] sm:$0xff]
                %3015 = vst [vmem:[%s2989 + $0xc0] sm:$0xff] %v3014
                %v3016 = vld [vmem:[%s2988 + $0xd0] sm:$0xff]
                %3017 = vst [vmem:[%s2989 + $0xd0] sm:$0xff] %v3016
                %v3018 = vld [vmem:[%s2988 + $0xe0] sm:$0xff]
                %3019 = vst [vmem:[%s2989 + $0xe0] sm:$0xff] %v3018
                %v3020 = vld [vmem:[%s2988 + $0xf0] sm:$0xff]
                %3021 = vst [vmem:[%s2989 + $0xf0] sm:$0xff] %v3020
                %v3022 = vld [vmem:[%s2988 + $0x100] sm:$0xff]
                %3023 = vst [vmem:[%s2989 + $0x100] sm:$0xff] %v3022
                %v3024 = vld [vmem:[%s2988 + $0x110] sm:$0xff]
                %3025 = vst [vmem:[%s2989 + $0x110] sm:$0xff] %v3024
                %v3026 = vld [vmem:[%s2988 + $0x120] sm:$0xff]
                %3027 = vst [vmem:[%s2989 + $0x120] sm:$0xff] %v3026
                %v3028 = vld [vmem:[%s2988 + $0x130] sm:$0xff]
                %3029 = vst [vmem:[%s2989 + $0x130] sm:$0xff] %v3028
                %v3030 = vld [vmem:[%s2988 + $0x140] sm:$0xff]
                %3031 = vst [vmem:[%s2989 + $0x140] sm:$0xff] %v3030
                %v3032 = vld [vmem:[%s2988 + $0x150] sm:$0xff]
                %3033 = vst [vmem:[%s2989 + $0x150] sm:$0xff] %v3032
                %v3034 = vld [vmem:[%s2988 + $0x160] sm:$0xff]
                %3035 = vst [vmem:[%s2989 + $0x160] sm:$0xff] %v3034
                %v3036 = vld [vmem:[%s2988 + $0x170] sm:$0xff]
                %3037 = vst [vmem:[%s2989 + $0x170] sm:$0xff] %v3036
                %v3038 = vld [vmem:[%s2988 + $0x180] sm:$0xff]
                %3039 = vst [vmem:[%s2989 + $0x180] sm:$0xff] %v3038
                %v3040 = vld [vmem:[%s2988 + $0x190] sm:$0xff]
                %3041 = vst [vmem:[%s2989 + $0x190] sm:$0xff] %v3040
                %v3042 = vld [vmem:[%s2988 + $0x1a0] sm:$0xff]
                %3043 = vst [vmem:[%s2989 + $0x1a0] sm:$0xff] %v3042
                %v3044 = vld [vmem:[%s2988 + $0x1b0] sm:$0xff]
                %3045 = vst [vmem:[%s2989 + $0x1b0] sm:$0xff] %v3044
                %v3046 = vld [vmem:[%s2988 + $0x1c0] sm:$0xff]
                %3047 = vst [vmem:[%s2989 + $0x1c0] sm:$0xff] %v3046
                %v3048 = vld [vmem:[%s2988 + $0x1d0] sm:$0xff]
                %3049 = vst [vmem:[%s2989 + $0x1d0] sm:$0xff] %v3048
                %v3050 = vld [vmem:[%s2988 + $0x1e0] sm:$0xff]
                %3051 = vst [vmem:[%s2989 + $0x1e0] sm:$0xff] %v3050
                %v3052 = vld [vmem:[%s2988 + $0x1f0] sm:$0xff]
                %3053 = vst [vmem:[%s2989 + $0x1f0] sm:$0xff] %v3052
                %v3054 = vld [vmem:[%s2988 + $0x8] sm:$0xff]
                %3055 = vst [vmem:[%s2989 + $0x8] sm:$0xff] %v3054
                %v3056 = vld [vmem:[%s2988 + $0x18] sm:$0xff]
                %3057 = vst [vmem:[%s2989 + $0x18] sm:$0xff] %v3056
                %v3058 = vld [vmem:[%s2988 + $0x28] sm:$0xff]
                %3059 = vst [vmem:[%s2989 + $0x28] sm:$0xff] %v3058
                %v3060 = vld [vmem:[%s2988 + $0x38] sm:$0xff]
                %3061 = vst [vmem:[%s2989 + $0x38] sm:$0xff] %v3060
                %v3062 = vld [vmem:[%s2988 + $0x48] sm:$0xff]
                %3063 = vst [vmem:[%s2989 + $0x48] sm:$0xff] %v3062
                %v3064 = vld [vmem:[%s2988 + $0x58] sm:$0xff]
                %3065 = vst [vmem:[%s2989 + $0x58] sm:$0xff] %v3064
                %v3066 = vld [vmem:[%s2988 + $0x68] sm:$0xff]
                %3067 = vst [vmem:[%s2989 + $0x68] sm:$0xff] %v3066
                %v3068 = vld [vmem:[%s2988 + $0x78] sm:$0xff]
                %3069 = vst [vmem:[%s2989 + $0x78] sm:$0xff] %v3068
                %v3070 = vld [vmem:[%s2988 + $0x88] sm:$0xff]
                %3071 = vst [vmem:[%s2989 + $0x88] sm:$0xff] %v3070
                %v3072 = vld [vmem:[%s2988 + $0x98] sm:$0xff]
                %3073 = vst [vmem:[%s2989 + $0x98] sm:$0xff] %v3072
                %v3074 = vld [vmem:[%s2988 + $0xa8] sm:$0xff]
                %3075 = vst [vmem:[%s2989 + $0xa8] sm:$0xff] %v3074
                %v3076 = vld [vmem:[%s2988 + $0xb8] sm:$0xff]
                %3077 = vst [vmem:[%s2989 + $0xb8] sm:$0xff] %v3076
                %v3078 = vld [vmem:[%s2988 + $0xc8] sm:$0xff]
                %3079 = vst [vmem:[%s2989 + $0xc8] sm:$0xff] %v3078
                %v3080 = vld [vmem:[%s2988 + $0xd8] sm:$0xff]
                %3081 = vst [vmem:[%s2989 + $0xd8] sm:$0xff] %v3080
                %v3082 = vld [vmem:[%s2988 + $0xe8] sm:$0xff]
                %3083 = vst [vmem:[%s2989 + $0xe8] sm:$0xff] %v3082
                %v3084 = vld [vmem:[%s2988 + $0xf8] sm:$0xff]
                %3085 = vst [vmem:[%s2989 + $0xf8] sm:$0xff] %v3084
                %v3086 = vld [vmem:[%s2988 + $0x108] sm:$0xff]
                %3087 = vst [vmem:[%s2989 + $0x108] sm:$0xff] %v3086
                %v3088 = vld [vmem:[%s2988 + $0x118] sm:$0xff]
                %3089 = vst [vmem:[%s2989 + $0x118] sm:$0xff] %v3088
                %v3090 = vld [vmem:[%s2988 + $0x128] sm:$0xff]
                %3091 = vst [vmem:[%s2989 + $0x128] sm:$0xff] %v3090
                %v3092 = vld [vmem:[%s2988 + $0x138] sm:$0xff]
                %3093 = vst [vmem:[%s2989 + $0x138] sm:$0xff] %v3092
                %v3094 = vld [vmem:[%s2988 + $0x148] sm:$0xff]
                %3095 = vst [vmem:[%s2989 + $0x148] sm:$0xff] %v3094
                %v3096 = vld [vmem:[%s2988 + $0x158] sm:$0xff]
                %3097 = vst [vmem:[%s2989 + $0x158] sm:$0xff] %v3096
                %v3098 = vld [vmem:[%s2988 + $0x168] sm:$0xff]
                %3099 = vst [vmem:[%s2989 + $0x168] sm:$0xff] %v3098
                %v3100 = vld [vmem:[%s2988 + $0x178] sm:$0xff]
                %3101 = vst [vmem:[%s2989 + $0x178] sm:$0xff] %v3100
                %v3102 = vld [vmem:[%s2988 + $0x188] sm:$0xff]
                %3103 = vst [vmem:[%s2989 + $0x188] sm:$0xff] %v3102
                %v3104 = vld [vmem:[%s2988 + $0x198] sm:$0xff]
                %3105 = vst [vmem:[%s2989 + $0x198] sm:$0xff] %v3104
                %v3106 = vld [vmem:[%s2988 + $0x1a8] sm:$0xff]
                %3107 = vst [vmem:[%s2989 + $0x1a8] sm:$0xff] %v3106
                %v3108 = vld [vmem:[%s2988 + $0x1b8] sm:$0xff]
                %3109 = vst [vmem:[%s2989 + $0x1b8] sm:$0xff] %v3108
                %v3110 = vld [vmem:[%s2988 + $0x1c8] sm:$0xff]
                %3111 = vst [vmem:[%s2989 + $0x1c8] sm:$0xff] %v3110
                %v3112 = vld [vmem:[%s2988 + $0x1d8] sm:$0xff]
                %3113 = vst [vmem:[%s2989 + $0x1d8] sm:$0xff] %v3112
                %v3114 = vld [vmem:[%s2988 + $0x1e8] sm:$0xff]
                %3115 = vst [vmem:[%s2989 + $0x1e8] sm:$0xff] %v3114
                %v3116 = vld [vmem:[%s2988 + $0x1f8] sm:$0xff]
                %3117 = vst [vmem:[%s2989 + $0x1f8] sm:$0xff] %v3116
                %s3118 = sadd.s32 1, %s2987
                %p3119 = scmp.ge.s32.totalorder %s3118, %s2980
                %s3120 = scalar_select %p3119, 0, %s3118
                %s3121 = smul.u32 %s3120, 512
                %s3122 = smul.u32 %s3120, 512
                %s3123 = scalar_lea.vmem %s2674, %s3121 [#allocation3]
                %s3124 = scalar_lea.vmem %s2974, %s3122
              $region113: #{encoder_layer_forward.2} parent=107 // loop_footer
                %s2984 = sadd.s32 %s2982, 1
              $region114: #{encoder_layer_forward.2} parent=107 // loop_footer_branch
                %2981 = sbr.rel target = $region110
              $region115: #{encoder_layer_forward.2} parent=107 // loop_exit
                _
              %s3125 = sshrl.u32 %s2968, 5
              %s3126 = sand.u32 %s2968, 31
              %s3127 = smul.u32 %s3125, 32
              %s3128 = smul.u32 16, %s3127
              %s3129 = scalar_lea.vmem %s2674, %s3128 [#allocation3]
              %s3130 = smul.u32 16, %s3127
              %s3131 = scalar_lea.vmem %s2974, %s3130
              // While loop
              $region116: #{encoder_layer_forward.2} parent=107 // loop_pre_header
                _
              $region117: #{encoder_layer_forward.2} parent=107 // loop_header
                %s3133 = sphi 0, %s3135
                %p3134 = scmp.ge.s32.totalorder %s3133, %s3126
                %s3138 = sphi 0, %s3147
                %s3139 = sphi %s3129, %s3150
                %s3140 = sphi %s3131, %s3151
              $region118: #{encoder_layer_forward.2} parent=107 // loop_header_branch
                %3137 = sbr.rel (%p3134) target = $region122
              $region119: #{encoder_layer_forward.2} parent=107 // loop_body
                %v3141 = vld [vmem:[%s3139] sm:$0xff]
                %3142 = vst [vmem:[%s3140] sm:$0xff] %v3141
                %v3143 = vld [vmem:[%s3139 + $0x8] sm:$0xff]
                %3144 = vst [vmem:[%s3140 + $0x8] sm:$0xff] %v3143
                %s3145 = sadd.s32 1, %s3138
                %p3146 = scmp.ge.s32.totalorder %s3145, %s3126
                %s3147 = scalar_select %p3146, 0, %s3145
                %s3148 = smul.u32 %s3147, 16
                %s3149 = smul.u32 %s3147, 16
                %s3150 = scalar_lea.vmem %s3129, %s3148 [#allocation3]
                %s3151 = scalar_lea.vmem %s3131, %s3149
              $region120: #{encoder_layer_forward.2} parent=107 // loop_footer
                %s3135 = sadd.s32 %s3133, 1
              $region121: #{encoder_layer_forward.2} parent=107 // loop_footer_branch
                %3132 = sbr.rel target = $region117
              $region122: #{encoder_layer_forward.2} parent=107 // loop_exit
                _
            $region108: #{encoder_layer_forward.2} parent=103 // pred_fallthru
              _
            // Predicated region
            $region123: #{encoder_layer_forward.2} parent=103 // pred_check
              _
            $region124: #{encoder_layer_forward.2} parent=103 // pred_check_branch
              %3153 = sbr.rel target = $region126
            $region125: #{encoder_layer_forward.2} parent=103 // pred_region
              _
            $region126: #{encoder_layer_forward.2} parent=103 // pred_fallthru
              _
          $region104: #{encoder_layer_forward.2} parent=99 // pred_fallthru
            _
          %3154 = vnop
        $region100: #{encoder_layer_forward.2} parent=47 // pred_fallthru
          _
        // Predicated region
        $region127: #{encoder_layer_forward.2} parent=47 // pred_check
          %p3155 = pneg %p248
        $region128: #{encoder_layer_forward.2} parent=47 // pred_check_branch
          %3157 = sbr.rel (%p3155) target = $region130
        $region129: #{encoder_layer_forward.2} parent=47 // pred_region
          %s3158 = smul.u32 43, %s21
          %s3159 = ssub.s32 85, %s3158
          %p3160 = scmp.lt.s32.totalorder %s3159, 43
          %s3161 = scalar_select %p3160, %s3159, 43
          %s3162 = smul.u32 128, %s3161
          %p3163 = scmp.ne.s32.totalorder 0, %s3162
          %s3164 = smul.addr %s3158, 8
          %s3165 = scalar_lea.vmem %s9, %s3164
          // Predicated region
          $region131: #{encoder_layer_forward.2} parent=129 // pred_check
            %p3166 = pneg %p3163
          $region132: #{encoder_layer_forward.2} parent=129 // pred_check_branch
            %3168 = sbr.rel (%p3166) target = $region134
          $region133: #{encoder_layer_forward.2} parent=129 // pred_region
            // Predicated region
            $region135: #{encoder_layer_forward.2} parent=133 // pred_check
              _
            $region136: #{encoder_layer_forward.2} parent=133 // pred_check_branch
              %3170 = sbr.rel (0) target = $region138
            $region137: #{encoder_layer_forward.2} parent=133 // pred_region
              // Predicated region
              $region157: #{encoder_layer_forward.2} parent=137 // pred_check
                _
              $region158: #{encoder_layer_forward.2} parent=137 // pred_check_branch
                %3305 = sbr.rel (0) target = $region160
              $region159: #{encoder_layer_forward.2} parent=137 // pred_region
                %s3306 = sdiv.u32.pop %s3161, 43
                %s3307 = srem.u32.pop %s3161, 43
                // While loop
                $region161: #{encoder_layer_forward.2} parent=159 // loop_pre_header
                  _
                $region162: #{encoder_layer_forward.2} parent=159 // loop_header
                  %s3309 = sphi 0, %s3311
                  %p3310 = scmp.ge.s32.totalorder %s3309, %s3306
                  %s3314 = sphi 0, %s3405
                  %s3315 = sphi %s2678, %s3408
                  %s3316 = sphi %s3165, %s3409
                $region163: #{encoder_layer_forward.2} parent=159 // loop_header_branch
                  %3313 = sbr.rel (%p3310) target = $region167
                $region164: #{encoder_layer_forward.2} parent=159 // loop_body
                  %v3317 = vld [vmem:[%s3315] sm:$0xff]
                  %3318 = vst [vmem:[%s3316] sm:$0xff] %v3317
                  %v3319 = vld [vmem:[%s3315 + $0x8] sm:$0xff]
                  %3320 = vst [vmem:[%s3316 + $0x8] sm:$0xff] %v3319
                  %v3321 = vld [vmem:[%s3315 + $0x10] sm:$0xff]
                  %3322 = vst [vmem:[%s3316 + $0x10] sm:$0xff] %v3321
                  %v3323 = vld [vmem:[%s3315 + $0x18] sm:$0xff]
                  %3324 = vst [vmem:[%s3316 + $0x18] sm:$0xff] %v3323
                  %v3325 = vld [vmem:[%s3315 + $0x20] sm:$0xff]
                  %3326 = vst [vmem:[%s3316 + $0x20] sm:$0xff] %v3325
                  %v3327 = vld [vmem:[%s3315 + $0x28] sm:$0xff]
                  %3328 = vst [vmem:[%s3316 + $0x28] sm:$0xff] %v3327
                  %v3329 = vld [vmem:[%s3315 + $0x30] sm:$0xff]
                  %3330 = vst [vmem:[%s3316 + $0x30] sm:$0xff] %v3329
                  %v3331 = vld [vmem:[%s3315 + $0x38] sm:$0xff]
                  %3332 = vst [vmem:[%s3316 + $0x38] sm:$0xff] %v3331
                  %v3333 = vld [vmem:[%s3315 + $0x40] sm:$0xff]
                  %3334 = vst [vmem:[%s3316 + $0x40] sm:$0xff] %v3333
                  %v3335 = vld [vmem:[%s3315 + $0x48] sm:$0xff]
                  %3336 = vst [vmem:[%s3316 + $0x48] sm:$0xff] %v3335
                  %v3337 = vld [vmem:[%s3315 + $0x50] sm:$0xff]
                  %3338 = vst [vmem:[%s3316 + $0x50] sm:$0xff] %v3337
                  %v3339 = vld [vmem:[%s3315 + $0x58] sm:$0xff]
                  %3340 = vst [vmem:[%s3316 + $0x58] sm:$0xff] %v3339
                  %v3341 = vld [vmem:[%s3315 + $0x60] sm:$0xff]
                  %3342 = vst [vmem:[%s3316 + $0x60] sm:$0xff] %v3341
                  %v3343 = vld [vmem:[%s3315 + $0x68] sm:$0xff]
                  %3344 = vst [vmem:[%s3316 + $0x68] sm:$0xff] %v3343
                  %v3345 = vld [vmem:[%s3315 + $0x70] sm:$0xff]
                  %3346 = vst [vmem:[%s3316 + $0x70] sm:$0xff] %v3345
                  %v3347 = vld [vmem:[%s3315 + $0x78] sm:$0xff]
                  %3348 = vst [vmem:[%s3316 + $0x78] sm:$0xff] %v3347
                  %v3349 = vld [vmem:[%s3315 + $0x80] sm:$0xff]
                  %3350 = vst [vmem:[%s3316 + $0x80] sm:$0xff] %v3349
                  %v3351 = vld [vmem:[%s3315 + $0x88] sm:$0xff]
                  %3352 = vst [vmem:[%s3316 + $0x88] sm:$0xff] %v3351
                  %v3353 = vld [vmem:[%s3315 + $0x90] sm:$0xff]
                  %3354 = vst [vmem:[%s3316 + $0x90] sm:$0xff] %v3353
                  %v3355 = vld [vmem:[%s3315 + $0x98] sm:$0xff]
                  %3356 = vst [vmem:[%s3316 + $0x98] sm:$0xff] %v3355
                  %v3357 = vld [vmem:[%s3315 + $0xa0] sm:$0xff]
                  %3358 = vst [vmem:[%s3316 + $0xa0] sm:$0xff] %v3357
                  %v3359 = vld [vmem:[%s3315 + $0xa8] sm:$0xff]
                  %3360 = vst [vmem:[%s3316 + $0xa8] sm:$0xff] %v3359
                  %v3361 = vld [vmem:[%s3315 + $0xb0] sm:$0xff]
                  %3362 = vst [vmem:[%s3316 + $0xb0] sm:$0xff] %v3361
                  %v3363 = vld [vmem:[%s3315 + $0xb8] sm:$0xff]
                  %3364 = vst [vmem:[%s3316 + $0xb8] sm:$0xff] %v3363
                  %v3365 = vld [vmem:[%s3315 + $0xc0] sm:$0xff]
                  %3366 = vst [vmem:[%s3316 + $0xc0] sm:$0xff] %v3365
                  %v3367 = vld [vmem:[%s3315 + $0xc8] sm:$0xff]
                  %3368 = vst [vmem:[%s3316 + $0xc8] sm:$0xff] %v3367
                  %v3369 = vld [vmem:[%s3315 + $0xd0] sm:$0xff]
                  %3370 = vst [vmem:[%s3316 + $0xd0] sm:$0xff] %v3369
                  %v3371 = vld [vmem:[%s3315 + $0xd8] sm:$0xff]
                  %3372 = vst [vmem:[%s3316 + $0xd8] sm:$0xff] %v3371
                  %v3373 = vld [vmem:[%s3315 + $0xe0] sm:$0xff]
                  %3374 = vst [vmem:[%s3316 + $0xe0] sm:$0xff] %v3373
                  %v3375 = vld [vmem:[%s3315 + $0xe8] sm:$0xff]
                  %3376 = vst [vmem:[%s3316 + $0xe8] sm:$0xff] %v3375
                  %v3377 = vld [vmem:[%s3315 + $0xf0] sm:$0xff]
                  %3378 = vst [vmem:[%s3316 + $0xf0] sm:$0xff] %v3377
                  %v3379 = vld [vmem:[%s3315 + $0xf8] sm:$0xff]
                  %3380 = vst [vmem:[%s3316 + $0xf8] sm:$0xff] %v3379
                  %v3381 = vld [vmem:[%s3315 + $0x100] sm:$0xff]
                  %3382 = vst [vmem:[%s3316 + $0x100] sm:$0xff] %v3381
                  %v3383 = vld [vmem:[%s3315 + $0x108] sm:$0xff]
                  %3384 = vst [vmem:[%s3316 + $0x108] sm:$0xff] %v3383
                  %v3385 = vld [vmem:[%s3315 + $0x110] sm:$0xff]
                  %3386 = vst [vmem:[%s3316 + $0x110] sm:$0xff] %v3385
                  %v3387 = vld [vmem:[%s3315 + $0x118] sm:$0xff]
                  %3388 = vst [vmem:[%s3316 + $0x118] sm:$0xff] %v3387
                  %v3389 = vld [vmem:[%s3315 + $0x120] sm:$0xff]
                  %3390 = vst [vmem:[%s3316 + $0x120] sm:$0xff] %v3389
                  %v3391 = vld [vmem:[%s3315 + $0x128] sm:$0xff]
                  %3392 = vst [vmem:[%s3316 + $0x128] sm:$0xff] %v3391
                  %v3393 = vld [vmem:[%s3315 + $0x130] sm:$0xff]
                  %3394 = vst [vmem:[%s3316 + $0x130] sm:$0xff] %v3393
                  %v3395 = vld [vmem:[%s3315 + $0x138] sm:$0xff]
                  %3396 = vst [vmem:[%s3316 + $0x138] sm:$0xff] %v3395
                  %v3397 = vld [vmem:[%s3315 + $0x140] sm:$0xff]
                  %3398 = vst [vmem:[%s3316 + $0x140] sm:$0xff] %v3397
                  %v3399 = vld [vmem:[%s3315 + $0x148] sm:$0xff]
                  %3400 = vst [vmem:[%s3316 + $0x148] sm:$0xff] %v3399
                  %v3401 = vld [vmem:[%s3315 + $0x150] sm:$0xff]
                  %3402 = vst [vmem:[%s3316 + $0x150] sm:$0xff] %v3401
                  %s3403 = sadd.s32 1, %s3314
                  %p3404 = scmp.ge.s32.totalorder %s3403, %s3306
                  %s3405 = scalar_select %p3404, 0, %s3403
                  %s3406 = smul.u32 %s3405, 344
                  %s3407 = smul.u32 %s3405, 344
                  %s3408 = scalar_lea.vmem %s2678, %s3406 [#allocation4]
                  %s3409 = scalar_lea.vmem %s3165, %s3407
                $region165: #{encoder_layer_forward.2} parent=159 // loop_footer
                  %s3311 = sadd.s32 %s3309, 1
                $region166: #{encoder_layer_forward.2} parent=159 // loop_footer_branch
                  %3308 = sbr.rel target = $region162
                $region167: #{encoder_layer_forward.2} parent=159 // loop_exit
                  _
                %s3410 = sdiv.u32.pop %s3161, 43
                %s3411 = srem.u32.pop %s3161, 43
                %s3412 = smul.u32 %s3410, 43
                %s3413 = smul.u32 8, %s3412
                %s3414 = scalar_lea.vmem %s2678, %s3413 [#allocation4]
                %s3415 = smul.u32 8, %s3412
                %s3416 = scalar_lea.vmem %s3165, %s3415
                // While loop
                $region168: #{encoder_layer_forward.2} parent=159 // loop_pre_header
                  _
                $region169: #{encoder_layer_forward.2} parent=159 // loop_header
                  %s3418 = sphi 0, %s3420
                  %p3419 = scmp.ge.s32.totalorder %s3418, %s3411
                  %s3423 = sphi 0, %s3430
                  %s3424 = sphi %s3414, %s3433
                  %s3425 = sphi %s3416, %s3434
                $region170: #{encoder_layer_forward.2} parent=159 // loop_header_branch
                  %3422 = sbr.rel (%p3419) target = $region174
                $region171: #{encoder_layer_forward.2} parent=159 // loop_body
                  %v3426 = vld [vmem:[%s3424] sm:$0xff]
                  %3427 = vst [vmem:[%s3425] sm:$0xff] %v3426
                  %s3428 = sadd.s32 1, %s3423
                  %p3429 = scmp.ge.s32.totalorder %s3428, %s3411
                  %s3430 = scalar_select %p3429, 0, %s3428
                  %s3431 = smul.u32 %s3430, 8
                  %s3432 = smul.u32 %s3430, 8
                  %s3433 = scalar_lea.vmem %s3414, %s3431 [#allocation4]
                  %s3434 = scalar_lea.vmem %s3416, %s3432
                $region172: #{encoder_layer_forward.2} parent=159 // loop_footer
                  %s3420 = sadd.s32 %s3418, 1
                $region173: #{encoder_layer_forward.2} parent=159 // loop_footer_branch
                  %3417 = sbr.rel target = $region169
                $region174: #{encoder_layer_forward.2} parent=159 // loop_exit
                  _
              $region160: #{encoder_layer_forward.2} parent=137 // pred_fallthru
                _
              // Predicated region
              $region175: #{encoder_layer_forward.2} parent=137 // pred_check
                _
              $region176: #{encoder_layer_forward.2} parent=137 // pred_check_branch
                %3436 = sbr.rel target = $region178
              $region177: #{encoder_layer_forward.2} parent=137 // pred_region
                _
              $region178: #{encoder_layer_forward.2} parent=137 // pred_fallthru
                _
            $region138: #{encoder_layer_forward.2} parent=133 // pred_fallthru
              _
            // Predicated region
            $region139: #{encoder_layer_forward.2} parent=133 // pred_check
              _
            $region140: #{encoder_layer_forward.2} parent=133 // pred_check_branch
              %3172 = sbr.rel target = $region142
            $region141: #{encoder_layer_forward.2} parent=133 // pred_region
              %s3174 = ssub.s32 256, 1
              %s3175 = sdiv.u32.pop %s3161, 43
              %s3176 = srem.u32.pop %s3161, 43
              // While loop
              $region143: #{encoder_layer_forward.2} parent=141 // loop_pre_header
                _
              $region144: #{encoder_layer_forward.2} parent=141 // loop_header
                %s3178 = sphi 0, %s3180
                %p3179 = scmp.ge.s32.totalorder %s3178, %s3175
                %s3183 = sphi 0, %s3274
                %s3184 = sphi %s2678, %s3277
                %s3185 = sphi %s3165, %s3278
              $region145: #{encoder_layer_forward.2} parent=141 // loop_header_branch
                %3182 = sbr.rel (%p3179) target = $region149
              $region146: #{encoder_layer_forward.2} parent=141 // loop_body
                %v3186 = vld [vmem:[%s3184] sm:%s3174]
                %3187 = vst [vmem:[%s3185] sm:%s3174] %v3186
                %v3188 = vld [vmem:[%s3184 + $0x8] sm:%s3174]
                %3189 = vst [vmem:[%s3185 + $0x8] sm:%s3174] %v3188
                %v3190 = vld [vmem:[%s3184 + $0x10] sm:%s3174]
                %3191 = vst [vmem:[%s3185 + $0x10] sm:%s3174] %v3190
                %v3192 = vld [vmem:[%s3184 + $0x18] sm:%s3174]
                %3193 = vst [vmem:[%s3185 + $0x18] sm:%s3174] %v3192
                %v3194 = vld [vmem:[%s3184 + $0x20] sm:%s3174]
                %3195 = vst [vmem:[%s3185 + $0x20] sm:%s3174] %v3194
                %v3196 = vld [vmem:[%s3184 + $0x28] sm:%s3174]
                %3197 = vst [vmem:[%s3185 + $0x28] sm:%s3174] %v3196
                %v3198 = vld [vmem:[%s3184 + $0x30] sm:%s3174]
                %3199 = vst [vmem:[%s3185 + $0x30] sm:%s3174] %v3198
                %v3200 = vld [vmem:[%s3184 + $0x38] sm:%s3174]
                %3201 = vst [vmem:[%s3185 + $0x38] sm:%s3174] %v3200
                %v3202 = vld [vmem:[%s3184 + $0x40] sm:%s3174]
                %3203 = vst [vmem:[%s3185 + $0x40] sm:%s3174] %v3202
                %v3204 = vld [vmem:[%s3184 + $0x48] sm:%s3174]
                %3205 = vst [vmem:[%s3185 + $0x48] sm:%s3174] %v3204
                %v3206 = vld [vmem:[%s3184 + $0x50] sm:%s3174]
                %3207 = vst [vmem:[%s3185 + $0x50] sm:%s3174] %v3206
                %v3208 = vld [vmem:[%s3184 + $0x58] sm:%s3174]
                %3209 = vst [vmem:[%s3185 + $0x58] sm:%s3174] %v3208
                %v3210 = vld [vmem:[%s3184 + $0x60] sm:%s3174]
                %3211 = vst [vmem:[%s3185 + $0x60] sm:%s3174] %v3210
                %v3212 = vld [vmem:[%s3184 + $0x68] sm:%s3174]
                %3213 = vst [vmem:[%s3185 + $0x68] sm:%s3174] %v3212
                %v3214 = vld [vmem:[%s3184 + $0x70] sm:%s3174]
                %3215 = vst [vmem:[%s3185 + $0x70] sm:%s3174] %v3214
                %v3216 = vld [vmem:[%s3184 + $0x78] sm:%s3174]
                %3217 = vst [vmem:[%s3185 + $0x78] sm:%s3174] %v3216
                %v3218 = vld [vmem:[%s3184 + $0x80] sm:%s3174]
                %3219 = vst [vmem:[%s3185 + $0x80] sm:%s3174] %v3218
                %v3220 = vld [vmem:[%s3184 + $0x88] sm:%s3174]
                %3221 = vst [vmem:[%s3185 + $0x88] sm:%s3174] %v3220
                %v3222 = vld [vmem:[%s3184 + $0x90] sm:%s3174]
                %3223 = vst [vmem:[%s3185 + $0x90] sm:%s3174] %v3222
                %v3224 = vld [vmem:[%s3184 + $0x98] sm:%s3174]
                %3225 = vst [vmem:[%s3185 + $0x98] sm:%s3174] %v3224
                %v3226 = vld [vmem:[%s3184 + $0xa0] sm:%s3174]
                %3227 = vst [vmem:[%s3185 + $0xa0] sm:%s3174] %v3226
                %v3228 = vld [vmem:[%s3184 + $0xa8] sm:%s3174]
                %3229 = vst [vmem:[%s3185 + $0xa8] sm:%s3174] %v3228
                %v3230 = vld [vmem:[%s3184 + $0xb0] sm:%s3174]
                %3231 = vst [vmem:[%s3185 + $0xb0] sm:%s3174] %v3230
                %v3232 = vld [vmem:[%s3184 + $0xb8] sm:%s3174]
                %3233 = vst [vmem:[%s3185 + $0xb8] sm:%s3174] %v3232
                %v3234 = vld [vmem:[%s3184 + $0xc0] sm:%s3174]
                %3235 = vst [vmem:[%s3185 + $0xc0] sm:%s3174] %v3234
                %v3236 = vld [vmem:[%s3184 + $0xc8] sm:%s3174]
                %3237 = vst [vmem:[%s3185 + $0xc8] sm:%s3174] %v3236
                %v3238 = vld [vmem:[%s3184 + $0xd0] sm:%s3174]
                %3239 = vst [vmem:[%s3185 + $0xd0] sm:%s3174] %v3238
                %v3240 = vld [vmem:[%s3184 + $0xd8] sm:%s3174]
                %3241 = vst [vmem:[%s3185 + $0xd8] sm:%s3174] %v3240
                %v3242 = vld [vmem:[%s3184 + $0xe0] sm:%s3174]
                %3243 = vst [vmem:[%s3185 + $0xe0] sm:%s3174] %v3242
                %v3244 = vld [vmem:[%s3184 + $0xe8] sm:%s3174]
                %3245 = vst [vmem:[%s3185 + $0xe8] sm:%s3174] %v3244
                %v3246 = vld [vmem:[%s3184 + $0xf0] sm:%s3174]
                %3247 = vst [vmem:[%s3185 + $0xf0] sm:%s3174] %v3246
                %v3248 = vld [vmem:[%s3184 + $0xf8] sm:%s3174]
                %3249 = vst [vmem:[%s3185 + $0xf8] sm:%s3174] %v3248
                %v3250 = vld [vmem:[%s3184 + $0x100] sm:%s3174]
                %3251 = vst [vmem:[%s3185 + $0x100] sm:%s3174] %v3250
                %v3252 = vld [vmem:[%s3184 + $0x108] sm:%s3174]
                %3253 = vst [vmem:[%s3185 + $0x108] sm:%s3174] %v3252
                %v3254 = vld [vmem:[%s3184 + $0x110] sm:%s3174]
                %3255 = vst [vmem:[%s3185 + $0x110] sm:%s3174] %v3254
                %v3256 = vld [vmem:[%s3184 + $0x118] sm:%s3174]
                %3257 = vst [vmem:[%s3185 + $0x118] sm:%s3174] %v3256
                %v3258 = vld [vmem:[%s3184 + $0x120] sm:%s3174]
                %3259 = vst [vmem:[%s3185 + $0x120] sm:%s3174] %v3258
                %v3260 = vld [vmem:[%s3184 + $0x128] sm:%s3174]
                %3261 = vst [vmem:[%s3185 + $0x128] sm:%s3174] %v3260
                %v3262 = vld [vmem:[%s3184 + $0x130] sm:%s3174]
                %3263 = vst [vmem:[%s3185 + $0x130] sm:%s3174] %v3262
                %v3264 = vld [vmem:[%s3184 + $0x138] sm:%s3174]
                %3265 = vst [vmem:[%s3185 + $0x138] sm:%s3174] %v3264
                %v3266 = vld [vmem:[%s3184 + $0x140] sm:%s3174]
                %3267 = vst [vmem:[%s3185 + $0x140] sm:%s3174] %v3266
                %v3268 = vld [vmem:[%s3184 + $0x148] sm:%s3174]
                %3269 = vst [vmem:[%s3185 + $0x148] sm:%s3174] %v3268
                %v3270 = vld [vmem:[%s3184 + $0x150] sm:%s3174]
                %3271 = vst [vmem:[%s3185 + $0x150] sm:%s3174] %v3270
                %s3272 = sadd.s32 1, %s3183
                %p3273 = scmp.ge.s32.totalorder %s3272, %s3175
                %s3274 = scalar_select %p3273, 0, %s3272
                %s3275 = smul.u32 %s3274, 344
                %s3276 = smul.u32 %s3274, 344
                %s3277 = scalar_lea.vmem %s2678, %s3275 [#allocation4]
                %s3278 = scalar_lea.vmem %s3165, %s3276
              $region147: #{encoder_layer_forward.2} parent=141 // loop_footer
                %s3180 = sadd.s32 %s3178, 1
              $region148: #{encoder_layer_forward.2} parent=141 // loop_footer_branch
                %3177 = sbr.rel target = $region144
              $region149: #{encoder_layer_forward.2} parent=141 // loop_exit
                _
              %s3279 = sdiv.u32.pop %s3161, 43
              %s3280 = srem.u32.pop %s3161, 43
              %s3281 = smul.u32 %s3279, 43
              %s3282 = smul.u32 8, %s3281
              %s3283 = scalar_lea.vmem %s2678, %s3282 [#allocation4]
              %s3284 = smul.u32 8, %s3281
              %s3285 = scalar_lea.vmem %s3165, %s3284
              // While loop
              $region150: #{encoder_layer_forward.2} parent=141 // loop_pre_header
                _
              $region151: #{encoder_layer_forward.2} parent=141 // loop_header
                %s3287 = sphi 0, %s3289
                %p3288 = scmp.ge.s32.totalorder %s3287, %s3280
                %s3292 = sphi 0, %s3299
                %s3293 = sphi %s3283, %s3302
                %s3294 = sphi %s3285, %s3303
              $region152: #{encoder_layer_forward.2} parent=141 // loop_header_branch
                %3291 = sbr.rel (%p3288) target = $region156
              $region153: #{encoder_layer_forward.2} parent=141 // loop_body
                %v3295 = vld [vmem:[%s3293] sm:%s3174]
                %3296 = vst [vmem:[%s3294] sm:%s3174] %v3295
                %s3297 = sadd.s32 1, %s3292
                %p3298 = scmp.ge.s32.totalorder %s3297, %s3280
                %s3299 = scalar_select %p3298, 0, %s3297
                %s3300 = smul.u32 %s3299, 8
                %s3301 = smul.u32 %s3299, 8
                %s3302 = scalar_lea.vmem %s3283, %s3300 [#allocation4]
                %s3303 = scalar_lea.vmem %s3285, %s3301
              $region154: #{encoder_layer_forward.2} parent=141 // loop_footer
                %s3289 = sadd.s32 %s3287, 1
              $region155: #{encoder_layer_forward.2} parent=141 // loop_footer_branch
                %3286 = sbr.rel target = $region151
              $region156: #{encoder_layer_forward.2} parent=141 // loop_exit
                _
            $region142: #{encoder_layer_forward.2} parent=133 // pred_fallthru
              _
          $region134: #{encoder_layer_forward.2} parent=129 // pred_fallthru
            _
          %3437 = vnop
        $region130: #{encoder_layer_forward.2} parent=47 // pred_fallthru
          _
      $region48: #{encoder_layer_forward.2} parent=5 // pred_fallthru
        _
      %p3438 = scmp.le.s32.totalorder 2, %s16
      // Predicated region
      $region179: #{encoder_layer_forward.2} parent=5 // pred_check
        %p3439 = pneg %p3438
      $region180: #{encoder_layer_forward.2} parent=5 // pred_check_branch
        %3441 = sbr.rel (%p3439) target = $region182
      $region181: #{encoder_layer_forward.2} parent=5 // pred_region
        %s3442 = ssub.s32 %s16, 2
        // Predicated region
        $region183: #{encoder_layer_forward.2} parent=181 // pred_check
          %p3443 = pneg %p202
        $region184: #{encoder_layer_forward.2} parent=181 // pred_check_branch
          %3445 = sbr.rel (%p3443) target = $region186
        $region185: #{encoder_layer_forward.2} parent=181 // pred_region
          %s3446 = sand.u32 %s187, 1
          %s3447 = sand.u32 %s187, 1
          %s3448 = smul.addr %s3447, 172
          %s3449 = scalar_lea.vmem [#allocation2], %s3448
        $region186: #{encoder_layer_forward.2} parent=181 // pred_fallthru
          _
        // Predicated region
        $region187: #{encoder_layer_forward.2} parent=181 // pred_check
          %p3450 = pneg %p228
        $region188: #{encoder_layer_forward.2} parent=181 // pred_check_branch
          %3452 = sbr.rel (%p3450) target = $region190
        $region189: #{encoder_layer_forward.2} parent=181 // pred_region
          %s3453 = sand.u32 %s213, 1
          %s3454 = sand.u32 %s213, 1
          %s3455 = smul.addr %s3454, 688
          %s3456 = scalar_lea.vmem [#allocation3], %s3455
        $region190: #{encoder_layer_forward.2} parent=181 // pred_fallthru
          _
        // Predicated region
        $region191: #{encoder_layer_forward.2} parent=181 // pred_check
          %p3457 = pneg %p254
        $region192: #{encoder_layer_forward.2} parent=181 // pred_check_branch
          %3459 = sbr.rel (%p3457) target = $region194
        $region193: #{encoder_layer_forward.2} parent=181 // pred_region
          %s3460 = sand.u32 %s239, 1
          %s3461 = sand.u32 %s239, 1
          %s3462 = smul.addr %s3461, 344
          %s3463 = scalar_lea.vmem [#allocation4], %s3462
        $region194: #{encoder_layer_forward.2} parent=181 // pred_fallthru
          _
      $region182: #{encoder_layer_forward.2} parent=5 // pred_fallthru
        _
    $region6: #{encoder_layer_forward.2} parent=1 // loop_footer
      %s20 = sadd.s32 1, %s16
    $region7: #{encoder_layer_forward.2} parent=1 // loop_footer_branch
      %15 = sbr.rel target = $region3
    $region8: #{encoder_layer_forward.2} parent=1 // loop_exit
      _

// kernel: encoder_layer_forward.3
$region0: #{encoder_layer_forward.3}
  #allocation0 [shape = 'u32[]', space=smem, size = 0x4, offset = 0x4, fixed_abs, tag = 'smem constant byte address 0x4 - core index']
  #allocation1 [shape = 'u32[144,128]{1,0:T(1,128)}', space=vmem, size = 0x12000, scoped, tag = 'internal scratch']
  %s0 = inlined_call_operand.vmem [shape: bf16[680,128], index: 0, kind: input, shape index: {}]
  %s1 = inlined_call_operand.vmem [shape: bf16[680,128], index: 1, kind: input, shape index: {}]
  %s2 = inlined_call_operand.vmem [shape: bf16[128,128], index: 2, kind: input, shape index: {}]
  %s3 = inlined_call_operand.vmem [shape: f32[1,128], index: 3, kind: input, shape index: {}]
  %s4 = inlined_call_operand.vmem [shape: f32[1,128], index: 4, kind: input, shape index: {}]
  %s5 = inlined_call_operand.vmem [shape: f32[1,128], index: 5, kind: input, shape index: {}]
  %s6 = inlined_call_operand.vmem [shape: bf16[128,256], index: 6, kind: input, shape index: {}]
  %s7 = inlined_call_operand.vmem [shape: f32[1,256], index: 7, kind: input, shape index: {}]
  %s8 = inlined_call_operand.vmem [shape: bf16[256,128], index: 8, kind: input, shape index: {}]
  %s9 = inlined_call_operand.vmem [shape: f32[1,128], index: 9, kind: input, shape index: {}]
  %s10 = inlined_call_operand.vmem [shape: f32[1,128], index: 10, kind: input, shape index: {}]
  %s11 = inlined_call_operand.vmem [shape: f32[1,128], index: 11, kind: input, shape index: {}]
  %s12 = inlined_call_operand.vmem [shape: f32[680,128], index: 12, kind: output, shape index: {}]
  %s13 = sld [smem:[#allocation0]]
  $region129: #{encoder_layer_forward.3} parent=0
    _
  %s15 = ssub.s32 1, %s13
  %s16 = scalar_select 0, %s15, %s13
  $region1: #{encoder_layer_forward.3} parent=0
    #allocation2 [shape = 'u8[352256]{0}', space=vmem, size = 0x56000, scoped, tag = 'output window, operand 0']
    loop: start=0, step=1, limit=4
    $region2: #{encoder_layer_forward.3} parent=1 // loop_pre_header
      _
    $region3: #{encoder_layer_forward.3} parent=1 // loop_header
      %s18 = sphi 0, %s22
      %p19 = scmp.ge.s32.totalorder %s18, 4
      %s28 = sphi 0, %s30
      %s31 = sphi 0, %s28
      %s32 = sphi 0, %s31
      %s48 = sphi 0, %s32
      %s54 = sphi 0, %s56
      %s57 = sphi 0, %s54
      %s58 = sphi 0, %s57
      %s74 = sphi 0, %s58
      %s78 = sphi 0, %s78
      %s80 = sphi 0, %s78
      %s81 = sphi 0, %s80
      %s95 = sphi 0, %s81
      %s99 = sphi 0, %s99
      %s101 = sphi 0, %s99
      %s102 = sphi 0, %s101
      %s116 = sphi 0, %s102
      %s120 = sphi 0, %s120
      %s122 = sphi 0, %s120
      %s123 = sphi 0, %s122
      %s137 = sphi 0, %s123
      %s141 = sphi 0, %s141
      %s143 = sphi 0, %s141
      %s144 = sphi 0, %s143
      %s158 = sphi 0, %s144
      %s162 = sphi 0, %s162
      %s164 = sphi 0, %s162
      %s165 = sphi 0, %s164
      %s179 = sphi 0, %s165
      %s183 = sphi 0, %s183
      %s185 = sphi 0, %s183
      %s186 = sphi 0, %s185
      %s200 = sphi 0, %s186
      %s204 = sphi 0, %s204
      %s206 = sphi 0, %s204
      %s207 = sphi 0, %s206
      %s221 = sphi 0, %s207
      %s225 = sphi 0, %s225
      %s227 = sphi 0, %s225
      %s228 = sphi 0, %s227
      %s242 = sphi 0, %s228
      %s246 = sphi 0, %s246
      %s248 = sphi 0, %s246
      %s249 = sphi 0, %s248
      %s263 = sphi 0, %s249
      %s267 = sphi 0, %s267
      %s269 = sphi 0, %s267
      %s270 = sphi 0, %s269
      %s284 = sphi 0, %s270
      %s290 = sphi 0, %s292
      %s293 = sphi 0, %s290
      %s294 = sphi 0, %s293
      %s310 = sphi 0, %s294
    $region4: #{encoder_layer_forward.3} parent=1 // loop_header_branch
      %21 = sbr.rel (%p19) target = $region8
    $region5: #{encoder_layer_forward.3} parent=1 // loop_body
      %s23 = ssub.s32 %s18, 1
      %s24 = ssub.s32 %s18, 2
      %s25 = sadd.s32 %s18, 1
      %s26 = ssub.s32 %s18, %s25
      %p27 = scmp.eq.s32.totalorder %s26, 0
      %s29 = sadd.s32 %s28, 1
      %s30 = scalar_select %p27, %s28, %s29
      %p33 = pneg %p27
      %p34 = scmp.eq.s32.totalorder %s18, 1
      %p35 = por %p33, %p34
      %p36 = scmp.ne.s32.totalorder %s28, %s31
      %p37 = scmp.eq.s32.totalorder %s18, 0
      %p38 = por %p36, %p37
      %p39 = scmp.ne.s32.totalorder %s28, %s31
      %p40 = scmp.eq.s32.totalorder %s23, 1
      %p41 = por %p39, %p40
      %p42 = scmp.ne.s32.totalorder %s31, %s32
      %p43 = scmp.eq.s32.totalorder %s23, 0
      %p44 = por %p42, %p43
      %p45 = scmp.ne.s32.totalorder %s31, %s32
      %p46 = scmp.eq.s32.totalorder %s24, 1
      %p47 = por %p45, %p46
      %p49 = scmp.ne.s32.totalorder %s32, %s48
      %p50 = scmp.eq.s32.totalorder %s24, 0
      %p51 = por %p49, %p50
      %s52 = ssub.s32 %s18, %s25
      %p53 = scmp.eq.s32.totalorder %s52, 0
      %s55 = sadd.s32 %s54, 1
      %s56 = scalar_select %p53, %s54, %s55
      %p59 = pneg %p53
      %p60 = scmp.eq.s32.totalorder %s18, 1
      %p61 = por %p59, %p60
      %p62 = scmp.ne.s32.totalorder %s54, %s57
      %p63 = scmp.eq.s32.totalorder %s18, 0
      %p64 = por %p62, %p63
      %p65 = scmp.ne.s32.totalorder %s54, %s57
      %p66 = scmp.eq.s32.totalorder %s23, 1
      %p67 = por %p65, %p66
      %p68 = scmp.ne.s32.totalorder %s57, %s58
      %p69 = scmp.eq.s32.totalorder %s23, 0
      %p70 = por %p68, %p69
      %p71 = scmp.ne.s32.totalorder %s57, %s58
      %p72 = scmp.eq.s32.totalorder %s24, 1
      %p73 = por %p71, %p72
      %p75 = scmp.ne.s32.totalorder %s58, %s74
      %p76 = scmp.eq.s32.totalorder %s24, 0
      %p77 = por %p75, %p76
      %s79 = sadd.s32 %s78, 1
      %p82 = scmp.eq.s32.totalorder %s18, 1
      %p83 = scmp.ne.s32.totalorder %s78, %s80
      %p84 = scmp.eq.s32.totalorder %s18, 0
      %p85 = por %p83, %p84
      %p86 = scmp.ne.s32.totalorder %s78, %s80
      %p87 = scmp.eq.s32.totalorder %s23, 1
      %p88 = por %p86, %p87
      %p89 = scmp.ne.s32.totalorder %s80, %s81
      %p90 = scmp.eq.s32.totalorder %s23, 0
      %p91 = por %p89, %p90
      %p92 = scmp.ne.s32.totalorder %s80, %s81
      %p93 = scmp.eq.s32.totalorder %s24, 1
      %p94 = por %p92, %p93
      %p96 = scmp.ne.s32.totalorder %s81, %s95
      %p97 = scmp.eq.s32.totalorder %s24, 0
      %p98 = por %p96, %p97
      %s100 = sadd.s32 %s99, 1
      %p103 = scmp.eq.s32.totalorder %s18, 1
      %p104 = scmp.ne.s32.totalorder %s99, %s101
      %p105 = scmp.eq.s32.totalorder %s18, 0
      %p106 = por %p104, %p105
      %p107 = scmp.ne.s32.totalorder %s99, %s101
      %p108 = scmp.eq.s32.totalorder %s23, 1
      %p109 = por %p107, %p108
      %p110 = scmp.ne.s32.totalorder %s101, %s102
      %p111 = scmp.eq.s32.totalorder %s23, 0
      %p112 = por %p110, %p111
      %p113 = scmp.ne.s32.totalorder %s101, %s102
      %p114 = scmp.eq.s32.totalorder %s24, 1
      %p115 = por %p113, %p114
      %p117 = scmp.ne.s32.totalorder %s102, %s116
      %p118 = scmp.eq.s32.totalorder %s24, 0
      %p119 = por %p117, %p118
      %s121 = sadd.s32 %s120, 1
      %p124 = scmp.eq.s32.totalorder %s18, 1
      %p125 = scmp.ne.s32.totalorder %s120, %s122
      %p126 = scmp.eq.s32.totalorder %s18, 0
      %p127 = por %p125, %p126
      %p128 = scmp.ne.s32.totalorder %s120, %s122
      %p129 = scmp.eq.s32.totalorder %s23, 1
      %p130 = por %p128, %p129
      %p131 = scmp.ne.s32.totalorder %s122, %s123
      %p132 = scmp.eq.s32.totalorder %s23, 0
      %p133 = por %p131, %p132
      %p134 = scmp.ne.s32.totalorder %s122, %s123
      %p135 = scmp.eq.s32.totalorder %s24, 1
      %p136 = por %p134, %p135
      %p138 = scmp.ne.s32.totalorder %s123, %s137
      %p139 = scmp.eq.s32.totalorder %s24, 0
      %p140 = por %p138, %p139
      %s142 = sadd.s32 %s141, 1
      %p145 = scmp.eq.s32.totalorder %s18, 1
      %p146 = scmp.ne.s32.totalorder %s141, %s143
      %p147 = scmp.eq.s32.totalorder %s18, 0
      %p148 = por %p146, %p147
      %p149 = scmp.ne.s32.totalorder %s141, %s143
      %p150 = scmp.eq.s32.totalorder %s23, 1
      %p151 = por %p149, %p150
      %p152 = scmp.ne.s32.totalorder %s143, %s144
      %p153 = scmp.eq.s32.totalorder %s23, 0
      %p154 = por %p152, %p153
      %p155 = scmp.ne.s32.totalorder %s143, %s144
      %p156 = scmp.eq.s32.totalorder %s24, 1
      %p157 = por %p155, %p156
      %p159 = scmp.ne.s32.totalorder %s144, %s158
      %p160 = scmp.eq.s32.totalorder %s24, 0
      %p161 = por %p159, %p160
      %s163 = sadd.s32 %s162, 1
      %p166 = scmp.eq.s32.totalorder %s18, 1
      %p167 = scmp.ne.s32.totalorder %s162, %s164
      %p168 = scmp.eq.s32.totalorder %s18, 0
      %p169 = por %p167, %p168
      %p170 = scmp.ne.s32.totalorder %s162, %s164
      %p171 = scmp.eq.s32.totalorder %s23, 1
      %p172 = por %p170, %p171
      %p173 = scmp.ne.s32.totalorder %s164, %s165
      %p174 = scmp.eq.s32.totalorder %s23, 0
      %p175 = por %p173, %p174
      %p176 = scmp.ne.s32.totalorder %s164, %s165
      %p177 = scmp.eq.s32.totalorder %s24, 1
      %p178 = por %p176, %p177
      %p180 = scmp.ne.s32.totalorder %s165, %s179
      %p181 = scmp.eq.s32.totalorder %s24, 0
      %p182 = por %p180, %p181
      %s184 = sadd.s32 %s183, 1
      %p187 = scmp.eq.s32.totalorder %s18, 1
      %p188 = scmp.ne.s32.totalorder %s183, %s185
      %p189 = scmp.eq.s32.totalorder %s18, 0
      %p190 = por %p188, %p189
      %p191 = scmp.ne.s32.totalorder %s183, %s185
      %p192 = scmp.eq.s32.totalorder %s23, 1
      %p193 = por %p191, %p192
      %p194 = scmp.ne.s32.totalorder %s185, %s186
      %p195 = scmp.eq.s32.totalorder %s23, 0
      %p196 = por %p194, %p195
      %p197 = scmp.ne.s32.totalorder %s185, %s186
      %p198 = scmp.eq.s32.totalorder %s24, 1
      %p199 = por %p197, %p198
      %p201 = scmp.ne.s32.totalorder %s186, %s200
      %p202 = scmp.eq.s32.totalorder %s24, 0
      %p203 = por %p201, %p202
      %s205 = sadd.s32 %s204, 1
      %p208 = scmp.eq.s32.totalorder %s18, 1
      %p209 = scmp.ne.s32.totalorder %s204, %s206
      %p210 = scmp.eq.s32.totalorder %s18, 0
      %p211 = por %p209, %p210
      %p212 = scmp.ne.s32.totalorder %s204, %s206
      %p213 = scmp.eq.s32.totalorder %s23, 1
      %p214 = por %p212, %p213
      %p215 = scmp.ne.s32.totalorder %s206, %s207
      %p216 = scmp.eq.s32.totalorder %s23, 0
      %p217 = por %p215, %p216
      %p218 = scmp.ne.s32.totalorder %s206, %s207
      %p219 = scmp.eq.s32.totalorder %s24, 1
      %p220 = por %p218, %p219
      %p222 = scmp.ne.s32.totalorder %s207, %s221
      %p223 = scmp.eq.s32.totalorder %s24, 0
      %p224 = por %p222, %p223
      %s226 = sadd.s32 %s225, 1
      %p229 = scmp.eq.s32.totalorder %s18, 1
      %p230 = scmp.ne.s32.totalorder %s225, %s227
      %p231 = scmp.eq.s32.totalorder %s18, 0
      %p232 = por %p230, %p231
      %p233 = scmp.ne.s32.totalorder %s225, %s227
      %p234 = scmp.eq.s32.totalorder %s23, 1
      %p235 = por %p233, %p234
      %p236 = scmp.ne.s32.totalorder %s227, %s228
      %p237 = scmp.eq.s32.totalorder %s23, 0
      %p238 = por %p236, %p237
      %p239 = scmp.ne.s32.totalorder %s227, %s228
      %p240 = scmp.eq.s32.totalorder %s24, 1
      %p241 = por %p239, %p240
      %p243 = scmp.ne.s32.totalorder %s228, %s242
      %p244 = scmp.eq.s32.totalorder %s24, 0
      %p245 = por %p243, %p244
      %s247 = sadd.s32 %s246, 1
      %p250 = scmp.eq.s32.totalorder %s18, 1
      %p251 = scmp.ne.s32.totalorder %s246, %s248
      %p252 = scmp.eq.s32.totalorder %s18, 0
      %p253 = por %p251, %p252
      %p254 = scmp.ne.s32.totalorder %s246, %s248
      %p255 = scmp.eq.s32.totalorder %s23, 1
      %p256 = por %p254, %p255
      %p257 = scmp.ne.s32.totalorder %s248, %s249
      %p258 = scmp.eq.s32.totalorder %s23, 0
      %p259 = por %p257, %p258
      %p260 = scmp.ne.s32.totalorder %s248, %s249
      %p261 = scmp.eq.s32.totalorder %s24, 1
      %p262 = por %p260, %p261
      %p264 = scmp.ne.s32.totalorder %s249, %s263
      %p265 = scmp.eq.s32.totalorder %s24, 0
      %p266 = por %p264, %p265
      %s268 = sadd.s32 %s267, 1
      %p271 = scmp.eq.s32.totalorder %s18, 1
      %p272 = scmp.ne.s32.totalorder %s267, %s269
      %p273 = scmp.eq.s32.totalorder %s18, 0
      %p274 = por %p272, %p273
      %p275 = scmp.ne.s32.totalorder %s267, %s269
      %p276 = scmp.eq.s32.totalorder %s23, 1
      %p277 = por %p275, %p276
      %p278 = scmp.ne.s32.totalorder %s269, %s270
      %p279 = scmp.eq.s32.totalorder %s23, 0
      %p280 = por %p278, %p279
      %p281 = scmp.ne.s32.totalorder %s269, %s270
      %p282 = scmp.eq.s32.totalorder %s24, 1
      %p283 = por %p281, %p282
      %p285 = scmp.ne.s32.totalorder %s270, %s284
      %p286 = scmp.eq.s32.totalorder %s24, 0
      %p287 = por %p285, %p286
      %s288 = ssub.s32 %s18, %s25
      %p289 = scmp.eq.s32.totalorder %s288, 0
      %s291 = sadd.s32 %s290, 1
      %s292 = scalar_select %p289, %s290, %s291
      %p295 = pneg %p289
      %p296 = scmp.eq.s32.totalorder %s18, 1
      %p297 = por %p295, %p296
      %p298 = scmp.ne.s32.totalorder %s290, %s293
      %p299 = scmp.eq.s32.totalorder %s18, 0
      %p300 = por %p298, %p299
      %p301 = scmp.ne.s32.totalorder %s290, %s293
      %p302 = scmp.eq.s32.totalorder %s23, 1
      %p303 = por %p301, %p302
      %p304 = scmp.ne.s32.totalorder %s293, %s294
      %p305 = scmp.eq.s32.totalorder %s23, 0
      %p306 = por %p304, %p305
      %p307 = scmp.ne.s32.totalorder %s293, %s294
      %p308 = scmp.eq.s32.totalorder %s24, 1
      %p309 = por %p307, %p308
      %p311 = scmp.ne.s32.totalorder %s294, %s310
      %p312 = scmp.eq.s32.totalorder %s24, 0
      %p313 = por %p311, %p312
      %p314 = scmp.le.s32.totalorder 1, %s18
      %p315 = scmp.lt.s32.totalorder %s18, 3
      %p316 = pnand %p314, %p315
      %p317 = pneg %p316
      // Predicated region
      $region9: #{encoder_layer_forward.3} parent=5 // pred_check
        _
      $region10: #{encoder_layer_forward.3} parent=5 // pred_check_branch
        %319 = sbr.rel (%p316) target = $region12
      $region11: #{encoder_layer_forward.3} parent=5 // pred_region
        %s320 = ssub.s32 %s18, 1
        // Predicated region
        $region13: #{encoder_layer_forward.3} parent=11 // pred_check
          %p321 = pneg %p91
        $region14: #{encoder_layer_forward.3} parent=11 // pred_check_branch
          %323 = sbr.rel (%p321) target = $region16
        $region15: #{encoder_layer_forward.3} parent=11 // pred_region
          _
        $region16: #{encoder_layer_forward.3} parent=11 // pred_fallthru
          _
        // Predicated region
        $region17: #{encoder_layer_forward.3} parent=11 // pred_check
          %p324 = pneg %p112
        $region18: #{encoder_layer_forward.3} parent=11 // pred_check_branch
          %326 = sbr.rel (%p324) target = $region20
        $region19: #{encoder_layer_forward.3} parent=11 // pred_region
          _
        $region20: #{encoder_layer_forward.3} parent=11 // pred_fallthru
          _
        // Predicated region
        $region21: #{encoder_layer_forward.3} parent=11 // pred_check
          %p327 = pneg %p133
        $region22: #{encoder_layer_forward.3} parent=11 // pred_check_branch
          %329 = sbr.rel (%p327) target = $region24
        $region23: #{encoder_layer_forward.3} parent=11 // pred_region
          _
        $region24: #{encoder_layer_forward.3} parent=11 // pred_fallthru
          _
        // Predicated region
        $region25: #{encoder_layer_forward.3} parent=11 // pred_check
          %p330 = pneg %p154
        $region26: #{encoder_layer_forward.3} parent=11 // pred_check_branch
          %332 = sbr.rel (%p330) target = $region28
        $region27: #{encoder_layer_forward.3} parent=11 // pred_region
          _
        $region28: #{encoder_layer_forward.3} parent=11 // pred_fallthru
          _
        // Predicated region
        $region29: #{encoder_layer_forward.3} parent=11 // pred_check
          %p333 = pneg %p175
        $region30: #{encoder_layer_forward.3} parent=11 // pred_check_branch
          %335 = sbr.rel (%p333) target = $region32
        $region31: #{encoder_layer_forward.3} parent=11 // pred_region
          _
        $region32: #{encoder_layer_forward.3} parent=11 // pred_fallthru
          _
        // Predicated region
        $region33: #{encoder_layer_forward.3} parent=11 // pred_check
          %p336 = pneg %p196
        $region34: #{encoder_layer_forward.3} parent=11 // pred_check_branch
          %338 = sbr.rel (%p336) target = $region36
        $region35: #{encoder_layer_forward.3} parent=11 // pred_region
          _
        $region36: #{encoder_layer_forward.3} parent=11 // pred_fallthru
          _
        // Predicated region
        $region37: #{encoder_layer_forward.3} parent=11 // pred_check
          %p339 = pneg %p217
        $region38: #{encoder_layer_forward.3} parent=11 // pred_check_branch
          %341 = sbr.rel (%p339) target = $region40
        $region39: #{encoder_layer_forward.3} parent=11 // pred_region
          _
        $region40: #{encoder_layer_forward.3} parent=11 // pred_fallthru
          _
        // Predicated region
        $region41: #{encoder_layer_forward.3} parent=11 // pred_check
          %p342 = pneg %p238
        $region42: #{encoder_layer_forward.3} parent=11 // pred_check_branch
          %344 = sbr.rel (%p342) target = $region44
        $region43: #{encoder_layer_forward.3} parent=11 // pred_region
          _
        $region44: #{encoder_layer_forward.3} parent=11 // pred_fallthru
          _
        // Predicated region
        $region45: #{encoder_layer_forward.3} parent=11 // pred_check
          %p345 = pneg %p259
        $region46: #{encoder_layer_forward.3} parent=11 // pred_check_branch
          %347 = sbr.rel (%p345) target = $region48
        $region47: #{encoder_layer_forward.3} parent=11 // pred_region
          _
        $region48: #{encoder_layer_forward.3} parent=11 // pred_fallthru
          _
        // Predicated region
        $region49: #{encoder_layer_forward.3} parent=11 // pred_check
          %p348 = pneg %p280
        $region50: #{encoder_layer_forward.3} parent=11 // pred_check_branch
          %350 = sbr.rel (%p348) target = $region52
        $region51: #{encoder_layer_forward.3} parent=11 // pred_region
          _
        $region52: #{encoder_layer_forward.3} parent=11 // pred_fallthru
          _
      $region12: #{encoder_layer_forward.3} parent=5 // pred_fallthru
        _
      %p351 = scmp.lt.s32.totalorder %s18, 2
      // Predicated region
      $region53: #{encoder_layer_forward.3} parent=5 // pred_check
        %p352 = pneg %p351
      $region54: #{encoder_layer_forward.3} parent=5 // pred_check_branch
        %354 = sbr.rel (%p352) target = $region56
      $region55: #{encoder_layer_forward.3} parent=5 // pred_region
        // Predicated region
        $region57: #{encoder_layer_forward.3} parent=55 // pred_check
          %p355 = pneg %p38
        $region58: #{encoder_layer_forward.3} parent=55 // pred_check_branch
          %357 = sbr.rel (%p355) target = $region60
        $region59: #{encoder_layer_forward.3} parent=55 // pred_region
          %s358 = smul.u32 43, %s18
          %s359 = ssub.s32 85, %s358
          %p360 = scmp.lt.s32.totalorder %s359, 43
          %s361 = scalar_select %p360, %s359, 43
          %s362 = smul.u32 64, %s361
          %p363 = scmp.lt.s32.totalorder %s358, 84
          %s364 = scalar_select %p363, %s358, 84
          %s365 = smul.addr %s364, 4
          %s366 = scalar_lea.vmem %s0, %s365
          %s367 = smul.u32 43, %s18
          %s368 = ssub.s32 85, %s367
          %p369 = scmp.lt.s32.totalorder %s368, 43
          %s370 = scalar_select %p369, %s368, 43
          %s371 = smul.u32 64, %s370
        $region60: #{encoder_layer_forward.3} parent=55 // pred_fallthru
          _
        // Predicated region
        $region61: #{encoder_layer_forward.3} parent=55 // pred_check
          %p372 = pneg %p64
        $region62: #{encoder_layer_forward.3} parent=55 // pred_check_branch
          %374 = sbr.rel (%p372) target = $region64
        $region63: #{encoder_layer_forward.3} parent=55 // pred_region
          %s375 = smul.u32 43, %s18
          %s376 = ssub.s32 85, %s375
          %p377 = scmp.lt.s32.totalorder %s376, 43
          %s378 = scalar_select %p377, %s376, 43
          %s379 = smul.u32 64, %s378
          %p380 = scmp.lt.s32.totalorder %s375, 84
          %s381 = scalar_select %p380, %s375, 84
          %s382 = smul.addr %s381, 4
          %s383 = scalar_lea.vmem %s1, %s382
          %s384 = smul.u32 43, %s18
          %s385 = ssub.s32 85, %s384
          %p386 = scmp.lt.s32.totalorder %s385, 43
          %s387 = scalar_select %p386, %s385, 43
          %s388 = smul.u32 64, %s387
        $region64: #{encoder_layer_forward.3} parent=55 // pred_fallthru
          _
      $region56: #{encoder_layer_forward.3} parent=5 // pred_fallthru
        _
      %p389 = scmp.le.s32.totalorder 1, %s18
      %p390 = scmp.lt.s32.totalorder %s18, 3
      %p391 = pnand %p389, %p390
      %p392 = pneg %p391
      // Predicated region
      $region65: #{encoder_layer_forward.3} parent=5 // pred_check
        _
      $region66: #{encoder_layer_forward.3} parent=5 // pred_check_branch
        %394 = sbr.rel (%p391) target = $region68
      $region67: #{encoder_layer_forward.3} parent=5 // pred_region
        %s395 = ssub.s32 %s18, 1
        %s396 = smul.u32 43, %s23
        %s397 = ssub.s32 85, %s396
        %p398 = scmp.lt.s32.totalorder %s397, 43
        %s399 = scalar_select %p398, %s397, 43
        %s400 = smul.u32 64, %s399
        %p401 = scmp.lt.s32.totalorder %s396, 84
        %s402 = scalar_select %p401, %s396, 84
        %s403 = smul.addr %s402, 4
        %s404 = scalar_lea.vmem %s0, %s403
        %p405 = pneg %p44
        %p406 = pneg %p41
        %s407 = smul.u32 43, %s23
        %s408 = ssub.s32 85, %s407
        %p409 = scmp.lt.s32.totalorder %s408, 43
        %s410 = scalar_select %p409, %s408, 43
        %s411 = smul.u32 64, %s410
        %p412 = scmp.lt.s32.totalorder %s407, 84
        %s413 = scalar_select %p412, %s407, 84
        %s414 = smul.addr %s413, 4
        %s415 = scalar_lea.vmem %s1, %s414
        %p416 = pneg %p70
        %p417 = pneg %p67
        %p418 = pneg %p91
        %p419 = pneg %p88
        %p420 = pneg %p112
        %p421 = pneg %p109
        %p422 = pneg %p133
        %p423 = pneg %p130
        %p424 = pneg %p154
        %p425 = pneg %p151
        %p426 = pneg %p175
        %p427 = pneg %p172
        %p428 = pneg %p196
        %p429 = pneg %p193
        %p430 = pneg %p217
        %p431 = pneg %p214
        %p432 = pneg %p238
        %p433 = pneg %p235
        %p434 = pneg %p259
        %p435 = pneg %p256
        %p436 = pneg %p280
        %p437 = pneg %p277
        %p438 = pneg %p306
        %p439 = pneg %p303
        %s440 = sand.u32 %s293, 1
        %s441 = sand.u32 %s293, 1
        %s442 = smul.addr %s441, 344
        %s443 = scalar_lea.vmem [#allocation2], %s442
        %s444 = smul.u32 43, %s23
        %s445 = ssub.s32 85, %s444
        %p446 = scmp.lt.s32.totalorder %s445, 43
        %s447 = scalar_select %p446, %s445, 43
        %s448 = smul.u32 64, %s447
        %p449 = scmp.lt.s32.totalorder %s444, 84
        %s450 = scalar_select %p449, %s444, 84
        %s451 = smul.addr %s450, 4
        %s452 = scalar_lea.vmem %s0, %s451
        %s453 = smul.u32 43, %s23
        %s454 = ssub.s32 85, %s453
        %p455 = scmp.lt.s32.totalorder %s454, 43
        %s456 = scalar_select %p455, %s454, 43
        %s457 = smul.u32 64, %s456
        %s458 = smul.u32 43, %s23
        %s459 = ssub.s32 85, %s458
        %p460 = scmp.lt.s32.totalorder %s459, 43
        %s461 = scalar_select %p460, %s459, 43
        %s462 = smul.u32 64, %s461
        %p463 = scmp.lt.s32.totalorder %s458, 84
        %s464 = scalar_select %p463, %s458, 84
        %s465 = smul.addr %s464, 4
        %s466 = scalar_lea.vmem %s1, %s465
        %s467 = smul.u32 43, %s23
        %s468 = ssub.s32 85, %s467
        %p469 = scmp.lt.s32.totalorder %s468, 43
        %s470 = scalar_select %p469, %s468, 43
        %s471 = smul.u32 64, %s470
        %s472 = smul.u32 43, %s23
        %s473 = ssub.s32 85, %s472
        %p474 = scmp.lt.s32.totalorder %s473, 43
        %s475 = scalar_select %p474, %s473, 43
        %s476 = smul.u32 128, %s475
        %v478 = vld [vmem:[%s452] sm:$0xf]
        %v479 = vld [vmem:[%s452 + $0x4] sm:$0xf]
        %v480 = vld [vmem:[%s452 + $0x8] sm:$0xf]
        %v481 = vld [vmem:[%s452 + $0xc] sm:$0xf]
        %v482 = vld [vmem:[%s452 + $0x10] sm:$0xf]
        %v483 = vld [vmem:[%s452 + $0x14] sm:$0xf]
        %v484 = vld [vmem:[%s452 + $0x18] sm:$0xf]
        %v485 = vld [vmem:[%s452 + $0x1c] sm:$0xf]
        %v486 = vld [vmem:[%s452 + $0x20] sm:$0xf]
        %v487 = vld [vmem:[%s452 + $0x24] sm:$0xf]
        %v488 = vld [vmem:[%s452 + $0x28] sm:$0xf]
        %v489 = vld [vmem:[%s452 + $0x2c] sm:$0xf]
        %v490 = vld [vmem:[%s452 + $0x30] sm:$0xf]
        %v491 = vld [vmem:[%s452 + $0x34] sm:$0xf]
        %v492 = vld [vmem:[%s452 + $0x38] sm:$0xf]
        %v493 = vld [vmem:[%s452 + $0x3c] sm:$0xf]
        %v494 = vld [vmem:[%s452 + $0x40] sm:$0xf]
        %v495 = vld [vmem:[%s452 + $0x44] sm:$0xf]
        %v496 = vld [vmem:[%s452 + $0x48] sm:$0xf]
        %v497 = vld [vmem:[%s452 + $0x4c] sm:$0xf]
        %v498 = vld [vmem:[%s452 + $0x50] sm:$0xf]
        %v499 = vld [vmem:[%s452 + $0x54] sm:$0xf]
        %v500 = vld [vmem:[%s452 + $0x58] sm:$0xf]
        %v501 = vld [vmem:[%s452 + $0x5c] sm:$0xf]
        %v502 = vld [vmem:[%s452 + $0x60] sm:$0xf]
        %v503 = vld [vmem:[%s452 + $0x64] sm:$0xf]
        %v504 = vld [vmem:[%s452 + $0x68] sm:$0xf]
        %v505 = vld [vmem:[%s452 + $0x6c] sm:$0xf]
        %v506 = vld [vmem:[%s452 + $0x70] sm:$0xf]
        %v507 = vld [vmem:[%s452 + $0x74] sm:$0xf]
        %v508 = vld [vmem:[%s452 + $0x78] sm:$0xf]
        %v509 = vld [vmem:[%s452 + $0x7c] sm:$0xf]
        %v510 = vld [vmem:[%s452 + $0x80] sm:$0xf]
        %v511 = vld [vmem:[%s452 + $0x84] sm:$0xf]
        %v512 = vld [vmem:[%s452 + $0x88] sm:$0xf]
        %v513 = vld [vmem:[%s452 + $0x8c] sm:$0xf]
        %v514 = vld [vmem:[%s452 + $0x90] sm:$0xf]
        %v515 = vld [vmem:[%s452 + $0x94] sm:$0xf]
        %v516 = vld [vmem:[%s452 + $0x98] sm:$0xf]
        %v517 = vld [vmem:[%s452 + $0x9c] sm:$0xf]
        %v518 = vld [vmem:[%s452 + $0xa0] sm:$0xf]
        %v519 = vld [vmem:[%s452 + $0xa4] sm:$0xf]
        %v520 = vld [vmem:[%s452 + $0xa8] sm:$0xf]
        %v521 = vld [vmem:[%s2] sm:$0xf]
        %v522 = vld [vmem:[%s2 + $0x4] sm:$0xf]
        %v523 = vld [vmem:[%s2 + $0x8] sm:$0xf]
        %v524 = vld [vmem:[%s2 + $0xc] sm:$0xf]
        %v525 = vld [vmem:[%s2 + $0x10] sm:$0xf]
        %v526 = vld [vmem:[%s2 + $0x14] sm:$0xf]
        %v527 = vld [vmem:[%s2 + $0x18] sm:$0xf]
        %v528 = vld [vmem:[%s2 + $0x1c] sm:$0xf]
        %v529 = vld [vmem:[%s2 + $0x20] sm:$0xf]
        %v530 = vld [vmem:[%s2 + $0x24] sm:$0xf]
        %v531 = vld [vmem:[%s2 + $0x28] sm:$0xf]
        %v532 = vld [vmem:[%s2 + $0x2c] sm:$0xf]
        %v533 = vld [vmem:[%s2 + $0x30] sm:$0xf]
        %v534 = vld [vmem:[%s2 + $0x34] sm:$0xf]
        %v535 = vld [vmem:[%s2 + $0x38] sm:$0xf]
        %v536 = vld [vmem:[%s2 + $0x3c] sm:$0xf]
        %v537 = vld [vmem:[%s3] sm:$0x1]
        %v539 = vlaneseq
        %v540 = vshrl.u32 %v539, 7
        %v541 = vsub.s32 0, %v540
        %v542 = vrot.slane %v537, %v541
        %v587 = vunpack.c.l.b16 %v478
        %v588 = vunpack.c.l.b16 %v479
        %v589 = vunpack.c.l.b16 %v480
        %v590 = vunpack.c.l.b16 %v481
        %v591 = vunpack.c.l.b16 %v482
        %v592 = vunpack.c.l.b16 %v483
        %v593 = vunpack.c.l.b16 %v484
        %v594 = vunpack.c.l.b16 %v485
        %v595 = vunpack.c.l.b16 %v486
        %v596 = vunpack.c.l.b16 %v487
        %v597 = vunpack.c.l.b16 %v488
        %v598 = vunpack.c.l.b16 %v489
        %v599 = vunpack.c.l.b16 %v490
        %v600 = vunpack.c.l.b16 %v491
        %v601 = vunpack.c.l.b16 %v492
        %v602 = vunpack.c.l.b16 %v493
        %v603 = vunpack.c.l.b16 %v494
        %v604 = vunpack.c.l.b16 %v495
        %v605 = vunpack.c.l.b16 %v496
        %v606 = vunpack.c.l.b16 %v497
        %v607 = vunpack.c.l.b16 %v498
        %v608 = vunpack.c.l.b16 %v499
        %v609 = vunpack.c.l.b16 %v500
        %v610 = vunpack.c.l.b16 %v501
        %v611 = vunpack.c.l.b16 %v502
        %v612 = vunpack.c.l.b16 %v503
        %v613 = vunpack.c.l.b16 %v504
        %v614 = vunpack.c.l.b16 %v505
        %v615 = vunpack.c.l.b16 %v506
        %v616 = vunpack.c.l.b16 %v507
        %v617 = vunpack.c.l.b16 %v508
        %v618 = vunpack.c.l.b16 %v509
        %v619 = vunpack.c.l.b16 %v510
        %v620 = vunpack.c.l.b16 %v511
        %v621 = vunpack.c.l.b16 %v512
        %v622 = vunpack.c.l.b16 %v513
        %v623 = vunpack.c.l.b16 %v514
        %v624 = vunpack.c.l.b16 %v515
        %v625 = vunpack.c.l.b16 %v516
        %v626 = vunpack.c.l.b16 %v517
        %v627 = vunpack.c.l.b16 %v518
        %v628 = vunpack.c.l.b16 %v519
        %v629 = vunpack.c.l.b16 %v520
        %v630 = vpack.c.b16 %v588, %v587
        %v631 = vpack.c.b16 %v590, %v589
        %v632 = vpack.c.b16 %v592, %v591
        %v633 = vpack.c.b16 %v594, %v593
        %v634 = vpack.c.b16 %v596, %v595
        %v635 = vpack.c.b16 %v598, %v597
        %v636 = vpack.c.b16 %v600, %v599
        %v637 = vpack.c.b16 %v602, %v601
        %v638 = vpack.c.b16 %v604, %v603
        %v639 = vpack.c.b16 %v606, %v605
        %v640 = vpack.c.b16 %v608, %v607
        %v641 = vpack.c.b16 %v610, %v609
        %v642 = vpack.c.b16 %v612, %v611
        %v643 = vpack.c.b16 %v614, %v613
        %v644 = vpack.c.b16 %v616, %v615
        %v645 = vpack.c.b16 %v618, %v617
        %v646 = vpack.c.b16 %v620, %v619
        %v647 = vpack.c.b16 %v622, %v621
        %v648 = vpack.c.b16 %v624, %v623
        %v649 = vpack.c.b16 %v626, %v625
        %v650 = vpack.c.b16 %v628, %v627
        %v651 = vpack.c.b16 %v629, %v629
        %v690 = vunpack.c.l.b16 %v521
        %v691 = vunpack.c.l.b16 %v522
        %v692 = vunpack.c.l.b16 %v523
        %v693 = vunpack.c.l.b16 %v524
        %v694 = vunpack.c.l.b16 %v525
        %v695 = vunpack.c.l.b16 %v526
        %v696 = vunpack.c.l.b16 %v527
        %v697 = vunpack.c.l.b16 %v528
        %v698 = vunpack.c.l.b16 %v529
        %v699 = vunpack.c.l.b16 %v530
        %v700 = vunpack.c.l.b16 %v531
        %v701 = vunpack.c.l.b16 %v532
        %v702 = vunpack.c.l.b16 %v533
        %v703 = vunpack.c.l.b16 %v534
        %v704 = vunpack.c.l.b16 %v535
        %v705 = vunpack.c.l.b16 %v536
        %v706 = vpack.c.b16 %v691, %v690
        %v707 = vpack.c.b16 %v693, %v692
        %v708 = vpack.c.b16 %v695, %v694
        %v709 = vpack.c.b16 %v697, %v696
        %v710 = vpack.c.b16 %v699, %v698
        %v711 = vpack.c.b16 %v701, %v700
        %v712 = vpack.c.b16 %v703, %v702
        %v713 = vpack.c.b16 %v705, %v704
        %722 = vmatprep.subr.bf16.mxu0 0
        %723 = vmatpush1.bf16.msra.mxu0 %v713
        %724 = vmatprep.subr.bf16.mxu0 0
        %725 = vmatpush1.bf16.msra.mxu0 %v712
        %726 = vmatprep.subr.bf16.mxu0 0
        %727 = vmatpush1.bf16.msra.mxu0 %v711
        %728 = vmatprep.subr.bf16.mxu0 0
        %729 = vmatpush1.bf16.msra.mxu0 %v710
        %730 = vmatprep.subr.bf16.mxu0 0
        %731 = vmatpush1.bf16.msra.mxu0 %v709
        %732 = vmatprep.subr.bf16.mxu0 0
        %733 = vmatpush1.bf16.msra.mxu0 %v708
        %734 = vmatprep.subr.bf16.mxu0 0
        %735 = vmatpush1.bf16.msra.mxu0 %v707
        %736 = vmatprep.subr.bf16.mxu0 0
        %737 = vmatpush1.bf16.msra.mxu0 %v706
        %738 = vmatprep.subr.bf16.mxu0 0
        %739 = vmatpush2.bf16.msra.mxu0 0
        %740 = vmatprep.subr.bf16.mxu0 0
        %741 = vmatpush2.bf16.msra.mxu0 0
        %742 = vmatprep.subr.bf16.mxu0 0
        %743 = vmatpush2.bf16.msra.mxu0 0
        %744 = vmatprep.subr.bf16.mxu0 0
        %745 = vmatpush2.bf16.msra.mxu0 0
        %746 = vmatprep.subr.bf16.mxu0 0
        %747 = vmatpush2.bf16.msra.mxu0 0
        %748 = vmatprep.subr.bf16.mxu0 0
        %749 = vmatpush2.bf16.msra.mxu0 0
        %750 = vmatprep.subr.bf16.mxu0 0
        %751 = vmatpush2.bf16.msra.mxu0 0
        %752 = vmatprep.subr.bf16.mxu0 0
        %753 = vmatpush2.bf16.msra.mxu0 0
        %754 = vmatprep.mubr.bf16.mxu0 0
        %755 = vmatmul.mubr.bf16.gmra.mxu0 %v630
        %v756 = vpop.f32.mrf.mxu0
        %v757 = vadd.f32 %v542, %v756
        %v758 = vpop.f32.mrf.mxu0
        %v759 = vpop.f32.mrf.mxu0
        %v760 = vadd.f32 %v542, %v759
        %v761 = vpop.f32.mrf.mxu0
        %762 = vmatprep.mubr.bf16.mxu0 0
        %763 = vmatmul.mubr.bf16.gmra.mxu0 %v631
        %v764 = vpop.f32.mrf.mxu0
        %v765 = vadd.f32 %v542, %v764
        %v766 = vpop.f32.mrf.mxu0
        %v767 = vpop.f32.mrf.mxu0
        %v768 = vadd.f32 %v542, %v767
        %v769 = vpop.f32.mrf.mxu0
        %770 = vmatprep.mubr.bf16.mxu0 0
        %771 = vmatmul.mubr.bf16.gmra.mxu0 %v632
        %v772 = vpop.f32.mrf.mxu0
        %v773 = vadd.f32 %v542, %v772
        %v774 = vpop.f32.mrf.mxu0
        %v775 = vpop.f32.mrf.mxu0
        %v776 = vadd.f32 %v542, %v775
        %v777 = vpop.f32.mrf.mxu0
        %778 = vmatprep.mubr.bf16.mxu0 0
        %779 = vmatmul.mubr.bf16.gmra.mxu0 %v633
        %v780 = vpop.f32.mrf.mxu0
        %v781 = vadd.f32 %v542, %v780
        %v782 = vpop.f32.mrf.mxu0
        %v783 = vpop.f32.mrf.mxu0
        %v784 = vadd.f32 %v542, %v783
        %v785 = vpop.f32.mrf.mxu0
        %786 = vmatprep.mubr.bf16.mxu0 0
        %787 = vmatmul.mubr.bf16.gmra.mxu0 %v634
        %v788 = vpop.f32.mrf.mxu0
        %v789 = vadd.f32 %v542, %v788
        %v790 = vpop.f32.mrf.mxu0
        %v791 = vpop.f32.mrf.mxu0
        %v792 = vadd.f32 %v542, %v791
        %v793 = vpop.f32.mrf.mxu0
        %794 = vmatprep.mubr.bf16.mxu0 0
        %795 = vmatmul.mubr.bf16.gmra.mxu0 %v635
        %v796 = vpop.f32.mrf.mxu0
        %v797 = vadd.f32 %v542, %v796
        %v798 = vpop.f32.mrf.mxu0
        %v799 = vpop.f32.mrf.mxu0
        %v800 = vadd.f32 %v542, %v799
        %v801 = vpop.f32.mrf.mxu0
        %802 = vmatprep.mubr.bf16.mxu0 0
        %803 = vmatmul.mubr.bf16.gmra.mxu0 %v636
        %v804 = vpop.f32.mrf.mxu0
        %v805 = vadd.f32 %v542, %v804
        %v806 = vpop.f32.mrf.mxu0
        %v807 = vpop.f32.mrf.mxu0
        %v808 = vadd.f32 %v542, %v807
        %v809 = vpop.f32.mrf.mxu0
        %810 = vmatprep.mubr.bf16.mxu0 0
        %811 = vmatmul.mubr.bf16.gmra.mxu0 %v637
        %v812 = vpop.f32.mrf.mxu0
        %v813 = vadd.f32 %v542, %v812
        %v814 = vpop.f32.mrf.mxu0
        %v815 = vpop.f32.mrf.mxu0
        %v816 = vadd.f32 %v542, %v815
        %v817 = vpop.f32.mrf.mxu0
        %818 = vmatprep.mubr.bf16.mxu0 0
        %819 = vmatmul.mubr.bf16.gmra.mxu0 %v638
        %v820 = vpop.f32.mrf.mxu0
        %v821 = vadd.f32 %v542, %v820
        %v822 = vpop.f32.mrf.mxu0
        %v823 = vpop.f32.mrf.mxu0
        %v824 = vadd.f32 %v542, %v823
        %v825 = vpop.f32.mrf.mxu0
        %826 = vmatprep.mubr.bf16.mxu0 0
        %827 = vmatmul.mubr.bf16.gmra.mxu0 %v639
        %v828 = vpop.f32.mrf.mxu0
        %v829 = vadd.f32 %v542, %v828
        %v830 = vpop.f32.mrf.mxu0
        %v831 = vpop.f32.mrf.mxu0
        %v832 = vadd.f32 %v542, %v831
        %v833 = vpop.f32.mrf.mxu0
        %834 = vmatprep.mubr.bf16.mxu0 0
        %835 = vmatmul.mubr.bf16.gmra.mxu0 %v640
        %v836 = vpop.f32.mrf.mxu0
        %v837 = vadd.f32 %v542, %v836
        %v838 = vpop.f32.mrf.mxu0
        %v839 = vpop.f32.mrf.mxu0
        %v840 = vadd.f32 %v542, %v839
        %v841 = vpop.f32.mrf.mxu0
        %842 = vmatprep.mubr.bf16.mxu0 0
        %843 = vmatmul.mubr.bf16.gmra.mxu0 %v641
        %v844 = vpop.f32.mrf.mxu0
        %v845 = vadd.f32 %v542, %v844
        %v846 = vpop.f32.mrf.mxu0
        %v847 = vpop.f32.mrf.mxu0
        %v848 = vadd.f32 %v542, %v847
        %v849 = vpop.f32.mrf.mxu0
        %850 = vmatprep.mubr.bf16.mxu0 0
        %851 = vmatmul.mubr.bf16.gmra.mxu0 %v642
        %v852 = vpop.f32.mrf.mxu0
        %v853 = vadd.f32 %v542, %v852
        %v854 = vpop.f32.mrf.mxu0
        %v855 = vpop.f32.mrf.mxu0
        %v856 = vadd.f32 %v542, %v855
        %v857 = vpop.f32.mrf.mxu0
        %858 = vmatprep.mubr.bf16.mxu0 0
        %859 = vmatmul.mubr.bf16.gmra.mxu0 %v643
        %v860 = vpop.f32.mrf.mxu0
        %v861 = vadd.f32 %v542, %v860
        %v862 = vpop.f32.mrf.mxu0
        %v863 = vpop.f32.mrf.mxu0
        %v864 = vadd.f32 %v542, %v863
        %v865 = vpop.f32.mrf.mxu0
        %866 = vmatprep.mubr.bf16.mxu0 0
        %867 = vmatmul.mubr.bf16.gmra.mxu0 %v644
        %v868 = vpop.f32.mrf.mxu0
        %v869 = vadd.f32 %v542, %v868
        %v870 = vpop.f32.mrf.mxu0
        %v871 = vpop.f32.mrf.mxu0
        %v872 = vadd.f32 %v542, %v871
        %v873 = vpop.f32.mrf.mxu0
        %874 = vmatprep.mubr.bf16.mxu0 0
        %875 = vmatmul.mubr.bf16.gmra.mxu0 %v645
        %v876 = vpop.f32.mrf.mxu0
        %v877 = vadd.f32 %v542, %v876
        %v878 = vpop.f32.mrf.mxu0
        %v879 = vpop.f32.mrf.mxu0
        %v880 = vadd.f32 %v542, %v879
        %v881 = vpop.f32.mrf.mxu0
        %882 = vmatprep.mubr.bf16.mxu0 0
        %883 = vmatmul.mubr.bf16.gmra.mxu0 %v646
        %v884 = vpop.f32.mrf.mxu0
        %v885 = vadd.f32 %v542, %v884
        %v886 = vpop.f32.mrf.mxu0
        %v887 = vpop.f32.mrf.mxu0
        %v888 = vadd.f32 %v542, %v887
        %v889 = vpop.f32.mrf.mxu0
        %890 = vmatprep.mubr.bf16.mxu0 0
        %891 = vmatmul.mubr.bf16.gmra.mxu0 %v647
        %v892 = vpop.f32.mrf.mxu0
        %v893 = vadd.f32 %v542, %v892
        %v894 = vpop.f32.mrf.mxu0
        %v895 = vpop.f32.mrf.mxu0
        %v896 = vadd.f32 %v542, %v895
        %v897 = vpop.f32.mrf.mxu0
        %898 = vmatprep.mubr.bf16.mxu0 0
        %899 = vmatmul.mubr.bf16.gmra.mxu0 %v648
        %v900 = vpop.f32.mrf.mxu0
        %v901 = vadd.f32 %v542, %v900
        %v902 = vpop.f32.mrf.mxu0
        %v903 = vpop.f32.mrf.mxu0
        %v904 = vadd.f32 %v542, %v903
        %v905 = vpop.f32.mrf.mxu0
        %906 = vmatprep.mubr.bf16.mxu0 0
        %907 = vmatmul.mubr.bf16.gmra.mxu0 %v649
        %v908 = vpop.f32.mrf.mxu0
        %v909 = vadd.f32 %v542, %v908
        %v910 = vpop.f32.mrf.mxu0
        %v911 = vpop.f32.mrf.mxu0
        %v912 = vadd.f32 %v542, %v911
        %v913 = vpop.f32.mrf.mxu0
        %914 = vmatprep.mubr.bf16.mxu0 0
        %915 = vmatmul.mubr.bf16.gmra.mxu0 %v650
        %v916 = vpop.f32.mrf.mxu0
        %v917 = vadd.f32 %v542, %v916
        %v918 = vpop.f32.mrf.mxu0
        %v919 = vpop.f32.mrf.mxu0
        %v920 = vadd.f32 %v542, %v919
        %v921 = vpop.f32.mrf.mxu0
        %922 = vmatprep.mubr.bf16.mxu0 0
        %923 = vmatmul.mubr.bf16.gmra.mxu0 %v651
        %v924 = vpop.f32.mrf.mxu0
        %v925 = vadd.f32 %v542, %v924
        %v926 = vpop.f32.mrf.mxu0
        %v927 = vpop.f32.mrf.mxu0
        %v928 = vpop.f32.mrf.mxu0
        %929 = vdwg.mxu0
        %v930 = vld [vmem:[%s466] sm:$0xf]
        %v931 = vld [vmem:[%s466 + $0x4] sm:$0xf]
        %v932 = vld [vmem:[%s466 + $0x8] sm:$0xf]
        %v933 = vld [vmem:[%s466 + $0xc] sm:$0xf]
        %v934 = vld [vmem:[%s466 + $0x10] sm:$0xf]
        %v935 = vld [vmem:[%s466 + $0x14] sm:$0xf]
        %v936 = vld [vmem:[%s466 + $0x18] sm:$0xf]
        %v937 = vld [vmem:[%s466 + $0x1c] sm:$0xf]
        %v938 = vld [vmem:[%s466 + $0x20] sm:$0xf]
        %v939 = vld [vmem:[%s466 + $0x24] sm:$0xf]
        %v940 = vld [vmem:[%s466 + $0x28] sm:$0xf]
        %v941 = vld [vmem:[%s466 + $0x2c] sm:$0xf]
        %v942 = vld [vmem:[%s466 + $0x30] sm:$0xf]
        %v943 = vld [vmem:[%s466 + $0x34] sm:$0xf]
        %v944 = vld [vmem:[%s466 + $0x38] sm:$0xf]
        %v945 = vld [vmem:[%s466 + $0x3c] sm:$0xf]
        %v946 = vld [vmem:[%s466 + $0x40] sm:$0xf]
        %v947 = vld [vmem:[%s466 + $0x44] sm:$0xf]
        %v948 = vld [vmem:[%s466 + $0x48] sm:$0xf]
        %v949 = vld [vmem:[%s466 + $0x4c] sm:$0xf]
        %v950 = vld [vmem:[%s466 + $0x50] sm:$0xf]
        %v951 = vld [vmem:[%s466 + $0x54] sm:$0xf]
        %v952 = vld [vmem:[%s466 + $0x58] sm:$0xf]
        %v953 = vld [vmem:[%s466 + $0x5c] sm:$0xf]
        %v954 = vld [vmem:[%s466 + $0x60] sm:$0xf]
        %v955 = vld [vmem:[%s466 + $0x64] sm:$0xf]
        %v956 = vld [vmem:[%s466 + $0x68] sm:$0xf]
        %v957 = vld [vmem:[%s466 + $0x6c] sm:$0xf]
        %v958 = vld [vmem:[%s466 + $0x70] sm:$0xf]
        %v959 = vld [vmem:[%s466 + $0x74] sm:$0xf]
        %v960 = vld [vmem:[%s466 + $0x78] sm:$0xf]
        %v961 = vld [vmem:[%s466 + $0x7c] sm:$0xf]
        %v962 = vld [vmem:[%s466 + $0x80] sm:$0xf]
        %v963 = vld [vmem:[%s466 + $0x84] sm:$0xf]
        %v964 = vld [vmem:[%s466 + $0x88] sm:$0xf]
        %v965 = vld [vmem:[%s466 + $0x8c] sm:$0xf]
        %v966 = vld [vmem:[%s466 + $0x90] sm:$0xf]
        %v967 = vld [vmem:[%s466 + $0x94] sm:$0xf]
        %v968 = vld [vmem:[%s466 + $0x98] sm:$0xf]
        %v969 = vld [vmem:[%s466 + $0x9c] sm:$0xf]
        %v970 = vld [vmem:[%s466 + $0xa0] sm:$0xf]
        %v971 = vld [vmem:[%s466 + $0xa4] sm:$0xf]
        %v972 = vld [vmem:[%s466 + $0xa8] sm:$0xf]
        %v973 = vunpack.c.l.bf16 %v930
        %v974 = vunpack.c.l.bf16 %v931
        %v975 = vunpack.c.l.bf16 %v932
        %v976 = vunpack.c.l.bf16 %v933
        %v977 = vunpack.c.l.bf16 %v934
        %v978 = vunpack.c.l.bf16 %v935
        %v979 = vunpack.c.l.bf16 %v936
        %v980 = vunpack.c.l.bf16 %v937
        %v981 = vunpack.c.l.bf16 %v938
        %v982 = vunpack.c.l.bf16 %v939
        %v983 = vunpack.c.l.bf16 %v940
        %v984 = vunpack.c.l.bf16 %v941
        %v985 = vunpack.c.l.bf16 %v942
        %v986 = vunpack.c.l.bf16 %v943
        %v987 = vunpack.c.l.bf16 %v944
        %v988 = vunpack.c.l.bf16 %v945
        %v989 = vunpack.c.l.bf16 %v946
        %v990 = vunpack.c.l.bf16 %v947
        %v991 = vunpack.c.l.bf16 %v948
        %v992 = vunpack.c.l.bf16 %v949
        %v993 = vunpack.c.l.bf16 %v950
        %v994 = vunpack.c.l.bf16 %v951
        %v995 = vunpack.c.l.bf16 %v952
        %v996 = vunpack.c.l.bf16 %v953
        %v997 = vunpack.c.l.bf16 %v954
        %v998 = vunpack.c.l.bf16 %v955
        %v999 = vunpack.c.l.bf16 %v956
        %v1000 = vunpack.c.l.bf16 %v957
        %v1001 = vunpack.c.l.bf16 %v958
        %v1002 = vunpack.c.l.bf16 %v959
        %v1003 = vunpack.c.l.bf16 %v960
        %v1004 = vunpack.c.l.bf16 %v961
        %v1005 = vunpack.c.l.bf16 %v962
        %v1006 = vunpack.c.l.bf16 %v963
        %v1007 = vunpack.c.l.bf16 %v964
        %v1008 = vunpack.c.l.bf16 %v965
        %v1009 = vunpack.c.l.bf16 %v966
        %v1010 = vunpack.c.l.bf16 %v967
        %v1011 = vunpack.c.l.bf16 %v968
        %v1012 = vunpack.c.l.bf16 %v969
        %v1013 = vunpack.c.l.bf16 %v970
        %v1014 = vunpack.c.l.bf16 %v971
        %v1015 = vunpack.c.l.bf16 %v972
        %v1016 = vadd.f32 %v973, %v757
        %v1017 = vadd.f32 %v974, %v760
        %v1018 = vadd.f32 %v975, %v765
        %v1019 = vadd.f32 %v976, %v768
        %v1020 = vadd.f32 %v977, %v773
        %v1021 = vadd.f32 %v978, %v776
        %v1022 = vadd.f32 %v979, %v781
        %v1023 = vadd.f32 %v980, %v784
        %v1024 = vadd.f32 %v981, %v789
        %v1025 = vadd.f32 %v982, %v792
        %v1026 = vadd.f32 %v983, %v797
        %v1027 = vadd.f32 %v984, %v800
        %v1028 = vadd.f32 %v985, %v805
        %v1029 = vadd.f32 %v986, %v808
        %v1030 = vadd.f32 %v987, %v813
        %v1031 = vadd.f32 %v988, %v816
        %v1032 = vadd.f32 %v989, %v821
        %v1033 = vadd.f32 %v990, %v824
        %v1034 = vadd.f32 %v991, %v829
        %v1035 = vadd.f32 %v992, %v832
        %v1036 = vadd.f32 %v993, %v837
        %v1037 = vadd.f32 %v994, %v840
        %v1038 = vadd.f32 %v995, %v845
        %v1039 = vadd.f32 %v996, %v848
        %v1040 = vadd.f32 %v997, %v853
        %v1041 = vadd.f32 %v998, %v856
        %v1042 = vadd.f32 %v999, %v861
        %v1043 = vadd.f32 %v1000, %v864
        %v1044 = vadd.f32 %v1001, %v869
        %v1045 = vadd.f32 %v1002, %v872
        %v1046 = vadd.f32 %v1003, %v877
        %v1047 = vadd.f32 %v1004, %v880
        %v1048 = vadd.f32 %v1005, %v885
        %v1049 = vadd.f32 %v1006, %v888
        %v1050 = vadd.f32 %v1007, %v893
        %v1051 = vadd.f32 %v1008, %v896
        %v1052 = vadd.f32 %v1009, %v901
        %v1053 = vadd.f32 %v1010, %v904
        %v1054 = vadd.f32 %v1011, %v909
        %v1055 = vadd.f32 %v1012, %v912
        %v1056 = vadd.f32 %v1013, %v917
        %v1057 = vadd.f32 %v1014, %v920
        %v1058 = vadd.f32 %v1015, %v925
        %1059 = vadd.xlane.f32.xlu0 %v1016
        %v1060 = vpop.xlane.xlu0 %1059
        %1061 = vadd.xlane.f32.xlu0 %v1017
        %v1062 = vpop.xlane.xlu0 %1061
        %1063 = vadd.xlane.f32.xlu0 %v1018
        %v1064 = vpop.xlane.xlu0 %1063
        %1065 = vadd.xlane.f32.xlu0 %v1019
        %v1066 = vpop.xlane.xlu0 %1065
        %1067 = vadd.xlane.f32.xlu0 %v1020
        %v1068 = vpop.xlane.xlu0 %1067
        %1069 = vadd.xlane.f32.xlu0 %v1021
        %v1070 = vpop.xlane.xlu0 %1069
        %1071 = vadd.xlane.f32.xlu0 %v1022
        %v1072 = vpop.xlane.xlu0 %1071
        %1073 = vadd.xlane.f32.xlu0 %v1023
        %v1074 = vpop.xlane.xlu0 %1073
        %1075 = vadd.xlane.f32.xlu0 %v1024
        %v1076 = vpop.xlane.xlu0 %1075
        %1077 = vadd.xlane.f32.xlu0 %v1025
        %v1078 = vpop.xlane.xlu0 %1077
        %1079 = vadd.xlane.f32.xlu0 %v1026
        %v1080 = vpop.xlane.xlu0 %1079
        %1081 = vadd.xlane.f32.xlu0 %v1027
        %v1082 = vpop.xlane.xlu0 %1081
        %1083 = vadd.xlane.f32.xlu0 %v1028
        %v1084 = vpop.xlane.xlu0 %1083
        %1085 = vadd.xlane.f32.xlu0 %v1029
        %v1086 = vpop.xlane.xlu0 %1085
        %1087 = vadd.xlane.f32.xlu0 %v1030
        %v1088 = vpop.xlane.xlu0 %1087
        %1089 = vadd.xlane.f32.xlu0 %v1031
        %v1090 = vpop.xlane.xlu0 %1089
        %1091 = vadd.xlane.f32.xlu0 %v1032
        %v1092 = vpop.xlane.xlu0 %1091
        %1093 = vadd.xlane.f32.xlu0 %v1033
        %v1094 = vpop.xlane.xlu0 %1093
        %1095 = vadd.xlane.f32.xlu0 %v1034
        %v1096 = vpop.xlane.xlu0 %1095
        %1097 = vadd.xlane.f32.xlu0 %v1035
        %v1098 = vpop.xlane.xlu0 %1097
        %1099 = vadd.xlane.f32.xlu0 %v1036
        %v1100 = vpop.xlane.xlu0 %1099
        %1101 = vadd.xlane.f32.xlu0 %v1037
        %v1102 = vpop.xlane.xlu0 %1101
        %1103 = vadd.xlane.f32.xlu0 %v1038
        %v1104 = vpop.xlane.xlu0 %1103
        %1105 = vadd.xlane.f32.xlu0 %v1039
        %v1106 = vpop.xlane.xlu0 %1105
        %1107 = vadd.xlane.f32.xlu0 %v1040
        %v1108 = vpop.xlane.xlu0 %1107
        %1109 = vadd.xlane.f32.xlu0 %v1041
        %v1110 = vpop.xlane.xlu0 %1109
        %1111 = vadd.xlane.f32.xlu0 %v1042
        %v1112 = vpop.xlane.xlu0 %1111
        %1113 = vadd.xlane.f32.xlu0 %v1043
        %v1114 = vpop.xlane.xlu0 %1113
        %1115 = vadd.xlane.f32.xlu0 %v1044
        %v1116 = vpop.xlane.xlu0 %1115
        %1117 = vadd.xlane.f32.xlu0 %v1045
        %v1118 = vpop.xlane.xlu0 %1117
        %1119 = vadd.xlane.f32.xlu0 %v1046
        %v1120 = vpop.xlane.xlu0 %1119
        %1121 = vadd.xlane.f32.xlu0 %v1047
        %v1122 = vpop.xlane.xlu0 %1121
        %1123 = vadd.xlane.f32.xlu0 %v1048
        %v1124 = vpop.xlane.xlu0 %1123
        %1125 = vadd.xlane.f32.xlu0 %v1049
        %v1126 = vpop.xlane.xlu0 %1125
        %1127 = vadd.xlane.f32.xlu0 %v1050
        %v1128 = vpop.xlane.xlu0 %1127
        %1129 = vadd.xlane.f32.xlu0 %v1051
        %v1130 = vpop.xlane.xlu0 %1129
        %1131 = vadd.xlane.f32.xlu0 %v1052
        %v1132 = vpop.xlane.xlu0 %1131
        %1133 = vadd.xlane.f32.xlu0 %v1053
        %v1134 = vpop.xlane.xlu0 %1133
        %1135 = vadd.xlane.f32.xlu0 %v1054
        %v1136 = vpop.xlane.xlu0 %1135
        %1137 = vadd.xlane.f32.xlu0 %v1055
        %v1138 = vpop.xlane.xlu0 %1137
        %1139 = vadd.xlane.f32.xlu0 %v1056
        %v1140 = vpop.xlane.xlu0 %1139
        %1141 = vadd.xlane.f32.xlu0 %v1057
        %v1142 = vpop.xlane.xlu0 %1141
        %1143 = vadd.xlane.f32.xlu0 %v1058
        %v1144 = vpop.xlane.xlu0 %1143
        %v1145 = vrcp.pop 128.0
        %v1146 = vmul.f32 %v1060, %v1145
        %v1147 = vmul.f32 %v1062, %v1145
        %v1148 = vmul.f32 %v1064, %v1145
        %v1149 = vmul.f32 %v1066, %v1145
        %v1150 = vmul.f32 %v1068, %v1145
        %v1151 = vmul.f32 %v1070, %v1145
        %v1152 = vmul.f32 %v1072, %v1145
        %v1153 = vmul.f32 %v1074, %v1145
        %v1154 = vmul.f32 %v1076, %v1145
        %v1155 = vmul.f32 %v1078, %v1145
        %v1156 = vmul.f32 %v1080, %v1145
        %v1157 = vmul.f32 %v1082, %v1145
        %v1158 = vmul.f32 %v1084, %v1145
        %v1159 = vmul.f32 %v1086, %v1145
        %v1160 = vmul.f32 %v1088, %v1145
        %v1161 = vmul.f32 %v1090, %v1145
        %v1162 = vmul.f32 %v1092, %v1145
        %v1163 = vmul.f32 %v1094, %v1145
        %v1164 = vmul.f32 %v1096, %v1145
        %v1165 = vmul.f32 %v1098, %v1145
        %v1166 = vmul.f32 %v1100, %v1145
        %v1167 = vmul.f32 %v1102, %v1145
        %v1168 = vmul.f32 %v1104, %v1145
        %v1169 = vmul.f32 %v1106, %v1145
        %v1170 = vmul.f32 %v1108, %v1145
        %v1171 = vmul.f32 %v1110, %v1145
        %v1172 = vmul.f32 %v1112, %v1145
        %v1173 = vmul.f32 %v1114, %v1145
        %v1174 = vmul.f32 %v1116, %v1145
        %v1175 = vmul.f32 %v1118, %v1145
        %v1176 = vmul.f32 %v1120, %v1145
        %v1177 = vmul.f32 %v1122, %v1145
        %v1178 = vmul.f32 %v1124, %v1145
        %v1179 = vmul.f32 %v1126, %v1145
        %v1180 = vmul.f32 %v1128, %v1145
        %v1181 = vmul.f32 %v1130, %v1145
        %v1182 = vmul.f32 %v1132, %v1145
        %v1183 = vmul.f32 %v1134, %v1145
        %v1184 = vmul.f32 %v1136, %v1145
        %v1185 = vmul.f32 %v1138, %v1145
        %v1186 = vmul.f32 %v1140, %v1145
        %v1187 = vmul.f32 %v1142, %v1145
        %v1188 = vmul.f32 %v1144, %v1145
        %v1189 = vsub.f32 %v1016, %v1146
        %v1190 = vsub.f32 %v1017, %v1147
        %v1191 = vsub.f32 %v1018, %v1148
        %v1192 = vsub.f32 %v1019, %v1149
        %v1193 = vsub.f32 %v1020, %v1150
        %v1194 = vsub.f32 %v1021, %v1151
        %v1195 = vsub.f32 %v1022, %v1152
        %v1196 = vsub.f32 %v1023, %v1153
        %v1197 = vsub.f32 %v1024, %v1154
        %v1198 = vsub.f32 %v1025, %v1155
        %v1199 = vsub.f32 %v1026, %v1156
        %v1200 = vsub.f32 %v1027, %v1157
        %v1201 = vsub.f32 %v1028, %v1158
        %v1202 = vsub.f32 %v1029, %v1159
        %v1203 = vsub.f32 %v1030, %v1160
        %v1204 = vsub.f32 %v1031, %v1161
        %v1205 = vsub.f32 %v1032, %v1162
        %v1206 = vsub.f32 %v1033, %v1163
        %v1207 = vsub.f32 %v1034, %v1164
        %v1208 = vsub.f32 %v1035, %v1165
        %v1209 = vsub.f32 %v1036, %v1166
        %v1210 = vsub.f32 %v1037, %v1167
        %v1211 = vsub.f32 %v1038, %v1168
        %v1212 = vsub.f32 %v1039, %v1169
        %v1213 = vsub.f32 %v1040, %v1170
        %v1214 = vsub.f32 %v1041, %v1171
        %v1215 = vsub.f32 %v1042, %v1172
        %v1216 = vsub.f32 %v1043, %v1173
        %v1217 = vsub.f32 %v1044, %v1174
        %v1218 = vsub.f32 %v1045, %v1175
        %v1219 = vsub.f32 %v1046, %v1176
        %v1220 = vsub.f32 %v1047, %v1177
        %v1221 = vsub.f32 %v1048, %v1178
        %v1222 = vsub.f32 %v1049, %v1179
        %v1223 = vsub.f32 %v1050, %v1180
        %v1224 = vsub.f32 %v1051, %v1181
        %v1225 = vsub.f32 %v1052, %v1182
        %v1226 = vsub.f32 %v1053, %v1183
        %v1227 = vsub.f32 %v1054, %v1184
        %v1228 = vsub.f32 %v1055, %v1185
        %v1229 = vsub.f32 %v1056, %v1186
        %v1230 = vsub.f32 %v1057, %v1187
        %v1231 = vsub.f32 %v1058, %v1188
        %v1232 = vmul.f32 %v1189, %v1189
        %v1233 = vmul.f32 %v1190, %v1190
        %v1234 = vmul.f32 %v1191, %v1191
        %v1235 = vmul.f32 %v1192, %v1192
        %v1236 = vmul.f32 %v1193, %v1193
        %v1237 = vmul.f32 %v1194, %v1194
        %v1238 = vmul.f32 %v1195, %v1195
        %v1239 = vmul.f32 %v1196, %v1196
        %v1240 = vmul.f32 %v1197, %v1197
        %v1241 = vmul.f32 %v1198, %v1198
        %v1242 = vmul.f32 %v1199, %v1199
        %v1243 = vmul.f32 %v1200, %v1200
        %v1244 = vmul.f32 %v1201, %v1201
        %v1245 = vmul.f32 %v1202, %v1202
        %v1246 = vmul.f32 %v1203, %v1203
        %v1247 = vmul.f32 %v1204, %v1204
        %v1248 = vmul.f32 %v1205, %v1205
        %v1249 = vmul.f32 %v1206, %v1206
        %v1250 = vmul.f32 %v1207, %v1207
        %v1251 = vmul.f32 %v1208, %v1208
        %v1252 = vmul.f32 %v1209, %v1209
        %v1253 = vmul.f32 %v1210, %v1210
        %v1254 = vmul.f32 %v1211, %v1211
        %v1255 = vmul.f32 %v1212, %v1212
        %v1256 = vmul.f32 %v1213, %v1213
        %v1257 = vmul.f32 %v1214, %v1214
        %v1258 = vmul.f32 %v1215, %v1215
        %v1259 = vmul.f32 %v1216, %v1216
        %v1260 = vmul.f32 %v1217, %v1217
        %v1261 = vmul.f32 %v1218, %v1218
        %v1262 = vmul.f32 %v1219, %v1219
        %v1263 = vmul.f32 %v1220, %v1220
        %v1264 = vmul.f32 %v1221, %v1221
        %v1265 = vmul.f32 %v1222, %v1222
        %v1266 = vmul.f32 %v1223, %v1223
        %v1267 = vmul.f32 %v1224, %v1224
        %v1268 = vmul.f32 %v1225, %v1225
        %v1269 = vmul.f32 %v1226, %v1226
        %v1270 = vmul.f32 %v1227, %v1227
        %v1271 = vmul.f32 %v1228, %v1228
        %v1272 = vmul.f32 %v1229, %v1229
        %v1273 = vmul.f32 %v1230, %v1230
        %v1274 = vmul.f32 %v1231, %v1231
        %1275 = vadd.xlane.f32.xlu0 %v1232
        %v1276 = vpop.xlane.xlu0 %1275
        %1277 = vadd.xlane.f32.xlu0 %v1233
        %v1278 = vpop.xlane.xlu0 %1277
        %1279 = vadd.xlane.f32.xlu0 %v1234
        %v1280 = vpop.xlane.xlu0 %1279
        %1281 = vadd.xlane.f32.xlu0 %v1235
        %v1282 = vpop.xlane.xlu0 %1281
        %1283 = vadd.xlane.f32.xlu0 %v1236
        %v1284 = vpop.xlane.xlu0 %1283
        %1285 = vadd.xlane.f32.xlu0 %v1237
        %v1286 = vpop.xlane.xlu0 %1285
        %1287 = vadd.xlane.f32.xlu0 %v1238
        %v1288 = vpop.xlane.xlu0 %1287
        %1289 = vadd.xlane.f32.xlu0 %v1239
        %v1290 = vpop.xlane.xlu0 %1289
        %1291 = vadd.xlane.f32.xlu0 %v1240
        %v1292 = vpop.xlane.xlu0 %1291
        %1293 = vadd.xlane.f32.xlu0 %v1241
        %v1294 = vpop.xlane.xlu0 %1293
        %1295 = vadd.xlane.f32.xlu0 %v1242
        %v1296 = vpop.xlane.xlu0 %1295
        %1297 = vadd.xlane.f32.xlu0 %v1243
        %v1298 = vpop.xlane.xlu0 %1297
        %1299 = vadd.xlane.f32.xlu0 %v1244
        %v1300 = vpop.xlane.xlu0 %1299
        %1301 = vadd.xlane.f32.xlu0 %v1245
        %v1302 = vpop.xlane.xlu0 %1301
        %1303 = vadd.xlane.f32.xlu0 %v1246
        %v1304 = vpop.xlane.xlu0 %1303
        %1305 = vadd.xlane.f32.xlu0 %v1247
        %v1306 = vpop.xlane.xlu0 %1305
        %1307 = vadd.xlane.f32.xlu0 %v1248
        %v1308 = vpop.xlane.xlu0 %1307
        %1309 = vadd.xlane.f32.xlu0 %v1249
        %v1310 = vpop.xlane.xlu0 %1309
        %1311 = vadd.xlane.f32.xlu0 %v1250
        %v1312 = vpop.xlane.xlu0 %1311
        %1313 = vadd.xlane.f32.xlu0 %v1251
        %v1314 = vpop.xlane.xlu0 %1313
        %1315 = vadd.xlane.f32.xlu0 %v1252
        %v1316 = vpop.xlane.xlu0 %1315
        %1317 = vadd.xlane.f32.xlu0 %v1253
        %v1318 = vpop.xlane.xlu0 %1317
        %1319 = vadd.xlane.f32.xlu0 %v1254
        %v1320 = vpop.xlane.xlu0 %1319
        %1321 = vadd.xlane.f32.xlu0 %v1255
        %v1322 = vpop.xlane.xlu0 %1321
        %1323 = vadd.xlane.f32.xlu0 %v1256
        %v1324 = vpop.xlane.xlu0 %1323
        %1325 = vadd.xlane.f32.xlu0 %v1257
        %v1326 = vpop.xlane.xlu0 %1325
        %1327 = vadd.xlane.f32.xlu0 %v1258
        %v1328 = vpop.xlane.xlu0 %1327
        %1329 = vadd.xlane.f32.xlu0 %v1259
        %v1330 = vpop.xlane.xlu0 %1329
        %1331 = vadd.xlane.f32.xlu0 %v1260
        %v1332 = vpop.xlane.xlu0 %1331
        %1333 = vadd.xlane.f32.xlu0 %v1261
        %v1334 = vpop.xlane.xlu0 %1333
        %1335 = vadd.xlane.f32.xlu0 %v1262
        %v1336 = vpop.xlane.xlu0 %1335
        %1337 = vadd.xlane.f32.xlu0 %v1263
        %v1338 = vpop.xlane.xlu0 %1337
        %1339 = vadd.xlane.f32.xlu0 %v1264
        %v1340 = vpop.xlane.xlu0 %1339
        %1341 = vadd.xlane.f32.xlu0 %v1265
        %v1342 = vpop.xlane.xlu0 %1341
        %1343 = vadd.xlane.f32.xlu0 %v1266
        %v1344 = vpop.xlane.xlu0 %1343
        %1345 = vadd.xlane.f32.xlu0 %v1267
        %v1346 = vpop.xlane.xlu0 %1345
        %1347 = vadd.xlane.f32.xlu0 %v1268
        %v1348 = vpop.xlane.xlu0 %1347
        %1349 = vadd.xlane.f32.xlu0 %v1269
        %v1350 = vpop.xlane.xlu0 %1349
        %1351 = vadd.xlane.f32.xlu0 %v1270
        %v1352 = vpop.xlane.xlu0 %1351
        %1353 = vadd.xlane.f32.xlu0 %v1271
        %v1354 = vpop.xlane.xlu0 %1353
        %1355 = vadd.xlane.f32.xlu0 %v1272
        %v1356 = vpop.xlane.xlu0 %1355
        %1357 = vadd.xlane.f32.xlu0 %v1273
        %v1358 = vpop.xlane.xlu0 %1357
        %1359 = vadd.xlane.f32.xlu0 %v1274
        %v1360 = vpop.xlane.xlu0 %1359
        %v1361 = vmul.f32 %v1276, %v1145
        %v1362 = vmul.f32 %v1278, %v1145
        %v1363 = vmul.f32 %v1280, %v1145
        %v1364 = vmul.f32 %v1282, %v1145
        %v1365 = vmul.f32 %v1284, %v1145
        %v1366 = vmul.f32 %v1286, %v1145
        %v1367 = vmul.f32 %v1288, %v1145
        %v1368 = vmul.f32 %v1290, %v1145
        %v1369 = vmul.f32 %v1292, %v1145
        %v1370 = vmul.f32 %v1294, %v1145
        %v1371 = vmul.f32 %v1296, %v1145
        %v1372 = vmul.f32 %v1298, %v1145
        %v1373 = vmul.f32 %v1300, %v1145
        %v1374 = vmul.f32 %v1302, %v1145
        %v1375 = vmul.f32 %v1304, %v1145
        %v1376 = vmul.f32 %v1306, %v1145
        %v1377 = vmul.f32 %v1308, %v1145
        %v1378 = vmul.f32 %v1310, %v1145
        %v1379 = vmul.f32 %v1312, %v1145
        %v1380 = vmul.f32 %v1314, %v1145
        %v1381 = vmul.f32 %v1316, %v1145
        %v1382 = vmul.f32 %v1318, %v1145
        %v1383 = vmul.f32 %v1320, %v1145
        %v1384 = vmul.f32 %v1322, %v1145
        %v1385 = vmul.f32 %v1324, %v1145
        %v1386 = vmul.f32 %v1326, %v1145
        %v1387 = vmul.f32 %v1328, %v1145
        %v1388 = vmul.f32 %v1330, %v1145
        %v1389 = vmul.f32 %v1332, %v1145
        %v1390 = vmul.f32 %v1334, %v1145
        %v1391 = vmul.f32 %v1336, %v1145
        %v1392 = vmul.f32 %v1338, %v1145
        %v1393 = vmul.f32 %v1340, %v1145
        %v1394 = vmul.f32 %v1342, %v1145
        %v1395 = vmul.f32 %v1344, %v1145
        %v1396 = vmul.f32 %v1346, %v1145
        %v1397 = vmul.f32 %v1348, %v1145
        %v1398 = vmul.f32 %v1350, %v1145
        %v1399 = vmul.f32 %v1352, %v1145
        %v1400 = vmul.f32 %v1354, %v1145
        %v1401 = vmul.f32 %v1356, %v1145
        %v1402 = vmul.f32 %v1358, %v1145
        %v1403 = vmul.f32 %v1360, %v1145
        %v1404 = vadd.f32 %v1361, 1e-05
        %v1405 = vadd.f32 %v1362, 1e-05
        %v1406 = vadd.f32 %v1363, 1e-05
        %v1407 = vadd.f32 %v1364, 1e-05
        %v1408 = vadd.f32 %v1365, 1e-05
        %v1409 = vadd.f32 %v1366, 1e-05
        %v1410 = vadd.f32 %v1367, 1e-05
        %v1411 = vadd.f32 %v1368, 1e-05
        %v1412 = vadd.f32 %v1369, 1e-05
        %v1413 = vadd.f32 %v1370, 1e-05
        %v1414 = vadd.f32 %v1371, 1e-05
        %v1415 = vadd.f32 %v1372, 1e-05
        %v1416 = vadd.f32 %v1373, 1e-05
        %v1417 = vadd.f32 %v1374, 1e-05
        %v1418 = vadd.f32 %v1375, 1e-05
        %v1419 = vadd.f32 %v1376, 1e-05
        %v1420 = vadd.f32 %v1377, 1e-05
        %v1421 = vadd.f32 %v1378, 1e-05
        %v1422 = vadd.f32 %v1379, 1e-05
        %v1423 = vadd.f32 %v1380, 1e-05
        %v1424 = vadd.f32 %v1381, 1e-05
        %v1425 = vadd.f32 %v1382, 1e-05
        %v1426 = vadd.f32 %v1383, 1e-05
        %v1427 = vadd.f32 %v1384, 1e-05
        %v1428 = vadd.f32 %v1385, 1e-05
        %v1429 = vadd.f32 %v1386, 1e-05
        %v1430 = vadd.f32 %v1387, 1e-05
        %v1431 = vadd.f32 %v1388, 1e-05
        %v1432 = vadd.f32 %v1389, 1e-05
        %v1433 = vadd.f32 %v1390, 1e-05
        %v1434 = vadd.f32 %v1391, 1e-05
        %v1435 = vadd.f32 %v1392, 1e-05
        %v1436 = vadd.f32 %v1393, 1e-05
        %v1437 = vadd.f32 %v1394, 1e-05
        %v1438 = vadd.f32 %v1395, 1e-05
        %v1439 = vadd.f32 %v1396, 1e-05
        %v1440 = vadd.f32 %v1397, 1e-05
        %v1441 = vadd.f32 %v1398, 1e-05
        %v1442 = vadd.f32 %v1399, 1e-05
        %v1443 = vadd.f32 %v1400, 1e-05
        %v1444 = vadd.f32 %v1401, 1e-05
        %v1445 = vadd.f32 %v1402, 1e-05
        %v1446 = vadd.f32 %v1403, 1e-05
        %v1447 = vrsqrt.pop %v1404
        %v1448 = vrsqrt.pop %v1405
        %v1449 = vrsqrt.pop %v1406
        %v1450 = vrsqrt.pop %v1407
        %v1451 = vrsqrt.pop %v1408
        %v1452 = vrsqrt.pop %v1409
        %v1453 = vrsqrt.pop %v1410
        %v1454 = vrsqrt.pop %v1411
        %v1455 = vrsqrt.pop %v1412
        %v1456 = vrsqrt.pop %v1413
        %v1457 = vrsqrt.pop %v1414
        %v1458 = vrsqrt.pop %v1415
        %v1459 = vrsqrt.pop %v1416
        %v1460 = vrsqrt.pop %v1417
        %v1461 = vrsqrt.pop %v1418
        %v1462 = vrsqrt.pop %v1419
        %v1463 = vrsqrt.pop %v1420
        %v1464 = vrsqrt.pop %v1421
        %v1465 = vrsqrt.pop %v1422
        %v1466 = vrsqrt.pop %v1423
        %v1467 = vrsqrt.pop %v1424
        %v1468 = vrsqrt.pop %v1425
        %v1469 = vrsqrt.pop %v1426
        %v1470 = vrsqrt.pop %v1427
        %v1471 = vrsqrt.pop %v1428
        %v1472 = vrsqrt.pop %v1429
        %v1473 = vrsqrt.pop %v1430
        %v1474 = vrsqrt.pop %v1431
        %v1475 = vrsqrt.pop %v1432
        %v1476 = vrsqrt.pop %v1433
        %v1477 = vrsqrt.pop %v1434
        %v1478 = vrsqrt.pop %v1435
        %v1479 = vrsqrt.pop %v1436
        %v1480 = vrsqrt.pop %v1437
        %v1481 = vrsqrt.pop %v1438
        %v1482 = vrsqrt.pop %v1439
        %v1483 = vrsqrt.pop %v1440
        %v1484 = vrsqrt.pop %v1441
        %v1485 = vrsqrt.pop %v1442
        %v1486 = vrsqrt.pop %v1443
        %v1487 = vrsqrt.pop %v1444
        %v1488 = vrsqrt.pop %v1445
        %v1489 = vrsqrt.pop %v1446
        %v1490 = vmul.f32 %v1189, %v1447
        %v1491 = vmul.f32 %v1190, %v1448
        %v1492 = vmul.f32 %v1191, %v1449
        %v1493 = vmul.f32 %v1192, %v1450
        %v1494 = vmul.f32 %v1193, %v1451
        %v1495 = vmul.f32 %v1194, %v1452
        %v1496 = vmul.f32 %v1195, %v1453
        %v1497 = vmul.f32 %v1196, %v1454
        %v1498 = vmul.f32 %v1197, %v1455
        %v1499 = vmul.f32 %v1198, %v1456
        %v1500 = vmul.f32 %v1199, %v1457
        %v1501 = vmul.f32 %v1200, %v1458
        %v1502 = vmul.f32 %v1201, %v1459
        %v1503 = vmul.f32 %v1202, %v1460
        %v1504 = vmul.f32 %v1203, %v1461
        %v1505 = vmul.f32 %v1204, %v1462
        %v1506 = vmul.f32 %v1205, %v1463
        %v1507 = vmul.f32 %v1206, %v1464
        %v1508 = vmul.f32 %v1207, %v1465
        %v1509 = vmul.f32 %v1208, %v1466
        %v1510 = vmul.f32 %v1209, %v1467
        %v1511 = vmul.f32 %v1210, %v1468
        %v1512 = vmul.f32 %v1211, %v1469
        %v1513 = vmul.f32 %v1212, %v1470
        %v1514 = vmul.f32 %v1213, %v1471
        %v1515 = vmul.f32 %v1214, %v1472
        %v1516 = vmul.f32 %v1215, %v1473
        %v1517 = vmul.f32 %v1216, %v1474
        %v1518 = vmul.f32 %v1217, %v1475
        %v1519 = vmul.f32 %v1218, %v1476
        %v1520 = vmul.f32 %v1219, %v1477
        %v1521 = vmul.f32 %v1220, %v1478
        %v1522 = vmul.f32 %v1221, %v1479
        %v1523 = vmul.f32 %v1222, %v1480
        %v1524 = vmul.f32 %v1223, %v1481
        %v1525 = vmul.f32 %v1224, %v1482
        %v1526 = vmul.f32 %v1225, %v1483
        %v1527 = vmul.f32 %v1226, %v1484
        %v1528 = vmul.f32 %v1227, %v1485
        %v1529 = vmul.f32 %v1228, %v1486
        %v1530 = vmul.f32 %v1229, %v1487
        %v1531 = vmul.f32 %v1230, %v1488
        %v1532 = vmul.f32 %v1231, %v1489
        %v1533 = vld [vmem:[%s4] sm:$0x1]
        %v1535 = vlaneseq
        %v1536 = vshrl.u32 %v1535, 7
        %v1537 = vsub.s32 0, %v1536
        %v1538 = vrot.slane %v1533, %v1537
        %v1540 = vmul.f32 %v1490, %v1538
        %v1541 = vmul.f32 %v1491, %v1538
        %v1542 = vmul.f32 %v1492, %v1538
        %v1543 = vmul.f32 %v1493, %v1538
        %v1544 = vmul.f32 %v1494, %v1538
        %v1545 = vmul.f32 %v1495, %v1538
        %v1546 = vmul.f32 %v1496, %v1538
        %v1547 = vmul.f32 %v1497, %v1538
        %v1548 = vmul.f32 %v1498, %v1538
        %v1549 = vmul.f32 %v1499, %v1538
        %v1550 = vmul.f32 %v1500, %v1538
        %v1551 = vmul.f32 %v1501, %v1538
        %v1552 = vmul.f32 %v1502, %v1538
        %v1553 = vmul.f32 %v1503, %v1538
        %v1554 = vmul.f32 %v1504, %v1538
        %v1555 = vmul.f32 %v1505, %v1538
        %v1556 = vmul.f32 %v1506, %v1538
        %v1557 = vmul.f32 %v1507, %v1538
        %v1558 = vmul.f32 %v1508, %v1538
        %v1559 = vmul.f32 %v1509, %v1538
        %v1560 = vmul.f32 %v1510, %v1538
        %v1561 = vmul.f32 %v1511, %v1538
        %v1562 = vmul.f32 %v1512, %v1538
        %v1563 = vmul.f32 %v1513, %v1538
        %v1564 = vmul.f32 %v1514, %v1538
        %v1565 = vmul.f32 %v1515, %v1538
        %v1566 = vmul.f32 %v1516, %v1538
        %v1567 = vmul.f32 %v1517, %v1538
        %v1568 = vmul.f32 %v1518, %v1538
        %v1569 = vmul.f32 %v1519, %v1538
        %v1570 = vmul.f32 %v1520, %v1538
        %v1571 = vmul.f32 %v1521, %v1538
        %v1572 = vmul.f32 %v1522, %v1538
        %v1573 = vmul.f32 %v1523, %v1538
        %v1574 = vmul.f32 %v1524, %v1538
        %v1575 = vmul.f32 %v1525, %v1538
        %v1576 = vmul.f32 %v1526, %v1538
        %v1577 = vmul.f32 %v1527, %v1538
        %v1578 = vmul.f32 %v1528, %v1538
        %v1579 = vmul.f32 %v1529, %v1538
        %v1580 = vmul.f32 %v1530, %v1538
        %v1581 = vmul.f32 %v1531, %v1538
        %v1582 = vmul.f32 %v1532, %v1538
        %v1583 = vld [vmem:[%s5] sm:$0x1]
        %v1585 = vlaneseq
        %v1586 = vshrl.u32 %v1585, 7
        %v1587 = vsub.s32 0, %v1586
        %v1588 = vrot.slane %v1583, %v1587
        %v1590 = vadd.f32 %v1540, %v1588
        %v1591 = vadd.f32 %v1541, %v1588
        %v1592 = vadd.f32 %v1542, %v1588
        %v1593 = vadd.f32 %v1543, %v1588
        %v1594 = vadd.f32 %v1544, %v1588
        %v1595 = vadd.f32 %v1545, %v1588
        %v1596 = vadd.f32 %v1546, %v1588
        %v1597 = vadd.f32 %v1547, %v1588
        %v1598 = vadd.f32 %v1548, %v1588
        %v1599 = vadd.f32 %v1549, %v1588
        %v1600 = vadd.f32 %v1550, %v1588
        %v1601 = vadd.f32 %v1551, %v1588
        %v1602 = vadd.f32 %v1552, %v1588
        %v1603 = vadd.f32 %v1553, %v1588
        %v1604 = vadd.f32 %v1554, %v1588
        %v1605 = vadd.f32 %v1555, %v1588
        %v1606 = vadd.f32 %v1556, %v1588
        %v1607 = vadd.f32 %v1557, %v1588
        %v1608 = vadd.f32 %v1558, %v1588
        %v1609 = vadd.f32 %v1559, %v1588
        %v1610 = vadd.f32 %v1560, %v1588
        %v1611 = vadd.f32 %v1561, %v1588
        %v1612 = vadd.f32 %v1562, %v1588
        %v1613 = vadd.f32 %v1563, %v1588
        %v1614 = vadd.f32 %v1564, %v1588
        %v1615 = vadd.f32 %v1565, %v1588
        %v1616 = vadd.f32 %v1566, %v1588
        %v1617 = vadd.f32 %v1567, %v1588
        %v1618 = vadd.f32 %v1568, %v1588
        %v1619 = vadd.f32 %v1569, %v1588
        %v1620 = vadd.f32 %v1570, %v1588
        %v1621 = vadd.f32 %v1571, %v1588
        %v1622 = vadd.f32 %v1572, %v1588
        %v1623 = vadd.f32 %v1573, %v1588
        %v1624 = vadd.f32 %v1574, %v1588
        %v1625 = vadd.f32 %v1575, %v1588
        %v1626 = vadd.f32 %v1576, %v1588
        %v1627 = vadd.f32 %v1577, %v1588
        %v1628 = vadd.f32 %v1578, %v1588
        %v1629 = vadd.f32 %v1579, %v1588
        %v1630 = vadd.f32 %v1580, %v1588
        %v1631 = vadd.f32 %v1581, %v1588
        %v1632 = vadd.f32 %v1582, %v1588
        %v1633 = vpack.c.bf16 %v1591, %v1590
        %v1634 = vpack.c.bf16 %v1593, %v1592
        %v1635 = vpack.c.bf16 %v1595, %v1594
        %v1636 = vpack.c.bf16 %v1597, %v1596
        %v1637 = vpack.c.bf16 %v1599, %v1598
        %v1638 = vpack.c.bf16 %v1601, %v1600
        %v1639 = vpack.c.bf16 %v1603, %v1602
        %v1640 = vpack.c.bf16 %v1605, %v1604
        %v1641 = vpack.c.bf16 %v1607, %v1606
        %v1642 = vpack.c.bf16 %v1609, %v1608
        %v1643 = vpack.c.bf16 %v1611, %v1610
        %v1644 = vpack.c.bf16 %v1613, %v1612
        %v1645 = vpack.c.bf16 %v1615, %v1614
        %v1646 = vpack.c.bf16 %v1617, %v1616
        %v1647 = vpack.c.bf16 %v1619, %v1618
        %v1648 = vpack.c.bf16 %v1621, %v1620
        %v1649 = vpack.c.bf16 %v1623, %v1622
        %v1650 = vpack.c.bf16 %v1625, %v1624
        %v1651 = vpack.c.bf16 %v1627, %v1626
        %v1652 = vpack.c.bf16 %v1629, %v1628
        %v1653 = vpack.c.bf16 %v1631, %v1630
        %v1654 = vpack.c.bf16 %v1632, %v1632
        %v1655 = vld [vmem:[%s6] sm:$0xff]
        %v1656 = vld [vmem:[%s6 + $0x8] sm:$0xff]
        %v1657 = vld [vmem:[%s6 + $0x10] sm:$0xff]
        %v1658 = vld [vmem:[%s6 + $0x18] sm:$0xff]
        %v1659 = vld [vmem:[%s6 + $0x20] sm:$0xff]
        %v1660 = vld [vmem:[%s6 + $0x28] sm:$0xff]
        %v1661 = vld [vmem:[%s6 + $0x30] sm:$0xff]
        %v1662 = vld [vmem:[%s6 + $0x38] sm:$0xff]
        %v1663 = vld [vmem:[%s6 + $0x40] sm:$0xff]
        %v1664 = vld [vmem:[%s6 + $0x48] sm:$0xff]
        %v1665 = vld [vmem:[%s6 + $0x50] sm:$0xff]
        %v1666 = vld [vmem:[%s6 + $0x58] sm:$0xff]
        %v1667 = vld [vmem:[%s6 + $0x60] sm:$0xff]
        %v1668 = vld [vmem:[%s6 + $0x68] sm:$0xff]
        %v1669 = vld [vmem:[%s6 + $0x70] sm:$0xff]
        %v1670 = vld [vmem:[%s6 + $0x78] sm:$0xff]
        %v1671 = vld [vmem:[%s7] sm:$0x3]
        %v1673 = vlaneseq
        %v1674 = vshrl.u32 %v1673, 7
        %v1675 = vsub.s32 0, %v1674
        %v1676 = vrot.slane %v1671, %v1675
        %v1677 = vlaneseq
        %v1678 = vshrl.u32 %v1677, 7
        %v1679 = vsub.s32 1, %v1678
        %v1680 = vrot.slane %v1671, %v1679
        %v1699 = vunpack.c.l.b16 %v1655
        %v1700 = vunpack.c.h.b16 %v1655
        %v1701 = vunpack.c.l.b16 %v1656
        %v1702 = vunpack.c.h.b16 %v1656
        %v1703 = vunpack.c.l.b16 %v1657
        %v1704 = vunpack.c.h.b16 %v1657
        %v1705 = vunpack.c.l.b16 %v1658
        %v1706 = vunpack.c.h.b16 %v1658
        %v1707 = vunpack.c.l.b16 %v1659
        %v1708 = vunpack.c.h.b16 %v1659
        %v1709 = vunpack.c.l.b16 %v1660
        %v1710 = vunpack.c.h.b16 %v1660
        %v1711 = vunpack.c.l.b16 %v1661
        %v1712 = vunpack.c.h.b16 %v1661
        %v1713 = vunpack.c.l.b16 %v1662
        %v1714 = vunpack.c.h.b16 %v1662
        %v1715 = vunpack.c.l.b16 %v1663
        %v1716 = vunpack.c.h.b16 %v1663
        %v1717 = vunpack.c.l.b16 %v1664
        %v1718 = vunpack.c.h.b16 %v1664
        %v1719 = vunpack.c.l.b16 %v1665
        %v1720 = vunpack.c.h.b16 %v1665
        %v1721 = vunpack.c.l.b16 %v1666
        %v1722 = vunpack.c.h.b16 %v1666
        %v1723 = vunpack.c.l.b16 %v1667
        %v1724 = vunpack.c.h.b16 %v1667
        %v1725 = vunpack.c.l.b16 %v1668
        %v1726 = vunpack.c.h.b16 %v1668
        %v1727 = vunpack.c.l.b16 %v1669
        %v1728 = vunpack.c.h.b16 %v1669
        %v1729 = vunpack.c.l.b16 %v1670
        %v1730 = vunpack.c.h.b16 %v1670
        %v1731 = vpack.c.b16 %v1701, %v1699
        %v1732 = vpack.c.b16 %v1702, %v1700
        %v1733 = vpack.c.b16 %v1705, %v1703
        %v1734 = vpack.c.b16 %v1706, %v1704
        %v1735 = vpack.c.b16 %v1709, %v1707
        %v1736 = vpack.c.b16 %v1710, %v1708
        %v1737 = vpack.c.b16 %v1713, %v1711
        %v1738 = vpack.c.b16 %v1714, %v1712
        %v1739 = vpack.c.b16 %v1717, %v1715
        %v1740 = vpack.c.b16 %v1718, %v1716
        %v1741 = vpack.c.b16 %v1721, %v1719
        %v1742 = vpack.c.b16 %v1722, %v1720
        %v1743 = vpack.c.b16 %v1725, %v1723
        %v1744 = vpack.c.b16 %v1726, %v1724
        %v1745 = vpack.c.b16 %v1729, %v1727
        %v1746 = vpack.c.b16 %v1730, %v1728
        %1763 = vmatprep.subr.bf16.mxu0 %v1746
        %1764 = vmatpush1.bf16.msra.mxu0 %v1745
        %1765 = vmatprep.subr.bf16.mxu0 %v1744
        %1766 = vmatpush1.bf16.msra.mxu0 %v1743
        %1767 = vmatprep.subr.bf16.mxu0 %v1742
        %1768 = vmatpush1.bf16.msra.mxu0 %v1741
        %1769 = vmatprep.subr.bf16.mxu0 %v1740
        %1770 = vmatpush1.bf16.msra.mxu0 %v1739
        %1771 = vmatprep.subr.bf16.mxu0 %v1738
        %1772 = vmatpush1.bf16.msra.mxu0 %v1737
        %1773 = vmatprep.subr.bf16.mxu0 %v1736
        %1774 = vmatpush1.bf16.msra.mxu0 %v1735
        %1775 = vmatprep.subr.bf16.mxu0 %v1734
        %1776 = vmatpush1.bf16.msra.mxu0 %v1733
        %1777 = vmatprep.subr.bf16.mxu0 %v1732
        %1778 = vmatpush1.bf16.msra.mxu0 %v1731
        %1779 = vmatprep.subr.bf16.mxu0 0
        %1780 = vmatpush2.bf16.msra.mxu0 0
        %1781 = vmatprep.subr.bf16.mxu0 0
        %1782 = vmatpush2.bf16.msra.mxu0 0
        %1783 = vmatprep.subr.bf16.mxu0 0
        %1784 = vmatpush2.bf16.msra.mxu0 0
        %1785 = vmatprep.subr.bf16.mxu0 0
        %1786 = vmatpush2.bf16.msra.mxu0 0
        %1787 = vmatprep.subr.bf16.mxu0 0
        %1788 = vmatpush2.bf16.msra.mxu0 0
        %1789 = vmatprep.subr.bf16.mxu0 0
        %1790 = vmatpush2.bf16.msra.mxu0 0
        %1791 = vmatprep.subr.bf16.mxu0 0
        %1792 = vmatpush2.bf16.msra.mxu0 0
        %1793 = vmatprep.subr.bf16.mxu0 0
        %1794 = vmatpush2.bf16.msra.mxu0 0
        %1795 = vmatprep.mubr.bf16.mxu0 0
        %1796 = vmatmul.mubr.bf16.gmra.mxu0 %v1633
        %v1797 = vpop.f32.mrf.mxu0
        %v1798 = vadd.f32 %v1676, %v1797
        %v1799 = vpop.f32.mrf.mxu0
        %v1800 = vadd.f32 %v1680, %v1799
        %v1801 = vpop.f32.mrf.mxu0
        %v1802 = vadd.f32 %v1676, %v1801
        %v1803 = vpop.f32.mrf.mxu0
        %v1804 = vadd.f32 %v1680, %v1803
        %1805 = vmatprep.mubr.bf16.mxu0 0
        %1806 = vmatmul.mubr.bf16.gmra.mxu0 %v1634
        %v1807 = vpop.f32.mrf.mxu0
        %v1808 = vadd.f32 %v1676, %v1807
        %v1809 = vpop.f32.mrf.mxu0
        %v1810 = vadd.f32 %v1680, %v1809
        %v1811 = vpop.f32.mrf.mxu0
        %v1812 = vadd.f32 %v1676, %v1811
        %v1813 = vpop.f32.mrf.mxu0
        %v1814 = vadd.f32 %v1680, %v1813
        %1815 = vmatprep.mubr.bf16.mxu0 0
        %1816 = vmatmul.mubr.bf16.gmra.mxu0 %v1635
        %v1817 = vpop.f32.mrf.mxu0
        %v1818 = vadd.f32 %v1676, %v1817
        %v1819 = vpop.f32.mrf.mxu0
        %v1820 = vadd.f32 %v1680, %v1819
        %v1821 = vpop.f32.mrf.mxu0
        %v1822 = vadd.f32 %v1676, %v1821
        %v1823 = vpop.f32.mrf.mxu0
        %v1824 = vadd.f32 %v1680, %v1823
        %1825 = vmatprep.mubr.bf16.mxu0 0
        %1826 = vmatmul.mubr.bf16.gmra.mxu0 %v1636
        %v1827 = vpop.f32.mrf.mxu0
        %v1828 = vadd.f32 %v1676, %v1827
        %v1829 = vpop.f32.mrf.mxu0
        %v1830 = vadd.f32 %v1680, %v1829
        %v1831 = vpop.f32.mrf.mxu0
        %v1832 = vadd.f32 %v1676, %v1831
        %v1833 = vpop.f32.mrf.mxu0
        %v1834 = vadd.f32 %v1680, %v1833
        %1835 = vmatprep.mubr.bf16.mxu0 0
        %1836 = vmatmul.mubr.bf16.gmra.mxu0 %v1637
        %v1837 = vpop.f32.mrf.mxu0
        %v1838 = vadd.f32 %v1676, %v1837
        %v1839 = vpop.f32.mrf.mxu0
        %v1840 = vadd.f32 %v1680, %v1839
        %v1841 = vpop.f32.mrf.mxu0
        %v1842 = vadd.f32 %v1676, %v1841
        %v1843 = vpop.f32.mrf.mxu0
        %v1844 = vadd.f32 %v1680, %v1843
        %1845 = vmatprep.mubr.bf16.mxu0 0
        %1846 = vmatmul.mubr.bf16.gmra.mxu0 %v1638
        %v1847 = vpop.f32.mrf.mxu0
        %v1848 = vadd.f32 %v1676, %v1847
        %v1849 = vpop.f32.mrf.mxu0
        %v1850 = vadd.f32 %v1680, %v1849
        %v1851 = vpop.f32.mrf.mxu0
        %v1852 = vadd.f32 %v1676, %v1851
        %v1853 = vpop.f32.mrf.mxu0
        %v1854 = vadd.f32 %v1680, %v1853
        %1855 = vmatprep.mubr.bf16.mxu0 0
        %1856 = vmatmul.mubr.bf16.gmra.mxu0 %v1639
        %v1857 = vpop.f32.mrf.mxu0
        %v1858 = vadd.f32 %v1676, %v1857
        %v1859 = vpop.f32.mrf.mxu0
        %v1860 = vadd.f32 %v1680, %v1859
        %v1861 = vpop.f32.mrf.mxu0
        %v1862 = vadd.f32 %v1676, %v1861
        %v1863 = vpop.f32.mrf.mxu0
        %v1864 = vadd.f32 %v1680, %v1863
        %1865 = vmatprep.mubr.bf16.mxu0 0
        %1866 = vmatmul.mubr.bf16.gmra.mxu0 %v1640
        %v1867 = vpop.f32.mrf.mxu0
        %v1868 = vadd.f32 %v1676, %v1867
        %v1869 = vpop.f32.mrf.mxu0
        %v1870 = vadd.f32 %v1680, %v1869
        %v1871 = vpop.f32.mrf.mxu0
        %v1872 = vadd.f32 %v1676, %v1871
        %v1873 = vpop.f32.mrf.mxu0
        %v1874 = vadd.f32 %v1680, %v1873
        %1875 = vmatprep.mubr.bf16.mxu0 0
        %1876 = vmatmul.mubr.bf16.gmra.mxu0 %v1641
        %v1877 = vpop.f32.mrf.mxu0
        %v1878 = vadd.f32 %v1676, %v1877
        %v1879 = vpop.f32.mrf.mxu0
        %v1880 = vadd.f32 %v1680, %v1879
        %v1881 = vpop.f32.mrf.mxu0
        %v1882 = vadd.f32 %v1676, %v1881
        %v1883 = vpop.f32.mrf.mxu0
        %v1884 = vadd.f32 %v1680, %v1883
        %1885 = vmatprep.mubr.bf16.mxu0 0
        %1886 = vmatmul.mubr.bf16.gmra.mxu0 %v1642
        %v1887 = vpop.f32.mrf.mxu0
        %v1888 = vadd.f32 %v1676, %v1887
        %v1889 = vpop.f32.mrf.mxu0
        %v1890 = vadd.f32 %v1680, %v1889
        %v1891 = vpop.f32.mrf.mxu0
        %v1892 = vadd.f32 %v1676, %v1891
        %v1893 = vpop.f32.mrf.mxu0
        %v1894 = vadd.f32 %v1680, %v1893
        %1895 = vmatprep.mubr.bf16.mxu0 0
        %1896 = vmatmul.mubr.bf16.gmra.mxu0 %v1643
        %v1897 = vpop.f32.mrf.mxu0
        %v1898 = vadd.f32 %v1676, %v1897
        %v1899 = vpop.f32.mrf.mxu0
        %v1900 = vadd.f32 %v1680, %v1899
        %v1901 = vpop.f32.mrf.mxu0
        %v1902 = vadd.f32 %v1676, %v1901
        %v1903 = vpop.f32.mrf.mxu0
        %v1904 = vadd.f32 %v1680, %v1903
        %1905 = vmatprep.mubr.bf16.mxu0 0
        %1906 = vmatmul.mubr.bf16.gmra.mxu0 %v1644
        %v1907 = vpop.f32.mrf.mxu0
        %v1908 = vadd.f32 %v1676, %v1907
        %v1909 = vpop.f32.mrf.mxu0
        %v1910 = vadd.f32 %v1680, %v1909
        %v1911 = vpop.f32.mrf.mxu0
        %v1912 = vadd.f32 %v1676, %v1911
        %v1913 = vpop.f32.mrf.mxu0
        %v1914 = vadd.f32 %v1680, %v1913
        %1915 = vmatprep.mubr.bf16.mxu0 0
        %1916 = vmatmul.mubr.bf16.gmra.mxu0 %v1645
        %v1917 = vpop.f32.mrf.mxu0
        %v1918 = vadd.f32 %v1676, %v1917
        %v1919 = vpop.f32.mrf.mxu0
        %v1920 = vadd.f32 %v1680, %v1919
        %v1921 = vpop.f32.mrf.mxu0
        %v1922 = vadd.f32 %v1676, %v1921
        %v1923 = vpop.f32.mrf.mxu0
        %v1924 = vadd.f32 %v1680, %v1923
        %1925 = vmatprep.mubr.bf16.mxu0 0
        %1926 = vmatmul.mubr.bf16.gmra.mxu0 %v1646
        %v1927 = vpop.f32.mrf.mxu0
        %v1928 = vadd.f32 %v1676, %v1927
        %v1929 = vpop.f32.mrf.mxu0
        %v1930 = vadd.f32 %v1680, %v1929
        %v1931 = vpop.f32.mrf.mxu0
        %v1932 = vadd.f32 %v1676, %v1931
        %v1933 = vpop.f32.mrf.mxu0
        %v1934 = vadd.f32 %v1680, %v1933
        %1935 = vmatprep.mubr.bf16.mxu0 0
        %1936 = vmatmul.mubr.bf16.gmra.mxu0 %v1647
        %v1937 = vpop.f32.mrf.mxu0
        %v1938 = vadd.f32 %v1676, %v1937
        %v1939 = vpop.f32.mrf.mxu0
        %v1940 = vadd.f32 %v1680, %v1939
        %v1941 = vpop.f32.mrf.mxu0
        %v1942 = vadd.f32 %v1676, %v1941
        %v1943 = vpop.f32.mrf.mxu0
        %v1944 = vadd.f32 %v1680, %v1943
        %1945 = vmatprep.mubr.bf16.mxu0 0
        %1946 = vmatmul.mubr.bf16.gmra.mxu0 %v1648
        %v1947 = vpop.f32.mrf.mxu0
        %v1948 = vadd.f32 %v1676, %v1947
        %v1949 = vpop.f32.mrf.mxu0
        %v1950 = vadd.f32 %v1680, %v1949
        %v1951 = vpop.f32.mrf.mxu0
        %v1952 = vadd.f32 %v1676, %v1951
        %v1953 = vpop.f32.mrf.mxu0
        %v1954 = vadd.f32 %v1680, %v1953
        %1955 = vmatprep.mubr.bf16.mxu0 0
        %1956 = vmatmul.mubr.bf16.gmra.mxu0 %v1649
        %v1957 = vpop.f32.mrf.mxu0
        %v1958 = vadd.f32 %v1676, %v1957
        %v1959 = vpop.f32.mrf.mxu0
        %v1960 = vadd.f32 %v1680, %v1959
        %v1961 = vpop.f32.mrf.mxu0
        %v1962 = vadd.f32 %v1676, %v1961
        %v1963 = vpop.f32.mrf.mxu0
        %v1964 = vadd.f32 %v1680, %v1963
        %1965 = vmatprep.mubr.bf16.mxu0 0
        %1966 = vmatmul.mubr.bf16.gmra.mxu0 %v1650
        %v1967 = vpop.f32.mrf.mxu0
        %v1968 = vadd.f32 %v1676, %v1967
        %v1969 = vpop.f32.mrf.mxu0
        %v1970 = vadd.f32 %v1680, %v1969
        %v1971 = vpop.f32.mrf.mxu0
        %v1972 = vadd.f32 %v1676, %v1971
        %v1973 = vpop.f32.mrf.mxu0
        %v1974 = vadd.f32 %v1680, %v1973
        %1975 = vmatprep.mubr.bf16.mxu0 0
        %1976 = vmatmul.mubr.bf16.gmra.mxu0 %v1651
        %v1977 = vpop.f32.mrf.mxu0
        %v1978 = vadd.f32 %v1676, %v1977
        %v1979 = vpop.f32.mrf.mxu0
        %v1980 = vadd.f32 %v1680, %v1979
        %v1981 = vpop.f32.mrf.mxu0
        %v1982 = vadd.f32 %v1676, %v1981
        %v1983 = vpop.f32.mrf.mxu0
        %v1984 = vadd.f32 %v1680, %v1983
        %1985 = vmatprep.mubr.bf16.mxu0 0
        %1986 = vmatmul.mubr.bf16.gmra.mxu0 %v1652
        %v1987 = vpop.f32.mrf.mxu0
        %v1988 = vadd.f32 %v1676, %v1987
        %v1989 = vpop.f32.mrf.mxu0
        %v1990 = vadd.f32 %v1680, %v1989
        %v1991 = vpop.f32.mrf.mxu0
        %v1992 = vadd.f32 %v1676, %v1991
        %v1993 = vpop.f32.mrf.mxu0
        %v1994 = vadd.f32 %v1680, %v1993
        %1995 = vmatprep.mubr.bf16.mxu0 0
        %1996 = vmatmul.mubr.bf16.gmra.mxu0 %v1653
        %v1997 = vpop.f32.mrf.mxu0
        %v1998 = vadd.f32 %v1676, %v1997
        %v1999 = vpop.f32.mrf.mxu0
        %v2000 = vadd.f32 %v1680, %v1999
        %v2001 = vpop.f32.mrf.mxu0
        %v2002 = vadd.f32 %v1676, %v2001
        %v2003 = vpop.f32.mrf.mxu0
        %v2004 = vadd.f32 %v1680, %v2003
        %2005 = vmatprep.mubr.bf16.mxu0 0
        %2006 = vmatmul.mubr.bf16.gmra.mxu0 %v1654
        %v2007 = vpop.f32.mrf.mxu0
        %v2008 = vadd.f32 %v1676, %v2007
        %v2009 = vpop.f32.mrf.mxu0
        %v2010 = vadd.f32 %v1680, %v2009
        %v2011 = vpop.f32.mrf.mxu0
        %v2012 = vpop.f32.mrf.mxu0
        %2013 = vdwg.mxu0
        %v2014 = vmax.f32 %v1798, 0.0
        %v2015 = vmax.f32 %v1800, 0.0
        %v2016 = vmax.f32 %v1802, 0.0
        %v2017 = vmax.f32 %v1804, 0.0
        %v2018 = vmax.f32 %v1808, 0.0
        %v2019 = vmax.f32 %v1810, 0.0
        %v2020 = vmax.f32 %v1812, 0.0
        %v2021 = vmax.f32 %v1814, 0.0
        %v2022 = vmax.f32 %v1818, 0.0
        %v2023 = vmax.f32 %v1820, 0.0
        %v2024 = vmax.f32 %v1822, 0.0
        %v2025 = vmax.f32 %v1824, 0.0
        %v2026 = vmax.f32 %v1828, 0.0
        %v2027 = vmax.f32 %v1830, 0.0
        %v2028 = vmax.f32 %v1832, 0.0
        %v2029 = vmax.f32 %v1834, 0.0
        %v2030 = vmax.f32 %v1838, 0.0
        %v2031 = vmax.f32 %v1840, 0.0
        %v2032 = vmax.f32 %v1842, 0.0
        %v2033 = vmax.f32 %v1844, 0.0
        %v2034 = vmax.f32 %v1848, 0.0
        %v2035 = vmax.f32 %v1850, 0.0
        %v2036 = vmax.f32 %v1852, 0.0
        %v2037 = vmax.f32 %v1854, 0.0
        %v2038 = vmax.f32 %v1858, 0.0
        %v2039 = vmax.f32 %v1860, 0.0
        %v2040 = vmax.f32 %v1862, 0.0
        %v2041 = vmax.f32 %v1864, 0.0
        %v2042 = vmax.f32 %v1868, 0.0
        %v2043 = vmax.f32 %v1870, 0.0
        %v2044 = vmax.f32 %v1872, 0.0
        %v2045 = vmax.f32 %v1874, 0.0
        %v2046 = vmax.f32 %v1878, 0.0
        %v2047 = vmax.f32 %v1880, 0.0
        %v2048 = vmax.f32 %v1882, 0.0
        %v2049 = vmax.f32 %v1884, 0.0
        %v2050 = vmax.f32 %v1888, 0.0
        %v2051 = vmax.f32 %v1890, 0.0
        %v2052 = vmax.f32 %v1892, 0.0
        %v2053 = vmax.f32 %v1894, 0.0
        %v2054 = vmax.f32 %v1898, 0.0
        %v2055 = vmax.f32 %v1900, 0.0
        %v2056 = vmax.f32 %v1902, 0.0
        %v2057 = vmax.f32 %v1904, 0.0
        %v2058 = vmax.f32 %v1908, 0.0
        %v2059 = vmax.f32 %v1910, 0.0
        %v2060 = vmax.f32 %v1912, 0.0
        %v2061 = vmax.f32 %v1914, 0.0
        %v2062 = vmax.f32 %v1918, 0.0
        %v2063 = vmax.f32 %v1920, 0.0
        %v2064 = vmax.f32 %v1922, 0.0
        %v2065 = vmax.f32 %v1924, 0.0
        %v2066 = vmax.f32 %v1928, 0.0
        %v2067 = vmax.f32 %v1930, 0.0
        %v2068 = vmax.f32 %v1932, 0.0
        %v2069 = vmax.f32 %v1934, 0.0
        %v2070 = vmax.f32 %v1938, 0.0
        %v2071 = vmax.f32 %v1940, 0.0
        %v2072 = vmax.f32 %v1942, 0.0
        %v2073 = vmax.f32 %v1944, 0.0
        %v2074 = vmax.f32 %v1948, 0.0
        %v2075 = vmax.f32 %v1950, 0.0
        %v2076 = vmax.f32 %v1952, 0.0
        %v2077 = vmax.f32 %v1954, 0.0
        %v2078 = vmax.f32 %v1958, 0.0
        %v2079 = vmax.f32 %v1960, 0.0
        %v2080 = vmax.f32 %v1962, 0.0
        %v2081 = vmax.f32 %v1964, 0.0
        %v2082 = vmax.f32 %v1968, 0.0
        %v2083 = vmax.f32 %v1970, 0.0
        %v2084 = vmax.f32 %v1972, 0.0
        %v2085 = vmax.f32 %v1974, 0.0
        %v2086 = vmax.f32 %v1978, 0.0
        %v2087 = vmax.f32 %v1980, 0.0
        %v2088 = vmax.f32 %v1982, 0.0
        %v2089 = vmax.f32 %v1984, 0.0
        %v2090 = vmax.f32 %v1988, 0.0
        %v2091 = vmax.f32 %v1990, 0.0
        %v2092 = vmax.f32 %v1992, 0.0
        %v2093 = vmax.f32 %v1994, 0.0
        %v2094 = vmax.f32 %v1998, 0.0
        %v2095 = vmax.f32 %v2000, 0.0
        %v2096 = vmax.f32 %v2002, 0.0
        %v2097 = vmax.f32 %v2004, 0.0
        %v2098 = vmax.f32 %v2008, 0.0
        %v2099 = vmax.f32 %v2010, 0.0
        %v2100 = vpack.c.bf16 %v2016, %v2014
        %v2101 = vpack.c.bf16 %v2017, %v2015
        %v2102 = vpack.c.bf16 %v2020, %v2018
        %v2103 = vpack.c.bf16 %v2021, %v2019
        %v2104 = vpack.c.bf16 %v2024, %v2022
        %v2105 = vpack.c.bf16 %v2025, %v2023
        %v2106 = vpack.c.bf16 %v2028, %v2026
        %v2107 = vpack.c.bf16 %v2029, %v2027
        %v2108 = vpack.c.bf16 %v2032, %v2030
        %v2109 = vpack.c.bf16 %v2033, %v2031
        %v2110 = vpack.c.bf16 %v2036, %v2034
        %v2111 = vpack.c.bf16 %v2037, %v2035
        %v2112 = vpack.c.bf16 %v2040, %v2038
        %v2113 = vpack.c.bf16 %v2041, %v2039
        %v2114 = vpack.c.bf16 %v2044, %v2042
        %v2115 = vpack.c.bf16 %v2045, %v2043
        %v2116 = vpack.c.bf16 %v2048, %v2046
        %v2117 = vpack.c.bf16 %v2049, %v2047
        %v2118 = vpack.c.bf16 %v2052, %v2050
        %v2119 = vpack.c.bf16 %v2053, %v2051
        %v2120 = vpack.c.bf16 %v2056, %v2054
        %v2121 = vpack.c.bf16 %v2057, %v2055
        %v2122 = vpack.c.bf16 %v2060, %v2058
        %v2123 = vpack.c.bf16 %v2061, %v2059
        %v2124 = vpack.c.bf16 %v2064, %v2062
        %v2125 = vpack.c.bf16 %v2065, %v2063
        %v2126 = vpack.c.bf16 %v2068, %v2066
        %v2127 = vpack.c.bf16 %v2069, %v2067
        %v2128 = vpack.c.bf16 %v2072, %v2070
        %v2129 = vpack.c.bf16 %v2073, %v2071
        %v2130 = vpack.c.bf16 %v2076, %v2074
        %v2131 = vpack.c.bf16 %v2077, %v2075
        %v2132 = vpack.c.bf16 %v2080, %v2078
        %v2133 = vpack.c.bf16 %v2081, %v2079
        %v2134 = vpack.c.bf16 %v2084, %v2082
        %v2135 = vpack.c.bf16 %v2085, %v2083
        %v2136 = vpack.c.bf16 %v2088, %v2086
        %v2137 = vpack.c.bf16 %v2089, %v2087
        %v2138 = vpack.c.bf16 %v2092, %v2090
        %v2139 = vpack.c.bf16 %v2093, %v2091
        %v2140 = vpack.c.bf16 %v2096, %v2094
        %v2141 = vpack.c.bf16 %v2097, %v2095
        %v2142 = vpack.c.bf16 %v2098, %v2098
        %v2143 = vpack.c.bf16 %v2099, %v2099
        %v2144 = vld [vmem:[%s8] sm:$0xf]
        %v2145 = vld [vmem:[%s8 + $0x4] sm:$0xf]
        %v2146 = vld [vmem:[%s8 + $0x8] sm:$0xf]
        %v2147 = vld [vmem:[%s8 + $0xc] sm:$0xf]
        %v2148 = vld [vmem:[%s8 + $0x10] sm:$0xf]
        %v2149 = vld [vmem:[%s8 + $0x14] sm:$0xf]
        %v2150 = vld [vmem:[%s8 + $0x18] sm:$0xf]
        %v2151 = vld [vmem:[%s8 + $0x1c] sm:$0xf]
        %v2152 = vld [vmem:[%s8 + $0x20] sm:$0xf]
        %v2153 = vld [vmem:[%s8 + $0x24] sm:$0xf]
        %v2154 = vld [vmem:[%s8 + $0x28] sm:$0xf]
        %v2155 = vld [vmem:[%s8 + $0x2c] sm:$0xf]
        %v2156 = vld [vmem:[%s8 + $0x30] sm:$0xf]
        %v2157 = vld [vmem:[%s8 + $0x34] sm:$0xf]
        %v2158 = vld [vmem:[%s8 + $0x38] sm:$0xf]
        %v2159 = vld [vmem:[%s8 + $0x3c] sm:$0xf]
        %v2160 = vld [vmem:[%s8 + $0x40] sm:$0xf]
        %v2161 = vld [vmem:[%s8 + $0x44] sm:$0xf]
        %v2162 = vld [vmem:[%s8 + $0x48] sm:$0xf]
        %v2163 = vld [vmem:[%s8 + $0x4c] sm:$0xf]
        %v2164 = vld [vmem:[%s8 + $0x50] sm:$0xf]
        %v2165 = vld [vmem:[%s8 + $0x54] sm:$0xf]
        %v2166 = vld [vmem:[%s8 + $0x58] sm:$0xf]
        %v2167 = vld [vmem:[%s8 + $0x5c] sm:$0xf]
        %v2168 = vld [vmem:[%s8 + $0x60] sm:$0xf]
        %v2169 = vld [vmem:[%s8 + $0x64] sm:$0xf]
        %v2170 = vld [vmem:[%s8 + $0x68] sm:$0xf]
        %v2171 = vld [vmem:[%s8 + $0x6c] sm:$0xf]
        %v2172 = vld [vmem:[%s8 + $0x70] sm:$0xf]
        %v2173 = vld [vmem:[%s8 + $0x74] sm:$0xf]
        %v2174 = vld [vmem:[%s8 + $0x78] sm:$0xf]
        %v2175 = vld [vmem:[%s8 + $0x7c] sm:$0xf]
        %v2176 = vld [vmem:[%s9] sm:$0x1]
        %v2178 = vlaneseq
        %v2179 = vshrl.u32 %v2178, 7
        %v2180 = vsub.s32 0, %v2179
        %v2181 = vrot.slane %v2176, %v2180
        %v2215 = vunpack.c.l.b16 %v2144
        %v2216 = vunpack.c.l.b16 %v2145
        %v2217 = vunpack.c.l.b16 %v2146
        %v2218 = vunpack.c.l.b16 %v2147
        %v2219 = vunpack.c.l.b16 %v2148
        %v2220 = vunpack.c.l.b16 %v2149
        %v2221 = vunpack.c.l.b16 %v2150
        %v2222 = vunpack.c.l.b16 %v2151
        %v2223 = vunpack.c.l.b16 %v2152
        %v2224 = vunpack.c.l.b16 %v2153
        %v2225 = vunpack.c.l.b16 %v2154
        %v2226 = vunpack.c.l.b16 %v2155
        %v2227 = vunpack.c.l.b16 %v2156
        %v2228 = vunpack.c.l.b16 %v2157
        %v2229 = vunpack.c.l.b16 %v2158
        %v2230 = vunpack.c.l.b16 %v2159
        %v2231 = vunpack.c.l.b16 %v2160
        %v2232 = vunpack.c.l.b16 %v2161
        %v2233 = vunpack.c.l.b16 %v2162
        %v2234 = vunpack.c.l.b16 %v2163
        %v2235 = vunpack.c.l.b16 %v2164
        %v2236 = vunpack.c.l.b16 %v2165
        %v2237 = vunpack.c.l.b16 %v2166
        %v2238 = vunpack.c.l.b16 %v2167
        %v2239 = vunpack.c.l.b16 %v2168
        %v2240 = vunpack.c.l.b16 %v2169
        %v2241 = vunpack.c.l.b16 %v2170
        %v2242 = vunpack.c.l.b16 %v2171
        %v2243 = vunpack.c.l.b16 %v2172
        %v2244 = vunpack.c.l.b16 %v2173
        %v2245 = vunpack.c.l.b16 %v2174
        %v2246 = vunpack.c.l.b16 %v2175
        %v2247 = vpack.c.b16 %v2216, %v2215
        %v2248 = vpack.c.b16 %v2218, %v2217
        %v2249 = vpack.c.b16 %v2220, %v2219
        %v2250 = vpack.c.b16 %v2222, %v2221
        %v2251 = vpack.c.b16 %v2224, %v2223
        %v2252 = vpack.c.b16 %v2226, %v2225
        %v2253 = vpack.c.b16 %v2228, %v2227
        %v2254 = vpack.c.b16 %v2230, %v2229
        %v2255 = vpack.c.b16 %v2232, %v2231
        %v2256 = vpack.c.b16 %v2234, %v2233
        %v2257 = vpack.c.b16 %v2236, %v2235
        %v2258 = vpack.c.b16 %v2238, %v2237
        %v2259 = vpack.c.b16 %v2240, %v2239
        %v2260 = vpack.c.b16 %v2242, %v2241
        %v2261 = vpack.c.b16 %v2244, %v2243
        %v2262 = vpack.c.b16 %v2246, %v2245
        %2279 = vmatprep.subr.bf16.mxu0 0
        %2280 = vmatpush1.bf16.msra.mxu0 %v2254
        %2281 = vmatprep.subr.bf16.mxu0 0
        %2282 = vmatpush1.bf16.msra.mxu0 %v2253
        %2283 = vmatprep.subr.bf16.mxu0 0
        %2284 = vmatpush1.bf16.msra.mxu0 %v2252
        %2285 = vmatprep.subr.bf16.mxu0 0
        %2286 = vmatpush1.bf16.msra.mxu0 %v2251
        %2287 = vmatprep.subr.bf16.mxu0 0
        %2288 = vmatpush1.bf16.msra.mxu0 %v2250
        %2289 = vmatprep.subr.bf16.mxu0 0
        %2290 = vmatpush1.bf16.msra.mxu0 %v2249
        %2291 = vmatprep.subr.bf16.mxu0 0
        %2292 = vmatpush1.bf16.msra.mxu0 %v2248
        %2293 = vmatprep.subr.bf16.mxu0 0
        %2294 = vmatpush1.bf16.msra.mxu0 %v2247
        %2295 = vmatprep.subr.bf16.mxu0 0
        %2296 = vmatpush2.bf16.msra.mxu0 %v2262
        %2297 = vmatprep.subr.bf16.mxu0 0
        %2298 = vmatpush2.bf16.msra.mxu0 %v2261
        %2299 = vmatprep.subr.bf16.mxu0 0
        %2300 = vmatpush2.bf16.msra.mxu0 %v2260
        %2301 = vmatprep.subr.bf16.mxu0 0
        %2302 = vmatpush2.bf16.msra.mxu0 %v2259
        %2303 = vmatprep.subr.bf16.mxu0 0
        %2304 = vmatpush2.bf16.msra.mxu0 %v2258
        %2305 = vmatprep.subr.bf16.mxu0 0
        %2306 = vmatpush2.bf16.msra.mxu0 %v2257
        %2307 = vmatprep.subr.bf16.mxu0 0
        %2308 = vmatpush2.bf16.msra.mxu0 %v2256
        %2309 = vmatprep.subr.bf16.mxu0 0
        %2310 = vmatpush2.bf16.msra.mxu0 %v2255
        %2311 = vmatprep.mubr.bf16.mxu0 %v2101
        %2312 = vmatmul.mubr.bf16.gmra.mxu0 %v2100
        %v2313 = vpop.f32.mrf.mxu0
        %v2314 = vadd.f32 %v2181, %v2313
        %v2315 = vpop.f32.mrf.mxu0
        %v2316 = vpop.f32.mrf.mxu0
        %v2317 = vadd.f32 %v2181, %v2316
        %v2318 = vpop.f32.mrf.mxu0
        %2319 = vmatprep.mubr.bf16.mxu0 %v2103
        %2320 = vmatmul.mubr.bf16.gmra.mxu0 %v2102
        %v2321 = vpop.f32.mrf.mxu0
        %v2322 = vadd.f32 %v2181, %v2321
        %v2323 = vpop.f32.mrf.mxu0
        %v2324 = vpop.f32.mrf.mxu0
        %v2325 = vadd.f32 %v2181, %v2324
        %v2326 = vpop.f32.mrf.mxu0
        %2327 = vmatprep.mubr.bf16.mxu0 %v2105
        %2328 = vmatmul.mubr.bf16.gmra.mxu0 %v2104
        %v2329 = vpop.f32.mrf.mxu0
        %v2330 = vadd.f32 %v2181, %v2329
        %v2331 = vpop.f32.mrf.mxu0
        %v2332 = vpop.f32.mrf.mxu0
        %v2333 = vadd.f32 %v2181, %v2332
        %v2334 = vpop.f32.mrf.mxu0
        %2335 = vmatprep.mubr.bf16.mxu0 %v2107
        %2336 = vmatmul.mubr.bf16.gmra.mxu0 %v2106
        %v2337 = vpop.f32.mrf.mxu0
        %v2338 = vadd.f32 %v2181, %v2337
        %v2339 = vpop.f32.mrf.mxu0
        %v2340 = vpop.f32.mrf.mxu0
        %v2341 = vadd.f32 %v2181, %v2340
        %v2342 = vpop.f32.mrf.mxu0
        %2343 = vmatprep.mubr.bf16.mxu0 %v2109
        %2344 = vmatmul.mubr.bf16.gmra.mxu0 %v2108
        %v2345 = vpop.f32.mrf.mxu0
        %v2346 = vadd.f32 %v2181, %v2345
        %v2347 = vpop.f32.mrf.mxu0
        %v2348 = vpop.f32.mrf.mxu0
        %v2349 = vadd.f32 %v2181, %v2348
        %v2350 = vpop.f32.mrf.mxu0
        %2351 = vmatprep.mubr.bf16.mxu0 %v2111
        %2352 = vmatmul.mubr.bf16.gmra.mxu0 %v2110
        %v2353 = vpop.f32.mrf.mxu0
        %v2354 = vadd.f32 %v2181, %v2353
        %v2355 = vpop.f32.mrf.mxu0
        %v2356 = vpop.f32.mrf.mxu0
        %v2357 = vadd.f32 %v2181, %v2356
        %v2358 = vpop.f32.mrf.mxu0
        %2359 = vmatprep.mubr.bf16.mxu0 %v2113
        %2360 = vmatmul.mubr.bf16.gmra.mxu0 %v2112
        %v2361 = vpop.f32.mrf.mxu0
        %v2362 = vadd.f32 %v2181, %v2361
        %v2363 = vpop.f32.mrf.mxu0
        %v2364 = vpop.f32.mrf.mxu0
        %v2365 = vadd.f32 %v2181, %v2364
        %v2366 = vpop.f32.mrf.mxu0
        %2367 = vmatprep.mubr.bf16.mxu0 %v2115
        %2368 = vmatmul.mubr.bf16.gmra.mxu0 %v2114
        %v2369 = vpop.f32.mrf.mxu0
        %v2370 = vadd.f32 %v2181, %v2369
        %v2371 = vpop.f32.mrf.mxu0
        %v2372 = vpop.f32.mrf.mxu0
        %v2373 = vadd.f32 %v2181, %v2372
        %v2374 = vpop.f32.mrf.mxu0
        %2375 = vmatprep.mubr.bf16.mxu0 %v2117
        %2376 = vmatmul.mubr.bf16.gmra.mxu0 %v2116
        %v2377 = vpop.f32.mrf.mxu0
        %v2378 = vadd.f32 %v2181, %v2377
        %v2379 = vpop.f32.mrf.mxu0
        %v2380 = vpop.f32.mrf.mxu0
        %v2381 = vadd.f32 %v2181, %v2380
        %v2382 = vpop.f32.mrf.mxu0
        %2383 = vmatprep.mubr.bf16.mxu0 %v2119
        %2384 = vmatmul.mubr.bf16.gmra.mxu0 %v2118
        %v2385 = vpop.f32.mrf.mxu0
        %v2386 = vadd.f32 %v2181, %v2385
        %v2387 = vpop.f32.mrf.mxu0
        %v2388 = vpop.f32.mrf.mxu0
        %v2389 = vadd.f32 %v2181, %v2388
        %v2390 = vpop.f32.mrf.mxu0
        %2391 = vmatprep.mubr.bf16.mxu0 %v2121
        %2392 = vmatmul.mubr.bf16.gmra.mxu0 %v2120
        %v2393 = vpop.f32.mrf.mxu0
        %v2394 = vadd.f32 %v2181, %v2393
        %v2395 = vpop.f32.mrf.mxu0
        %v2396 = vpop.f32.mrf.mxu0
        %v2397 = vadd.f32 %v2181, %v2396
        %v2398 = vpop.f32.mrf.mxu0
        %2399 = vmatprep.mubr.bf16.mxu0 %v2123
        %2400 = vmatmul.mubr.bf16.gmra.mxu0 %v2122
        %v2401 = vpop.f32.mrf.mxu0
        %v2402 = vadd.f32 %v2181, %v2401
        %v2403 = vpop.f32.mrf.mxu0
        %v2404 = vpop.f32.mrf.mxu0
        %v2405 = vadd.f32 %v2181, %v2404
        %v2406 = vpop.f32.mrf.mxu0
        %2407 = vmatprep.mubr.bf16.mxu0 %v2125
        %2408 = vmatmul.mubr.bf16.gmra.mxu0 %v2124
        %v2409 = vpop.f32.mrf.mxu0
        %v2410 = vadd.f32 %v2181, %v2409
        %v2411 = vpop.f32.mrf.mxu0
        %v2412 = vpop.f32.mrf.mxu0
        %v2413 = vadd.f32 %v2181, %v2412
        %v2414 = vpop.f32.mrf.mxu0
        %2415 = vmatprep.mubr.bf16.mxu0 %v2127
        %2416 = vmatmul.mubr.bf16.gmra.mxu0 %v2126
        %v2417 = vpop.f32.mrf.mxu0
        %v2418 = vadd.f32 %v2181, %v2417
        %v2419 = vpop.f32.mrf.mxu0
        %v2420 = vpop.f32.mrf.mxu0
        %v2421 = vadd.f32 %v2181, %v2420
        %v2422 = vpop.f32.mrf.mxu0
        %2423 = vmatprep.mubr.bf16.mxu0 %v2129
        %2424 = vmatmul.mubr.bf16.gmra.mxu0 %v2128
        %v2425 = vpop.f32.mrf.mxu0
        %v2426 = vadd.f32 %v2181, %v2425
        %v2427 = vpop.f32.mrf.mxu0
        %v2428 = vpop.f32.mrf.mxu0
        %v2429 = vadd.f32 %v2181, %v2428
        %v2430 = vpop.f32.mrf.mxu0
        %2431 = vmatprep.mubr.bf16.mxu0 %v2131
        %2432 = vmatmul.mubr.bf16.gmra.mxu0 %v2130
        %v2433 = vpop.f32.mrf.mxu0
        %v2434 = vadd.f32 %v2181, %v2433
        %v2435 = vpop.f32.mrf.mxu0
        %v2436 = vpop.f32.mrf.mxu0
        %v2437 = vadd.f32 %v2181, %v2436
        %v2438 = vpop.f32.mrf.mxu0
        %2439 = vmatprep.mubr.bf16.mxu0 %v2133
        %2440 = vmatmul.mubr.bf16.gmra.mxu0 %v2132
        %v2441 = vpop.f32.mrf.mxu0
        %v2442 = vadd.f32 %v2181, %v2441
        %v2443 = vpop.f32.mrf.mxu0
        %v2444 = vpop.f32.mrf.mxu0
        %v2445 = vadd.f32 %v2181, %v2444
        %v2446 = vpop.f32.mrf.mxu0
        %2447 = vmatprep.mubr.bf16.mxu0 %v2135
        %2448 = vmatmul.mubr.bf16.gmra.mxu0 %v2134
        %v2449 = vpop.f32.mrf.mxu0
        %v2450 = vadd.f32 %v2181, %v2449
        %v2451 = vpop.f32.mrf.mxu0
        %v2452 = vpop.f32.mrf.mxu0
        %v2453 = vadd.f32 %v2181, %v2452
        %v2454 = vpop.f32.mrf.mxu0
        %2455 = vmatprep.mubr.bf16.mxu0 %v2137
        %2456 = vmatmul.mubr.bf16.gmra.mxu0 %v2136
        %v2457 = vpop.f32.mrf.mxu0
        %v2458 = vadd.f32 %v2181, %v2457
        %v2459 = vpop.f32.mrf.mxu0
        %v2460 = vpop.f32.mrf.mxu0
        %v2461 = vadd.f32 %v2181, %v2460
        %v2462 = vpop.f32.mrf.mxu0
        %2463 = vmatprep.mubr.bf16.mxu0 %v2139
        %2464 = vmatmul.mubr.bf16.gmra.mxu0 %v2138
        %v2465 = vpop.f32.mrf.mxu0
        %v2466 = vadd.f32 %v2181, %v2465
        %v2467 = vpop.f32.mrf.mxu0
        %v2468 = vpop.f32.mrf.mxu0
        %v2469 = vadd.f32 %v2181, %v2468
        %v2470 = vpop.f32.mrf.mxu0
        %2471 = vmatprep.mubr.bf16.mxu0 %v2141
        %2472 = vmatmul.mubr.bf16.gmra.mxu0 %v2140
        %v2473 = vpop.f32.mrf.mxu0
        %v2474 = vadd.f32 %v2181, %v2473
        %v2475 = vpop.f32.mrf.mxu0
        %v2476 = vpop.f32.mrf.mxu0
        %v2477 = vadd.f32 %v2181, %v2476
        %v2478 = vpop.f32.mrf.mxu0
        %2479 = vmatprep.mubr.bf16.mxu0 %v2143
        %2480 = vmatmul.mubr.bf16.gmra.mxu0 %v2142
        %v2481 = vpop.f32.mrf.mxu0
        %v2482 = vadd.f32 %v2181, %v2481
        %v2483 = vpop.f32.mrf.mxu0
        %v2484 = vpop.f32.mrf.mxu0
        %v2485 = vpop.f32.mrf.mxu0
        %2486 = vdwg.mxu0
        %v2487 = vadd.f32 %v1590, %v2314
        %v2488 = vadd.f32 %v1591, %v2317
        %v2489 = vadd.f32 %v1592, %v2322
        %v2490 = vadd.f32 %v1593, %v2325
        %v2491 = vadd.f32 %v1594, %v2330
        %v2492 = vadd.f32 %v1595, %v2333
        %v2493 = vadd.f32 %v1596, %v2338
        %v2494 = vadd.f32 %v1597, %v2341
        %v2495 = vadd.f32 %v1598, %v2346
        %v2496 = vadd.f32 %v1599, %v2349
        %v2497 = vadd.f32 %v1600, %v2354
        %v2498 = vadd.f32 %v1601, %v2357
        %v2499 = vadd.f32 %v1602, %v2362
        %v2500 = vadd.f32 %v1603, %v2365
        %v2501 = vadd.f32 %v1604, %v2370
        %v2502 = vadd.f32 %v1605, %v2373
        %v2503 = vadd.f32 %v1606, %v2378
        %v2504 = vadd.f32 %v1607, %v2381
        %v2505 = vadd.f32 %v1608, %v2386
        %v2506 = vadd.f32 %v1609, %v2389
        %v2507 = vadd.f32 %v1610, %v2394
        %v2508 = vadd.f32 %v1611, %v2397
        %v2509 = vadd.f32 %v1612, %v2402
        %v2510 = vadd.f32 %v1613, %v2405
        %v2511 = vadd.f32 %v1614, %v2410
        %v2512 = vadd.f32 %v1615, %v2413
        %v2513 = vadd.f32 %v1616, %v2418
        %v2514 = vadd.f32 %v1617, %v2421
        %v2515 = vadd.f32 %v1618, %v2426
        %v2516 = vadd.f32 %v1619, %v2429
        %v2517 = vadd.f32 %v1620, %v2434
        %v2518 = vadd.f32 %v1621, %v2437
        %v2519 = vadd.f32 %v1622, %v2442
        %v2520 = vadd.f32 %v1623, %v2445
        %v2521 = vadd.f32 %v1624, %v2450
        %v2522 = vadd.f32 %v1625, %v2453
        %v2523 = vadd.f32 %v1626, %v2458
        %v2524 = vadd.f32 %v1627, %v2461
        %v2525 = vadd.f32 %v1628, %v2466
        %v2526 = vadd.f32 %v1629, %v2469
        %v2527 = vadd.f32 %v1630, %v2474
        %v2528 = vadd.f32 %v1631, %v2477
        %v2529 = vadd.f32 %v1632, %v2482
        %2530 = vadd.xlane.f32.xlu0 %v2487
        %v2531 = vpop.xlane.xlu0 %2530
        %2532 = vadd.xlane.f32.xlu0 %v2488
        %v2533 = vpop.xlane.xlu0 %2532
        %2534 = vadd.xlane.f32.xlu0 %v2489
        %v2535 = vpop.xlane.xlu0 %2534
        %2536 = vadd.xlane.f32.xlu0 %v2490
        %v2537 = vpop.xlane.xlu0 %2536
        %2538 = vadd.xlane.f32.xlu0 %v2491
        %v2539 = vpop.xlane.xlu0 %2538
        %2540 = vadd.xlane.f32.xlu0 %v2492
        %v2541 = vpop.xlane.xlu0 %2540
        %2542 = vadd.xlane.f32.xlu0 %v2493
        %v2543 = vpop.xlane.xlu0 %2542
        %2544 = vadd.xlane.f32.xlu0 %v2494
        %v2545 = vpop.xlane.xlu0 %2544
        %2546 = vadd.xlane.f32.xlu0 %v2495
        %v2547 = vpop.xlane.xlu0 %2546
        %2548 = vadd.xlane.f32.xlu0 %v2496
        %v2549 = vpop.xlane.xlu0 %2548
        %2550 = vadd.xlane.f32.xlu0 %v2497
        %v2551 = vpop.xlane.xlu0 %2550
        %2552 = vadd.xlane.f32.xlu0 %v2498
        %v2553 = vpop.xlane.xlu0 %2552
        %2554 = vadd.xlane.f32.xlu0 %v2499
        %v2555 = vpop.xlane.xlu0 %2554
        %2556 = vadd.xlane.f32.xlu0 %v2500
        %v2557 = vpop.xlane.xlu0 %2556
        %2558 = vadd.xlane.f32.xlu0 %v2501
        %v2559 = vpop.xlane.xlu0 %2558
        %2560 = vadd.xlane.f32.xlu0 %v2502
        %v2561 = vpop.xlane.xlu0 %2560
        %2562 = vadd.xlane.f32.xlu0 %v2503
        %v2563 = vpop.xlane.xlu0 %2562
        %2564 = vadd.xlane.f32.xlu0 %v2504
        %v2565 = vpop.xlane.xlu0 %2564
        %2566 = vadd.xlane.f32.xlu0 %v2505
        %v2567 = vpop.xlane.xlu0 %2566
        %2568 = vadd.xlane.f32.xlu0 %v2506
        %v2569 = vpop.xlane.xlu0 %2568
        %2570 = vadd.xlane.f32.xlu0 %v2507
        %v2571 = vpop.xlane.xlu0 %2570
        %2572 = vadd.xlane.f32.xlu0 %v2508
        %v2573 = vpop.xlane.xlu0 %2572
        %2574 = vadd.xlane.f32.xlu0 %v2509
        %v2575 = vpop.xlane.xlu0 %2574
        %2576 = vadd.xlane.f32.xlu0 %v2510
        %v2577 = vpop.xlane.xlu0 %2576
        %2578 = vadd.xlane.f32.xlu0 %v2511
        %v2579 = vpop.xlane.xlu0 %2578
        %2580 = vadd.xlane.f32.xlu0 %v2512
        %v2581 = vpop.xlane.xlu0 %2580
        %2582 = vadd.xlane.f32.xlu0 %v2513
        %v2583 = vpop.xlane.xlu0 %2582
        %2584 = vadd.xlane.f32.xlu0 %v2514
        %v2585 = vpop.xlane.xlu0 %2584
        %2586 = vadd.xlane.f32.xlu0 %v2515
        %v2587 = vpop.xlane.xlu0 %2586
        %2588 = vadd.xlane.f32.xlu0 %v2516
        %v2589 = vpop.xlane.xlu0 %2588
        %2590 = vadd.xlane.f32.xlu0 %v2517
        %v2591 = vpop.xlane.xlu0 %2590
        %2592 = vadd.xlane.f32.xlu0 %v2518
        %v2593 = vpop.xlane.xlu0 %2592
        %2594 = vadd.xlane.f32.xlu0 %v2519
        %v2595 = vpop.xlane.xlu0 %2594
        %2596 = vadd.xlane.f32.xlu0 %v2520
        %v2597 = vpop.xlane.xlu0 %2596
        %2598 = vadd.xlane.f32.xlu0 %v2521
        %v2599 = vpop.xlane.xlu0 %2598
        %2600 = vadd.xlane.f32.xlu0 %v2522
        %v2601 = vpop.xlane.xlu0 %2600
        %2602 = vadd.xlane.f32.xlu0 %v2523
        %v2603 = vpop.xlane.xlu0 %2602
        %2604 = vadd.xlane.f32.xlu0 %v2524
        %v2605 = vpop.xlane.xlu0 %2604
        %2606 = vadd.xlane.f32.xlu0 %v2525
        %v2607 = vpop.xlane.xlu0 %2606
        %2608 = vadd.xlane.f32.xlu0 %v2526
        %v2609 = vpop.xlane.xlu0 %2608
        %2610 = vadd.xlane.f32.xlu0 %v2527
        %v2611 = vpop.xlane.xlu0 %2610
        %2612 = vadd.xlane.f32.xlu0 %v2528
        %v2613 = vpop.xlane.xlu0 %2612
        %2614 = vadd.xlane.f32.xlu0 %v2529
        %v2615 = vpop.xlane.xlu0 %2614
        %v2616 = vmul.f32 %v2531, %v1145
        %v2617 = vmul.f32 %v2533, %v1145
        %v2618 = vmul.f32 %v2535, %v1145
        %v2619 = vmul.f32 %v2537, %v1145
        %v2620 = vmul.f32 %v2539, %v1145
        %v2621 = vmul.f32 %v2541, %v1145
        %v2622 = vmul.f32 %v2543, %v1145
        %v2623 = vmul.f32 %v2545, %v1145
        %v2624 = vmul.f32 %v2547, %v1145
        %v2625 = vmul.f32 %v2549, %v1145
        %v2626 = vmul.f32 %v2551, %v1145
        %v2627 = vmul.f32 %v2553, %v1145
        %v2628 = vmul.f32 %v2555, %v1145
        %v2629 = vmul.f32 %v2557, %v1145
        %v2630 = vmul.f32 %v2559, %v1145
        %v2631 = vmul.f32 %v2561, %v1145
        %v2632 = vmul.f32 %v2563, %v1145
        %v2633 = vmul.f32 %v2565, %v1145
        %v2634 = vmul.f32 %v2567, %v1145
        %v2635 = vmul.f32 %v2569, %v1145
        %v2636 = vmul.f32 %v2571, %v1145
        %v2637 = vmul.f32 %v2573, %v1145
        %v2638 = vmul.f32 %v2575, %v1145
        %v2639 = vmul.f32 %v2577, %v1145
        %v2640 = vmul.f32 %v2579, %v1145
        %v2641 = vmul.f32 %v2581, %v1145
        %v2642 = vmul.f32 %v2583, %v1145
        %v2643 = vmul.f32 %v2585, %v1145
        %v2644 = vmul.f32 %v2587, %v1145
        %v2645 = vmul.f32 %v2589, %v1145
        %v2646 = vmul.f32 %v2591, %v1145
        %v2647 = vmul.f32 %v2593, %v1145
        %v2648 = vmul.f32 %v2595, %v1145
        %v2649 = vmul.f32 %v2597, %v1145
        %v2650 = vmul.f32 %v2599, %v1145
        %v2651 = vmul.f32 %v2601, %v1145
        %v2652 = vmul.f32 %v2603, %v1145
        %v2653 = vmul.f32 %v2605, %v1145
        %v2654 = vmul.f32 %v2607, %v1145
        %v2655 = vmul.f32 %v2609, %v1145
        %v2656 = vmul.f32 %v2611, %v1145
        %v2657 = vmul.f32 %v2613, %v1145
        %v2658 = vmul.f32 %v2615, %v1145
        %v2659 = vsub.f32 %v2487, %v2616
        %v2660 = vsub.f32 %v2488, %v2617
        %v2661 = vsub.f32 %v2489, %v2618
        %v2662 = vsub.f32 %v2490, %v2619
        %v2663 = vsub.f32 %v2491, %v2620
        %v2664 = vsub.f32 %v2492, %v2621
        %v2665 = vsub.f32 %v2493, %v2622
        %v2666 = vsub.f32 %v2494, %v2623
        %v2667 = vsub.f32 %v2495, %v2624
        %v2668 = vsub.f32 %v2496, %v2625
        %v2669 = vsub.f32 %v2497, %v2626
        %v2670 = vsub.f32 %v2498, %v2627
        %v2671 = vsub.f32 %v2499, %v2628
        %v2672 = vsub.f32 %v2500, %v2629
        %v2673 = vsub.f32 %v2501, %v2630
        %v2674 = vsub.f32 %v2502, %v2631
        %v2675 = vsub.f32 %v2503, %v2632
        %v2676 = vsub.f32 %v2504, %v2633
        %v2677 = vsub.f32 %v2505, %v2634
        %v2678 = vsub.f32 %v2506, %v2635
        %v2679 = vsub.f32 %v2507, %v2636
        %v2680 = vsub.f32 %v2508, %v2637
        %v2681 = vsub.f32 %v2509, %v2638
        %v2682 = vsub.f32 %v2510, %v2639
        %v2683 = vsub.f32 %v2511, %v2640
        %v2684 = vsub.f32 %v2512, %v2641
        %v2685 = vsub.f32 %v2513, %v2642
        %v2686 = vsub.f32 %v2514, %v2643
        %v2687 = vsub.f32 %v2515, %v2644
        %v2688 = vsub.f32 %v2516, %v2645
        %v2689 = vsub.f32 %v2517, %v2646
        %v2690 = vsub.f32 %v2518, %v2647
        %v2691 = vsub.f32 %v2519, %v2648
        %v2692 = vsub.f32 %v2520, %v2649
        %v2693 = vsub.f32 %v2521, %v2650
        %v2694 = vsub.f32 %v2522, %v2651
        %v2695 = vsub.f32 %v2523, %v2652
        %v2696 = vsub.f32 %v2524, %v2653
        %v2697 = vsub.f32 %v2525, %v2654
        %v2698 = vsub.f32 %v2526, %v2655
        %v2699 = vsub.f32 %v2527, %v2656
        %v2700 = vsub.f32 %v2528, %v2657
        %v2701 = vsub.f32 %v2529, %v2658
        %v2702 = vmul.f32 %v2659, %v2659
        %v2703 = vmul.f32 %v2660, %v2660
        %v2704 = vmul.f32 %v2661, %v2661
        %v2705 = vmul.f32 %v2662, %v2662
        %v2706 = vmul.f32 %v2663, %v2663
        %v2707 = vmul.f32 %v2664, %v2664
        %v2708 = vmul.f32 %v2665, %v2665
        %v2709 = vmul.f32 %v2666, %v2666
        %v2710 = vmul.f32 %v2667, %v2667
        %v2711 = vmul.f32 %v2668, %v2668
        %v2712 = vmul.f32 %v2669, %v2669
        %v2713 = vmul.f32 %v2670, %v2670
        %v2714 = vmul.f32 %v2671, %v2671
        %v2715 = vmul.f32 %v2672, %v2672
        %v2716 = vmul.f32 %v2673, %v2673
        %v2717 = vmul.f32 %v2674, %v2674
        %v2718 = vmul.f32 %v2675, %v2675
        %v2719 = vmul.f32 %v2676, %v2676
        %v2720 = vmul.f32 %v2677, %v2677
        %v2721 = vmul.f32 %v2678, %v2678
        %v2722 = vmul.f32 %v2679, %v2679
        %v2723 = vmul.f32 %v2680, %v2680
        %v2724 = vmul.f32 %v2681, %v2681
        %v2725 = vmul.f32 %v2682, %v2682
        %v2726 = vmul.f32 %v2683, %v2683
        %v2727 = vmul.f32 %v2684, %v2684
        %v2728 = vmul.f32 %v2685, %v2685
        %v2729 = vmul.f32 %v2686, %v2686
        %v2730 = vmul.f32 %v2687, %v2687
        %v2731 = vmul.f32 %v2688, %v2688
        %v2732 = vmul.f32 %v2689, %v2689
        %v2733 = vmul.f32 %v2690, %v2690
        %v2734 = vmul.f32 %v2691, %v2691
        %v2735 = vmul.f32 %v2692, %v2692
        %v2736 = vmul.f32 %v2693, %v2693
        %v2737 = vmul.f32 %v2694, %v2694
        %v2738 = vmul.f32 %v2695, %v2695
        %v2739 = vmul.f32 %v2696, %v2696
        %v2740 = vmul.f32 %v2697, %v2697
        %v2741 = vmul.f32 %v2698, %v2698
        %v2742 = vmul.f32 %v2699, %v2699
        %v2743 = vmul.f32 %v2700, %v2700
        %v2744 = vmul.f32 %v2701, %v2701
        %2745 = vadd.xlane.f32.xlu0 %v2702
        %v2746 = vpop.xlane.xlu0 %2745
        %2747 = vadd.xlane.f32.xlu0 %v2703
        %v2748 = vpop.xlane.xlu0 %2747
        %2749 = vadd.xlane.f32.xlu0 %v2704
        %v2750 = vpop.xlane.xlu0 %2749
        %2751 = vadd.xlane.f32.xlu0 %v2705
        %v2752 = vpop.xlane.xlu0 %2751
        %2753 = vadd.xlane.f32.xlu0 %v2706
        %v2754 = vpop.xlane.xlu0 %2753
        %2755 = vadd.xlane.f32.xlu0 %v2707
        %v2756 = vpop.xlane.xlu0 %2755
        %2757 = vadd.xlane.f32.xlu0 %v2708
        %v2758 = vpop.xlane.xlu0 %2757
        %2759 = vadd.xlane.f32.xlu0 %v2709
        %v2760 = vpop.xlane.xlu0 %2759
        %2761 = vadd.xlane.f32.xlu0 %v2710
        %v2762 = vpop.xlane.xlu0 %2761
        %2763 = vadd.xlane.f32.xlu0 %v2711
        %v2764 = vpop.xlane.xlu0 %2763
        %2765 = vadd.xlane.f32.xlu0 %v2712
        %v2766 = vpop.xlane.xlu0 %2765
        %2767 = vadd.xlane.f32.xlu0 %v2713
        %v2768 = vpop.xlane.xlu0 %2767
        %2769 = vadd.xlane.f32.xlu0 %v2714
        %v2770 = vpop.xlane.xlu0 %2769
        %2771 = vadd.xlane.f32.xlu0 %v2715
        %v2772 = vpop.xlane.xlu0 %2771
        %2773 = vadd.xlane.f32.xlu0 %v2716
        %v2774 = vpop.xlane.xlu0 %2773
        %2775 = vadd.xlane.f32.xlu0 %v2717
        %v2776 = vpop.xlane.xlu0 %2775
        %2777 = vadd.xlane.f32.xlu0 %v2718
        %v2778 = vpop.xlane.xlu0 %2777
        %2779 = vadd.xlane.f32.xlu0 %v2719
        %v2780 = vpop.xlane.xlu0 %2779
        %2781 = vadd.xlane.f32.xlu0 %v2720
        %v2782 = vpop.xlane.xlu0 %2781
        %2783 = vadd.xlane.f32.xlu0 %v2721
        %v2784 = vpop.xlane.xlu0 %2783
        %2785 = vadd.xlane.f32.xlu0 %v2722
        %v2786 = vpop.xlane.xlu0 %2785
        %2787 = vadd.xlane.f32.xlu0 %v2723
        %v2788 = vpop.xlane.xlu0 %2787
        %2789 = vadd.xlane.f32.xlu0 %v2724
        %v2790 = vpop.xlane.xlu0 %2789
        %2791 = vadd.xlane.f32.xlu0 %v2725
        %v2792 = vpop.xlane.xlu0 %2791
        %2793 = vadd.xlane.f32.xlu0 %v2726
        %v2794 = vpop.xlane.xlu0 %2793
        %2795 = vadd.xlane.f32.xlu0 %v2727
        %v2796 = vpop.xlane.xlu0 %2795
        %2797 = vadd.xlane.f32.xlu0 %v2728
        %v2798 = vpop.xlane.xlu0 %2797
        %2799 = vadd.xlane.f32.xlu0 %v2729
        %v2800 = vpop.xlane.xlu0 %2799
        %2801 = vadd.xlane.f32.xlu0 %v2730
        %v2802 = vpop.xlane.xlu0 %2801
        %2803 = vadd.xlane.f32.xlu0 %v2731
        %v2804 = vpop.xlane.xlu0 %2803
        %2805 = vadd.xlane.f32.xlu0 %v2732
        %v2806 = vpop.xlane.xlu0 %2805
        %2807 = vadd.xlane.f32.xlu0 %v2733
        %v2808 = vpop.xlane.xlu0 %2807
        %2809 = vadd.xlane.f32.xlu0 %v2734
        %v2810 = vpop.xlane.xlu0 %2809
        %2811 = vadd.xlane.f32.xlu0 %v2735
        %v2812 = vpop.xlane.xlu0 %2811
        %2813 = vadd.xlane.f32.xlu0 %v2736
        %v2814 = vpop.xlane.xlu0 %2813
        %2815 = vadd.xlane.f32.xlu0 %v2737
        %v2816 = vpop.xlane.xlu0 %2815
        %2817 = vadd.xlane.f32.xlu0 %v2738
        %v2818 = vpop.xlane.xlu0 %2817
        %2819 = vadd.xlane.f32.xlu0 %v2739
        %v2820 = vpop.xlane.xlu0 %2819
        %2821 = vadd.xlane.f32.xlu0 %v2740
        %v2822 = vpop.xlane.xlu0 %2821
        %2823 = vadd.xlane.f32.xlu0 %v2741
        %v2824 = vpop.xlane.xlu0 %2823
        %2825 = vadd.xlane.f32.xlu0 %v2742
        %v2826 = vpop.xlane.xlu0 %2825
        %2827 = vadd.xlane.f32.xlu0 %v2743
        %v2828 = vpop.xlane.xlu0 %2827
        %2829 = vadd.xlane.f32.xlu0 %v2744
        %v2830 = vpop.xlane.xlu0 %2829
        %v2831 = vmul.f32 %v2746, %v1145
        %v2832 = vmul.f32 %v2748, %v1145
        %v2833 = vmul.f32 %v2750, %v1145
        %v2834 = vmul.f32 %v2752, %v1145
        %v2835 = vmul.f32 %v2754, %v1145
        %v2836 = vmul.f32 %v2756, %v1145
        %v2837 = vmul.f32 %v2758, %v1145
        %v2838 = vmul.f32 %v2760, %v1145
        %v2839 = vmul.f32 %v2762, %v1145
        %v2840 = vmul.f32 %v2764, %v1145
        %v2841 = vmul.f32 %v2766, %v1145
        %v2842 = vmul.f32 %v2768, %v1145
        %v2843 = vmul.f32 %v2770, %v1145
        %v2844 = vmul.f32 %v2772, %v1145
        %v2845 = vmul.f32 %v2774, %v1145
        %v2846 = vmul.f32 %v2776, %v1145
        %v2847 = vmul.f32 %v2778, %v1145
        %v2848 = vmul.f32 %v2780, %v1145
        %v2849 = vmul.f32 %v2782, %v1145
        %v2850 = vmul.f32 %v2784, %v1145
        %v2851 = vmul.f32 %v2786, %v1145
        %v2852 = vmul.f32 %v2788, %v1145
        %v2853 = vmul.f32 %v2790, %v1145
        %v2854 = vmul.f32 %v2792, %v1145
        %v2855 = vmul.f32 %v2794, %v1145
        %v2856 = vmul.f32 %v2796, %v1145
        %v2857 = vmul.f32 %v2798, %v1145
        %v2858 = vmul.f32 %v2800, %v1145
        %v2859 = vmul.f32 %v2802, %v1145
        %v2860 = vmul.f32 %v2804, %v1145
        %v2861 = vmul.f32 %v2806, %v1145
        %v2862 = vmul.f32 %v2808, %v1145
        %v2863 = vmul.f32 %v2810, %v1145
        %v2864 = vmul.f32 %v2812, %v1145
        %v2865 = vmul.f32 %v2814, %v1145
        %v2866 = vmul.f32 %v2816, %v1145
        %v2867 = vmul.f32 %v2818, %v1145
        %v2868 = vmul.f32 %v2820, %v1145
        %v2869 = vmul.f32 %v2822, %v1145
        %v2870 = vmul.f32 %v2824, %v1145
        %v2871 = vmul.f32 %v2826, %v1145
        %v2872 = vmul.f32 %v2828, %v1145
        %v2873 = vmul.f32 %v2830, %v1145
        %v2874 = vadd.f32 %v2831, 1e-05
        %v2875 = vadd.f32 %v2832, 1e-05
        %v2876 = vadd.f32 %v2833, 1e-05
        %v2877 = vadd.f32 %v2834, 1e-05
        %v2878 = vadd.f32 %v2835, 1e-05
        %v2879 = vadd.f32 %v2836, 1e-05
        %v2880 = vadd.f32 %v2837, 1e-05
        %v2881 = vadd.f32 %v2838, 1e-05
        %v2882 = vadd.f32 %v2839, 1e-05
        %v2883 = vadd.f32 %v2840, 1e-05
        %v2884 = vadd.f32 %v2841, 1e-05
        %v2885 = vadd.f32 %v2842, 1e-05
        %v2886 = vadd.f32 %v2843, 1e-05
        %v2887 = vadd.f32 %v2844, 1e-05
        %v2888 = vadd.f32 %v2845, 1e-05
        %v2889 = vadd.f32 %v2846, 1e-05
        %v2890 = vadd.f32 %v2847, 1e-05
        %v2891 = vadd.f32 %v2848, 1e-05
        %v2892 = vadd.f32 %v2849, 1e-05
        %v2893 = vadd.f32 %v2850, 1e-05
        %v2894 = vadd.f32 %v2851, 1e-05
        %v2895 = vadd.f32 %v2852, 1e-05
        %v2896 = vadd.f32 %v2853, 1e-05
        %v2897 = vadd.f32 %v2854, 1e-05
        %v2898 = vadd.f32 %v2855, 1e-05
        %v2899 = vadd.f32 %v2856, 1e-05
        %v2900 = vadd.f32 %v2857, 1e-05
        %v2901 = vadd.f32 %v2858, 1e-05
        %v2902 = vadd.f32 %v2859, 1e-05
        %v2903 = vadd.f32 %v2860, 1e-05
        %v2904 = vadd.f32 %v2861, 1e-05
        %v2905 = vadd.f32 %v2862, 1e-05
        %v2906 = vadd.f32 %v2863, 1e-05
        %v2907 = vadd.f32 %v2864, 1e-05
        %v2908 = vadd.f32 %v2865, 1e-05
        %v2909 = vadd.f32 %v2866, 1e-05
        %v2910 = vadd.f32 %v2867, 1e-05
        %v2911 = vadd.f32 %v2868, 1e-05
        %v2912 = vadd.f32 %v2869, 1e-05
        %v2913 = vadd.f32 %v2870, 1e-05
        %v2914 = vadd.f32 %v2871, 1e-05
        %v2915 = vadd.f32 %v2872, 1e-05
        %v2916 = vadd.f32 %v2873, 1e-05
        %v2917 = vrsqrt.pop %v2874
        %v2918 = vrsqrt.pop %v2875
        %v2919 = vrsqrt.pop %v2876
        %v2920 = vrsqrt.pop %v2877
        %v2921 = vrsqrt.pop %v2878
        %v2922 = vrsqrt.pop %v2879
        %v2923 = vrsqrt.pop %v2880
        %v2924 = vrsqrt.pop %v2881
        %v2925 = vrsqrt.pop %v2882
        %v2926 = vrsqrt.pop %v2883
        %v2927 = vrsqrt.pop %v2884
        %v2928 = vrsqrt.pop %v2885
        %v2929 = vrsqrt.pop %v2886
        %v2930 = vrsqrt.pop %v2887
        %v2931 = vrsqrt.pop %v2888
        %v2932 = vrsqrt.pop %v2889
        %v2933 = vrsqrt.pop %v2890
        %v2934 = vrsqrt.pop %v2891
        %v2935 = vrsqrt.pop %v2892
        %v2936 = vrsqrt.pop %v2893
        %v2937 = vrsqrt.pop %v2894
        %v2938 = vrsqrt.pop %v2895
        %v2939 = vrsqrt.pop %v2896
        %v2940 = vrsqrt.pop %v2897
        %v2941 = vrsqrt.pop %v2898
        %v2942 = vrsqrt.pop %v2899
        %v2943 = vrsqrt.pop %v2900
        %v2944 = vrsqrt.pop %v2901
        %v2945 = vrsqrt.pop %v2902
        %v2946 = vrsqrt.pop %v2903
        %v2947 = vrsqrt.pop %v2904
        %v2948 = vrsqrt.pop %v2905
        %v2949 = vrsqrt.pop %v2906
        %v2950 = vrsqrt.pop %v2907
        %v2951 = vrsqrt.pop %v2908
        %v2952 = vrsqrt.pop %v2909
        %v2953 = vrsqrt.pop %v2910
        %v2954 = vrsqrt.pop %v2911
        %v2955 = vrsqrt.pop %v2912
        %v2956 = vrsqrt.pop %v2913
        %v2957 = vrsqrt.pop %v2914
        %v2958 = vrsqrt.pop %v2915
        %v2959 = vrsqrt.pop %v2916
        %v2960 = vmul.f32 %v2659, %v2917
        %v2961 = vmul.f32 %v2660, %v2918
        %v2962 = vmul.f32 %v2661, %v2919
        %v2963 = vmul.f32 %v2662, %v2920
        %v2964 = vmul.f32 %v2663, %v2921
        %v2965 = vmul.f32 %v2664, %v2922
        %v2966 = vmul.f32 %v2665, %v2923
        %v2967 = vmul.f32 %v2666, %v2924
        %v2968 = vmul.f32 %v2667, %v2925
        %v2969 = vmul.f32 %v2668, %v2926
        %v2970 = vmul.f32 %v2669, %v2927
        %v2971 = vmul.f32 %v2670, %v2928
        %v2972 = vmul.f32 %v2671, %v2929
        %v2973 = vmul.f32 %v2672, %v2930
        %v2974 = vmul.f32 %v2673, %v2931
        %v2975 = vmul.f32 %v2674, %v2932
        %v2976 = vmul.f32 %v2675, %v2933
        %v2977 = vmul.f32 %v2676, %v2934
        %v2978 = vmul.f32 %v2677, %v2935
        %v2979 = vmul.f32 %v2678, %v2936
        %v2980 = vmul.f32 %v2679, %v2937
        %v2981 = vmul.f32 %v2680, %v2938
        %v2982 = vmul.f32 %v2681, %v2939
        %v2983 = vmul.f32 %v2682, %v2940
        %v2984 = vmul.f32 %v2683, %v2941
        %v2985 = vmul.f32 %v2684, %v2942
        %v2986 = vmul.f32 %v2685, %v2943
        %v2987 = vmul.f32 %v2686, %v2944
        %v2988 = vmul.f32 %v2687, %v2945
        %v2989 = vmul.f32 %v2688, %v2946
        %v2990 = vmul.f32 %v2689, %v2947
        %v2991 = vmul.f32 %v2690, %v2948
        %v2992 = vmul.f32 %v2691, %v2949
        %v2993 = vmul.f32 %v2692, %v2950
        %v2994 = vmul.f32 %v2693, %v2951
        %v2995 = vmul.f32 %v2694, %v2952
        %v2996 = vmul.f32 %v2695, %v2953
        %v2997 = vmul.f32 %v2696, %v2954
        %v2998 = vmul.f32 %v2697, %v2955
        %v2999 = vmul.f32 %v2698, %v2956
        %v3000 = vmul.f32 %v2699, %v2957
        %v3001 = vmul.f32 %v2700, %v2958
        %v3002 = vmul.f32 %v2701, %v2959
        %v3003 = vld [vmem:[%s10] sm:$0x1]
        %v3005 = vlaneseq
        %v3006 = vshrl.u32 %v3005, 7
        %v3007 = vsub.s32 0, %v3006
        %v3008 = vrot.slane %v3003, %v3007
        %v3010 = vmul.f32 %v2960, %v3008
        %v3011 = vmul.f32 %v2961, %v3008
        %v3012 = vmul.f32 %v2962, %v3008
        %v3013 = vmul.f32 %v2963, %v3008
        %v3014 = vmul.f32 %v2964, %v3008
        %v3015 = vmul.f32 %v2965, %v3008
        %v3016 = vmul.f32 %v2966, %v3008
        %v3017 = vmul.f32 %v2967, %v3008
        %v3018 = vmul.f32 %v2968, %v3008
        %v3019 = vmul.f32 %v2969, %v3008
        %v3020 = vmul.f32 %v2970, %v3008
        %v3021 = vmul.f32 %v2971, %v3008
        %v3022 = vmul.f32 %v2972, %v3008
        %v3023 = vmul.f32 %v2973, %v3008
        %v3024 = vmul.f32 %v2974, %v3008
        %v3025 = vmul.f32 %v2975, %v3008
        %v3026 = vmul.f32 %v2976, %v3008
        %v3027 = vmul.f32 %v2977, %v3008
        %v3028 = vmul.f32 %v2978, %v3008
        %v3029 = vmul.f32 %v2979, %v3008
        %v3030 = vmul.f32 %v2980, %v3008
        %v3031 = vmul.f32 %v2981, %v3008
        %v3032 = vmul.f32 %v2982, %v3008
        %v3033 = vmul.f32 %v2983, %v3008
        %v3034 = vmul.f32 %v2984, %v3008
        %v3035 = vmul.f32 %v2985, %v3008
        %v3036 = vmul.f32 %v2986, %v3008
        %v3037 = vmul.f32 %v2987, %v3008
        %v3038 = vmul.f32 %v2988, %v3008
        %v3039 = vmul.f32 %v2989, %v3008
        %v3040 = vmul.f32 %v2990, %v3008
        %v3041 = vmul.f32 %v2991, %v3008
        %v3042 = vmul.f32 %v2992, %v3008
        %v3043 = vmul.f32 %v2993, %v3008
        %v3044 = vmul.f32 %v2994, %v3008
        %v3045 = vmul.f32 %v2995, %v3008
        %v3046 = vmul.f32 %v2996, %v3008
        %v3047 = vmul.f32 %v2997, %v3008
        %v3048 = vmul.f32 %v2998, %v3008
        %v3049 = vmul.f32 %v2999, %v3008
        %v3050 = vmul.f32 %v3000, %v3008
        %v3051 = vmul.f32 %v3001, %v3008
        %v3052 = vmul.f32 %v3002, %v3008
        %v3053 = vld [vmem:[%s11] sm:$0x1]
        %v3055 = vlaneseq
        %v3056 = vshrl.u32 %v3055, 7
        %v3057 = vsub.s32 0, %v3056
        %v3058 = vrot.slane %v3053, %v3057
        %v3060 = vadd.f32 %v3010, %v3058
        %v3061 = vadd.f32 %v3011, %v3058
        %v3062 = vadd.f32 %v3012, %v3058
        %v3063 = vadd.f32 %v3013, %v3058
        %v3064 = vadd.f32 %v3014, %v3058
        %v3065 = vadd.f32 %v3015, %v3058
        %v3066 = vadd.f32 %v3016, %v3058
        %v3067 = vadd.f32 %v3017, %v3058
        %v3068 = vadd.f32 %v3018, %v3058
        %v3069 = vadd.f32 %v3019, %v3058
        %v3070 = vadd.f32 %v3020, %v3058
        %v3071 = vadd.f32 %v3021, %v3058
        %v3072 = vadd.f32 %v3022, %v3058
        %v3073 = vadd.f32 %v3023, %v3058
        %v3074 = vadd.f32 %v3024, %v3058
        %v3075 = vadd.f32 %v3025, %v3058
        %v3076 = vadd.f32 %v3026, %v3058
        %v3077 = vadd.f32 %v3027, %v3058
        %v3078 = vadd.f32 %v3028, %v3058
        %v3079 = vadd.f32 %v3029, %v3058
        %v3080 = vadd.f32 %v3030, %v3058
        %v3081 = vadd.f32 %v3031, %v3058
        %v3082 = vadd.f32 %v3032, %v3058
        %v3083 = vadd.f32 %v3033, %v3058
        %v3084 = vadd.f32 %v3034, %v3058
        %v3085 = vadd.f32 %v3035, %v3058
        %v3086 = vadd.f32 %v3036, %v3058
        %v3087 = vadd.f32 %v3037, %v3058
        %v3088 = vadd.f32 %v3038, %v3058
        %v3089 = vadd.f32 %v3039, %v3058
        %v3090 = vadd.f32 %v3040, %v3058
        %v3091 = vadd.f32 %v3041, %v3058
        %v3092 = vadd.f32 %v3042, %v3058
        %v3093 = vadd.f32 %v3043, %v3058
        %v3094 = vadd.f32 %v3044, %v3058
        %v3095 = vadd.f32 %v3045, %v3058
        %v3096 = vadd.f32 %v3046, %v3058
        %v3097 = vadd.f32 %v3047, %v3058
        %v3098 = vadd.f32 %v3048, %v3058
        %v3099 = vadd.f32 %v3049, %v3058
        %v3100 = vadd.f32 %v3050, %v3058
        %v3101 = vadd.f32 %v3051, %v3058
        %v3102 = vadd.f32 %v3052, %v3058
        %3103 = vst [vmem:[%s443] sm:$0xff] %v3060
        %3104 = vst [vmem:[%s443 + $0x8] sm:$0xff] %v3061
        %3105 = vst [vmem:[%s443 + $0x10] sm:$0xff] %v3062
        %3106 = vst [vmem:[%s443 + $0x18] sm:$0xff] %v3063
        %3107 = vst [vmem:[%s443 + $0x20] sm:$0xff] %v3064
        %3108 = vst [vmem:[%s443 + $0x28] sm:$0xff] %v3065
        %3109 = vst [vmem:[%s443 + $0x30] sm:$0xff] %v3066
        %3110 = vst [vmem:[%s443 + $0x38] sm:$0xff] %v3067
        %3111 = vst [vmem:[%s443 + $0x40] sm:$0xff] %v3068
        %3112 = vst [vmem:[%s443 + $0x48] sm:$0xff] %v3069
        %3113 = vst [vmem:[%s443 + $0x50] sm:$0xff] %v3070
        %3114 = vst [vmem:[%s443 + $0x58] sm:$0xff] %v3071
        %3115 = vst [vmem:[%s443 + $0x60] sm:$0xff] %v3072
        %3116 = vst [vmem:[%s443 + $0x68] sm:$0xff] %v3073
        %3117 = vst [vmem:[%s443 + $0x70] sm:$0xff] %v3074
        %3118 = vst [vmem:[%s443 + $0x78] sm:$0xff] %v3075
        %3119 = vst [vmem:[%s443 + $0x80] sm:$0xff] %v3076
        %3120 = vst [vmem:[%s443 + $0x88] sm:$0xff] %v3077
        %3121 = vst [vmem:[%s443 + $0x90] sm:$0xff] %v3078
        %3122 = vst [vmem:[%s443 + $0x98] sm:$0xff] %v3079
        %3123 = vst [vmem:[%s443 + $0xa0] sm:$0xff] %v3080
        %3124 = vst [vmem:[%s443 + $0xa8] sm:$0xff] %v3081
        %3125 = vst [vmem:[%s443 + $0xb0] sm:$0xff] %v3082
        %3126 = vst [vmem:[%s443 + $0xb8] sm:$0xff] %v3083
        %3127 = vst [vmem:[%s443 + $0xc0] sm:$0xff] %v3084
        %3128 = vst [vmem:[%s443 + $0xc8] sm:$0xff] %v3085
        %3129 = vst [vmem:[%s443 + $0xd0] sm:$0xff] %v3086
        %3130 = vst [vmem:[%s443 + $0xd8] sm:$0xff] %v3087
        %3131 = vst [vmem:[%s443 + $0xe0] sm:$0xff] %v3088
        %3132 = vst [vmem:[%s443 + $0xe8] sm:$0xff] %v3089
        %3133 = vst [vmem:[%s443 + $0xf0] sm:$0xff] %v3090
        %3134 = vst [vmem:[%s443 + $0xf8] sm:$0xff] %v3091
        %3135 = vst [vmem:[%s443 + $0x100] sm:$0xff] %v3092
        %3136 = vst [vmem:[%s443 + $0x108] sm:$0xff] %v3093
        %3137 = vst [vmem:[%s443 + $0x110] sm:$0xff] %v3094
        %3138 = vst [vmem:[%s443 + $0x118] sm:$0xff] %v3095
        %3139 = vst [vmem:[%s443 + $0x120] sm:$0xff] %v3096
        %3140 = vst [vmem:[%s443 + $0x128] sm:$0xff] %v3097
        %3141 = vst [vmem:[%s443 + $0x130] sm:$0xff] %v3098
        %3142 = vst [vmem:[%s443 + $0x138] sm:$0xff] %v3099
        %3143 = vst [vmem:[%s443 + $0x140] sm:$0xff] %v3100
        %3144 = vst [vmem:[%s443 + $0x148] sm:$0xff] %v3101
        %3145 = vst [vmem:[%s443 + $0x150] sm:$0xff] %v3102
        %s3146 = sand.u32 %s293, 1
        %s3147 = sand.u32 %s293, 1
        %s3148 = smul.addr %s3147, 344
        %s3149 = scalar_lea.vmem [#allocation2], %s3148
        // Predicated region
        $region69: #{encoder_layer_forward.3} parent=67 // pred_check
          %p3150 = pneg %p303
        $region70: #{encoder_layer_forward.3} parent=67 // pred_check_branch
          %3152 = sbr.rel (%p3150) target = $region72
        $region71: #{encoder_layer_forward.3} parent=67 // pred_region
          %s3153 = smul.u32 43, %s23
          %s3154 = ssub.s32 85, %s3153
          %p3155 = scmp.lt.s32.totalorder %s3154, 43
          %s3156 = scalar_select %p3155, %s3154, 43
          %s3157 = smul.u32 128, %s3156
          %p3158 = scmp.ne.s32.totalorder 0, %s3157
          %s3159 = smul.addr %s3153, 8
          %s3160 = scalar_lea.vmem %s12, %s3159
          // Predicated region
          $region73: #{encoder_layer_forward.3} parent=71 // pred_check
            %p3161 = pneg %p3158
          $region74: #{encoder_layer_forward.3} parent=71 // pred_check_branch
            %3163 = sbr.rel (%p3161) target = $region76
          $region75: #{encoder_layer_forward.3} parent=71 // pred_region
            // Predicated region
            $region77: #{encoder_layer_forward.3} parent=75 // pred_check
              _
            $region78: #{encoder_layer_forward.3} parent=75 // pred_check_branch
              %3165 = sbr.rel (0) target = $region80
            $region79: #{encoder_layer_forward.3} parent=75 // pred_region
              // Predicated region
              $region99: #{encoder_layer_forward.3} parent=79 // pred_check
                _
              $region100: #{encoder_layer_forward.3} parent=79 // pred_check_branch
                %3300 = sbr.rel (0) target = $region102
              $region101: #{encoder_layer_forward.3} parent=79 // pred_region
                %s3301 = sdiv.u32.pop %s3156, 43
                %s3302 = srem.u32.pop %s3156, 43
                // While loop
                $region103: #{encoder_layer_forward.3} parent=101 // loop_pre_header
                  _
                $region104: #{encoder_layer_forward.3} parent=101 // loop_header
                  %s3304 = sphi 0, %s3306
                  %p3305 = scmp.ge.s32.totalorder %s3304, %s3301
                  %s3309 = sphi 0, %s3400
                  %s3310 = sphi %s3149, %s3403
                  %s3311 = sphi %s3160, %s3404
                $region105: #{encoder_layer_forward.3} parent=101 // loop_header_branch
                  %3308 = sbr.rel (%p3305) target = $region109
                $region106: #{encoder_layer_forward.3} parent=101 // loop_body
                  %v3312 = vld [vmem:[%s3310] sm:$0xff]
                  %3313 = vst [vmem:[%s3311] sm:$0xff] %v3312
                  %v3314 = vld [vmem:[%s3310 + $0x8] sm:$0xff]
                  %3315 = vst [vmem:[%s3311 + $0x8] sm:$0xff] %v3314
                  %v3316 = vld [vmem:[%s3310 + $0x10] sm:$0xff]
                  %3317 = vst [vmem:[%s3311 + $0x10] sm:$0xff] %v3316
                  %v3318 = vld [vmem:[%s3310 + $0x18] sm:$0xff]
                  %3319 = vst [vmem:[%s3311 + $0x18] sm:$0xff] %v3318
                  %v3320 = vld [vmem:[%s3310 + $0x20] sm:$0xff]
                  %3321 = vst [vmem:[%s3311 + $0x20] sm:$0xff] %v3320
                  %v3322 = vld [vmem:[%s3310 + $0x28] sm:$0xff]
                  %3323 = vst [vmem:[%s3311 + $0x28] sm:$0xff] %v3322
                  %v3324 = vld [vmem:[%s3310 + $0x30] sm:$0xff]
                  %3325 = vst [vmem:[%s3311 + $0x30] sm:$0xff] %v3324
                  %v3326 = vld [vmem:[%s3310 + $0x38] sm:$0xff]
                  %3327 = vst [vmem:[%s3311 + $0x38] sm:$0xff] %v3326
                  %v3328 = vld [vmem:[%s3310 + $0x40] sm:$0xff]
                  %3329 = vst [vmem:[%s3311 + $0x40] sm:$0xff] %v3328
                  %v3330 = vld [vmem:[%s3310 + $0x48] sm:$0xff]
                  %3331 = vst [vmem:[%s3311 + $0x48] sm:$0xff] %v3330
                  %v3332 = vld [vmem:[%s3310 + $0x50] sm:$0xff]
                  %3333 = vst [vmem:[%s3311 + $0x50] sm:$0xff] %v3332
                  %v3334 = vld [vmem:[%s3310 + $0x58] sm:$0xff]
                  %3335 = vst [vmem:[%s3311 + $0x58] sm:$0xff] %v3334
                  %v3336 = vld [vmem:[%s3310 + $0x60] sm:$0xff]
                  %3337 = vst [vmem:[%s3311 + $0x60] sm:$0xff] %v3336
                  %v3338 = vld [vmem:[%s3310 + $0x68] sm:$0xff]
                  %3339 = vst [vmem:[%s3311 + $0x68] sm:$0xff] %v3338
                  %v3340 = vld [vmem:[%s3310 + $0x70] sm:$0xff]
                  %3341 = vst [vmem:[%s3311 + $0x70] sm:$0xff] %v3340
                  %v3342 = vld [vmem:[%s3310 + $0x78] sm:$0xff]
                  %3343 = vst [vmem:[%s3311 + $0x78] sm:$0xff] %v3342
                  %v3344 = vld [vmem:[%s3310 + $0x80] sm:$0xff]
                  %3345 = vst [vmem:[%s3311 + $0x80] sm:$0xff] %v3344
                  %v3346 = vld [vmem:[%s3310 + $0x88] sm:$0xff]
                  %3347 = vst [vmem:[%s3311 + $0x88] sm:$0xff] %v3346
                  %v3348 = vld [vmem:[%s3310 + $0x90] sm:$0xff]
                  %3349 = vst [vmem:[%s3311 + $0x90] sm:$0xff] %v3348
                  %v3350 = vld [vmem:[%s3310 + $0x98] sm:$0xff]
                  %3351 = vst [vmem:[%s3311 + $0x98] sm:$0xff] %v3350
                  %v3352 = vld [vmem:[%s3310 + $0xa0] sm:$0xff]
                  %3353 = vst [vmem:[%s3311 + $0xa0] sm:$0xff] %v3352
                  %v3354 = vld [vmem:[%s3310 + $0xa8] sm:$0xff]
                  %3355 = vst [vmem:[%s3311 + $0xa8] sm:$0xff] %v3354
                  %v3356 = vld [vmem:[%s3310 + $0xb0] sm:$0xff]
                  %3357 = vst [vmem:[%s3311 + $0xb0] sm:$0xff] %v3356
                  %v3358 = vld [vmem:[%s3310 + $0xb8] sm:$0xff]
                  %3359 = vst [vmem:[%s3311 + $0xb8] sm:$0xff] %v3358
                  %v3360 = vld [vmem:[%s3310 + $0xc0] sm:$0xff]
                  %3361 = vst [vmem:[%s3311 + $0xc0] sm:$0xff] %v3360
                  %v3362 = vld [vmem:[%s3310 + $0xc8] sm:$0xff]
                  %3363 = vst [vmem:[%s3311 + $0xc8] sm:$0xff] %v3362
                  %v3364 = vld [vmem:[%s3310 + $0xd0] sm:$0xff]
                  %3365 = vst [vmem:[%s3311 + $0xd0] sm:$0xff] %v3364
                  %v3366 = vld [vmem:[%s3310 + $0xd8] sm:$0xff]
                  %3367 = vst [vmem:[%s3311 + $0xd8] sm:$0xff] %v3366
                  %v3368 = vld [vmem:[%s3310 + $0xe0] sm:$0xff]
                  %3369 = vst [vmem:[%s3311 + $0xe0] sm:$0xff] %v3368
                  %v3370 = vld [vmem:[%s3310 + $0xe8] sm:$0xff]
                  %3371 = vst [vmem:[%s3311 + $0xe8] sm:$0xff] %v3370
                  %v3372 = vld [vmem:[%s3310 + $0xf0] sm:$0xff]
                  %3373 = vst [vmem:[%s3311 + $0xf0] sm:$0xff] %v3372
                  %v3374 = vld [vmem:[%s3310 + $0xf8] sm:$0xff]
                  %3375 = vst [vmem:[%s3311 + $0xf8] sm:$0xff] %v3374
                  %v3376 = vld [vmem:[%s3310 + $0x100] sm:$0xff]
                  %3377 = vst [vmem:[%s3311 + $0x100] sm:$0xff] %v3376
                  %v3378 = vld [vmem:[%s3310 + $0x108] sm:$0xff]
                  %3379 = vst [vmem:[%s3311 + $0x108] sm:$0xff] %v3378
                  %v3380 = vld [vmem:[%s3310 + $0x110] sm:$0xff]
                  %3381 = vst [vmem:[%s3311 + $0x110] sm:$0xff] %v3380
                  %v3382 = vld [vmem:[%s3310 + $0x118] sm:$0xff]
                  %3383 = vst [vmem:[%s3311 + $0x118] sm:$0xff] %v3382
                  %v3384 = vld [vmem:[%s3310 + $0x120] sm:$0xff]
                  %3385 = vst [vmem:[%s3311 + $0x120] sm:$0xff] %v3384
                  %v3386 = vld [vmem:[%s3310 + $0x128] sm:$0xff]
                  %3387 = vst [vmem:[%s3311 + $0x128] sm:$0xff] %v3386
                  %v3388 = vld [vmem:[%s3310 + $0x130] sm:$0xff]
                  %3389 = vst [vmem:[%s3311 + $0x130] sm:$0xff] %v3388
                  %v3390 = vld [vmem:[%s3310 + $0x138] sm:$0xff]
                  %3391 = vst [vmem:[%s3311 + $0x138] sm:$0xff] %v3390
                  %v3392 = vld [vmem:[%s3310 + $0x140] sm:$0xff]
                  %3393 = vst [vmem:[%s3311 + $0x140] sm:$0xff] %v3392
                  %v3394 = vld [vmem:[%s3310 + $0x148] sm:$0xff]
                  %3395 = vst [vmem:[%s3311 + $0x148] sm:$0xff] %v3394
                  %v3396 = vld [vmem:[%s3310 + $0x150] sm:$0xff]
                  %3397 = vst [vmem:[%s3311 + $0x150] sm:$0xff] %v3396
                  %s3398 = sadd.s32 1, %s3309
                  %p3399 = scmp.ge.s32.totalorder %s3398, %s3301
                  %s3400 = scalar_select %p3399, 0, %s3398
                  %s3401 = smul.u32 %s3400, 344
                  %s3402 = smul.u32 %s3400, 344
                  %s3403 = scalar_lea.vmem %s3149, %s3401 [#allocation2]
                  %s3404 = scalar_lea.vmem %s3160, %s3402
                $region107: #{encoder_layer_forward.3} parent=101 // loop_footer
                  %s3306 = sadd.s32 %s3304, 1
                $region108: #{encoder_layer_forward.3} parent=101 // loop_footer_branch
                  %3303 = sbr.rel target = $region104
                $region109: #{encoder_layer_forward.3} parent=101 // loop_exit
                  _
                %s3405 = sdiv.u32.pop %s3156, 43
                %s3406 = srem.u32.pop %s3156, 43
                %s3407 = smul.u32 %s3405, 43
                %s3408 = smul.u32 8, %s3407
                %s3409 = scalar_lea.vmem %s3149, %s3408 [#allocation2]
                %s3410 = smul.u32 8, %s3407
                %s3411 = scalar_lea.vmem %s3160, %s3410
                // While loop
                $region110: #{encoder_layer_forward.3} parent=101 // loop_pre_header
                  _
                $region111: #{encoder_layer_forward.3} parent=101 // loop_header
                  %s3413 = sphi 0, %s3415
                  %p3414 = scmp.ge.s32.totalorder %s3413, %s3406
                  %s3418 = sphi 0, %s3425
                  %s3419 = sphi %s3409, %s3428
                  %s3420 = sphi %s3411, %s3429
                $region112: #{encoder_layer_forward.3} parent=101 // loop_header_branch
                  %3417 = sbr.rel (%p3414) target = $region116
                $region113: #{encoder_layer_forward.3} parent=101 // loop_body
                  %v3421 = vld [vmem:[%s3419] sm:$0xff]
                  %3422 = vst [vmem:[%s3420] sm:$0xff] %v3421
                  %s3423 = sadd.s32 1, %s3418
                  %p3424 = scmp.ge.s32.totalorder %s3423, %s3406
                  %s3425 = scalar_select %p3424, 0, %s3423
                  %s3426 = smul.u32 %s3425, 8
                  %s3427 = smul.u32 %s3425, 8
                  %s3428 = scalar_lea.vmem %s3409, %s3426 [#allocation2]
                  %s3429 = scalar_lea.vmem %s3411, %s3427
                $region114: #{encoder_layer_forward.3} parent=101 // loop_footer
                  %s3415 = sadd.s32 %s3413, 1
                $region115: #{encoder_layer_forward.3} parent=101 // loop_footer_branch
                  %3412 = sbr.rel target = $region111
                $region116: #{encoder_layer_forward.3} parent=101 // loop_exit
                  _
              $region102: #{encoder_layer_forward.3} parent=79 // pred_fallthru
                _
              // Predicated region
              $region117: #{encoder_layer_forward.3} parent=79 // pred_check
                _
              $region118: #{encoder_layer_forward.3} parent=79 // pred_check_branch
                %3431 = sbr.rel target = $region120
              $region119: #{encoder_layer_forward.3} parent=79 // pred_region
                _
              $region120: #{encoder_layer_forward.3} parent=79 // pred_fallthru
                _
            $region80: #{encoder_layer_forward.3} parent=75 // pred_fallthru
              _
            // Predicated region
            $region81: #{encoder_layer_forward.3} parent=75 // pred_check
              _
            $region82: #{encoder_layer_forward.3} parent=75 // pred_check_branch
              %3167 = sbr.rel target = $region84
            $region83: #{encoder_layer_forward.3} parent=75 // pred_region
              %s3169 = ssub.s32 256, 1
              %s3170 = sdiv.u32.pop %s3156, 43
              %s3171 = srem.u32.pop %s3156, 43
              // While loop
              $region85: #{encoder_layer_forward.3} parent=83 // loop_pre_header
                _
              $region86: #{encoder_layer_forward.3} parent=83 // loop_header
                %s3173 = sphi 0, %s3175
                %p3174 = scmp.ge.s32.totalorder %s3173, %s3170
                %s3178 = sphi 0, %s3269
                %s3179 = sphi %s3149, %s3272
                %s3180 = sphi %s3160, %s3273
              $region87: #{encoder_layer_forward.3} parent=83 // loop_header_branch
                %3177 = sbr.rel (%p3174) target = $region91
              $region88: #{encoder_layer_forward.3} parent=83 // loop_body
                %v3181 = vld [vmem:[%s3179] sm:%s3169]
                %3182 = vst [vmem:[%s3180] sm:%s3169] %v3181
                %v3183 = vld [vmem:[%s3179 + $0x8] sm:%s3169]
                %3184 = vst [vmem:[%s3180 + $0x8] sm:%s3169] %v3183
                %v3185 = vld [vmem:[%s3179 + $0x10] sm:%s3169]
                %3186 = vst [vmem:[%s3180 + $0x10] sm:%s3169] %v3185
                %v3187 = vld [vmem:[%s3179 + $0x18] sm:%s3169]
                %3188 = vst [vmem:[%s3180 + $0x18] sm:%s3169] %v3187
                %v3189 = vld [vmem:[%s3179 + $0x20] sm:%s3169]
                %3190 = vst [vmem:[%s3180 + $0x20] sm:%s3169] %v3189
                %v3191 = vld [vmem:[%s3179 + $0x28] sm:%s3169]
                %3192 = vst [vmem:[%s3180 + $0x28] sm:%s3169] %v3191
                %v3193 = vld [vmem:[%s3179 + $0x30] sm:%s3169]
                %3194 = vst [vmem:[%s3180 + $0x30] sm:%s3169] %v3193
                %v3195 = vld [vmem:[%s3179 + $0x38] sm:%s3169]
                %3196 = vst [vmem:[%s3180 + $0x38] sm:%s3169] %v3195
                %v3197 = vld [vmem:[%s3179 + $0x40] sm:%s3169]
                %3198 = vst [vmem:[%s3180 + $0x40] sm:%s3169] %v3197
                %v3199 = vld [vmem:[%s3179 + $0x48] sm:%s3169]
                %3200 = vst [vmem:[%s3180 + $0x48] sm:%s3169] %v3199
                %v3201 = vld [vmem:[%s3179 + $0x50] sm:%s3169]
                %3202 = vst [vmem:[%s3180 + $0x50] sm:%s3169] %v3201
                %v3203 = vld [vmem:[%s3179 + $0x58] sm:%s3169]
                %3204 = vst [vmem:[%s3180 + $0x58] sm:%s3169] %v3203
                %v3205 = vld [vmem:[%s3179 + $0x60] sm:%s3169]
                %3206 = vst [vmem:[%s3180 + $0x60] sm:%s3169] %v3205
                %v3207 = vld [vmem:[%s3179 + $0x68] sm:%s3169]
                %3208 = vst [vmem:[%s3180 + $0x68] sm:%s3169] %v3207
                %v3209 = vld [vmem:[%s3179 + $0x70] sm:%s3169]
                %3210 = vst [vmem:[%s3180 + $0x70] sm:%s3169] %v3209
                %v3211 = vld [vmem:[%s3179 + $0x78] sm:%s3169]
                %3212 = vst [vmem:[%s3180 + $0x78] sm:%s3169] %v3211
                %v3213 = vld [vmem:[%s3179 + $0x80] sm:%s3169]
                %3214 = vst [vmem:[%s3180 + $0x80] sm:%s3169] %v3213
                %v3215 = vld [vmem:[%s3179 + $0x88] sm:%s3169]
                %3216 = vst [vmem:[%s3180 + $0x88] sm:%s3169] %v3215
                %v3217 = vld [vmem:[%s3179 + $0x90] sm:%s3169]
                %3218 = vst [vmem:[%s3180 + $0x90] sm:%s3169] %v3217
                %v3219 = vld [vmem:[%s3179 + $0x98] sm:%s3169]
                %3220 = vst [vmem:[%s3180 + $0x98] sm:%s3169] %v3219
                %v3221 = vld [vmem:[%s3179 + $0xa0] sm:%s3169]
                %3222 = vst [vmem:[%s3180 + $0xa0] sm:%s3169] %v3221
                %v3223 = vld [vmem:[%s3179 + $0xa8] sm:%s3169]
                %3224 = vst [vmem:[%s3180 + $0xa8] sm:%s3169] %v3223
                %v3225 = vld [vmem:[%s3179 + $0xb0] sm:%s3169]
                %3226 = vst [vmem:[%s3180 + $0xb0] sm:%s3169] %v3225
                %v3227 = vld [vmem:[%s3179 + $0xb8] sm:%s3169]
                %3228 = vst [vmem:[%s3180 + $0xb8] sm:%s3169] %v3227
                %v3229 = vld [vmem:[%s3179 + $0xc0] sm:%s3169]
                %3230 = vst [vmem:[%s3180 + $0xc0] sm:%s3169] %v3229
                %v3231 = vld [vmem:[%s3179 + $0xc8] sm:%s3169]
                %3232 = vst [vmem:[%s3180 + $0xc8] sm:%s3169] %v3231
                %v3233 = vld [vmem:[%s3179 + $0xd0] sm:%s3169]
                %3234 = vst [vmem:[%s3180 + $0xd0] sm:%s3169] %v3233
                %v3235 = vld [vmem:[%s3179 + $0xd8] sm:%s3169]
                %3236 = vst [vmem:[%s3180 + $0xd8] sm:%s3169] %v3235
                %v3237 = vld [vmem:[%s3179 + $0xe0] sm:%s3169]
                %3238 = vst [vmem:[%s3180 + $0xe0] sm:%s3169] %v3237
                %v3239 = vld [vmem:[%s3179 + $0xe8] sm:%s3169]
                %3240 = vst [vmem:[%s3180 + $0xe8] sm:%s3169] %v3239
                %v3241 = vld [vmem:[%s3179 + $0xf0] sm:%s3169]
                %3242 = vst [vmem:[%s3180 + $0xf0] sm:%s3169] %v3241
                %v3243 = vld [vmem:[%s3179 + $0xf8] sm:%s3169]
                %3244 = vst [vmem:[%s3180 + $0xf8] sm:%s3169] %v3243
                %v3245 = vld [vmem:[%s3179 + $0x100] sm:%s3169]
                %3246 = vst [vmem:[%s3180 + $0x100] sm:%s3169] %v3245
                %v3247 = vld [vmem:[%s3179 + $0x108] sm:%s3169]
                %3248 = vst [vmem:[%s3180 + $0x108] sm:%s3169] %v3247
                %v3249 = vld [vmem:[%s3179 + $0x110] sm:%s3169]
                %3250 = vst [vmem:[%s3180 + $0x110] sm:%s3169] %v3249
                %v3251 = vld [vmem:[%s3179 + $0x118] sm:%s3169]
                %3252 = vst [vmem:[%s3180 + $0x118] sm:%s3169] %v3251
                %v3253 = vld [vmem:[%s3179 + $0x120] sm:%s3169]
                %3254 = vst [vmem:[%s3180 + $0x120] sm:%s3169] %v3253
                %v3255 = vld [vmem:[%s3179 + $0x128] sm:%s3169]
                %3256 = vst [vmem:[%s3180 + $0x128] sm:%s3169] %v3255
                %v3257 = vld [vmem:[%s3179 + $0x130] sm:%s3169]
                %3258 = vst [vmem:[%s3180 + $0x130] sm:%s3169] %v3257
                %v3259 = vld [vmem:[%s3179 + $0x138] sm:%s3169]
                %3260 = vst [vmem:[%s3180 + $0x138] sm:%s3169] %v3259
                %v3261 = vld [vmem:[%s3179 + $0x140] sm:%s3169]
                %3262 = vst [vmem:[%s3180 + $0x140] sm:%s3169] %v3261
                %v3263 = vld [vmem:[%s3179 + $0x148] sm:%s3169]
                %3264 = vst [vmem:[%s3180 + $0x148] sm:%s3169] %v3263
                %v3265 = vld [vmem:[%s3179 + $0x150] sm:%s3169]
                %3266 = vst [vmem:[%s3180 + $0x150] sm:%s3169] %v3265
                %s3267 = sadd.s32 1, %s3178
                %p3268 = scmp.ge.s32.totalorder %s3267, %s3170
                %s3269 = scalar_select %p3268, 0, %s3267
                %s3270 = smul.u32 %s3269, 344
                %s3271 = smul.u32 %s3269, 344
                %s3272 = scalar_lea.vmem %s3149, %s3270 [#allocation2]
                %s3273 = scalar_lea.vmem %s3160, %s3271
              $region89: #{encoder_layer_forward.3} parent=83 // loop_footer
                %s3175 = sadd.s32 %s3173, 1
              $region90: #{encoder_layer_forward.3} parent=83 // loop_footer_branch
                %3172 = sbr.rel target = $region86
              $region91: #{encoder_layer_forward.3} parent=83 // loop_exit
                _
              %s3274 = sdiv.u32.pop %s3156, 43
              %s3275 = srem.u32.pop %s3156, 43
              %s3276 = smul.u32 %s3274, 43
              %s3277 = smul.u32 8, %s3276
              %s3278 = scalar_lea.vmem %s3149, %s3277 [#allocation2]
              %s3279 = smul.u32 8, %s3276
              %s3280 = scalar_lea.vmem %s3160, %s3279
              // While loop
              $region92: #{encoder_layer_forward.3} parent=83 // loop_pre_header
                _
              $region93: #{encoder_layer_forward.3} parent=83 // loop_header
                %s3282 = sphi 0, %s3284
                %p3283 = scmp.ge.s32.totalorder %s3282, %s3275
                %s3287 = sphi 0, %s3294
                %s3288 = sphi %s3278, %s3297
                %s3289 = sphi %s3280, %s3298
              $region94: #{encoder_layer_forward.3} parent=83 // loop_header_branch
                %3286 = sbr.rel (%p3283) target = $region98
              $region95: #{encoder_layer_forward.3} parent=83 // loop_body
                %v3290 = vld [vmem:[%s3288] sm:%s3169]
                %3291 = vst [vmem:[%s3289] sm:%s3169] %v3290
                %s3292 = sadd.s32 1, %s3287
                %p3293 = scmp.ge.s32.totalorder %s3292, %s3275
                %s3294 = scalar_select %p3293, 0, %s3292
                %s3295 = smul.u32 %s3294, 8
                %s3296 = smul.u32 %s3294, 8
                %s3297 = scalar_lea.vmem %s3278, %s3295 [#allocation2]
                %s3298 = scalar_lea.vmem %s3280, %s3296
              $region96: #{encoder_layer_forward.3} parent=83 // loop_footer
                %s3284 = sadd.s32 %s3282, 1
              $region97: #{encoder_layer_forward.3} parent=83 // loop_footer_branch
                %3281 = sbr.rel target = $region93
              $region98: #{encoder_layer_forward.3} parent=83 // loop_exit
                _
            $region84: #{encoder_layer_forward.3} parent=75 // pred_fallthru
              _
          $region76: #{encoder_layer_forward.3} parent=71 // pred_fallthru
            _
          %3432 = vnop
        $region72: #{encoder_layer_forward.3} parent=67 // pred_fallthru
          _
      $region68: #{encoder_layer_forward.3} parent=5 // pred_fallthru
        _
      %p3433 = scmp.le.s32.totalorder 2, %s18
      // Predicated region
      $region121: #{encoder_layer_forward.3} parent=5 // pred_check
        %p3434 = pneg %p3433
      $region122: #{encoder_layer_forward.3} parent=5 // pred_check_branch
        %3436 = sbr.rel (%p3434) target = $region124
      $region123: #{encoder_layer_forward.3} parent=5 // pred_region
        %s3437 = ssub.s32 %s18, 2
        // Predicated region
        $region125: #{encoder_layer_forward.3} parent=123 // pred_check
          %p3438 = pneg %p309
        $region126: #{encoder_layer_forward.3} parent=123 // pred_check_branch
          %3440 = sbr.rel (%p3438) target = $region128
        $region127: #{encoder_layer_forward.3} parent=123 // pred_region
          %s3441 = sand.u32 %s294, 1
          %s3442 = sand.u32 %s294, 1
          %s3443 = smul.addr %s3442, 344
          %s3444 = scalar_lea.vmem [#allocation2], %s3443
        $region128: #{encoder_layer_forward.3} parent=123 // pred_fallthru
          _
      $region124: #{encoder_layer_forward.3} parent=5 // pred_fallthru
        _
    $region6: #{encoder_layer_forward.3} parent=1 // loop_footer
      %s22 = sadd.s32 1, %s18
    $region7: #{encoder_layer_forward.3} parent=1 // loop_footer_branch
      %17 = sbr.rel target = $region3
    $region8: #{encoder_layer_forward.3} parent=1 // loop_exit
      _

</llo_original>
